<compile_context>
chip_gen: v7x
topology: tpu7x:2x2x1
jax: 0.10.0
libtpu: 0.0.40
codegen_flags: <defaults>
</compile_context>

<pallas_src>
import functools

import jax
import jax.numpy as jnp
import numpy as np
from jax.experimental import pallas as pl
from jax.experimental.pallas import tpu as pltpu

KSIZE = 5
C1_OUT = 32
C2_OUT = 64
LANE = 128          # channel / class padding target (one vreg lane width)

# Spatial sizes implied by the module (fc1 expects 1024 = 64*4*4 -> 28x28 input).
H_IN = 28
OH1 = H_IN - KSIZE + 1      # 24  conv1 output
PH1 = OH1 // 2              # 12  pooled conv1 output
OH2 = PH1 - KSIZE + 1       # 8   conv2 output
PH2 = OH2 // 2              # 4   pooled conv2 output


# ----------------------------------------------------------------------------
# Pallas kernels
# ----------------------------------------------------------------------------
def _conv1_relu_pool_kernel(p_ref, w_ref, b_ref, o_ref):
    """Per-image conv1 (im2col matmul) + bias + ReLU + fused 2x2 max-pool.

    p_ref rows are ordered (quadrant, hp, wp) where quadrant q = qh*2+qw selects
    the conv-output position (2*hp+qh, 2*wp+qw).  The 2x2 max-pool is therefore
    an elementwise max of four contiguous, sublane-aligned 144-row slices of the
    f32 accumulator (ReLU commutes with max-pool, so relu-then-pool is valid).
    """
    acc = jnp.dot(p_ref[...], w_ref[...], preferred_element_type=jnp.float32)
    acc = jnp.maximum(acc + b_ref[...], 0.0)
    n = PH1 * PH1                                   # 144
    pooled = jnp.maximum(jnp.maximum(acc[0:n], acc[n:2 * n]),
                         jnp.maximum(acc[2 * n:3 * n], acc[3 * n:4 * n]))
    o_ref[...] = pooled.astype(o_ref.dtype)         # [144, 128], rows = (hp, wp)


def _conv2_relu_pool_kernel(x_ref, w_ref, b_ref, o_ref, p_ref):
    """Per-image conv2 with in-kernel im2col + bias + ReLU + fused 2x2 max-pool.

    x_ref: [144, 128] f32   pooled conv1 activations, rows = (h, w) of the 12x12
                            image, lanes = channels zero-padded 32 -> 128.
    w_ref: [3200, 128] bf16 rows ordered (kh, kw, cin128), cout padded 64 -> 128.
    p_ref: [64, 3200] bf16  VMEM scratch patch matrix, rows ordered (qh, hp, wo)
                            with conv-output row ho = 2*hp + qh.
    """
    # In-kernel im2col: each source slab is 8 contiguous input rows (one conv
    # output row's 8 receptive-field columns for a fixed (kh, kw)); it is loaded
    # once and written to every tap position that needs it (static indices only).
    for hi in range(PH1):                     # input image row 0..11
        for kw in range(KSIZE):
            src = hi * PH1 + kw
            slab = x_ref[src:src + OH2, :].astype(p_ref.dtype)       # [8, 128]
            for kh in range(KSIZE):
                ho = hi - kh                  # conv output row fed by (hi, kh)
                if 0 <= ho < OH2:
                    dst = (ho % 2) * 32 + (ho // 2) * OH2            # (qh, hp, wo)
                    col = (kh * KSIZE + kw) * LANE
                    p_ref[dst:dst + OH2, col:col + LANE] = slab

    acc = jnp.dot(p_ref[...], w_ref[...], preferred_element_type=jnp.float32)
    acc = jnp.maximum(acc + b_ref[...], 0.0)                          # [64, 128]

    # 2x2 max-pool on the f32 accumulator:
    #  - H direction: rows [0:32] (qh=0) vs [32:64] (qh=1)  -> rows = (hp, wo)
    #  - W direction: adjacent row pairs (wo=2*wp, 2*wp+1)   -> rows = (hp, wp)
    hmax = jnp.maximum(acc[0:32], acc[32:64])
    pooled = jnp.concatenate(
        [jnp.maximum(hmax[2 * i:2 * i + 1, :], hmax[2 * i + 1:2 * i + 2, :])
         for i in range(PH2 * OH2 // 2)],                             # 16 rows
        axis=0)
    o_ref[...] = pooled.astype(o_ref.dtype)                           # [16, 128]


def _fc_fused_kernel(x_ref, w1_ref, b1_ref, w2_ref, b2_ref, o_ref):
    """fc1 + ReLU + fc2 in one kernel; the fc1 activation never leaves VMEM."""
    h = jnp.dot(x_ref[...], w1_ref[...], preferred_element_type=jnp.float32)
    h = jnp.maximum(h + b1_ref[...], 0.0)
    # TODO(synk): F.dropout(training=True) is stochastic; applied as identity
    # (eval-mode semantics).
    o_ref[...] = (jnp.dot(h.astype(jnp.bfloat16), w2_ref[...],
                          preferred_element_type=jnp.float32) + b2_ref[...])


# ----------------------------------------------------------------------------
# Pallas wrappers
# ----------------------------------------------------------------------------
def conv1_relu_pool(patches, w, b, batch):
    """patches: [B*4*144, Kp] bf16 (rows ordered (b, quadrant, hp, wp))."""
    kdim = patches.shape[1]
    return pl.pallas_call(
        _conv1_relu_pool_kernel,
        out_shape=jax.ShapeDtypeStruct((batch * PH1 * PH1, LANE), jnp.float32),
        grid=(batch,),
        in_specs=[
            pl.BlockSpec((4 * PH1 * PH1, kdim), lambda i: (i, 0)),
            pl.BlockSpec((kdim, LANE), lambda i: (0, 0)),
            pl.BlockSpec((1, LANE), lambda i: (0, 0)),
        ],
        out_specs=pl.BlockSpec((PH1 * PH1, LANE), lambda i: (i, 0)),
        compiler_params=pltpu.CompilerParams(dimension_semantics=("parallel",)),
    )(patches, w, b)


def conv2_relu_pool(h1, w, b, batch):
    """h1: [B*144, 128] f32 pooled conv1 activations (NHWC flat, padded lanes)."""
    k2 = KSIZE * KSIZE * LANE          # 3200
    return pl.pallas_call(
        _conv2_relu_pool_kernel,
        out_shape=jax.ShapeDtypeStruct((batch * PH2 * PH2, LANE), jnp.bfloat16),
        grid=(batch,),
        in_specs=[
            pl.BlockSpec((PH1 * PH1, LANE), lambda i: (i, 0)),
            pl.BlockSpec((k2, LANE), lambda i: (0, 0)),
            pl.BlockSpec((1, LANE), lambda i: (0, 0)),
        ],
        out_specs=pl.BlockSpec((PH2 * PH2, LANE), lambda i: (i, 0)),
        scratch_shapes=[pltpu.VMEM((OH2 * OH2, k2), jnp.bfloat16)],
        compiler_params=pltpu.CompilerParams(dimension_semantics=("parallel",)),
    )(h1, w, b)


def fc1_fc2_fused(x, w1, b1, w2, b2, *, block_m=256):
    """x: [M, 2048] bf16 -> logits [M, 128] f32 (fc1 + relu + fc2 fused)."""
    m, k = x.shape
    n_mid = w1.shape[1]
    n_out = w2.shape[1]
    if m <= block_m:
        bm, mp, xp = m, m, x                       # single full-M block
    else:
        bm = block_m                               # cdiv grid + zero-padded tail
        mp = pl.cdiv(m, bm) * bm
        xp = jnp.pad(x, ((0, mp - m), (0, 0))) if mp != m else x
    out = pl.pallas_call(
        _fc_fused_kernel,
        out_shape=jax.ShapeDtypeStruct((mp, n_out), jnp.float32),
        grid=(mp // bm,),
        in_specs=[
            pl.BlockSpec((bm, k), lambda i: (i, 0)),
            pl.BlockSpec((k, n_mid), lambda i: (0, 0)),
            pl.BlockSpec((1, n_mid), lambda i: (0, 0)),
            pl.BlockSpec((n_mid, n_out), lambda i: (0, 0)),
            pl.BlockSpec((1, n_out), lambda i: (0, 0)),
        ],
        out_specs=pl.BlockSpec((bm, n_out), lambda i: (i, 0)),
        compiler_params=pltpu.CompilerParams(dimension_semantics=("parallel",)),
    )(xp, w1, b1, w2, b2)
    return out[:m]


# ----------------------------------------------------------------------------
# Glue: im2col (conv1 only), parameter init / one-time prep, forward pass
# ----------------------------------------------------------------------------
def conv1_im2col_quadrant(x_nhwc, pad_k_to):
    """x: [B, 28, 28, C] -> [B*4*144, pad_k_to], rows ordered (b, quadrant, hp, wp).

    The quadrant ordering lets the conv1 kernel apply the 2x2 max-pool as an
    elementwise max of four contiguous slices of its accumulator.
    """
    bsz, h, w, c = x_nhwc.shape
    oh, ow = h - KSIZE + 1, w - KSIZE + 1
    cols = []
    for kh in range(KSIZE):
        for kw in range(KSIZE):
            cols.append(x_nhwc[:, kh:kh + oh, kw:kw + ow, :])       # [B, OH, OW, C]
    p = jnp.stack(cols, axis=3).reshape(bsz, oh, ow, KSIZE * KSIZE * c)
    p = p.reshape(bsz, oh // 2, 2, ow // 2, 2, KSIZE * KSIZE * c)   # (b,hp,qh,wp,qw,t)
    p = jnp.transpose(p, (0, 2, 4, 1, 3, 5))                        # (b,qh,qw,hp,wp,t)
    p = p.reshape(bsz * 4 * (oh // 2) * (ow // 2), KSIZE * KSIZE * c)
    if pad_k_to > p.shape[1]:
        p = jnp.pad(p, ((0, 0), (0, pad_k_to - p.shape[1])))
    return p


def init_params(key, num_channels=1, num_classes=10):
    ks = jax.random.split(key, 8)

    def u(k, shape, fan_in):
        bound = 1.0 / np.sqrt(fan_in)
        return jax.random.uniform(k, shape, jnp.float32, -bound, bound)

    return {
        "conv1_w": u(ks[0], (C1_OUT, num_channels, KSIZE, KSIZE), num_channels * 25),
        "conv1_b": u(ks[1], (C1_OUT,), num_channels * 25),
        "conv2_w": u(ks[2], (C2_OUT, C1_OUT, KSIZE, KSIZE), C1_OUT * 25),
        "conv2_b": u(ks[3], (C2_OUT,), C1_OUT * 25),
        "fc1_w": u(ks[4], (512, 1024), 1024),      # torch Linear: [out, in]
        "fc1_b": u(ks[5], (512,), 1024),
        "fc2_w": u(ks[6], (num_classes, 512), 512),
        "fc2_b": u(ks[7], (num_classes,), 512),
    }


def prepare_params(params):
    """One-time re-layout of torch-style params into kernel-friendly tensors."""
    f32, bf16 = jnp.float32, jnp.bfloat16

    # conv1: OIHW -> [K_pad, 128], rows ordered (kh, kw, cin), K padded 25 -> 32.
    cin1 = params["conv1_w"].shape[1]
    w1 = jnp.transpose(params["conv1_w"], (2, 3, 1, 0)).reshape(
        KSIZE * KSIZE * cin1, C1_OUT)
    k1 = w1.shape[0]
    k1p = -(-k1 // 8) * 8
    w1 = jnp.pad(w1, ((0, k1p - k1), (0, LANE - C1_OUT)))
    b1 = jnp.pad(params["conv1_b"], (0, LANE - C1_OUT)).reshape(1, LANE)

    # conv2: OIHW -> [3200, 128], rows ordered (kh, kw, cin padded 32->128), cols
    # cout padded 64 -> 128.  Zero-padding cin lets conv2 consume all 128 stored
    # lanes of the pooled conv1 activations (no channel slice in the forward).
    w2 = jnp.transpose(params["conv2_w"], (2, 3, 1, 0))             # [5,5,32,64]
    w2 = jnp.pad(w2, ((0, 0), (0, 0), (0, LANE - C1_OUT), (0, LANE - C2_OUT)))
    w2 = w2.reshape(KSIZE * KSIZE * LANE, LANE)
    b2 = jnp.pad(params["conv2_b"], (0, LANE - C2_OUT)).reshape(1, LANE)

    # fc1: [512, 1024] (torch flatten order c,h,w) -> [h*w*128, 512]; folds in the
    # NCHW flatten permutation and zero weights for the padded pool channels.
    fo1, _ = params["fc1_w"].shape
    wf1 = params["fc1_w"].reshape(fo1, C2_OUT, PH2, PH2)
    wf1 = jnp.transpose(wf1, (0, 2, 3, 1))                          # (out, h, w, c)
    wf1 = jnp.pad(wf1, ((0, 0), (0, 0), (0, 0), (0, LANE - C2_OUT)))
    wf1 = wf1.reshape(fo1, PH2 * PH2 * LANE).T                      # (2048, 512)
    bf1 = params["fc1_b"].reshape(1, fo1)

    # fc2: [num_classes, 512] -> [512, 128] (classes padded to a full lane width).
    nc = params["fc2_w"].shape[0]
    wf2 = jnp.pad(params["fc2_w"].T, ((0, 0), (0, LANE - nc)))
    bf2 = jnp.pad(params["fc2_b"], (0, LANE - nc)).reshape(1, LANE)

    return {
        "w1": w1.astype(bf16), "b1": b1.astype(f32),
        "w2": w2.astype(bf16), "b2": b2.astype(f32),
        "fc1_w": wf1.astype(bf16), "fc1_b": bf1.astype(f32),
        "fc2_w": wf2.astype(bf16), "fc2_b": bf2.astype(f32),
    }


@functools.partial(jax.jit, static_argnames=("num_classes",))
def cnn_mnist_forward(x_nchw, prep, *, num_classes=10):
    batch = x_nchw.shape[0]
    x = jnp.transpose(x_nchw, (0, 2, 3, 1)).astype(jnp.bfloat16)     # NHWC bf16

    # conv1 + relu + 2x2 max-pool (fused): [B*144, 128] NHWC, channels padded.
    p1 = conv1_im2col_quadrant(x, prep["w1"].shape[0])
    h1 = conv1_relu_pool(p1, prep["w1"], prep["b1"], batch)

    # conv2 + relu + 2x2 max-pool (fused, in-kernel im2col over all 128 lanes).
    h2 = conv2_relu_pool(h1, prep["w2"], prep["b2"], batch)          # [B*16, 128]

    # flatten: torch's NCHW view(-1, 1024) permutation and the padded channels are
    # folded into prep["fc1_w"], so a plain row-major reshape suffices.
    flat = h2.reshape(batch, PH2 * PH2 * LANE)                       # [B, 2048]

    # fc1 + relu (+ dropout as identity) + fc2, all in one kernel.
    logits = fc1_fc2_fused(flat, prep["fc1_w"], prep["fc1_b"],
                           prep["fc2_w"], prep["fc2_b"])             # [B, 128] f32
    return logits[:, :num_classes]


# ----------------------------------------------------------------------------
# Pure-JAX f32 reference for a correctness sanity check
# ----------------------------------------------------------------------------
def ref_forward(x_nchw, params):
    def pool2(y):  # NCHW 2x2 max pool
        bsz, c, h, w = y.shape
        return y.reshape(bsz, c, h // 2, 2, w // 2, 2).max(axis=(3, 5))

    y = jax.lax.conv_general_dilated(
        x_nchw, params["conv1_w"], (1, 1), "VALID",
        dimension_numbers=("NCHW", "OIHW", "NCHW"),
    ) + params["conv1_b"][None, :, None, None]
    y = jax.nn.relu(pool2(y))
    y = jax.lax.conv_general_dilated(
        y, params["conv2_w"], (1, 1), "VALID",
        dimension_numbers=("NCHW", "OIHW", "NCHW"),
    ) + params["conv2_b"][None, :, None, None]
    y = jax.nn.relu(pool2(y))
    y = y.reshape(y.shape[0], -1)
    y = jax.nn.relu(y @ params["fc1_w"].T + params["fc1_b"])
    return y @ params["fc2_w"].T + params["fc2_b"]


if __name__ == "__main__":
    key = jax.random.PRNGKey(0)
    k_x, k_p = jax.random.split(key)
    # MNIST-shaped input: batch=2, 1 channel, 28x28 (required so the flatten is 1024).
    x = jax.random.normal(k_x, (2, 1, 28, 28), jnp.float32)
    params = init_params(k_p, num_channels=1, num_classes=10)
    prep = prepare_params(params)          # one-time weight re-layout (hoisted)

    out = jax.block_until_ready(cnn_mnist_forward(x, prep, num_classes=10))
    ref = jax.block_until_ready(ref_forward(x, params))

    assert out.shape == (2, 10), out.shape
    # bf16 MXU path vs f32 reference: relaxed tolerance.
    np.testing.assert_allclose(np.asarray(out, dtype=np.float32), np.asarray(ref),
                               rtol=2e-2, atol=2e-2)
    print("KERNEL_OK")
</pallas_src>

<mosaic_0001>
module attributes {stable_mosaic.version = 11 : i64} {
  func.func @_conv1_relu_pool_kernel(%arg0: i32, %arg1: memref<576x32xbf16, #tpu.memory_space<vmem>>, %arg2: memref<32x128xbf16, #tpu.memory_space<vmem>>, %arg3: memref<1x128xf32, #tpu.memory_space<vmem>>, %arg4: memref<144x128xf32, #tpu.memory_space<vmem>>) attributes {dimension_semantics = [#tpu.dimension_semantics<parallel>], iteration_bounds = array<i64: 2>, scalar_prefetch = 0 : i64, scratch_operands = 0 : i64, tpu.core_type = #tpu.core_type<tc>, window_params = [{transform_indices = @transform_0, window_bounds = array<i64: 576, 32>}, {pipeline_mode = #tpu.pipeline_mode<synchronous>, transform_indices = @transform_1, window_bounds = array<i64: 32, 128>}, {pipeline_mode = #tpu.pipeline_mode<synchronous>, transform_indices = @transform_2, window_bounds = array<i64: 1, 128>}, {transform_indices = @transform_3, window_bounds = array<i64: 144, 128>}]} {
    %c0 = arith.constant 0 : index
    %c0_0 = arith.constant 0 : index
    %0 = vector.load %arg1[%c0, %c0_0] : memref<576x32xbf16, #tpu.memory_space<vmem>>, vector<576x32xbf16>
    %c0_1 = arith.constant 0 : index
    %c0_2 = arith.constant 0 : index
    %1 = vector.load %arg2[%c0_1, %c0_2] : memref<32x128xbf16, #tpu.memory_space<vmem>>, vector<32x128xbf16>
    %cst = arith.constant dense<0.000000e+00> : vector<576x128xf32>
    %2 = tpu.matmul %0, %1, %cst {dimension_numbers = #tpu.dot_dimension_numbers<[1], [0], [0], [1], [0, 0, 1, 1], [], []>} : vector<576x32xbf16>, vector<32x128xbf16>, vector<576x128xf32> -> vector<576x128xf32>
    %c0_3 = arith.constant 0 : index
    %c0_4 = arith.constant 0 : index
    %3 = vector.load %arg3[%c0_3, %c0_4] : memref<1x128xf32, #tpu.memory_space<vmem>>, vector<1x128xf32>
    %4 = vector.broadcast %3 : vector<1x128xf32> to vector<576x128xf32>
    %5 = arith.addf %2, %4 : vector<576x128xf32>
    %cst_5 = arith.constant 0.000000e+00 : f32
    %6 = vector.broadcast %cst_5 : f32 to vector<576x128xf32>
    %7 = arith.maximumf %5, %6 : vector<576x128xf32>
    %8 = vector.extract_strided_slice %7 {offsets = [0, 0], sizes = [144, 128], strides = [1, 1]} : vector<576x128xf32> to vector<144x128xf32>
    %9 = vector.extract_strided_slice %7 {offsets = [144, 0], sizes = [144, 128], strides = [1, 1]} : vector<576x128xf32> to vector<144x128xf32>
    %10 = arith.maximumf %8, %9 : vector<144x128xf32>
    %11 = vector.extract_strided_slice %7 {offsets = [288, 0], sizes = [144, 128], strides = [1, 1]} : vector<576x128xf32> to vector<144x128xf32>
    %12 = vector.extract_strided_slice %7 {offsets = [432, 0], sizes = [144, 128], strides = [1, 1]} : vector<576x128xf32> to vector<144x128xf32>
    %13 = arith.maximumf %11, %12 : vector<144x128xf32>
    %14 = arith.maximumf %10, %13 : vector<144x128xf32>
    %c0_6 = arith.constant 0 : index
    %c0_7 = arith.constant 0 : index
    %15 = vector.load %arg4[%c0_6, %c0_7] : memref<144x128xf32, #tpu.memory_space<vmem>>, vector<144x128xf32>
    tpu.vector_store %arg4[%c0_6, %c0_7], %14 {strides = array<i32>} : memref<144x128xf32, #tpu.memory_space<vmem>>, vector<144x128xf32>,
    return
  }
  func.func @transform_0(%arg0: i32) -> (i32, i32) {
    %c0_i32 = arith.constant 0 : i32
    %c0_i32_0 = arith.constant 0 : i32
    return %arg0, %c0_i32 : i32, i32
  }
  func.func @transform_1(%arg0: i32) -> (i32, i32) {
    %c0_i32 = arith.constant 0 : i32
    %c0_i32_0 = arith.constant 0 : i32
    %c0_i32_1 = arith.constant 0 : i32
    return %c0_i32, %c0_i32_0 : i32, i32
  }
  func.func @transform_2(%arg0: i32) -> (i32, i32) {
    %c0_i32 = arith.constant 0 : i32
    %c0_i32_0 = arith.constant 0 : i32
    %c0_i32_1 = arith.constant 0 : i32
    return %c0_i32, %c0_i32_0 : i32, i32
  }
  func.func @transform_3(%arg0: i32) -> (i32, i32) {
    %c0_i32 = arith.constant 0 : i32
    %c0_i32_0 = arith.constant 0 : i32
    return %arg0, %c0_i32 : i32, i32
  }
}

module attributes {stable_mosaic.version = 11 : i64} {
  func.func @_conv2_relu_pool_kernel(%arg0: i32, %arg1: memref<144x128xf32, #tpu.memory_space<vmem>>, %arg2: memref<3200x128xbf16, #tpu.memory_space<vmem>>, %arg3: memref<1x128xf32, #tpu.memory_space<vmem>>, %arg4: memref<16x128xbf16, #tpu.memory_space<vmem>>, %arg5: memref<64x3200xbf16, #tpu.memory_space<vmem>>) attributes {dimension_semantics = [#tpu.dimension_semantics<parallel>], iteration_bounds = array<i64: 2>, scalar_prefetch = 0 : i64, scratch_operands = 1 : i64, tpu.core_type = #tpu.core_type<tc>, window_params = [{transform_indices = @transform_0, window_bounds = array<i64: 144, 128>}, {pipeline_mode = #tpu.pipeline_mode<synchronous>, transform_indices = @transform_1, window_bounds = array<i64: 3200, 128>}, {pipeline_mode = #tpu.pipeline_mode<synchronous>, transform_indices = @transform_2, window_bounds = array<i64: 1, 128>}, {transform_indices = @transform_3, window_bounds = array<i64: 16, 128>}]} {
    %c0 = arith.constant 0 : index
    %c0_0 = arith.constant 0 : index
    %0 = vector.load %arg1[%c0, %c0_0] : memref<144x128xf32, #tpu.memory_space<vmem>>, vector<8x128xf32>
    %1 = arith.truncf %0 : vector<8x128xf32> to vector<8x128xbf16>
    %c0_1 = arith.constant 0 : index
    %c0_2 = arith.constant 0 : index
    %2 = vector.load %arg5[%c0_1, %c0_2] : memref<64x3200xbf16, #tpu.memory_space<vmem>>, vector<8x128xbf16>
    tpu.vector_store %arg5[%c0_1, %c0_2], %1 {strides = array<i32>} : memref<64x3200xbf16, #tpu.memory_space<vmem>>, vector<8x128xbf16>,
    %c1 = arith.constant 1 : index
    %c0_3 = arith.constant 0 : index
    %3 = vector.load %arg1[%c1, %c0_3] : memref<144x128xf32, #tpu.memory_space<vmem>>, vector<8x128xf32>
    %4 = arith.truncf %3 : vector<8x128xf32> to vector<8x128xbf16>
    %c0_4 = arith.constant 0 : index
    %c128 = arith.constant 128 : index
    %5 = vector.load %arg5[%c0_4, %c128] : memref<64x3200xbf16, #tpu.memory_space<vmem>>, vector<8x128xbf16>
    tpu.vector_store %arg5[%c0_4, %c128], %4 {strides = array<i32>} : memref<64x3200xbf16, #tpu.memory_space<vmem>>, vector<8x128xbf16>,
    %c2 = arith.constant 2 : index
    %c0_5 = arith.constant 0 : index
    %6 = vector.load %arg1[%c2, %c0_5] : memref<144x128xf32, #tpu.memory_space<vmem>>, vector<8x128xf32>
    %7 = arith.truncf %6 : vector<8x128xf32> to vector<8x128xbf16>
    %c0_6 = arith.constant 0 : index
    %c256 = arith.constant 256 : index
    %8 = vector.load %arg5[%c0_6, %c256] : memref<64x3200xbf16, #tpu.memory_space<vmem>>, vector<8x128xbf16>
    tpu.vector_store %arg5[%c0_6, %c256], %7 {strides = array<i32>} : memref<64x3200xbf16, #tpu.memory_space<vmem>>, vector<8x128xbf16>,
    %c3 = arith.constant 3 : index
    %c0_7 = arith.constant 0 : index
    %9 = vector.load %arg1[%c3, %c0_7] : memref<144x128xf32, #tpu.memory_space<vmem>>, vector<8x128xf32>
    %10 = arith.truncf %9 : vector<8x128xf32> to vector<8x128xbf16>
    %c0_8 = arith.constant 0 : index
    %c384 = arith.constant 384 : index
    %11 = vector.load %arg5[%c0_8, %c384] : memref<64x3200xbf16, #tpu.memory_space<vmem>>, vector<8x128xbf16>
    tpu.vector_store %arg5[%c0_8, %c384], %10 {strides = array<i32>} : memref<64x3200xbf16, #tpu.memory_space<vmem>>, vector<8x128xbf16>,
    %c4 = arith.constant 4 : index
    %c0_9 = arith.constant 0 : index
    %12 = vector.load %arg1[%c4, %c0_9] : memref<144x128xf32, #tpu.memory_space<vmem>>, vector<8x128xf32>
    %13 = arith.truncf %12 : vector<8x128xf32> to vector<8x128xbf16>
    %c0_10 = arith.constant 0 : index
    %c512 = arith.constant 512 : index
    %14 = vector.load %arg5[%c0_10, %c512] : memref<64x3200xbf16, #tpu.memory_space<vmem>>, vector<8x128xbf16>
    tpu.vector_store %arg5[%c0_10, %c512], %13 {strides = array<i32>} : memref<64x3200xbf16, #tpu.memory_space<vmem>>, vector<8x128xbf16>,
    %c12 = arith.constant 12 : index
    %c0_11 = arith.constant 0 : index
    %15 = vector.load %arg1[%c12, %c0_11] : memref<144x128xf32, #tpu.memory_space<vmem>>, vector<8x128xf32>
    %16 = arith.truncf %15 : vector<8x128xf32> to vector<8x128xbf16>
    %c32 = arith.constant 32 : index
    %c0_12 = arith.constant 0 : index
    %17 = vector.load %arg5[%c32, %c0_12] : memref<64x3200xbf16, #tpu.memory_space<vmem>>, vector<8x128xbf16>
    tpu.vector_store %arg5[%c32, %c0_12], %16 {strides = array<i32>} : memref<64x3200xbf16, #tpu.memory_space<vmem>>, vector<8x128xbf16>,
    %c0_13 = arith.constant 0 : index
    %c640 = arith.constant 640 : index
    %18 = vector.load %arg5[%c0_13, %c640] : memref<64x3200xbf16, #tpu.memory_space<vmem>>, vector<8x128xbf16>
    tpu.vector_store %arg5[%c0_13, %c640], %16 {strides = array<i32>} : memref<64x3200xbf16, #tpu.memory_space<vmem>>, vector<8x128xbf16>,
    %c13 = arith.constant 13 : index
    %c0_14 = arith.constant 0 : index
    %19 = vector.load %arg1[%c13, %c0_14] : memref<144x128xf32, #tpu.memory_space<vmem>>, vector<8x128xf32>
    %20 = arith.truncf %19 : vector<8x128xf32> to vector<8x128xbf16>
    %c32_15 = arith.constant 32 : index
    %c128_16 = arith.constant 128 : index
    %21 = vector.load %arg5[%c32_15, %c128_16] : memref<64x3200xbf16, #tpu.memory_space<vmem>>, vector<8x128xbf16>
    tpu.vector_store %arg5[%c32_15, %c128_16], %20 {strides = array<i32>} : memref<64x3200xbf16, #tpu.memory_space<vmem>>, vector<8x128xbf16>,
    %c0_17 = arith.constant 0 : index
    %c768 = arith.constant 768 : index
    %22 = vector.load %arg5[%c0_17, %c768] : memref<64x3200xbf16, #tpu.memory_space<vmem>>, vector<8x128xbf16>
    tpu.vector_store %arg5[%c0_17, %c768], %20 {strides = array<i32>} : memref<64x3200xbf16, #tpu.memory_space<vmem>>, vector<8x128xbf16>,
    %c14 = arith.constant 14 : index
    %c0_18 = arith.constant 0 : index
    %23 = vector.load %arg1[%c14, %c0_18] : memref<144x128xf32, #tpu.memory_space<vmem>>, vector<8x128xf32>
    %24 = arith.truncf %23 : vector<8x128xf32> to vector<8x128xbf16>
    %c32_19 = arith.constant 32 : index
    %c256_20 = arith.constant 256 : index
    %25 = vector.load %arg5[%c32_19, %c256_20] : memref<64x3200xbf16, #tpu.memory_space<vmem>>, vector<8x128xbf16>
    tpu.vector_store %arg5[%c32_19, %c256_20], %24 {strides = array<i32>} : memref<64x3200xbf16, #tpu.memory_space<vmem>>, vector<8x128xbf16>,
    %c0_21 = arith.constant 0 : index
    %c896 = arith.constant 896 : index
    %26 = vector.load %arg5[%c0_21, %c896] : memref<64x3200xbf16, #tpu.memory_space<vmem>>, vector<8x128xbf16>
    tpu.vector_store %arg5[%c0_21, %c896], %24 {strides = array<i32>} : memref<64x3200xbf16, #tpu.memory_space<vmem>>, vector<8x128xbf16>,
    %c15 = arith.constant 15 : index
    %c0_22 = arith.constant 0 : index
    %27 = vector.load %arg1[%c15, %c0_22] : memref<144x128xf32, #tpu.memory_space<vmem>>, vector<8x128xf32>
    %28 = arith.truncf %27 : vector<8x128xf32> to vector<8x128xbf16>
    %c32_23 = arith.constant 32 : index
    %c384_24 = arith.constant 384 : index
    %29 = vector.load %arg5[%c32_23, %c384_24] : memref<64x3200xbf16, #tpu.memory_space<vmem>>, vector<8x128xbf16>
    tpu.vector_store %arg5[%c32_23, %c384_24], %28 {strides = array<i32>} : memref<64x3200xbf16, #tpu.memory_space<vmem>>, vector<8x128xbf16>,
    %c0_25 = arith.constant 0 : index
    %c1024 = arith.constant 1024 : index
    %30 = vector.load %arg5[%c0_25, %c1024] : memref<64x3200xbf16, #tpu.memory_space<vmem>>, vector<8x128xbf16>
    tpu.vector_store %arg5[%c0_25, %c1024], %28 {strides = array<i32>} : memref<64x3200xbf16, #tpu.memory_space<vmem>>, vector<8x128xbf16>,
    %c16 = arith.constant 16 : index
    %c0_26 = arith.constant 0 : index
    %31 = vector.load %arg1[%c16, %c0_26] : memref<144x128xf32, #tpu.memory_space<vmem>>, vector<8x128xf32>
    %32 = arith.truncf %31 : vector<8x128xf32> to vector<8x128xbf16>
    %c32_27 = arith.constant 32 : index
    %c512_28 = arith.constant 512 : index
    %33 = vector.load %arg5[%c32_27, %c512_28] : memref<64x3200xbf16, #tpu.memory_space<vmem>>, vector<8x128xbf16>
    tpu.vector_store %arg5[%c32_27, %c512_28], %32 {strides = array<i32>} : memref<64x3200xbf16, #tpu.memory_space<vmem>>, vector<8x128xbf16>,
    %c0_29 = arith.constant 0 : index
    %c1152 = arith.constant 1152 : index
    %34 = vector.load %arg5[%c0_29, %c1152] : memref<64x3200xbf16, #tpu.memory_space<vmem>>, vector<8x128xbf16>
    tpu.vector_store %arg5[%c0_29, %c1152], %32 {strides = array<i32>} : memref<64x3200xbf16, #tpu.memory_space<vmem>>, vector<8x128xbf16>,
    %c24 = arith.constant 24 : index
    %c0_30 = arith.constant 0 : index
    %35 = vector.load %arg1[%c24, %c0_30] : memref<144x128xf32, #tpu.memory_space<vmem>>, vector<8x128xf32>
    %36 = arith.truncf %35 : vector<8x128xf32> to vector<8x128xbf16>
    %c8 = arith.constant 8 : index
    %c0_31 = arith.constant 0 : index
    %37 = vector.load %arg5[%c8, %c0_31] : memref<64x3200xbf16, #tpu.memory_space<vmem>>, vector<8x128xbf16>
    tpu.vector_store %arg5[%c8, %c0_31], %36 {strides = array<i32>} : memref<64x3200xbf16, #tpu.memory_space<vmem>>, vector<8x128xbf16>,
    %c32_32 = arith.constant 32 : index
    %c640_33 = arith.constant 640 : index
    %38 = vector.load %arg5[%c32_32, %c640_33] : memref<64x3200xbf16, #tpu.memory_space<vmem>>, vector<8x128xbf16>
    tpu.vector_store %arg5[%c32_32, %c640_33], %36 {strides = array<i32>} : memref<64x3200xbf16, #tpu.memory_space<vmem>>, vector<8x128xbf16>,
    %c0_34 = arith.constant 0 : index
    %c1280 = arith.constant 1280 : index
    %39 = vector.load %arg5[%c0_34, %c1280] : memref<64x3200xbf16, #tpu.memory_space<vmem>>, vector<8x128xbf16>
    tpu.vector_store %arg5[%c0_34, %c1280], %36 {strides = array<i32>} : memref<64x3200xbf16, #tpu.memory_space<vmem>>, vector<8x128xbf16>,
    %c25 = arith.constant 25 : index
    %c0_35 = arith.constant 0 : index
    %40 = vector.load %arg1[%c25, %c0_35] : memref<144x128xf32, #tpu.memory_space<vmem>>, vector<8x128xf32>
    %41 = arith.truncf %40 : vector<8x128xf32> to vector<8x128xbf16>
    %c8_36 = arith.constant 8 : index
    %c128_37 = arith.constant 128 : index
    %42 = vector.load %arg5[%c8_36, %c128_37] : memref<64x3200xbf16, #tpu.memory_space<vmem>>, vector<8x128xbf16>
    tpu.vector_store %arg5[%c8_36, %c128_37], %41 {strides = array<i32>} : memref<64x3200xbf16, #tpu.memory_space<vmem>>, vector<8x128xbf16>,
    %c32_38 = arith.constant 32 : index
    %c768_39 = arith.constant 768 : index
    %43 = vector.load %arg5[%c32_38, %c768_39] : memref<64x3200xbf16, #tpu.memory_space<vmem>>, vector<8x128xbf16>
    tpu.vector_store %arg5[%c32_38, %c768_39], %41 {strides = array<i32>} : memref<64x3200xbf16, #tpu.memory_space<vmem>>, vector<8x128xbf16>,
    %c0_40 = arith.constant 0 : index
    %c1408 = arith.constant 1408 : index
    %44 = vector.load %arg5[%c0_40, %c1408] : memref<64x3200xbf16, #tpu.memory_space<vmem>>, vector<8x128xbf16>
    tpu.vector_store %arg5[%c0_40, %c1408], %41 {strides = array<i32>} : memref<64x3200xbf16, #tpu.memory_space<vmem>>, vector<8x128xbf16>,
    %c26 = arith.constant 26 : index
    %c0_41 = arith.constant 0 : index
    %45 = vector.load %arg1[%c26, %c0_41] : memref<144x128xf32, #tpu.memory_space<vmem>>, vector<8x128xf32>
    %46 = arith.truncf %45 : vector<8x128xf32> to vector<8x128xbf16>
    %c8_42 = arith.constant 8 : index
    %c256_43 = arith.constant 256 : index
    %47 = vector.load %arg5[%c8_42, %c256_43] : memref<64x3200xbf16, #tpu.memory_space<vmem>>, vector<8x128xbf16>
    tpu.vector_store %arg5[%c8_42, %c256_43], %46 {strides = array<i32>} : memref<64x3200xbf16, #tpu.memory_space<vmem>>, vector<8x128xbf16>,
    %c32_44 = arith.constant 32 : index
    %c896_45 = arith.constant 896 : index
    %48 = vector.load %arg5[%c32_44, %c896_45] : memref<64x3200xbf16, #tpu.memory_space<vmem>>, vector<8x128xbf16>
    tpu.vector_store %arg5[%c32_44, %c896_45], %46 {strides = array<i32>} : memref<64x3200xbf16, #tpu.memory_space<vmem>>, vector<8x128xbf16>,
    %c0_46 = arith.constant 0 : index
    %c1536 = arith.constant 1536 : index
    %49 = vector.load %arg5[%c0_46, %c1536] : memref<64x3200xbf16, #tpu.memory_space<vmem>>, vector<8x128xbf16>
    tpu.vector_store %arg5[%c0_46, %c1536], %46 {strides = array<i32>} : memref<64x3200xbf16, #tpu.memory_space<vmem>>, vector<8x128xbf16>,
    %c27 = arith.constant 27 : index
    %c0_47 = arith.constant 0 : index
    %50 = vector.load %arg1[%c27, %c0_47] : memref<144x128xf32, #tpu.memory_space<vmem>>, vector<8x128xf32>
    %51 = arith.truncf %50 : vector<8x128xf32> to vector<8x128xbf16>
    %c8_48 = arith.constant 8 : index
    %c384_49 = arith.constant 384 : index
    %52 = vector.load %arg5[%c8_48, %c384_49] : memref<64x3200xbf16, #tpu.memory_space<vmem>>, vector<8x128xbf16>
    tpu.vector_store %arg5[%c8_48, %c384_49], %51 {strides = array<i32>} : memref<64x3200xbf16, #tpu.memory_space<vmem>>, vector<8x128xbf16>,
    %c32_50 = arith.constant 32 : index
    %c1024_51 = arith.constant 1024 : index
    %53 = vector.load %arg5[%c32_50, %c1024_51] : memref<64x3200xbf16, #tpu.memory_space<vmem>>, vector<8x128xbf16>
    tpu.vector_store %arg5[%c32_50, %c1024_51], %51 {strides = array<i32>} : memref<64x3200xbf16, #tpu.memory_space<vmem>>, vector<8x128xbf16>,
    %c0_52 = arith.constant 0 : index
    %c1664 = arith.constant 1664 : index
    %54 = vector.load %arg5[%c0_52, %c1664] : memref<64x3200xbf16, #tpu.memory_space<vmem>>, vector<8x128xbf16>
    tpu.vector_store %arg5[%c0_52, %c1664], %51 {strides = array<i32>} : memref<64x3200xbf16, #tpu.memory_space<vmem>>, vector<8x128xbf16>,
    %c28 = arith.constant 28 : index
    %c0_53 = arith.constant 0 : index
    %55 = vector.load %arg1[%c28, %c0_53] : memref<144x128xf32, #tpu.memory_space<vmem>>, vector<8x128xf32>
    %56 = arith.truncf %55 : vector<8x128xf32> to vector<8x128xbf16>
    %c8_54 = arith.constant 8 : index
    %c512_55 = arith.constant 512 : index
    %57 = vector.load %arg5[%c8_54, %c512_55] : memref<64x3200xbf16, #tpu.memory_space<vmem>>, vector<8x128xbf16>
    tpu.vector_store %arg5[%c8_54, %c512_55], %56 {strides = array<i32>} : memref<64x3200xbf16, #tpu.memory_space<vmem>>, vector<8x128xbf16>,
    %c32_56 = arith.constant 32 : index
    %c1152_57 = arith.constant 1152 : index
    %58 = vector.load %arg5[%c32_56, %c1152_57] : memref<64x3200xbf16, #tpu.memory_space<vmem>>, vector<8x128xbf16>
    tpu.vector_store %arg5[%c32_56, %c1152_57], %56 {strides = array<i32>} : memref<64x3200xbf16, #tpu.memory_space<vmem>>, vector<8x128xbf16>,
    %c0_58 = arith.constant 0 : index
    %c1792 = arith.constant 1792 : index
    %59 = vector.load %arg5[%c0_58, %c1792] : memref<64x3200xbf16, #tpu.memory_space<vmem>>, vector<8x128xbf16>
    tpu.vector_store %arg5[%c0_58, %c1792], %56 {strides = array<i32>} : memref<64x3200xbf16, #tpu.memory_space<vmem>>, vector<8x128xbf16>,
    %c36 = arith.constant 36 : index
    %c0_59 = arith.constant 0 : index
    %60 = vector.load %arg1[%c36, %c0_59] : memref<144x128xf32, #tpu.memory_space<vmem>>, vector<8x128xf32>
    %61 = arith.truncf %60 : vector<8x128xf32> to vector<8x128xbf16>
    %c40 = arith.constant 40 : index
    %c0_60 = arith.constant 0 : index
    %62 = vector.load %arg5[%c40, %c0_60] : memref<64x3200xbf16, #tpu.memory_space<vmem>>, vector<8x128xbf16>
    tpu.vector_store %arg5[%c40, %c0_60], %61 {strides = array<i32>} : memref<64x3200xbf16, #tpu.memory_space<vmem>>, vector<8x128xbf16>,
    %c8_61 = arith.constant 8 : index
    %c640_62 = arith.constant 640 : index
    %63 = vector.load %arg5[%c8_61, %c640_62] : memref<64x3200xbf16, #tpu.memory_space<vmem>>, vector<8x128xbf16>
    tpu.vector_store %arg5[%c8_61, %c640_62], %61 {strides = array<i32>} : memref<64x3200xbf16, #tpu.memory_space<vmem>>, vector<8x128xbf16>,
    %c32_63 = arith.constant 32 : index
    %c1280_64 = arith.constant 1280 : index
    %64 = vector.load %arg5[%c32_63, %c1280_64] : memref<64x3200xbf16, #tpu.memory_space<vmem>>, vector<8x128xbf16>
    tpu.vector_store %arg5[%c32_63, %c1280_64], %61 {strides = array<i32>} : memref<64x3200xbf16, #tpu.memory_space<vmem>>, vector<8x128xbf16>,
    %c0_65 = arith.constant 0 : index
    %c1920 = arith.constant 1920 : index
    %65 = vector.load %arg5[%c0_65, %c1920] : memref<64x3200xbf16, #tpu.memory_space<vmem>>, vector<8x128xbf16>
    tpu.vector_store %arg5[%c0_65, %c1920], %61 {strides = array<i32>} : memref<64x3200xbf16, #tpu.memory_space<vmem>>, vector<8x128xbf16>,
    %c37 = arith.constant 37 : index
    %c0_66 = arith.constant 0 : index
    %66 = vector.load %arg1[%c37, %c0_66] : memref<144x128xf32, #tpu.memory_space<vmem>>, vector<8x128xf32>
    %67 = arith.truncf %66 : vector<8x128xf32> to vector<8x128xbf16>
    %c40_67 = arith.constant 40 : index
    %c128_68 = arith.constant 128 : index
    %68 = vector.load %arg5[%c40_67, %c128_68] : memref<64x3200xbf16, #tpu.memory_space<vmem>>, vector<8x128xbf16>
    tpu.vector_store %arg5[%c40_67, %c128_68], %67 {strides = array<i32>} : memref<64x3200xbf16, #tpu.memory_space<vmem>>, vector<8x128xbf16>,
    %c8_69 = arith.constant 8 : index
    %c768_70 = arith.constant 768 : index
    %69 = vector.load %arg5[%c8_69, %c768_70] : memref<64x3200xbf16, #tpu.memory_space<vmem>>, vector<8x128xbf16>
    tpu.vector_store %arg5[%c8_69, %c768_70], %67 {strides = array<i32>} : memref<64x3200xbf16, #tpu.memory_space<vmem>>, vector<8x128xbf16>,
    %c32_71 = arith.constant 32 : index
    %c1408_72 = arith.constant 1408 : index
    %70 = vector.load %arg5[%c32_71, %c1408_72] : memref<64x3200xbf16, #tpu.memory_space<vmem>>, vector<8x128xbf16>
    tpu.vector_store %arg5[%c32_71, %c1408_72], %67 {strides = array<i32>} : memref<64x3200xbf16, #tpu.memory_space<vmem>>, vector<8x128xbf16>,
    %c0_73 = arith.constant 0 : index
    %c2048 = arith.constant 2048 : index
    %71 = vector.load %arg5[%c0_73, %c2048] : memref<64x3200xbf16, #tpu.memory_space<vmem>>, vector<8x128xbf16>
    tpu.vector_store %arg5[%c0_73, %c2048], %67 {strides = array<i32>} : memref<64x3200xbf16, #tpu.memory_space<vmem>>, vector<8x128xbf16>,
    %c38 = arith.constant 38 : index
    %c0_74 = arith.constant 0 : index
    %72 = vector.load %arg1[%c38, %c0_74] : memref<144x128xf32, #tpu.memory_space<vmem>>, vector<8x128xf32>
    %73 = arith.truncf %72 : vector<8x128xf32> to vector<8x128xbf16>
    %c40_75 = arith.constant 40 : index
    %c256_76 = arith.constant 256 : index
    %74 = vector.load %arg5[%c40_75, %c256_76] : memref<64x3200xbf16, #tpu.memory_space<vmem>>, vector<8x128xbf16>
    tpu.vector_store %arg5[%c40_75, %c256_76], %73 {strides = array<i32>} : memref<64x3200xbf16, #tpu.memory_space<vmem>>, vector<8x128xbf16>,
    %c8_77 = arith.constant 8 : index
    %c896_78 = arith.constant 896 : index
    %75 = vector.load %arg5[%c8_77, %c896_78] : memref<64x3200xbf16, #tpu.memory_space<vmem>>, vector<8x128xbf16>
    tpu.vector_store %arg5[%c8_77, %c896_78], %73 {strides = array<i32>} : memref<64x3200xbf16, #tpu.memory_space<vmem>>, vector<8x128xbf16>,
    %c32_79 = arith.constant 32 : index
    %c1536_80 = arith.constant 1536 : index
    %76 = vector.load %arg5[%c32_79, %c1536_80] : memref<64x3200xbf16, #tpu.memory_space<vmem>>, vector<8x128xbf16>
    tpu.vector_store %arg5[%c32_79, %c1536_80], %73 {strides = array<i32>} : memref<64x3200xbf16, #tpu.memory_space<vmem>>, vector<8x128xbf16>,
    %c0_81 = arith.constant 0 : index
    %c2176 = arith.constant 2176 : index
    %77 = vector.load %arg5[%c0_81, %c2176] : memref<64x3200xbf16, #tpu.memory_space<vmem>>, vector<8x128xbf16>
    tpu.vector_store %arg5[%c0_81, %c2176], %73 {strides = array<i32>} : memref<64x3200xbf16, #tpu.memory_space<vmem>>, vector<8x128xbf16>,
    %c39 = arith.constant 39 : index
    %c0_82 = arith.constant 0 : index
    %78 = vector.load %arg1[%c39, %c0_82] : memref<144x128xf32, #tpu.memory_space<vmem>>, vector<8x128xf32>
    %79 = arith.truncf %78 : vector<8x128xf32> to vector<8x128xbf16>
    %c40_83 = arith.constant 40 : index
    %c384_84 = arith.constant 384 : index
    %80 = vector.load %arg5[%c40_83, %c384_84] : memref<64x3200xbf16, #tpu.memory_space<vmem>>, vector<8x128xbf16>
    tpu.vector_store %arg5[%c40_83, %c384_84], %79 {strides = array<i32>} : memref<64x3200xbf16, #tpu.memory_space<vmem>>, vector<8x128xbf16>,
    %c8_85 = arith.constant 8 : index
    %c1024_86 = arith.constant 1024 : index
    %81 = vector.load %arg5[%c8_85, %c1024_86] : memref<64x3200xbf16, #tpu.memory_space<vmem>>, vector<8x128xbf16>
    tpu.vector_store %arg5[%c8_85, %c1024_86], %79 {strides = array<i32>} : memref<64x3200xbf16, #tpu.memory_space<vmem>>, vector<8x128xbf16>,
    %c32_87 = arith.constant 32 : index
    %c1664_88 = arith.constant 1664 : index
    %82 = vector.load %arg5[%c32_87, %c1664_88] : memref<64x3200xbf16, #tpu.memory_space<vmem>>, vector<8x128xbf16>
    tpu.vector_store %arg5[%c32_87, %c1664_88], %79 {strides = array<i32>} : memref<64x3200xbf16, #tpu.memory_space<vmem>>, vector<8x128xbf16>,
    %c0_89 = arith.constant 0 : index
    %c2304 = arith.constant 2304 : index
    %83 = vector.load %arg5[%c0_89, %c2304] : memref<64x3200xbf16, #tpu.memory_space<vmem>>, vector<8x128xbf16>
    tpu.vector_store %arg5[%c0_89, %c2304], %79 {strides = array<i32>} : memref<64x3200xbf16, #tpu.memory_space<vmem>>, vector<8x128xbf16>,
    %c40_90 = arith.constant 40 : index
    %c0_91 = arith.constant 0 : index
    %84 = vector.load %arg1[%c40_90, %c0_91] : memref<144x128xf32, #tpu.memory_space<vmem>>, vector<8x128xf32>
    %85 = arith.truncf %84 : vector<8x128xf32> to vector<8x128xbf16>
    %c40_92 = arith.constant 40 : index
    %c512_93 = arith.constant 512 : index
    %86 = vector.load %arg5[%c40_92, %c512_93] : memref<64x3200xbf16, #tpu.memory_space<vmem>>, vector<8x128xbf16>
    tpu.vector_store %arg5[%c40_92, %c512_93], %85 {strides = array<i32>} : memref<64x3200xbf16, #tpu.memory_space<vmem>>, vector<8x128xbf16>,
    %c8_94 = arith.constant 8 : index
    %c1152_95 = arith.constant 1152 : index
    %87 = vector.load %arg5[%c8_94, %c1152_95] : memref<64x3200xbf16, #tpu.memory_space<vmem>>, vector<8x128xbf16>
    tpu.vector_store %arg5[%c8_94, %c1152_95], %85 {strides = array<i32>} : memref<64x3200xbf16, #tpu.memory_space<vmem>>, vector<8x128xbf16>,
    %c32_96 = arith.constant 32 : index
    %c1792_97 = arith.constant 1792 : index
    %88 = vector.load %arg5[%c32_96, %c1792_97] : memref<64x3200xbf16, #tpu.memory_space<vmem>>, vector<8x128xbf16>
    tpu.vector_store %arg5[%c32_96, %c1792_97], %85 {strides = array<i32>} : memref<64x3200xbf16, #tpu.memory_space<vmem>>, vector<8x128xbf16>,
    %c0_98 = arith.constant 0 : index
    %c2432 = arith.constant 2432 : index
    %89 = vector.load %arg5[%c0_98, %c2432] : memref<64x3200xbf16, #tpu.memory_space<vmem>>, vector<8x128xbf16>
    tpu.vector_store %arg5[%c0_98, %c2432], %85 {strides = array<i32>} : memref<64x3200xbf16, #tpu.memory_space<vmem>>, vector<8x128xbf16>,
    %c48 = arith.constant 48 : index
    %c0_99 = arith.constant 0 : index
    %90 = vector.load %arg1[%c48, %c0_99] : memref<144x128xf32, #tpu.memory_space<vmem>>, vector<8x128xf32>
    %91 = arith.truncf %90 : vector<8x128xf32> to vector<8x128xbf16>
    %c16_100 = arith.constant 16 : index
    %c0_101 = arith.constant 0 : index
    %92 = vector.load %arg5[%c16_100, %c0_101] : memref<64x3200xbf16, #tpu.memory_space<vmem>>, vector<8x128xbf16>
    tpu.vector_store %arg5[%c16_100, %c0_101], %91 {strides = array<i32>} : memref<64x3200xbf16, #tpu.memory_space<vmem>>, vector<8x128xbf16>,
    %c40_102 = arith.constant 40 : index
    %c640_103 = arith.constant 640 : index
    %93 = vector.load %arg5[%c40_102, %c640_103] : memref<64x3200xbf16, #tpu.memory_space<vmem>>, vector<8x128xbf16>
    tpu.vector_store %arg5[%c40_102, %c640_103], %91 {strides = array<i32>} : memref<64x3200xbf16, #tpu.memory_space<vmem>>, vector<8x128xbf16>,
    %c8_104 = arith.constant 8 : index
    %c1280_105 = arith.constant 1280 : index
    %94 = vector.load %arg5[%c8_104, %c1280_105] : memref<64x3200xbf16, #tpu.memory_space<vmem>>, vector<8x128xbf16>
    tpu.vector_store %arg5[%c8_104, %c1280_105], %91 {strides = array<i32>} : memref<64x3200xbf16, #tpu.memory_space<vmem>>, vector<8x128xbf16>,
    %c32_106 = arith.constant 32 : index
    %c1920_107 = arith.constant 1920 : index
    %95 = vector.load %arg5[%c32_106, %c1920_107] : memref<64x3200xbf16, #tpu.memory_space<vmem>>, vector<8x128xbf16>
    tpu.vector_store %arg5[%c32_106, %c1920_107], %91 {strides = array<i32>} : memref<64x3200xbf16, #tpu.memory_space<vmem>>, vector<8x128xbf16>,
    %c0_108 = arith.constant 0 : index
    %c2560 = arith.constant 2560 : index
    %96 = vector.load %arg5[%c0_108, %c2560] : memref<64x3200xbf16, #tpu.memory_space<vmem>>, vector<8x128xbf16>
    tpu.vector_store %arg5[%c0_108, %c2560], %91 {strides = array<i32>} : memref<64x3200xbf16, #tpu.memory_space<vmem>>, vector<8x128xbf16>,
    %c49 = arith.constant 49 : index
    %c0_109 = arith.constant 0 : index
    %97 = vector.load %arg1[%c49, %c0_109] : memref<144x128xf32, #tpu.memory_space<vmem>>, vector<8x128xf32>
    %98 = arith.truncf %97 : vector<8x128xf32> to vector<8x128xbf16>
    %c16_110 = arith.constant 16 : index
    %c128_111 = arith.constant 128 : index
    %99 = vector.load %arg5[%c16_110, %c128_111] : memref<64x3200xbf16, #tpu.memory_space<vmem>>, vector<8x128xbf16>
    tpu.vector_store %arg5[%c16_110, %c128_111], %98 {strides = array<i32>} : memref<64x3200xbf16, #tpu.memory_space<vmem>>, vector<8x128xbf16>,
    %c40_112 = arith.constant 40 : index
    %c768_113 = arith.constant 768 : index
    %100 = vector.load %arg5[%c40_112, %c768_113] : memref<64x3200xbf16, #tpu.memory_space<vmem>>, vector<8x128xbf16>
    tpu.vector_store %arg5[%c40_112, %c768_113], %98 {strides = array<i32>} : memref<64x3200xbf16, #tpu.memory_space<vmem>>, vector<8x128xbf16>,
    %c8_114 = arith.constant 8 : index
    %c1408_115 = arith.constant 1408 : index
    %101 = vector.load %arg5[%c8_114, %c1408_115] : memref<64x3200xbf16, #tpu.memory_space<vmem>>, vector<8x128xbf16>
    tpu.vector_store %arg5[%c8_114, %c1408_115], %98 {strides = array<i32>} : memref<64x3200xbf16, #tpu.memory_space<vmem>>, vector<8x128xbf16>,
    %c32_116 = arith.constant 32 : index
    %c2048_117 = arith.constant 2048 : index
    %102 = vector.load %arg5[%c32_116, %c2048_117] : memref<64x3200xbf16, #tpu.memory_space<vmem>>, vector<8x128xbf16>
    tpu.vector_store %arg5[%c32_116, %c2048_117], %98 {strides = array<i32>} : memref<64x3200xbf16, #tpu.memory_space<vmem>>, vector<8x128xbf16>,
    %c0_118 = arith.constant 0 : index
    %c2688 = arith.constant 2688 : index
    %103 = vector.load %arg5[%c0_118, %c2688] : memref<64x3200xbf16, #tpu.memory_space<vmem>>, vector<8x128xbf16>
    tpu.vector_store %arg5[%c0_118, %c2688], %98 {strides = array<i32>} : memref<64x3200xbf16, #tpu.memory_space<vmem>>, vector<8x128xbf16>,
    %c50 = arith.constant 50 : index
    %c0_119 = arith.constant 0 : index
    %104 = vector.load %arg1[%c50, %c0_119] : memref<144x128xf32, #tpu.memory_space<vmem>>, vector<8x128xf32>
    %105 = arith.truncf %104 : vector<8x128xf32> to vector<8x128xbf16>
    %c16_120 = arith.constant 16 : index
    %c256_121 = arith.constant 256 : index
    %106 = vector.load %arg5[%c16_120, %c256_121] : memref<64x3200xbf16, #tpu.memory_space<vmem>>, vector<8x128xbf16>
    tpu.vector_store %arg5[%c16_120, %c256_121], %105 {strides = array<i32>} : memref<64x3200xbf16, #tpu.memory_space<vmem>>, vector<8x128xbf16>,
    %c40_122 = arith.constant 40 : index
    %c896_123 = arith.constant 896 : index
    %107 = vector.load %arg5[%c40_122, %c896_123] : memref<64x3200xbf16, #tpu.memory_space<vmem>>, vector<8x128xbf16>
    tpu.vector_store %arg5[%c40_122, %c896_123], %105 {strides = array<i32>} : memref<64x3200xbf16, #tpu.memory_space<vmem>>, vector<8x128xbf16>,
    %c8_124 = arith.constant 8 : index
    %c1536_125 = arith.constant 1536 : index
    %108 = vector.load %arg5[%c8_124, %c1536_125] : memref<64x3200xbf16, #tpu.memory_space<vmem>>, vector<8x128xbf16>
    tpu.vector_store %arg5[%c8_124, %c1536_125], %105 {strides = array<i32>} : memref<64x3200xbf16, #tpu.memory_space<vmem>>, vector<8x128xbf16>,
    %c32_126 = arith.constant 32 : index
    %c2176_127 = arith.constant 2176 : index
    %109 = vector.load %arg5[%c32_126, %c2176_127] : memref<64x3200xbf16, #tpu.memory_space<vmem>>, vector<8x128xbf16>
    tpu.vector_store %arg5[%c32_126, %c2176_127], %105 {strides = array<i32>} : memref<64x3200xbf16, #tpu.memory_space<vmem>>, vector<8x128xbf16>,
    %c0_128 = arith.constant 0 : index
    %c2816 = arith.constant 2816 : index
    %110 = vector.load %arg5[%c0_128, %c2816] : memref<64x3200xbf16, #tpu.memory_space<vmem>>, vector<8x128xbf16>
    tpu.vector_store %arg5[%c0_128, %c2816], %105 {strides = array<i32>} : memref<64x3200xbf16, #tpu.memory_space<vmem>>, vector<8x128xbf16>,
    %c51 = arith.constant 51 : index
    %c0_129 = arith.constant 0 : index
    %111 = vector.load %arg1[%c51, %c0_129] : memref<144x128xf32, #tpu.memory_space<vmem>>, vector<8x128xf32>
    %112 = arith.truncf %111 : vector<8x128xf32> to vector<8x128xbf16>
    %c16_130 = arith.constant 16 : index
    %c384_131 = arith.constant 384 : index
    %113 = vector.load %arg5[%c16_130, %c384_131] : memref<64x3200xbf16, #tpu.memory_space<vmem>>, vector<8x128xbf16>
    tpu.vector_store %arg5[%c16_130, %c384_131], %112 {strides = array<i32>} : memref<64x3200xbf16, #tpu.memory_space<vmem>>, vector<8x128xbf16>,
    %c40_132 = arith.constant 40 : index
    %c1024_133 = arith.constant 1024 : index
    %114 = vector.load %arg5[%c40_132, %c1024_133] : memref<64x3200xbf16, #tpu.memory_space<vmem>>, vector<8x128xbf16>
    tpu.vector_store %arg5[%c40_132, %c1024_133], %112 {strides = array<i32>} : memref<64x3200xbf16, #tpu.memory_space<vmem>>, vector<8x128xbf16>,
    %c8_134 = arith.constant 8 : index
    %c1664_135 = arith.constant 1664 : index
    %115 = vector.load %arg5[%c8_134, %c1664_135] : memref<64x3200xbf16, #tpu.memory_space<vmem>>, vector<8x128xbf16>
    tpu.vector_store %arg5[%c8_134, %c1664_135], %112 {strides = array<i32>} : memref<64x3200xbf16, #tpu.memory_space<vmem>>, vector<8x128xbf16>,
    %c32_136 = arith.constant 32 : index
    %c2304_137 = arith.constant 2304 : index
    %116 = vector.load %arg5[%c32_136, %c2304_137] : memref<64x3200xbf16, #tpu.memory_space<vmem>>, vector<8x128xbf16>
    tpu.vector_store %arg5[%c32_136, %c2304_137], %112 {strides = array<i32>} : memref<64x3200xbf16, #tpu.memory_space<vmem>>, vector<8x128xbf16>,
    %c0_138 = arith.constant 0 : index
    %c2944 = arith.constant 2944 : index
    %117 = vector.load %arg5[%c0_138, %c2944] : memref<64x3200xbf16, #tpu.memory_space<vmem>>, vector<8x128xbf16>
    tpu.vector_store %arg5[%c0_138, %c2944], %112 {strides = array<i32>} : memref<64x3200xbf16, #tpu.memory_space<vmem>>, vector<8x128xbf16>,
    %c52 = arith.constant 52 : index
    %c0_139 = arith.constant 0 : index
    %118 = vector.load %arg1[%c52, %c0_139] : memref<144x128xf32, #tpu.memory_space<vmem>>, vector<8x128xf32>
    %119 = arith.truncf %118 : vector<8x128xf32> to vector<8x128xbf16>
    %c16_140 = arith.constant 16 : index
    %c512_141 = arith.constant 512 : index
    %120 = vector.load %arg5[%c16_140, %c512_141] : memref<64x3200xbf16, #tpu.memory_space<vmem>>, vector<8x128xbf16>
    tpu.vector_store %arg5[%c16_140, %c512_141], %119 {strides = array<i32>} : memref<64x3200xbf16, #tpu.memory_space<vmem>>, vector<8x128xbf16>,
    %c40_142 = arith.constant 40 : index
    %c1152_143 = arith.constant 1152 : index
    %121 = vector.load %arg5[%c40_142, %c1152_143] : memref<64x3200xbf16, #tpu.memory_space<vmem>>, vector<8x128xbf16>
    tpu.vector_store %arg5[%c40_142, %c1152_143], %119 {strides = array<i32>} : memref<64x3200xbf16, #tpu.memory_space<vmem>>, vector<8x128xbf16>,
    %c8_144 = arith.constant 8 : index
    %c1792_145 = arith.constant 1792 : index
    %122 = vector.load %arg5[%c8_144, %c1792_145] : memref<64x3200xbf16, #tpu.memory_space<vmem>>, vector<8x128xbf16>
    tpu.vector_store %arg5[%c8_144, %c1792_145], %119 {strides = array<i32>} : memref<64x3200xbf16, #tpu.memory_space<vmem>>, vector<8x128xbf16>,
    %c32_146 = arith.constant 32 : index
    %c2432_147 = arith.constant 2432 : index
    %123 = vector.load %arg5[%c32_146, %c2432_147] : memref<64x3200xbf16, #tpu.memory_space<vmem>>, vector<8x128xbf16>
    tpu.vector_store %arg5[%c32_146, %c2432_147], %119 {strides = array<i32>} : memref<64x3200xbf16, #tpu.memory_space<vmem>>, vector<8x128xbf16>,
    %c0_148 = arith.constant 0 : index
    %c3072 = arith.constant 3072 : index
    %124 = vector.load %arg5[%c0_148, %c3072] : memref<64x3200xbf16, #tpu.memory_space<vmem>>, vector<8x128xbf16>
    tpu.vector_store %arg5[%c0_148, %c3072], %119 {strides = array<i32>} : memref<64x3200xbf16, #tpu.memory_space<vmem>>, vector<8x128xbf16>,
    %c60 = arith.constant 60 : index
    %c0_149 = arith.constant 0 : index
    %125 = vector.load %arg1[%c60, %c0_149] : memref<144x128xf32, #tpu.memory_space<vmem>>, vector<8x128xf32>
    %126 = arith.truncf %125 : vector<8x128xf32> to vector<8x128xbf16>
    %c48_150 = arith.constant 48 : index
    %c0_151 = arith.constant 0 : index
    %127 = vector.load %arg5[%c48_150, %c0_151] : memref<64x3200xbf16, #tpu.memory_space<vmem>>, vector<8x128xbf16>
    tpu.vector_store %arg5[%c48_150, %c0_151], %126 {strides = array<i32>} : memref<64x3200xbf16, #tpu.memory_space<vmem>>, vector<8x128xbf16>,
    %c16_152 = arith.constant 16 : index
    %c640_153 = arith.constant 640 : index
    %128 = vector.load %arg5[%c16_152, %c640_153] : memref<64x3200xbf16, #tpu.memory_space<vmem>>, vector<8x128xbf16>
    tpu.vector_store %arg5[%c16_152, %c640_153], %126 {strides = array<i32>} : memref<64x3200xbf16, #tpu.memory_space<vmem>>, vector<8x128xbf16>,
    %c40_154 = arith.constant 40 : index
    %c1280_155 = arith.constant 1280 : index
    %129 = vector.load %arg5[%c40_154, %c1280_155] : memref<64x3200xbf16, #tpu.memory_space<vmem>>, vector<8x128xbf16>
    tpu.vector_store %arg5[%c40_154, %c1280_155], %126 {strides = array<i32>} : memref<64x3200xbf16, #tpu.memory_space<vmem>>, vector<8x128xbf16>,
    %c8_156 = arith.constant 8 : index
    %c1920_157 = arith.constant 1920 : index
    %130 = vector.load %arg5[%c8_156, %c1920_157] : memref<64x3200xbf16, #tpu.memory_space<vmem>>, vector<8x128xbf16>
    tpu.vector_store %arg5[%c8_156, %c1920_157], %126 {strides = array<i32>} : memref<64x3200xbf16, #tpu.memory_space<vmem>>, vector<8x128xbf16>,
    %c32_158 = arith.constant 32 : index
    %c2560_159 = arith.constant 2560 : index
    %131 = vector.load %arg5[%c32_158, %c2560_159] : memref<64x3200xbf16, #tpu.memory_space<vmem>>, vector<8x128xbf16>
    tpu.vector_store %arg5[%c32_158, %c2560_159], %126 {strides = array<i32>} : memref<64x3200xbf16, #tpu.memory_space<vmem>>, vector<8x128xbf16>,
    %c61 = arith.constant 61 : index
    %c0_160 = arith.constant 0 : index
    %132 = vector.load %arg1[%c61, %c0_160] : memref<144x128xf32, #tpu.memory_space<vmem>>, vector<8x128xf32>
    %133 = arith.truncf %132 : vector<8x128xf32> to vector<8x128xbf16>
    %c48_161 = arith.constant 48 : index
    %c128_162 = arith.constant 128 : index
    %134 = vector.load %arg5[%c48_161, %c128_162] : memref<64x3200xbf16, #tpu.memory_space<vmem>>, vector<8x128xbf16>
    tpu.vector_store %arg5[%c48_161, %c128_162], %133 {strides = array<i32>} : memref<64x3200xbf16, #tpu.memory_space<vmem>>, vector<8x128xbf16>,
    %c16_163 = arith.constant 16 : index
    %c768_164 = arith.constant 768 : index
    %135 = vector.load %arg5[%c16_163, %c768_164] : memref<64x3200xbf16, #tpu.memory_space<vmem>>, vector<8x128xbf16>
    tpu.vector_store %arg5[%c16_163, %c768_164], %133 {strides = array<i32>} : memref<64x3200xbf16, #tpu.memory_space<vmem>>, vector<8x128xbf16>,
    %c40_165 = arith.constant 40 : index
    %c1408_166 = arith.constant 1408 : index
    %136 = vector.load %arg5[%c40_165, %c1408_166] : memref<64x3200xbf16, #tpu.memory_space<vmem>>, vector<8x128xbf16>
    tpu.vector_store %arg5[%c40_165, %c1408_166], %133 {strides = array<i32>} : memref<64x3200xbf16, #tpu.memory_space<vmem>>, vector<8x128xbf16>,
    %c8_167 = arith.constant 8 : index
    %c2048_168 = arith.constant 2048 : index
    %137 = vector.load %arg5[%c8_167, %c2048_168] : memref<64x3200xbf16, #tpu.memory_space<vmem>>, vector<8x128xbf16>
    tpu.vector_store %arg5[%c8_167, %c2048_168], %133 {strides = array<i32>} : memref<64x3200xbf16, #tpu.memory_space<vmem>>, vector<8x128xbf16>,
    %c32_169 = arith.constant 32 : index
    %c2688_170 = arith.constant 2688 : index
    %138 = vector.load %arg5[%c32_169, %c2688_170] : memref<64x3200xbf16, #tpu.memory_space<vmem>>, vector<8x128xbf16>
    tpu.vector_store %arg5[%c32_169, %c2688_170], %133 {strides = array<i32>} : memref<64x3200xbf16, #tpu.memory_space<vmem>>, vector<8x128xbf16>,
    %c62 = arith.constant 62 : index
    %c0_171 = arith.constant 0 : index
    %139 = vector.load %arg1[%c62, %c0_171] : memref<144x128xf32, #tpu.memory_space<vmem>>, vector<8x128xf32>
    %140 = arith.truncf %139 : vector<8x128xf32> to vector<8x128xbf16>
    %c48_172 = arith.constant 48 : index
    %c256_173 = arith.constant 256 : index
    %141 = vector.load %arg5[%c48_172, %c256_173] : memref<64x3200xbf16, #tpu.memory_space<vmem>>, vector<8x128xbf16>
    tpu.vector_store %arg5[%c48_172, %c256_173], %140 {strides = array<i32>} : memref<64x3200xbf16, #tpu.memory_space<vmem>>, vector<8x128xbf16>,
    %c16_174 = arith.constant 16 : index
    %c896_175 = arith.constant 896 : index
    %142 = vector.load %arg5[%c16_174, %c896_175] : memref<64x3200xbf16, #tpu.memory_space<vmem>>, vector<8x128xbf16>
    tpu.vector_store %arg5[%c16_174, %c896_175], %140 {strides = array<i32>} : memref<64x3200xbf16, #tpu.memory_space<vmem>>, vector<8x128xbf16>,
    %c40_176 = arith.constant 40 : index
    %c1536_177 = arith.constant 1536 : index
    %143 = vector.load %arg5[%c40_176, %c1536_177] : memref<64x3200xbf16, #tpu.memory_space<vmem>>, vector<8x128xbf16>
    tpu.vector_store %arg5[%c40_176, %c1536_177], %140 {strides = array<i32>} : memref<64x3200xbf16, #tpu.memory_space<vmem>>, vector<8x128xbf16>,
    %c8_178 = arith.constant 8 : index
    %c2176_179 = arith.constant 2176 : index
    %144 = vector.load %arg5[%c8_178, %c2176_179] : memref<64x3200xbf16, #tpu.memory_space<vmem>>, vector<8x128xbf16>
    tpu.vector_store %arg5[%c8_178, %c2176_179], %140 {strides = array<i32>} : memref<64x3200xbf16, #tpu.memory_space<vmem>>, vector<8x128xbf16>,
    %c32_180 = arith.constant 32 : index
    %c2816_181 = arith.constant 2816 : index
    %145 = vector.load %arg5[%c32_180, %c2816_181] : memref<64x3200xbf16, #tpu.memory_space<vmem>>, vector<8x128xbf16>
    tpu.vector_store %arg5[%c32_180, %c2816_181], %140 {strides = array<i32>} : memref<64x3200xbf16, #tpu.memory_space<vmem>>, vector<8x128xbf16>,
    %c63 = arith.constant 63 : index
    %c0_182 = arith.constant 0 : index
    %146 = vector.load %arg1[%c63, %c0_182] : memref<144x128xf32, #tpu.memory_space<vmem>>, vector<8x128xf32>
    %147 = arith.truncf %146 : vector<8x128xf32> to vector<8x128xbf16>
    %c48_183 = arith.constant 48 : index
    %c384_184 = arith.constant 384 : index
    %148 = vector.load %arg5[%c48_183, %c384_184] : memref<64x3200xbf16, #tpu.memory_space<vmem>>, vector<8x128xbf16>
    tpu.vector_store %arg5[%c48_183, %c384_184], %147 {strides = array<i32>} : memref<64x3200xbf16, #tpu.memory_space<vmem>>, vector<8x128xbf16>,
    %c16_185 = arith.constant 16 : index
    %c1024_186 = arith.constant 1024 : index
    %149 = vector.load %arg5[%c16_185, %c1024_186] : memref<64x3200xbf16, #tpu.memory_space<vmem>>, vector<8x128xbf16>
    tpu.vector_store %arg5[%c16_185, %c1024_186], %147 {strides = array<i32>} : memref<64x3200xbf16, #tpu.memory_space<vmem>>, vector<8x128xbf16>,
    %c40_187 = arith.constant 40 : index
    %c1664_188 = arith.constant 1664 : index
    %150 = vector.load %arg5[%c40_187, %c1664_188] : memref<64x3200xbf16, #tpu.memory_space<vmem>>, vector<8x128xbf16>
    tpu.vector_store %arg5[%c40_187, %c1664_188], %147 {strides = array<i32>} : memref<64x3200xbf16, #tpu.memory_space<vmem>>, vector<8x128xbf16>,
    %c8_189 = arith.constant 8 : index
    %c2304_190 = arith.constant 2304 : index
    %151 = vector.load %arg5[%c8_189, %c2304_190] : memref<64x3200xbf16, #tpu.memory_space<vmem>>, vector<8x128xbf16>
    tpu.vector_store %arg5[%c8_189, %c2304_190], %147 {strides = array<i32>} : memref<64x3200xbf16, #tpu.memory_space<vmem>>, vector<8x128xbf16>,
    %c32_191 = arith.constant 32 : index
    %c2944_192 = arith.constant 2944 : index
    %152 = vector.load %arg5[%c32_191, %c2944_192] : memref<64x3200xbf16, #tpu.memory_space<vmem>>, vector<8x128xbf16>
    tpu.vector_store %arg5[%c32_191, %c2944_192], %147 {strides = array<i32>} : memref<64x3200xbf16, #tpu.memory_space<vmem>>, vector<8x128xbf16>,
    %c64 = arith.constant 64 : index
    %c0_193 = arith.constant 0 : index
    %153 = vector.load %arg1[%c64, %c0_193] : memref<144x128xf32, #tpu.memory_space<vmem>>, vector<8x128xf32>
    %154 = arith.truncf %153 : vector<8x128xf32> to vector<8x128xbf16>
    %c48_194 = arith.constant 48 : index
    %c512_195 = arith.constant 512 : index
    %155 = vector.load %arg5[%c48_194, %c512_195] : memref<64x3200xbf16, #tpu.memory_space<vmem>>, vector<8x128xbf16>
    tpu.vector_store %arg5[%c48_194, %c512_195], %154 {strides = array<i32>} : memref<64x3200xbf16, #tpu.memory_space<vmem>>, vector<8x128xbf16>,
    %c16_196 = arith.constant 16 : index
    %c1152_197 = arith.constant 1152 : index
    %156 = vector.load %arg5[%c16_196, %c1152_197] : memref<64x3200xbf16, #tpu.memory_space<vmem>>, vector<8x128xbf16>
    tpu.vector_store %arg5[%c16_196, %c1152_197], %154 {strides = array<i32>} : memref<64x3200xbf16, #tpu.memory_space<vmem>>, vector<8x128xbf16>,
    %c40_198 = arith.constant 40 : index
    %c1792_199 = arith.constant 1792 : index
    %157 = vector.load %arg5[%c40_198, %c1792_199] : memref<64x3200xbf16, #tpu.memory_space<vmem>>, vector<8x128xbf16>
    tpu.vector_store %arg5[%c40_198, %c1792_199], %154 {strides = array<i32>} : memref<64x3200xbf16, #tpu.memory_space<vmem>>, vector<8x128xbf16>,
    %c8_200 = arith.constant 8 : index
    %c2432_201 = arith.constant 2432 : index
    %158 = vector.load %arg5[%c8_200, %c2432_201] : memref<64x3200xbf16, #tpu.memory_space<vmem>>, vector<8x128xbf16>
    tpu.vector_store %arg5[%c8_200, %c2432_201], %154 {strides = array<i32>} : memref<64x3200xbf16, #tpu.memory_space<vmem>>, vector<8x128xbf16>,
    %c32_202 = arith.constant 32 : index
    %c3072_203 = arith.constant 3072 : index
    %159 = vector.load %arg5[%c32_202, %c3072_203] : memref<64x3200xbf16, #tpu.memory_space<vmem>>, vector<8x128xbf16>
    tpu.vector_store %arg5[%c32_202, %c3072_203], %154 {strides = array<i32>} : memref<64x3200xbf16, #tpu.memory_space<vmem>>, vector<8x128xbf16>,
    %c72 = arith.constant 72 : index
    %c0_204 = arith.constant 0 : index
    %160 = vector.load %arg1[%c72, %c0_204] : memref<144x128xf32, #tpu.memory_space<vmem>>, vector<8x128xf32>
    %161 = arith.truncf %160 : vector<8x128xf32> to vector<8x128xbf16>
    %c24_205 = arith.constant 24 : index
    %c0_206 = arith.constant 0 : index
    %162 = vector.load %arg5[%c24_205, %c0_206] : memref<64x3200xbf16, #tpu.memory_space<vmem>>, vector<8x128xbf16>
    tpu.vector_store %arg5[%c24_205, %c0_206], %161 {strides = array<i32>} : memref<64x3200xbf16, #tpu.memory_space<vmem>>, vector<8x128xbf16>,
    %c48_207 = arith.constant 48 : index
    %c640_208 = arith.constant 640 : index
    %163 = vector.load %arg5[%c48_207, %c640_208] : memref<64x3200xbf16, #tpu.memory_space<vmem>>, vector<8x128xbf16>
    tpu.vector_store %arg5[%c48_207, %c640_208], %161 {strides = array<i32>} : memref<64x3200xbf16, #tpu.memory_space<vmem>>, vector<8x128xbf16>,
    %c16_209 = arith.constant 16 : index
    %c1280_210 = arith.constant 1280 : index
    %164 = vector.load %arg5[%c16_209, %c1280_210] : memref<64x3200xbf16, #tpu.memory_space<vmem>>, vector<8x128xbf16>
    tpu.vector_store %arg5[%c16_209, %c1280_210], %161 {strides = array<i32>} : memref<64x3200xbf16, #tpu.memory_space<vmem>>, vector<8x128xbf16>,
    %c40_211 = arith.constant 40 : index
    %c1920_212 = arith.constant 1920 : index
    %165 = vector.load %arg5[%c40_211, %c1920_212] : memref<64x3200xbf16, #tpu.memory_space<vmem>>, vector<8x128xbf16>
    tpu.vector_store %arg5[%c40_211, %c1920_212], %161 {strides = array<i32>} : memref<64x3200xbf16, #tpu.memory_space<vmem>>, vector<8x128xbf16>,
    %c8_213 = arith.constant 8 : index
    %c2560_214 = arith.constant 2560 : index
    %166 = vector.load %arg5[%c8_213, %c2560_214] : memref<64x3200xbf16, #tpu.memory_space<vmem>>, vector<8x128xbf16>
    tpu.vector_store %arg5[%c8_213, %c2560_214], %161 {strides = array<i32>} : memref<64x3200xbf16, #tpu.memory_space<vmem>>, vector<8x128xbf16>,
    %c73 = arith.constant 73 : index
    %c0_215 = arith.constant 0 : index
    %167 = vector.load %arg1[%c73, %c0_215] : memref<144x128xf32, #tpu.memory_space<vmem>>, vector<8x128xf32>
    %168 = arith.truncf %167 : vector<8x128xf32> to vector<8x128xbf16>
    %c24_216 = arith.constant 24 : index
    %c128_217 = arith.constant 128 : index
    %169 = vector.load %arg5[%c24_216, %c128_217] : memref<64x3200xbf16, #tpu.memory_space<vmem>>, vector<8x128xbf16>
    tpu.vector_store %arg5[%c24_216, %c128_217], %168 {strides = array<i32>} : memref<64x3200xbf16, #tpu.memory_space<vmem>>, vector<8x128xbf16>,
    %c48_218 = arith.constant 48 : index
    %c768_219 = arith.constant 768 : index
    %170 = vector.load %arg5[%c48_218, %c768_219] : memref<64x3200xbf16, #tpu.memory_space<vmem>>, vector<8x128xbf16>
    tpu.vector_store %arg5[%c48_218, %c768_219], %168 {strides = array<i32>} : memref<64x3200xbf16, #tpu.memory_space<vmem>>, vector<8x128xbf16>,
    %c16_220 = arith.constant 16 : index
    %c1408_221 = arith.constant 1408 : index
    %171 = vector.load %arg5[%c16_220, %c1408_221] : memref<64x3200xbf16, #tpu.memory_space<vmem>>, vector<8x128xbf16>
    tpu.vector_store %arg5[%c16_220, %c1408_221], %168 {strides = array<i32>} : memref<64x3200xbf16, #tpu.memory_space<vmem>>, vector<8x128xbf16>,
    %c40_222 = arith.constant 40 : index
    %c2048_223 = arith.constant 2048 : index
    %172 = vector.load %arg5[%c40_222, %c2048_223] : memref<64x3200xbf16, #tpu.memory_space<vmem>>, vector<8x128xbf16>
    tpu.vector_store %arg5[%c40_222, %c2048_223], %168 {strides = array<i32>} : memref<64x3200xbf16, #tpu.memory_space<vmem>>, vector<8x128xbf16>,
    %c8_224 = arith.constant 8 : index
    %c2688_225 = arith.constant 2688 : index
    %173 = vector.load %arg5[%c8_224, %c2688_225] : memref<64x3200xbf16, #tpu.memory_space<vmem>>, vector<8x128xbf16>
    tpu.vector_store %arg5[%c8_224, %c2688_225], %168 {strides = array<i32>} : memref<64x3200xbf16, #tpu.memory_space<vmem>>, vector<8x128xbf16>,
    %c74 = arith.constant 74 : index
    %c0_226 = arith.constant 0 : index
    %174 = vector.load %arg1[%c74, %c0_226] : memref<144x128xf32, #tpu.memory_space<vmem>>, vector<8x128xf32>
    %175 = arith.truncf %174 : vector<8x128xf32> to vector<8x128xbf16>
    %c24_227 = arith.constant 24 : index
    %c256_228 = arith.constant 256 : index
    %176 = vector.load %arg5[%c24_227, %c256_228] : memref<64x3200xbf16, #tpu.memory_space<vmem>>, vector<8x128xbf16>
    tpu.vector_store %arg5[%c24_227, %c256_228], %175 {strides = array<i32>} : memref<64x3200xbf16, #tpu.memory_space<vmem>>, vector<8x128xbf16>,
    %c48_229 = arith.constant 48 : index
    %c896_230 = arith.constant 896 : index
    %177 = vector.load %arg5[%c48_229, %c896_230] : memref<64x3200xbf16, #tpu.memory_space<vmem>>, vector<8x128xbf16>
    tpu.vector_store %arg5[%c48_229, %c896_230], %175 {strides = array<i32>} : memref<64x3200xbf16, #tpu.memory_space<vmem>>, vector<8x128xbf16>,
    %c16_231 = arith.constant 16 : index
    %c1536_232 = arith.constant 1536 : index
    %178 = vector.load %arg5[%c16_231, %c1536_232] : memref<64x3200xbf16, #tpu.memory_space<vmem>>, vector<8x128xbf16>
    tpu.vector_store %arg5[%c16_231, %c1536_232], %175 {strides = array<i32>} : memref<64x3200xbf16, #tpu.memory_space<vmem>>, vector<8x128xbf16>,
    %c40_233 = arith.constant 40 : index
    %c2176_234 = arith.constant 2176 : index
    %179 = vector.load %arg5[%c40_233, %c2176_234] : memref<64x3200xbf16, #tpu.memory_space<vmem>>, vector<8x128xbf16>
    tpu.vector_store %arg5[%c40_233, %c2176_234], %175 {strides = array<i32>} : memref<64x3200xbf16, #tpu.memory_space<vmem>>, vector<8x128xbf16>,
    %c8_235 = arith.constant 8 : index
    %c2816_236 = arith.constant 2816 : index
    %180 = vector.load %arg5[%c8_235, %c2816_236] : memref<64x3200xbf16, #tpu.memory_space<vmem>>, vector<8x128xbf16>
    tpu.vector_store %arg5[%c8_235, %c2816_236], %175 {strides = array<i32>} : memref<64x3200xbf16, #tpu.memory_space<vmem>>, vector<8x128xbf16>,
    %c75 = arith.constant 75 : index
    %c0_237 = arith.constant 0 : index
    %181 = vector.load %arg1[%c75, %c0_237] : memref<144x128xf32, #tpu.memory_space<vmem>>, vector<8x128xf32>
    %182 = arith.truncf %181 : vector<8x128xf32> to vector<8x128xbf16>
    %c24_238 = arith.constant 24 : index
    %c384_239 = arith.constant 384 : index
    %183 = vector.load %arg5[%c24_238, %c384_239] : memref<64x3200xbf16, #tpu.memory_space<vmem>>, vector<8x128xbf16>
    tpu.vector_store %arg5[%c24_238, %c384_239], %182 {strides = array<i32>} : memref<64x3200xbf16, #tpu.memory_space<vmem>>, vector<8x128xbf16>,
    %c48_240 = arith.constant 48 : index
    %c1024_241 = arith.constant 1024 : index
    %184 = vector.load %arg5[%c48_240, %c1024_241] : memref<64x3200xbf16, #tpu.memory_space<vmem>>, vector<8x128xbf16>
    tpu.vector_store %arg5[%c48_240, %c1024_241], %182 {strides = array<i32>} : memref<64x3200xbf16, #tpu.memory_space<vmem>>, vector<8x128xbf16>,
    %c16_242 = arith.constant 16 : index
    %c1664_243 = arith.constant 1664 : index
    %185 = vector.load %arg5[%c16_242, %c1664_243] : memref<64x3200xbf16, #tpu.memory_space<vmem>>, vector<8x128xbf16>
    tpu.vector_store %arg5[%c16_242, %c1664_243], %182 {strides = array<i32>} : memref<64x3200xbf16, #tpu.memory_space<vmem>>, vector<8x128xbf16>,
    %c40_244 = arith.constant 40 : index
    %c2304_245 = arith.constant 2304 : index
    %186 = vector.load %arg5[%c40_244, %c2304_245] : memref<64x3200xbf16, #tpu.memory_space<vmem>>, vector<8x128xbf16>
    tpu.vector_store %arg5[%c40_244, %c2304_245], %182 {strides = array<i32>} : memref<64x3200xbf16, #tpu.memory_space<vmem>>, vector<8x128xbf16>,
    %c8_246 = arith.constant 8 : index
    %c2944_247 = arith.constant 2944 : index
    %187 = vector.load %arg5[%c8_246, %c2944_247] : memref<64x3200xbf16, #tpu.memory_space<vmem>>, vector<8x128xbf16>
    tpu.vector_store %arg5[%c8_246, %c2944_247], %182 {strides = array<i32>} : memref<64x3200xbf16, #tpu.memory_space<vmem>>, vector<8x128xbf16>,
    %c76 = arith.constant 76 : index
    %c0_248 = arith.constant 0 : index
    %188 = vector.load %arg1[%c76, %c0_248] : memref<144x128xf32, #tpu.memory_space<vmem>>, vector<8x128xf32>
    %189 = arith.truncf %188 : vector<8x128xf32> to vector<8x128xbf16>
    %c24_249 = arith.constant 24 : index
    %c512_250 = arith.constant 512 : index
    %190 = vector.load %arg5[%c24_249, %c512_250] : memref<64x3200xbf16, #tpu.memory_space<vmem>>, vector<8x128xbf16>
    tpu.vector_store %arg5[%c24_249, %c512_250], %189 {strides = array<i32>} : memref<64x3200xbf16, #tpu.memory_space<vmem>>, vector<8x128xbf16>,
    %c48_251 = arith.constant 48 : index
    %c1152_252 = arith.constant 1152 : index
    %191 = vector.load %arg5[%c48_251, %c1152_252] : memref<64x3200xbf16, #tpu.memory_space<vmem>>, vector<8x128xbf16>
    tpu.vector_store %arg5[%c48_251, %c1152_252], %189 {strides = array<i32>} : memref<64x3200xbf16, #tpu.memory_space<vmem>>, vector<8x128xbf16>,
    %c16_253 = arith.constant 16 : index
    %c1792_254 = arith.constant 1792 : index
    %192 = vector.load %arg5[%c16_253, %c1792_254] : memref<64x3200xbf16, #tpu.memory_space<vmem>>, vector<8x128xbf16>
    tpu.vector_store %arg5[%c16_253, %c1792_254], %189 {strides = array<i32>} : memref<64x3200xbf16, #tpu.memory_space<vmem>>, vector<8x128xbf16>,
    %c40_255 = arith.constant 40 : index
    %c2432_256 = arith.constant 2432 : index
    %193 = vector.load %arg5[%c40_255, %c2432_256] : memref<64x3200xbf16, #tpu.memory_space<vmem>>, vector<8x128xbf16>
    tpu.vector_store %arg5[%c40_255, %c2432_256], %189 {strides = array<i32>} : memref<64x3200xbf16, #tpu.memory_space<vmem>>, vector<8x128xbf16>,
    %c8_257 = arith.constant 8 : index
    %c3072_258 = arith.constant 3072 : index
    %194 = vector.load %arg5[%c8_257, %c3072_258] : memref<64x3200xbf16, #tpu.memory_space<vmem>>, vector<8x128xbf16>
    tpu.vector_store %arg5[%c8_257, %c3072_258], %189 {strides = array<i32>} : memref<64x3200xbf16, #tpu.memory_space<vmem>>, vector<8x128xbf16>,
    %c84 = arith.constant 84 : index
    %c0_259 = arith.constant 0 : index
    %195 = vector.load %arg1[%c84, %c0_259] : memref<144x128xf32, #tpu.memory_space<vmem>>, vector<8x128xf32>
    %196 = arith.truncf %195 : vector<8x128xf32> to vector<8x128xbf16>
    %c56 = arith.constant 56 : index
    %c0_260 = arith.constant 0 : index
    %197 = vector.load %arg5[%c56, %c0_260] : memref<64x3200xbf16, #tpu.memory_space<vmem>>, vector<8x128xbf16>
    tpu.vector_store %arg5[%c56, %c0_260], %196 {strides = array<i32>} : memref<64x3200xbf16, #tpu.memory_space<vmem>>, vector<8x128xbf16>,
    %c24_261 = arith.constant 24 : index
    %c640_262 = arith.constant 640 : index
    %198 = vector.load %arg5[%c24_261, %c640_262] : memref<64x3200xbf16, #tpu.memory_space<vmem>>, vector<8x128xbf16>
    tpu.vector_store %arg5[%c24_261, %c640_262], %196 {strides = array<i32>} : memref<64x3200xbf16, #tpu.memory_space<vmem>>, vector<8x128xbf16>,
    %c48_263 = arith.constant 48 : index
    %c1280_264 = arith.constant 1280 : index
    %199 = vector.load %arg5[%c48_263, %c1280_264] : memref<64x3200xbf16, #tpu.memory_space<vmem>>, vector<8x128xbf16>
    tpu.vector_store %arg5[%c48_263, %c1280_264], %196 {strides = array<i32>} : memref<64x3200xbf16, #tpu.memory_space<vmem>>, vector<8x128xbf16>,
    %c16_265 = arith.constant 16 : index
    %c1920_266 = arith.constant 1920 : index
    %200 = vector.load %arg5[%c16_265, %c1920_266] : memref<64x3200xbf16, #tpu.memory_space<vmem>>, vector<8x128xbf16>
    tpu.vector_store %arg5[%c16_265, %c1920_266], %196 {strides = array<i32>} : memref<64x3200xbf16, #tpu.memory_space<vmem>>, vector<8x128xbf16>,
    %c40_267 = arith.constant 40 : index
    %c2560_268 = arith.constant 2560 : index
    %201 = vector.load %arg5[%c40_267, %c2560_268] : memref<64x3200xbf16, #tpu.memory_space<vmem>>, vector<8x128xbf16>
    tpu.vector_store %arg5[%c40_267, %c2560_268], %196 {strides = array<i32>} : memref<64x3200xbf16, #tpu.memory_space<vmem>>, vector<8x128xbf16>,
    %c85 = arith.constant 85 : index
    %c0_269 = arith.constant 0 : index
    %202 = vector.load %arg1[%c85, %c0_269] : memref<144x128xf32, #tpu.memory_space<vmem>>, vector<8x128xf32>
    %203 = arith.truncf %202 : vector<8x128xf32> to vector<8x128xbf16>
    %c56_270 = arith.constant 56 : index
    %c128_271 = arith.constant 128 : index
    %204 = vector.load %arg5[%c56_270, %c128_271] : memref<64x3200xbf16, #tpu.memory_space<vmem>>, vector<8x128xbf16>
    tpu.vector_store %arg5[%c56_270, %c128_271], %203 {strides = array<i32>} : memref<64x3200xbf16, #tpu.memory_space<vmem>>, vector<8x128xbf16>,
    %c24_272 = arith.constant 24 : index
    %c768_273 = arith.constant 768 : index
    %205 = vector.load %arg5[%c24_272, %c768_273] : memref<64x3200xbf16, #tpu.memory_space<vmem>>, vector<8x128xbf16>
    tpu.vector_store %arg5[%c24_272, %c768_273], %203 {strides = array<i32>} : memref<64x3200xbf16, #tpu.memory_space<vmem>>, vector<8x128xbf16>,
    %c48_274 = arith.constant 48 : index
    %c1408_275 = arith.constant 1408 : index
    %206 = vector.load %arg5[%c48_274, %c1408_275] : memref<64x3200xbf16, #tpu.memory_space<vmem>>, vector<8x128xbf16>
    tpu.vector_store %arg5[%c48_274, %c1408_275], %203 {strides = array<i32>} : memref<64x3200xbf16, #tpu.memory_space<vmem>>, vector<8x128xbf16>,
    %c16_276 = arith.constant 16 : index
    %c2048_277 = arith.constant 2048 : index
    %207 = vector.load %arg5[%c16_276, %c2048_277] : memref<64x3200xbf16, #tpu.memory_space<vmem>>, vector<8x128xbf16>
    tpu.vector_store %arg5[%c16_276, %c2048_277], %203 {strides = array<i32>} : memref<64x3200xbf16, #tpu.memory_space<vmem>>, vector<8x128xbf16>,
    %c40_278 = arith.constant 40 : index
    %c2688_279 = arith.constant 2688 : index
    %208 = vector.load %arg5[%c40_278, %c2688_279] : memref<64x3200xbf16, #tpu.memory_space<vmem>>, vector<8x128xbf16>
    tpu.vector_store %arg5[%c40_278, %c2688_279], %203 {strides = array<i32>} : memref<64x3200xbf16, #tpu.memory_space<vmem>>, vector<8x128xbf16>,
    %c86 = arith.constant 86 : index
    %c0_280 = arith.constant 0 : index
    %209 = vector.load %arg1[%c86, %c0_280] : memref<144x128xf32, #tpu.memory_space<vmem>>, vector<8x128xf32>
    %210 = arith.truncf %209 : vector<8x128xf32> to vector<8x128xbf16>
    %c56_281 = arith.constant 56 : index
    %c256_282 = arith.constant 256 : index
    %211 = vector.load %arg5[%c56_281, %c256_282] : memref<64x3200xbf16, #tpu.memory_space<vmem>>, vector<8x128xbf16>
    tpu.vector_store %arg5[%c56_281, %c256_282], %210 {strides = array<i32>} : memref<64x3200xbf16, #tpu.memory_space<vmem>>, vector<8x128xbf16>,
    %c24_283 = arith.constant 24 : index
    %c896_284 = arith.constant 896 : index
    %212 = vector.load %arg5[%c24_283, %c896_284] : memref<64x3200xbf16, #tpu.memory_space<vmem>>, vector<8x128xbf16>
    tpu.vector_store %arg5[%c24_283, %c896_284], %210 {strides = array<i32>} : memref<64x3200xbf16, #tpu.memory_space<vmem>>, vector<8x128xbf16>,
    %c48_285 = arith.constant 48 : index
    %c1536_286 = arith.constant 1536 : index
    %213 = vector.load %arg5[%c48_285, %c1536_286] : memref<64x3200xbf16, #tpu.memory_space<vmem>>, vector<8x128xbf16>
    tpu.vector_store %arg5[%c48_285, %c1536_286], %210 {strides = array<i32>} : memref<64x3200xbf16, #tpu.memory_space<vmem>>, vector<8x128xbf16>,
    %c16_287 = arith.constant 16 : index
    %c2176_288 = arith.constant 2176 : index
    %214 = vector.load %arg5[%c16_287, %c2176_288] : memref<64x3200xbf16, #tpu.memory_space<vmem>>, vector<8x128xbf16>
    tpu.vector_store %arg5[%c16_287, %c2176_288], %210 {strides = array<i32>} : memref<64x3200xbf16, #tpu.memory_space<vmem>>, vector<8x128xbf16>,
    %c40_289 = arith.constant 40 : index
    %c2816_290 = arith.constant 2816 : index
    %215 = vector.load %arg5[%c40_289, %c2816_290] : memref<64x3200xbf16, #tpu.memory_space<vmem>>, vector<8x128xbf16>
    tpu.vector_store %arg5[%c40_289, %c2816_290], %210 {strides = array<i32>} : memref<64x3200xbf16, #tpu.memory_space<vmem>>, vector<8x128xbf16>,
    %c87 = arith.constant 87 : index
    %c0_291 = arith.constant 0 : index
    %216 = vector.load %arg1[%c87, %c0_291] : memref<144x128xf32, #tpu.memory_space<vmem>>, vector<8x128xf32>
    %217 = arith.truncf %216 : vector<8x128xf32> to vector<8x128xbf16>
    %c56_292 = arith.constant 56 : index
    %c384_293 = arith.constant 384 : index
    %218 = vector.load %arg5[%c56_292, %c384_293] : memref<64x3200xbf16, #tpu.memory_space<vmem>>, vector<8x128xbf16>
    tpu.vector_store %arg5[%c56_292, %c384_293], %217 {strides = array<i32>} : memref<64x3200xbf16, #tpu.memory_space<vmem>>, vector<8x128xbf16>,
    %c24_294 = arith.constant 24 : index
    %c1024_295 = arith.constant 1024 : index
    %219 = vector.load %arg5[%c24_294, %c1024_295] : memref<64x3200xbf16, #tpu.memory_space<vmem>>, vector<8x128xbf16>
    tpu.vector_store %arg5[%c24_294, %c1024_295], %217 {strides = array<i32>} : memref<64x3200xbf16, #tpu.memory_space<vmem>>, vector<8x128xbf16>,
    %c48_296 = arith.constant 48 : index
    %c1664_297 = arith.constant 1664 : index
    %220 = vector.load %arg5[%c48_296, %c1664_297] : memref<64x3200xbf16, #tpu.memory_space<vmem>>, vector<8x128xbf16>
    tpu.vector_store %arg5[%c48_296, %c1664_297], %217 {strides = array<i32>} : memref<64x3200xbf16, #tpu.memory_space<vmem>>, vector<8x128xbf16>,
    %c16_298 = arith.constant 16 : index
    %c2304_299 = arith.constant 2304 : index
    %221 = vector.load %arg5[%c16_298, %c2304_299] : memref<64x3200xbf16, #tpu.memory_space<vmem>>, vector<8x128xbf16>
    tpu.vector_store %arg5[%c16_298, %c2304_299], %217 {strides = array<i32>} : memref<64x3200xbf16, #tpu.memory_space<vmem>>, vector<8x128xbf16>,
    %c40_300 = arith.constant 40 : index
    %c2944_301 = arith.constant 2944 : index
    %222 = vector.load %arg5[%c40_300, %c2944_301] : memref<64x3200xbf16, #tpu.memory_space<vmem>>, vector<8x128xbf16>
    tpu.vector_store %arg5[%c40_300, %c2944_301], %217 {strides = array<i32>} : memref<64x3200xbf16, #tpu.memory_space<vmem>>, vector<8x128xbf16>,
    %c88 = arith.constant 88 : index
    %c0_302 = arith.constant 0 : index
    %223 = vector.load %arg1[%c88, %c0_302] : memref<144x128xf32, #tpu.memory_space<vmem>>, vector<8x128xf32>
    %224 = arith.truncf %223 : vector<8x128xf32> to vector<8x128xbf16>
    %c56_303 = arith.constant 56 : index
    %c512_304 = arith.constant 512 : index
    %225 = vector.load %arg5[%c56_303, %c512_304] : memref<64x3200xbf16, #tpu.memory_space<vmem>>, vector<8x128xbf16>
    tpu.vector_store %arg5[%c56_303, %c512_304], %224 {strides = array<i32>} : memref<64x3200xbf16, #tpu.memory_space<vmem>>, vector<8x128xbf16>,
    %c24_305 = arith.constant 24 : index
    %c1152_306 = arith.constant 1152 : index
    %226 = vector.load %arg5[%c24_305, %c1152_306] : memref<64x3200xbf16, #tpu.memory_space<vmem>>, vector<8x128xbf16>
    tpu.vector_store %arg5[%c24_305, %c1152_306], %224 {strides = array<i32>} : memref<64x3200xbf16, #tpu.memory_space<vmem>>, vector<8x128xbf16>,
    %c48_307 = arith.constant 48 : index
    %c1792_308 = arith.constant 1792 : index
    %227 = vector.load %arg5[%c48_307, %c1792_308] : memref<64x3200xbf16, #tpu.memory_space<vmem>>, vector<8x128xbf16>
    tpu.vector_store %arg5[%c48_307, %c1792_308], %224 {strides = array<i32>} : memref<64x3200xbf16, #tpu.memory_space<vmem>>, vector<8x128xbf16>,
    %c16_309 = arith.constant 16 : index
    %c2432_310 = arith.constant 2432 : index
    %228 = vector.load %arg5[%c16_309, %c2432_310] : memref<64x3200xbf16, #tpu.memory_space<vmem>>, vector<8x128xbf16>
    tpu.vector_store %arg5[%c16_309, %c2432_310], %224 {strides = array<i32>} : memref<64x3200xbf16, #tpu.memory_space<vmem>>, vector<8x128xbf16>,
    %c40_311 = arith.constant 40 : index
    %c3072_312 = arith.constant 3072 : index
    %229 = vector.load %arg5[%c40_311, %c3072_312] : memref<64x3200xbf16, #tpu.memory_space<vmem>>, vector<8x128xbf16>
    tpu.vector_store %arg5[%c40_311, %c3072_312], %224 {strides = array<i32>} : memref<64x3200xbf16, #tpu.memory_space<vmem>>, vector<8x128xbf16>,
    %c96 = arith.constant 96 : index
    %c0_313 = arith.constant 0 : index
    %230 = vector.load %arg1[%c96, %c0_313] : memref<144x128xf32, #tpu.memory_space<vmem>>, vector<8x128xf32>
    %231 = arith.truncf %230 : vector<8x128xf32> to vector<8x128xbf16>
    %c56_314 = arith.constant 56 : index
    %c640_315 = arith.constant 640 : index
    %232 = vector.load %arg5[%c56_314, %c640_315] : memref<64x3200xbf16, #tpu.memory_space<vmem>>, vector<8x128xbf16>
    tpu.vector_store %arg5[%c56_314, %c640_315], %231 {strides = array<i32>} : memref<64x3200xbf16, #tpu.memory_space<vmem>>, vector<8x128xbf16>,
    %c24_316 = arith.constant 24 : index
    %c1280_317 = arith.constant 1280 : index
    %233 = vector.load %arg5[%c24_316, %c1280_317] : memref<64x3200xbf16, #tpu.memory_space<vmem>>, vector<8x128xbf16>
    tpu.vector_store %arg5[%c24_316, %c1280_317], %231 {strides = array<i32>} : memref<64x3200xbf16, #tpu.memory_space<vmem>>, vector<8x128xbf16>,
    %c48_318 = arith.constant 48 : index
    %c1920_319 = arith.constant 1920 : index
    %234 = vector.load %arg5[%c48_318, %c1920_319] : memref<64x3200xbf16, #tpu.memory_space<vmem>>, vector<8x128xbf16>
    tpu.vector_store %arg5[%c48_318, %c1920_319], %231 {strides = array<i32>} : memref<64x3200xbf16, #tpu.memory_space<vmem>>, vector<8x128xbf16>,
    %c16_320 = arith.constant 16 : index
    %c2560_321 = arith.constant 2560 : index
    %235 = vector.load %arg5[%c16_320, %c2560_321] : memref<64x3200xbf16, #tpu.memory_space<vmem>>, vector<8x128xbf16>
    tpu.vector_store %arg5[%c16_320, %c2560_321], %231 {strides = array<i32>} : memref<64x3200xbf16, #tpu.memory_space<vmem>>, vector<8x128xbf16>,
    %c97 = arith.constant 97 : index
    %c0_322 = arith.constant 0 : index
    %236 = vector.load %arg1[%c97, %c0_322] : memref<144x128xf32, #tpu.memory_space<vmem>>, vector<8x128xf32>
    %237 = arith.truncf %236 : vector<8x128xf32> to vector<8x128xbf16>
    %c56_323 = arith.constant 56 : index
    %c768_324 = arith.constant 768 : index
    %238 = vector.load %arg5[%c56_323, %c768_324] : memref<64x3200xbf16, #tpu.memory_space<vmem>>, vector<8x128xbf16>
    tpu.vector_store %arg5[%c56_323, %c768_324], %237 {strides = array<i32>} : memref<64x3200xbf16, #tpu.memory_space<vmem>>, vector<8x128xbf16>,
    %c24_325 = arith.constant 24 : index
    %c1408_326 = arith.constant 1408 : index
    %239 = vector.load %arg5[%c24_325, %c1408_326] : memref<64x3200xbf16, #tpu.memory_space<vmem>>, vector<8x128xbf16>
    tpu.vector_store %arg5[%c24_325, %c1408_326], %237 {strides = array<i32>} : memref<64x3200xbf16, #tpu.memory_space<vmem>>, vector<8x128xbf16>,
    %c48_327 = arith.constant 48 : index
    %c2048_328 = arith.constant 2048 : index
    %240 = vector.load %arg5[%c48_327, %c2048_328] : memref<64x3200xbf16, #tpu.memory_space<vmem>>, vector<8x128xbf16>
    tpu.vector_store %arg5[%c48_327, %c2048_328], %237 {strides = array<i32>} : memref<64x3200xbf16, #tpu.memory_space<vmem>>, vector<8x128xbf16>,
    %c16_329 = arith.constant 16 : index
    %c2688_330 = arith.constant 2688 : index
    %241 = vector.load %arg5[%c16_329, %c2688_330] : memref<64x3200xbf16, #tpu.memory_space<vmem>>, vector<8x128xbf16>
    tpu.vector_store %arg5[%c16_329, %c2688_330], %237 {strides = array<i32>} : memref<64x3200xbf16, #tpu.memory_space<vmem>>, vector<8x128xbf16>,
    %c98 = arith.constant 98 : index
    %c0_331 = arith.constant 0 : index
    %242 = vector.load %arg1[%c98, %c0_331] : memref<144x128xf32, #tpu.memory_space<vmem>>, vector<8x128xf32>
    %243 = arith.truncf %242 : vector<8x128xf32> to vector<8x128xbf16>
    %c56_332 = arith.constant 56 : index
    %c896_333 = arith.constant 896 : index
    %244 = vector.load %arg5[%c56_332, %c896_333] : memref<64x3200xbf16, #tpu.memory_space<vmem>>, vector<8x128xbf16>
    tpu.vector_store %arg5[%c56_332, %c896_333], %243 {strides = array<i32>} : memref<64x3200xbf16, #tpu.memory_space<vmem>>, vector<8x128xbf16>,
    %c24_334 = arith.constant 24 : index
    %c1536_335 = arith.constant 1536 : index
    %245 = vector.load %arg5[%c24_334, %c1536_335] : memref<64x3200xbf16, #tpu.memory_space<vmem>>, vector<8x128xbf16>
    tpu.vector_store %arg5[%c24_334, %c1536_335], %243 {strides = array<i32>} : memref<64x3200xbf16, #tpu.memory_space<vmem>>, vector<8x128xbf16>,
    %c48_336 = arith.constant 48 : index
    %c2176_337 = arith.constant 2176 : index
    %246 = vector.load %arg5[%c48_336, %c2176_337] : memref<64x3200xbf16, #tpu.memory_space<vmem>>, vector<8x128xbf16>
    tpu.vector_store %arg5[%c48_336, %c2176_337], %243 {strides = array<i32>} : memref<64x3200xbf16, #tpu.memory_space<vmem>>, vector<8x128xbf16>,
    %c16_338 = arith.constant 16 : index
    %c2816_339 = arith.constant 2816 : index
    %247 = vector.load %arg5[%c16_338, %c2816_339] : memref<64x3200xbf16, #tpu.memory_space<vmem>>, vector<8x128xbf16>
    tpu.vector_store %arg5[%c16_338, %c2816_339], %243 {strides = array<i32>} : memref<64x3200xbf16, #tpu.memory_space<vmem>>, vector<8x128xbf16>,
    %c99 = arith.constant 99 : index
    %c0_340 = arith.constant 0 : index
    %248 = vector.load %arg1[%c99, %c0_340] : memref<144x128xf32, #tpu.memory_space<vmem>>, vector<8x128xf32>
    %249 = arith.truncf %248 : vector<8x128xf32> to vector<8x128xbf16>
    %c56_341 = arith.constant 56 : index
    %c1024_342 = arith.constant 1024 : index
    %250 = vector.load %arg5[%c56_341, %c1024_342] : memref<64x3200xbf16, #tpu.memory_space<vmem>>, vector<8x128xbf16>
    tpu.vector_store %arg5[%c56_341, %c1024_342], %249 {strides = array<i32>} : memref<64x3200xbf16, #tpu.memory_space<vmem>>, vector<8x128xbf16>,
    %c24_343 = arith.constant 24 : index
    %c1664_344 = arith.constant 1664 : index
    %251 = vector.load %arg5[%c24_343, %c1664_344] : memref<64x3200xbf16, #tpu.memory_space<vmem>>, vector<8x128xbf16>
    tpu.vector_store %arg5[%c24_343, %c1664_344], %249 {strides = array<i32>} : memref<64x3200xbf16, #tpu.memory_space<vmem>>, vector<8x128xbf16>,
    %c48_345 = arith.constant 48 : index
    %c2304_346 = arith.constant 2304 : index
    %252 = vector.load %arg5[%c48_345, %c2304_346] : memref<64x3200xbf16, #tpu.memory_space<vmem>>, vector<8x128xbf16>
    tpu.vector_store %arg5[%c48_345, %c2304_346], %249 {strides = array<i32>} : memref<64x3200xbf16, #tpu.memory_space<vmem>>, vector<8x128xbf16>,
    %c16_347 = arith.constant 16 : index
    %c2944_348 = arith.constant 2944 : index
    %253 = vector.load %arg5[%c16_347, %c2944_348] : memref<64x3200xbf16, #tpu.memory_space<vmem>>, vector<8x128xbf16>
    tpu.vector_store %arg5[%c16_347, %c2944_348], %249 {strides = array<i32>} : memref<64x3200xbf16, #tpu.memory_space<vmem>>, vector<8x128xbf16>,
    %c100 = arith.constant 100 : index
    %c0_349 = arith.constant 0 : index
    %254 = vector.load %arg1[%c100, %c0_349] : memref<144x128xf32, #tpu.memory_space<vmem>>, vector<8x128xf32>
    %255 = arith.truncf %254 : vector<8x128xf32> to vector<8x128xbf16>
    %c56_350 = arith.constant 56 : index
    %c1152_351 = arith.constant 1152 : index
    %256 = vector.load %arg5[%c56_350, %c1152_351] : memref<64x3200xbf16, #tpu.memory_space<vmem>>, vector<8x128xbf16>
    tpu.vector_store %arg5[%c56_350, %c1152_351], %255 {strides = array<i32>} : memref<64x3200xbf16, #tpu.memory_space<vmem>>, vector<8x128xbf16>,
    %c24_352 = arith.constant 24 : index
    %c1792_353 = arith.constant 1792 : index
    %257 = vector.load %arg5[%c24_352, %c1792_353] : memref<64x3200xbf16, #tpu.memory_space<vmem>>, vector<8x128xbf16>
    tpu.vector_store %arg5[%c24_352, %c1792_353], %255 {strides = array<i32>} : memref<64x3200xbf16, #tpu.memory_space<vmem>>, vector<8x128xbf16>,
    %c48_354 = arith.constant 48 : index
    %c2432_355 = arith.constant 2432 : index
    %258 = vector.load %arg5[%c48_354, %c2432_355] : memref<64x3200xbf16, #tpu.memory_space<vmem>>, vector<8x128xbf16>
    tpu.vector_store %arg5[%c48_354, %c2432_355], %255 {strides = array<i32>} : memref<64x3200xbf16, #tpu.memory_space<vmem>>, vector<8x128xbf16>,
    %c16_356 = arith.constant 16 : index
    %c3072_357 = arith.constant 3072 : index
    %259 = vector.load %arg5[%c16_356, %c3072_357] : memref<64x3200xbf16, #tpu.memory_space<vmem>>, vector<8x128xbf16>
    tpu.vector_store %arg5[%c16_356, %c3072_357], %255 {strides = array<i32>} : memref<64x3200xbf16, #tpu.memory_space<vmem>>, vector<8x128xbf16>,
    %c108 = arith.constant 108 : index
    %c0_358 = arith.constant 0 : index
    %260 = vector.load %arg1[%c108, %c0_358] : memref<144x128xf32, #tpu.memory_space<vmem>>, vector<8x128xf32>
    %261 = arith.truncf %260 : vector<8x128xf32> to vector<8x128xbf16>
    %c56_359 = arith.constant 56 : index
    %c1280_360 = arith.constant 1280 : index
    %262 = vector.load %arg5[%c56_359, %c1280_360] : memref<64x3200xbf16, #tpu.memory_space<vmem>>, vector<8x128xbf16>
    tpu.vector_store %arg5[%c56_359, %c1280_360], %261 {strides = array<i32>} : memref<64x3200xbf16, #tpu.memory_space<vmem>>, vector<8x128xbf16>,
    %c24_361 = arith.constant 24 : index
    %c1920_362 = arith.constant 1920 : index
    %263 = vector.load %arg5[%c24_361, %c1920_362] : memref<64x3200xbf16, #tpu.memory_space<vmem>>, vector<8x128xbf16>
    tpu.vector_store %arg5[%c24_361, %c1920_362], %261 {strides = array<i32>} : memref<64x3200xbf16, #tpu.memory_space<vmem>>, vector<8x128xbf16>,
    %c48_363 = arith.constant 48 : index
    %c2560_364 = arith.constant 2560 : index
    %264 = vector.load %arg5[%c48_363, %c2560_364] : memref<64x3200xbf16, #tpu.memory_space<vmem>>, vector<8x128xbf16>
    tpu.vector_store %arg5[%c48_363, %c2560_364], %261 {strides = array<i32>} : memref<64x3200xbf16, #tpu.memory_space<vmem>>, vector<8x128xbf16>,
    %c109 = arith.constant 109 : index
    %c0_365 = arith.constant 0 : index
    %265 = vector.load %arg1[%c109, %c0_365] : memref<144x128xf32, #tpu.memory_space<vmem>>, vector<8x128xf32>
    %266 = arith.truncf %265 : vector<8x128xf32> to vector<8x128xbf16>
    %c56_366 = arith.constant 56 : index
    %c1408_367 = arith.constant 1408 : index
    %267 = vector.load %arg5[%c56_366, %c1408_367] : memref<64x3200xbf16, #tpu.memory_space<vmem>>, vector<8x128xbf16>
    tpu.vector_store %arg5[%c56_366, %c1408_367], %266 {strides = array<i32>} : memref<64x3200xbf16, #tpu.memory_space<vmem>>, vector<8x128xbf16>,
    %c24_368 = arith.constant 24 : index
    %c2048_369 = arith.constant 2048 : index
    %268 = vector.load %arg5[%c24_368, %c2048_369] : memref<64x3200xbf16, #tpu.memory_space<vmem>>, vector<8x128xbf16>
    tpu.vector_store %arg5[%c24_368, %c2048_369], %266 {strides = array<i32>} : memref<64x3200xbf16, #tpu.memory_space<vmem>>, vector<8x128xbf16>,
    %c48_370 = arith.constant 48 : index
    %c2688_371 = arith.constant 2688 : index
    %269 = vector.load %arg5[%c48_370, %c2688_371] : memref<64x3200xbf16, #tpu.memory_space<vmem>>, vector<8x128xbf16>
    tpu.vector_store %arg5[%c48_370, %c2688_371], %266 {strides = array<i32>} : memref<64x3200xbf16, #tpu.memory_space<vmem>>, vector<8x128xbf16>,
    %c110 = arith.constant 110 : index
    %c0_372 = arith.constant 0 : index
    %270 = vector.load %arg1[%c110, %c0_372] : memref<144x128xf32, #tpu.memory_space<vmem>>, vector<8x128xf32>
    %271 = arith.truncf %270 : vector<8x128xf32> to vector<8x128xbf16>
    %c56_373 = arith.constant 56 : index
    %c1536_374 = arith.constant 1536 : index
    %272 = vector.load %arg5[%c56_373, %c1536_374] : memref<64x3200xbf16, #tpu.memory_space<vmem>>, vector<8x128xbf16>
    tpu.vector_store %arg5[%c56_373, %c1536_374], %271 {strides = array<i32>} : memref<64x3200xbf16, #tpu.memory_space<vmem>>, vector<8x128xbf16>,
    %c24_375 = arith.constant 24 : index
    %c2176_376 = arith.constant 2176 : index
    %273 = vector.load %arg5[%c24_375, %c2176_376] : memref<64x3200xbf16, #tpu.memory_space<vmem>>, vector<8x128xbf16>
    tpu.vector_store %arg5[%c24_375, %c2176_376], %271 {strides = array<i32>} : memref<64x3200xbf16, #tpu.memory_space<vmem>>, vector<8x128xbf16>,
    %c48_377 = arith.constant 48 : index
    %c2816_378 = arith.constant 2816 : index
    %274 = vector.load %arg5[%c48_377, %c2816_378] : memref<64x3200xbf16, #tpu.memory_space<vmem>>, vector<8x128xbf16>
    tpu.vector_store %arg5[%c48_377, %c2816_378], %271 {strides = array<i32>} : memref<64x3200xbf16, #tpu.memory_space<vmem>>, vector<8x128xbf16>,
    %c111 = arith.constant 111 : index
    %c0_379 = arith.constant 0 : index
    %275 = vector.load %arg1[%c111, %c0_379] : memref<144x128xf32, #tpu.memory_space<vmem>>, vector<8x128xf32>
    %276 = arith.truncf %275 : vector<8x128xf32> to vector<8x128xbf16>
    %c56_380 = arith.constant 56 : index
    %c1664_381 = arith.constant 1664 : index
    %277 = vector.load %arg5[%c56_380, %c1664_381] : memref<64x3200xbf16, #tpu.memory_space<vmem>>, vector<8x128xbf16>
    tpu.vector_store %arg5[%c56_380, %c1664_381], %276 {strides = array<i32>} : memref<64x3200xbf16, #tpu.memory_space<vmem>>, vector<8x128xbf16>,
    %c24_382 = arith.constant 24 : index
    %c2304_383 = arith.constant 2304 : index
    %278 = vector.load %arg5[%c24_382, %c2304_383] : memref<64x3200xbf16, #tpu.memory_space<vmem>>, vector<8x128xbf16>
    tpu.vector_store %arg5[%c24_382, %c2304_383], %276 {strides = array<i32>} : memref<64x3200xbf16, #tpu.memory_space<vmem>>, vector<8x128xbf16>,
    %c48_384 = arith.constant 48 : index
    %c2944_385 = arith.constant 2944 : index
    %279 = vector.load %arg5[%c48_384, %c2944_385] : memref<64x3200xbf16, #tpu.memory_space<vmem>>, vector<8x128xbf16>
    tpu.vector_store %arg5[%c48_384, %c2944_385], %276 {strides = array<i32>} : memref<64x3200xbf16, #tpu.memory_space<vmem>>, vector<8x128xbf16>,
    %c112 = arith.constant 112 : index
    %c0_386 = arith.constant 0 : index
    %280 = vector.load %arg1[%c112, %c0_386] : memref<144x128xf32, #tpu.memory_space<vmem>>, vector<8x128xf32>
    %281 = arith.truncf %280 : vector<8x128xf32> to vector<8x128xbf16>
    %c56_387 = arith.constant 56 : index
    %c1792_388 = arith.constant 1792 : index
    %282 = vector.load %arg5[%c56_387, %c1792_388] : memref<64x3200xbf16, #tpu.memory_space<vmem>>, vector<8x128xbf16>
    tpu.vector_store %arg5[%c56_387, %c1792_388], %281 {strides = array<i32>} : memref<64x3200xbf16, #tpu.memory_space<vmem>>, vector<8x128xbf16>,
    %c24_389 = arith.constant 24 : index
    %c2432_390 = arith.constant 2432 : index
    %283 = vector.load %arg5[%c24_389, %c2432_390] : memref<64x3200xbf16, #tpu.memory_space<vmem>>, vector<8x128xbf16>
    tpu.vector_store %arg5[%c24_389, %c2432_390], %281 {strides = array<i32>} : memref<64x3200xbf16, #tpu.memory_space<vmem>>, vector<8x128xbf16>,
    %c48_391 = arith.constant 48 : index
    %c3072_392 = arith.constant 3072 : index
    %284 = vector.load %arg5[%c48_391, %c3072_392] : memref<64x3200xbf16, #tpu.memory_space<vmem>>, vector<8x128xbf16>
    tpu.vector_store %arg5[%c48_391, %c3072_392], %281 {strides = array<i32>} : memref<64x3200xbf16, #tpu.memory_space<vmem>>, vector<8x128xbf16>,
    %c120 = arith.constant 120 : index
    %c0_393 = arith.constant 0 : index
    %285 = vector.load %arg1[%c120, %c0_393] : memref<144x128xf32, #tpu.memory_space<vmem>>, vector<8x128xf32>
    %286 = arith.truncf %285 : vector<8x128xf32> to vector<8x128xbf16>
    %c56_394 = arith.constant 56 : index
    %c1920_395 = arith.constant 1920 : index
    %287 = vector.load %arg5[%c56_394, %c1920_395] : memref<64x3200xbf16, #tpu.memory_space<vmem>>, vector<8x128xbf16>
    tpu.vector_store %arg5[%c56_394, %c1920_395], %286 {strides = array<i32>} : memref<64x3200xbf16, #tpu.memory_space<vmem>>, vector<8x128xbf16>,
    %c24_396 = arith.constant 24 : index
    %c2560_397 = arith.constant 2560 : index
    %288 = vector.load %arg5[%c24_396, %c2560_397] : memref<64x3200xbf16, #tpu.memory_space<vmem>>, vector<8x128xbf16>
    tpu.vector_store %arg5[%c24_396, %c2560_397], %286 {strides = array<i32>} : memref<64x3200xbf16, #tpu.memory_space<vmem>>, vector<8x128xbf16>,
    %c121 = arith.constant 121 : index
    %c0_398 = arith.constant 0 : index
    %289 = vector.load %arg1[%c121, %c0_398] : memref<144x128xf32, #tpu.memory_space<vmem>>, vector<8x128xf32>
    %290 = arith.truncf %289 : vector<8x128xf32> to vector<8x128xbf16>
    %c56_399 = arith.constant 56 : index
    %c2048_400 = arith.constant 2048 : index
    %291 = vector.load %arg5[%c56_399, %c2048_400] : memref<64x3200xbf16, #tpu.memory_space<vmem>>, vector<8x128xbf16>
    tpu.vector_store %arg5[%c56_399, %c2048_400], %290 {strides = array<i32>} : memref<64x3200xbf16, #tpu.memory_space<vmem>>, vector<8x128xbf16>,
    %c24_401 = arith.constant 24 : index
    %c2688_402 = arith.constant 2688 : index
    %292 = vector.load %arg5[%c24_401, %c2688_402] : memref<64x3200xbf16, #tpu.memory_space<vmem>>, vector<8x128xbf16>
    tpu.vector_store %arg5[%c24_401, %c2688_402], %290 {strides = array<i32>} : memref<64x3200xbf16, #tpu.memory_space<vmem>>, vector<8x128xbf16>,
    %c122 = arith.constant 122 : index
    %c0_403 = arith.constant 0 : index
    %293 = vector.load %arg1[%c122, %c0_403] : memref<144x128xf32, #tpu.memory_space<vmem>>, vector<8x128xf32>
    %294 = arith.truncf %293 : vector<8x128xf32> to vector<8x128xbf16>
    %c56_404 = arith.constant 56 : index
    %c2176_405 = arith.constant 2176 : index
    %295 = vector.load %arg5[%c56_404, %c2176_405] : memref<64x3200xbf16, #tpu.memory_space<vmem>>, vector<8x128xbf16>
    tpu.vector_store %arg5[%c56_404, %c2176_405], %294 {strides = array<i32>} : memref<64x3200xbf16, #tpu.memory_space<vmem>>, vector<8x128xbf16>,
    %c24_406 = arith.constant 24 : index
    %c2816_407 = arith.constant 2816 : index
    %296 = vector.load %arg5[%c24_406, %c2816_407] : memref<64x3200xbf16, #tpu.memory_space<vmem>>, vector<8x128xbf16>
    tpu.vector_store %arg5[%c24_406, %c2816_407], %294 {strides = array<i32>} : memref<64x3200xbf16, #tpu.memory_space<vmem>>, vector<8x128xbf16>,
    %c123 = arith.constant 123 : index
    %c0_408 = arith.constant 0 : index
    %297 = vector.load %arg1[%c123, %c0_408] : memref<144x128xf32, #tpu.memory_space<vmem>>, vector<8x128xf32>
    %298 = arith.truncf %297 : vector<8x128xf32> to vector<8x128xbf16>
    %c56_409 = arith.constant 56 : index
    %c2304_410 = arith.constant 2304 : index
    %299 = vector.load %arg5[%c56_409, %c2304_410] : memref<64x3200xbf16, #tpu.memory_space<vmem>>, vector<8x128xbf16>
    tpu.vector_store %arg5[%c56_409, %c2304_410], %298 {strides = array<i32>} : memref<64x3200xbf16, #tpu.memory_space<vmem>>, vector<8x128xbf16>,
    %c24_411 = arith.constant 24 : index
    %c2944_412 = arith.constant 2944 : index
    %300 = vector.load %arg5[%c24_411, %c2944_412] : memref<64x3200xbf16, #tpu.memory_space<vmem>>, vector<8x128xbf16>
    tpu.vector_store %arg5[%c24_411, %c2944_412], %298 {strides = array<i32>} : memref<64x3200xbf16, #tpu.memory_space<vmem>>, vector<8x128xbf16>,
    %c124 = arith.constant 124 : index
    %c0_413 = arith.constant 0 : index
    %301 = vector.load %arg1[%c124, %c0_413] : memref<144x128xf32, #tpu.memory_space<vmem>>, vector<8x128xf32>
    %302 = arith.truncf %301 : vector<8x128xf32> to vector<8x128xbf16>
    %c56_414 = arith.constant 56 : index
    %c2432_415 = arith.constant 2432 : index
    %303 = vector.load %arg5[%c56_414, %c2432_415] : memref<64x3200xbf16, #tpu.memory_space<vmem>>, vector<8x128xbf16>
    tpu.vector_store %arg5[%c56_414, %c2432_415], %302 {strides = array<i32>} : memref<64x3200xbf16, #tpu.memory_space<vmem>>, vector<8x128xbf16>,
    %c24_416 = arith.constant 24 : index
    %c3072_417 = arith.constant 3072 : index
    %304 = vector.load %arg5[%c24_416, %c3072_417] : memref<64x3200xbf16, #tpu.memory_space<vmem>>, vector<8x128xbf16>
    tpu.vector_store %arg5[%c24_416, %c3072_417], %302 {strides = array<i32>} : memref<64x3200xbf16, #tpu.memory_space<vmem>>, vector<8x128xbf16>,
    %c132 = arith.constant 132 : index
    %c0_418 = arith.constant 0 : index
    %305 = vector.load %arg1[%c132, %c0_418] : memref<144x128xf32, #tpu.memory_space<vmem>>, vector<8x128xf32>
    %306 = arith.truncf %305 : vector<8x128xf32> to vector<8x128xbf16>
    %c56_419 = arith.constant 56 : index
    %c2560_420 = arith.constant 2560 : index
    %307 = vector.load %arg5[%c56_419, %c2560_420] : memref<64x3200xbf16, #tpu.memory_space<vmem>>, vector<8x128xbf16>
    tpu.vector_store %arg5[%c56_419, %c2560_420], %306 {strides = array<i32>} : memref<64x3200xbf16, #tpu.memory_space<vmem>>, vector<8x128xbf16>,
    %c133 = arith.constant 133 : index
    %c0_421 = arith.constant 0 : index
    %308 = vector.load %arg1[%c133, %c0_421] : memref<144x128xf32, #tpu.memory_space<vmem>>, vector<8x128xf32>
    %309 = arith.truncf %308 : vector<8x128xf32> to vector<8x128xbf16>
    %c56_422 = arith.constant 56 : index
    %c2688_423 = arith.constant 2688 : index
    %310 = vector.load %arg5[%c56_422, %c2688_423] : memref<64x3200xbf16, #tpu.memory_space<vmem>>, vector<8x128xbf16>
    tpu.vector_store %arg5[%c56_422, %c2688_423], %309 {strides = array<i32>} : memref<64x3200xbf16, #tpu.memory_space<vmem>>, vector<8x128xbf16>,
    %c134 = arith.constant 134 : index
    %c0_424 = arith.constant 0 : index
    %311 = vector.load %arg1[%c134, %c0_424] : memref<144x128xf32, #tpu.memory_space<vmem>>, vector<8x128xf32>
    %312 = arith.truncf %311 : vector<8x128xf32> to vector<8x128xbf16>
    %c56_425 = arith.constant 56 : index
    %c2816_426 = arith.constant 2816 : index
    %313 = vector.load %arg5[%c56_425, %c2816_426] : memref<64x3200xbf16, #tpu.memory_space<vmem>>, vector<8x128xbf16>
    tpu.vector_store %arg5[%c56_425, %c2816_426], %312 {strides = array<i32>} : memref<64x3200xbf16, #tpu.memory_space<vmem>>, vector<8x128xbf16>,
    %c135 = arith.constant 135 : index
    %c0_427 = arith.constant 0 : index
    %314 = vector.load %arg1[%c135, %c0_427] : memref<144x128xf32, #tpu.memory_space<vmem>>, vector<8x128xf32>
    %315 = arith.truncf %314 : vector<8x128xf32> to vector<8x128xbf16>
    %c56_428 = arith.constant 56 : index
    %c2944_429 = arith.constant 2944 : index
    %316 = vector.load %arg5[%c56_428, %c2944_429] : memref<64x3200xbf16, #tpu.memory_space<vmem>>, vector<8x128xbf16>
    tpu.vector_store %arg5[%c56_428, %c2944_429], %315 {strides = array<i32>} : memref<64x3200xbf16, #tpu.memory_space<vmem>>, vector<8x128xbf16>,
    %c136 = arith.constant 136 : index
    %c0_430 = arith.constant 0 : index
    %317 = vector.load %arg1[%c136, %c0_430] : memref<144x128xf32, #tpu.memory_space<vmem>>, vector<8x128xf32>
    %318 = arith.truncf %317 : vector<8x128xf32> to vector<8x128xbf16>
    %c56_431 = arith.constant 56 : index
    %c3072_432 = arith.constant 3072 : index
    %319 = vector.load %arg5[%c56_431, %c3072_432] : memref<64x3200xbf16, #tpu.memory_space<vmem>>, vector<8x128xbf16>
    tpu.vector_store %arg5[%c56_431, %c3072_432], %318 {strides = array<i32>} : memref<64x3200xbf16, #tpu.memory_space<vmem>>, vector<8x128xbf16>,
    %c0_433 = arith.constant 0 : index
    %c0_434 = arith.constant 0 : index
    %320 = vector.load %arg5[%c0_433, %c0_434] : memref<64x3200xbf16, #tpu.memory_space<vmem>>, vector<64x3200xbf16>
    %c0_435 = arith.constant 0 : index
    %c0_436 = arith.constant 0 : index
    %321 = vector.load %arg2[%c0_435, %c0_436] : memref<3200x128xbf16, #tpu.memory_space<vmem>>, vector<3200x128xbf16>
    %cst = arith.constant dense<0.000000e+00> : vector<64x128xf32>
    %322 = tpu.matmul %320, %321, %cst {dimension_numbers = #tpu.dot_dimension_numbers<[1], [0], [0], [1], [0, 0, 1, 1], [], []>} : vector<64x3200xbf16>, vector<3200x128xbf16>, vector<64x128xf32> -> vector<64x128xf32>
    %c0_437 = arith.constant 0 : index
    %c0_438 = arith.constant 0 : index
    %323 = vector.load %arg3[%c0_437, %c0_438] : memref<1x128xf32, #tpu.memory_space<vmem>>, vector<1x128xf32>
    %324 = vector.broadcast %323 : vector<1x128xf32> to vector<64x128xf32>
    %325 = arith.addf %322, %324 : vector<64x128xf32>
    %cst_439 = arith.constant 0.000000e+00 : f32
    %326 = vector.broadcast %cst_439 : f32 to vector<64x128xf32>
    %327 = arith.maximumf %325, %326 : vector<64x128xf32>
    %328 = vector.extract_strided_slice %327 {offsets = [0, 0], sizes = [32, 128], strides = [1, 1]} : vector<64x128xf32> to vector<32x128xf32>
    %329 = vector.extract_strided_slice %327 {offsets = [32, 0], sizes = [32, 128], strides = [1, 1]} : vector<64x128xf32> to vector<32x128xf32>
    %330 = arith.maximumf %328, %329 : vector<32x128xf32>
    %331 = vector.extract_strided_slice %330 {offsets = [0, 0], sizes = [1, 128], strides = [1, 1]} : vector<32x128xf32> to vector<1x128xf32>
    %332 = vector.extract_strided_slice %330 {offsets = [1, 0], sizes = [1, 128], strides = [1, 1]} : vector<32x128xf32> to vector<1x128xf32>
    %333 = arith.maximumf %331, %332 : vector<1x128xf32>
    %334 = vector.extract_strided_slice %330 {offsets = [2, 0], sizes = [1, 128], strides = [1, 1]} : vector<32x128xf32> to vector<1x128xf32>
    %335 = vector.extract_strided_slice %330 {offsets = [3, 0], sizes = [1, 128], strides = [1, 1]} : vector<32x128xf32> to vector<1x128xf32>
    %336 = arith.maximumf %334, %335 : vector<1x128xf32>
    %337 = vector.extract_strided_slice %330 {offsets = [4, 0], sizes = [1, 128], strides = [1, 1]} : vector<32x128xf32> to vector<1x128xf32>
    %338 = vector.extract_strided_slice %330 {offsets = [5, 0], sizes = [1, 128], strides = [1, 1]} : vector<32x128xf32> to vector<1x128xf32>
    %339 = arith.maximumf %337, %338 : vector<1x128xf32>
    %340 = vector.extract_strided_slice %330 {offsets = [6, 0], sizes = [1, 128], strides = [1, 1]} : vector<32x128xf32> to vector<1x128xf32>
    %341 = vector.extract_strided_slice %330 {offsets = [7, 0], sizes = [1, 128], strides = [1, 1]} : vector<32x128xf32> to vector<1x128xf32>
    %342 = arith.maximumf %340, %341 : vector<1x128xf32>
    %343 = vector.extract_strided_slice %330 {offsets = [8, 0], sizes = [1, 128], strides = [1, 1]} : vector<32x128xf32> to vector<1x128xf32>
    %344 = vector.extract_strided_slice %330 {offsets = [9, 0], sizes = [1, 128], strides = [1, 1]} : vector<32x128xf32> to vector<1x128xf32>
    %345 = arith.maximumf %343, %344 : vector<1x128xf32>
    %346 = vector.extract_strided_slice %330 {offsets = [10, 0], sizes = [1, 128], strides = [1, 1]} : vector<32x128xf32> to vector<1x128xf32>
    %347 = vector.extract_strided_slice %330 {offsets = [11, 0], sizes = [1, 128], strides = [1, 1]} : vector<32x128xf32> to vector<1x128xf32>
    %348 = arith.maximumf %346, %347 : vector<1x128xf32>
    %349 = vector.extract_strided_slice %330 {offsets = [12, 0], sizes = [1, 128], strides = [1, 1]} : vector<32x128xf32> to vector<1x128xf32>
    %350 = vector.extract_strided_slice %330 {offsets = [13, 0], sizes = [1, 128], strides = [1, 1]} : vector<32x128xf32> to vector<1x128xf32>
    %351 = arith.maximumf %349, %350 : vector<1x128xf32>
    %352 = vector.extract_strided_slice %330 {offsets = [14, 0], sizes = [1, 128], strides = [1, 1]} : vector<32x128xf32> to vector<1x128xf32>
    %353 = vector.extract_strided_slice %330 {offsets = [15, 0], sizes = [1, 128], strides = [1, 1]} : vector<32x128xf32> to vector<1x128xf32>
    %354 = arith.maximumf %352, %353 : vector<1x128xf32>
    %355 = vector.extract_strided_slice %330 {offsets = [16, 0], sizes = [1, 128], strides = [1, 1]} : vector<32x128xf32> to vector<1x128xf32>
    %356 = vector.extract_strided_slice %330 {offsets = [17, 0], sizes = [1, 128], strides = [1, 1]} : vector<32x128xf32> to vector<1x128xf32>
    %357 = arith.maximumf %355, %356 : vector<1x128xf32>
    %358 = vector.extract_strided_slice %330 {offsets = [18, 0], sizes = [1, 128], strides = [1, 1]} : vector<32x128xf32> to vector<1x128xf32>
    %359 = vector.extract_strided_slice %330 {offsets = [19, 0], sizes = [1, 128], strides = [1, 1]} : vector<32x128xf32> to vector<1x128xf32>
    %360 = arith.maximumf %358, %359 : vector<1x128xf32>
    %361 = vector.extract_strided_slice %330 {offsets = [20, 0], sizes = [1, 128], strides = [1, 1]} : vector<32x128xf32> to vector<1x128xf32>
    %362 = vector.extract_strided_slice %330 {offsets = [21, 0], sizes = [1, 128], strides = [1, 1]} : vector<32x128xf32> to vector<1x128xf32>
    %363 = arith.maximumf %361, %362 : vector<1x128xf32>
    %364 = vector.extract_strided_slice %330 {offsets = [22, 0], sizes = [1, 128], strides = [1, 1]} : vector<32x128xf32> to vector<1x128xf32>
    %365 = vector.extract_strided_slice %330 {offsets = [23, 0], sizes = [1, 128], strides = [1, 1]} : vector<32x128xf32> to vector<1x128xf32>
    %366 = arith.maximumf %364, %365 : vector<1x128xf32>
    %367 = vector.extract_strided_slice %330 {offsets = [24, 0], sizes = [1, 128], strides = [1, 1]} : vector<32x128xf32> to vector<1x128xf32>
    %368 = vector.extract_strided_slice %330 {offsets = [25, 0], sizes = [1, 128], strides = [1, 1]} : vector<32x128xf32> to vector<1x128xf32>
    %369 = arith.maximumf %367, %368 : vector<1x128xf32>
    %370 = vector.extract_strided_slice %330 {offsets = [26, 0], sizes = [1, 128], strides = [1, 1]} : vector<32x128xf32> to vector<1x128xf32>
    %371 = vector.extract_strided_slice %330 {offsets = [27, 0], sizes = [1, 128], strides = [1, 1]} : vector<32x128xf32> to vector<1x128xf32>
    %372 = arith.maximumf %370, %371 : vector<1x128xf32>
    %373 = vector.extract_strided_slice %330 {offsets = [28, 0], sizes = [1, 128], strides = [1, 1]} : vector<32x128xf32> to vector<1x128xf32>
    %374 = vector.extract_strided_slice %330 {offsets = [29, 0], sizes = [1, 128], strides = [1, 1]} : vector<32x128xf32> to vector<1x128xf32>
    %375 = arith.maximumf %373, %374 : vector<1x128xf32>
    %376 = vector.extract_strided_slice %330 {offsets = [30, 0], sizes = [1, 128], strides = [1, 1]} : vector<32x128xf32> to vector<1x128xf32>
    %377 = vector.extract_strided_slice %330 {offsets = [31, 0], sizes = [1, 128], strides = [1, 1]} : vector<32x128xf32> to vector<1x128xf32>
    %378 = arith.maximumf %376, %377 : vector<1x128xf32>
    %379 = tpu.concatenate %333, %336, %339, %342, %345, %348, %351, %354, %357, %360, %363, %366, %369, %372, %375, %378 in 0 : vector<1x128xf32>, vector<1x128xf32>, vector<1x128xf32>, vector<1x128xf32>, vector<1x128xf32>, vector<1x128xf32>, vector<1x128xf32>, vector<1x128xf32>, vector<1x128xf32>, vector<1x128xf32>, vector<1x128xf32>, vector<1x128xf32>, vector<1x128xf32>, vector<1x128xf32>, vector<1x128xf32>, vector<1x128xf32> -> vector<16x128xf32>
    %380 = arith.truncf %379 : vector<16x128xf32> to vector<16x128xbf16>
    %c0_440 = arith.constant 0 : index
    %c0_441 = arith.constant 0 : index
    %381 = vector.load %arg4[%c0_440, %c0_441] : memref<16x128xbf16, #tpu.memory_space<vmem>>, vector<16x128xbf16>
    tpu.vector_store %arg4[%c0_440, %c0_441], %380 {strides = array<i32>} : memref<16x128xbf16, #tpu.memory_space<vmem>>, vector<16x128xbf16>,
    return
  }
  func.func @transform_0(%arg0: i32) -> (i32, i32) {
    %c0_i32 = arith.constant 0 : i32
    %c0_i32_0 = arith.constant 0 : i32
    return %arg0, %c0_i32 : i32, i32
  }
  func.func @transform_1(%arg0: i32) -> (i32, i32) {
    %c0_i32 = arith.constant 0 : i32
    %c0_i32_0 = arith.constant 0 : i32
    %c0_i32_1 = arith.constant 0 : i32
    return %c0_i32, %c0_i32_0 : i32, i32
  }
  func.func @transform_2(%arg0: i32) -> (i32, i32) {
    %c0_i32 = arith.constant 0 : i32
    %c0_i32_0 = arith.constant 0 : i32
    %c0_i32_1 = arith.constant 0 : i32
    return %c0_i32, %c0_i32_0 : i32, i32
  }
  func.func @transform_3(%arg0: i32) -> (i32, i32) {
    %c0_i32 = arith.constant 0 : i32
    %c0_i32_0 = arith.constant 0 : i32
    return %arg0, %c0_i32 : i32, i32
  }
}

module attributes {stable_mosaic.version = 11 : i64} {
  func.func @_fc_fused_kernel(%arg0: i32, %arg1: memref<2x2048xbf16, #tpu.memory_space<vmem>>, %arg2: memref<2048x512xbf16, #tpu.memory_space<vmem>>, %arg3: memref<1x512xf32, #tpu.memory_space<vmem>>, %arg4: memref<512x128xbf16, #tpu.memory_space<vmem>>, %arg5: memref<1x128xf32, #tpu.memory_space<vmem>>, %arg6: memref<2x128xf32, #tpu.memory_space<vmem>>) attributes {dimension_semantics = [#tpu.dimension_semantics<parallel>], iteration_bounds = array<i64: 1>, scalar_prefetch = 0 : i64, scratch_operands = 0 : i64, tpu.core_type = #tpu.core_type<tc>, window_params = [{transform_indices = @transform_0, window_bounds = array<i64: 2, 2048>}, {pipeline_mode = #tpu.pipeline_mode<synchronous>, transform_indices = @transform_1, window_bounds = array<i64: 2048, 512>}, {pipeline_mode = #tpu.pipeline_mode<synchronous>, transform_indices = @transform_2, window_bounds = array<i64: 1, 512>}, {pipeline_mode = #tpu.pipeline_mode<synchronous>, transform_indices = @transform_3, window_bounds = array<i64: 512, 128>}, {pipeline_mode = #tpu.pipeline_mode<synchronous>, transform_indices = @transform_4, window_bounds = array<i64: 1, 128>}, {transform_indices = @transform_5, window_bounds = array<i64: 2, 128>}]} {
    %c0 = arith.constant 0 : index
    %c0_0 = arith.constant 0 : index
    %0 = vector.load %arg1[%c0, %c0_0] : memref<2x2048xbf16, #tpu.memory_space<vmem>>, vector<2x2048xbf16>
    %c0_1 = arith.constant 0 : index
    %c0_2 = arith.constant 0 : index
    %1 = vector.load %arg2[%c0_1, %c0_2] : memref<2048x512xbf16, #tpu.memory_space<vmem>>, vector<2048x512xbf16>
    %cst = arith.constant dense<0.000000e+00> : vector<2x512xf32>
    %2 = tpu.matmul %0, %1, %cst {dimension_numbers = #tpu.dot_dimension_numbers<[1], [0], [0], [1], [0, 0, 1, 1], [], []>} : vector<2x2048xbf16>, vector<2048x512xbf16>, vector<2x512xf32> -> vector<2x512xf32>
    %c0_3 = arith.constant 0 : index
    %c0_4 = arith.constant 0 : index
    %3 = vector.load %arg3[%c0_3, %c0_4] : memref<1x512xf32, #tpu.memory_space<vmem>>, vector<1x512xf32>
    %4 = vector.broadcast %3 : vector<1x512xf32> to vector<2x512xf32>
    %5 = arith.addf %2, %4 : vector<2x512xf32>
    %cst_5 = arith.constant 0.000000e+00 : f32
    %6 = vector.broadcast %cst_5 : f32 to vector<2x512xf32>
    %7 = arith.maximumf %5, %6 : vector<2x512xf32>
    %8 = arith.truncf %7 : vector<2x512xf32> to vector<2x512xbf16>
    %c0_6 = arith.constant 0 : index
    %c0_7 = arith.constant 0 : index
    %9 = vector.load %arg4[%c0_6, %c0_7] : memref<512x128xbf16, #tpu.memory_space<vmem>>, vector<512x128xbf16>
    %cst_8 = arith.constant dense<0.000000e+00> : vector<2x128xf32>
    %10 = tpu.matmul %8, %9, %cst_8 {dimension_numbers = #tpu.dot_dimension_numbers<[1], [0], [0], [1], [0, 0, 1, 1], [], []>} : vector<2x512xbf16>, vector<512x128xbf16>, vector<2x128xf32> -> vector<2x128xf32>
    %c0_9 = arith.constant 0 : index
    %c0_10 = arith.constant 0 : index
    %11 = vector.load %arg5[%c0_9, %c0_10] : memref<1x128xf32, #tpu.memory_space<vmem>>, vector<1x128xf32>
    %12 = vector.broadcast %11 : vector<1x128xf32> to vector<2x128xf32>
    %13 = arith.addf %10, %12 : vector<2x128xf32>
    %c0_11 = arith.constant 0 : index
    %c0_12 = arith.constant 0 : index
    %14 = vector.load %arg6[%c0_11, %c0_12] : memref<2x128xf32, #tpu.memory_space<vmem>>, vector<2x128xf32>
    tpu.vector_store %arg6[%c0_11, %c0_12], %13 {strides = array<i32>} : memref<2x128xf32, #tpu.memory_space<vmem>>, vector<2x128xf32>,
    return
  }
  func.func @transform_0(%arg0: i32) -> (i32, i32) {
    %c0_i32 = arith.constant 0 : i32
    %c0_i32_0 = arith.constant 0 : i32
    return %arg0, %c0_i32 : i32, i32
  }
  func.func @transform_1(%arg0: i32) -> (i32, i32) {
    %c0_i32 = arith.constant 0 : i32
    %c0_i32_0 = arith.constant 0 : i32
    %c0_i32_1 = arith.constant 0 : i32
    return %c0_i32, %c0_i32_0 : i32, i32
  }
  func.func @transform_2(%arg0: i32) -> (i32, i32) {
    %c0_i32 = arith.constant 0 : i32
    %c0_i32_0 = arith.constant 0 : i32
    %c0_i32_1 = arith.constant 0 : i32
    return %c0_i32, %c0_i32_0 : i32, i32
  }
  func.func @transform_3(%arg0: i32) -> (i32, i32) {
    %c0_i32 = arith.constant 0 : i32
    %c0_i32_0 = arith.constant 0 : i32
    %c0_i32_1 = arith.constant 0 : i32
    return %c0_i32, %c0_i32_0 : i32, i32
  }
  func.func @transform_4(%arg0: i32) -> (i32, i32) {
    %c0_i32 = arith.constant 0 : i32
    %c0_i32_0 = arith.constant 0 : i32
    %c0_i32_1 = arith.constant 0 : i32
    return %c0_i32, %c0_i32_0 : i32, i32
  }
  func.func @transform_5(%arg0: i32) -> (i32, i32) {
    %c0_i32 = arith.constant 0 : i32
    %c0_i32_0 = arith.constant 0 : i32
    return %arg0, %c0_i32 : i32, i32
  }
}

</mosaic_0001>

<llo_original>
// kernel: cnn_mnist_forward.3
$region0: #{cnn_mnist_forward.3}
  #allocation0 [shape = 'u32[]', space=smem, size = 0x4, offset = 0x4, fixed_abs, tag = 'smem constant byte address 0x4 - core index']
  #allocation1 [shape = 'u32[144,128]{1,0:T(1,128)}', space=vmem, size = 0x12000, scoped, tag = 'internal scratch']
  %s0 = inlined_call_operand.vmem [shape: bf16[1152,32], index: 0, kind: input, shape index: {}]
  %s1 = inlined_call_operand.vmem [shape: bf16[32,128], index: 1, kind: input, shape index: {}]
  %s2 = inlined_call_operand.vmem [shape: f32[1,128], index: 2, kind: input, shape index: {}]
  %s3 = inlined_call_operand.vmem [shape: f32[288,128], index: 3, kind: output, shape index: {}]
  %s4 = sld [smem:[#allocation0]]
  $region45: #{cnn_mnist_forward.3} parent=0
    _
  %s6 = ssub.s32 1, %s4
  %s7 = scalar_select 0, %s6, %s4
  loop: start=0, step=1, limit=4
  $region2: #{cnn_mnist_forward.3} parent=0 // loop_pre_header
    _
  $region3: #{cnn_mnist_forward.3} parent=0 // loop_header
    %s9 = sphi 0, %s13
    %p10 = scmp.ge.s32.totalorder %s9, 4
    %s19 = sphi 0, %s21
    %s22 = sphi 0, %s19
    %s23 = sphi 0, %s22
    %s39 = sphi 0, %s23
    %s43 = sphi 0, %s43
    %s45 = sphi 0, %s43
    %s46 = sphi 0, %s45
    %s60 = sphi 0, %s46
    %s64 = sphi 0, %s64
    %s66 = sphi 0, %s64
    %s67 = sphi 0, %s66
    %s81 = sphi 0, %s67
    %s87 = sphi 0, %s89
    %s90 = sphi 0, %s87
    %s91 = sphi 0, %s90
    %s107 = sphi 0, %s91
  $region4: #{cnn_mnist_forward.3} parent=0 // loop_header_branch
    %12 = sbr.rel (%p10) target = $region8
  $region5: #{cnn_mnist_forward.3} parent=0 // loop_body
    %s14 = ssub.s32 %s9, 1
    %s15 = ssub.s32 %s9, 2
    %s16 = sadd.s32 %s9, 1
    %s17 = ssub.s32 %s9, %s16
    %p18 = scmp.eq.s32.totalorder %s17, 0
    %s20 = sadd.s32 %s19, 1
    %s21 = scalar_select %p18, %s19, %s20
    %p24 = pneg %p18
    %p25 = scmp.eq.s32.totalorder %s9, 1
    %p26 = por %p24, %p25
    %p27 = scmp.ne.s32.totalorder %s19, %s22
    %p28 = scmp.eq.s32.totalorder %s9, 0
    %p29 = por %p27, %p28
    %p30 = scmp.ne.s32.totalorder %s19, %s22
    %p31 = scmp.eq.s32.totalorder %s14, 1
    %p32 = por %p30, %p31
    %p33 = scmp.ne.s32.totalorder %s22, %s23
    %p34 = scmp.eq.s32.totalorder %s14, 0
    %p35 = por %p33, %p34
    %p36 = scmp.ne.s32.totalorder %s22, %s23
    %p37 = scmp.eq.s32.totalorder %s15, 1
    %p38 = por %p36, %p37
    %p40 = scmp.ne.s32.totalorder %s23, %s39
    %p41 = scmp.eq.s32.totalorder %s15, 0
    %p42 = por %p40, %p41
    %s44 = sadd.s32 %s43, 1
    %p47 = scmp.eq.s32.totalorder %s9, 1
    %p48 = scmp.ne.s32.totalorder %s43, %s45
    %p49 = scmp.eq.s32.totalorder %s9, 0
    %p50 = por %p48, %p49
    %p51 = scmp.ne.s32.totalorder %s43, %s45
    %p52 = scmp.eq.s32.totalorder %s14, 1
    %p53 = por %p51, %p52
    %p54 = scmp.ne.s32.totalorder %s45, %s46
    %p55 = scmp.eq.s32.totalorder %s14, 0
    %p56 = por %p54, %p55
    %p57 = scmp.ne.s32.totalorder %s45, %s46
    %p58 = scmp.eq.s32.totalorder %s15, 1
    %p59 = por %p57, %p58
    %p61 = scmp.ne.s32.totalorder %s46, %s60
    %p62 = scmp.eq.s32.totalorder %s15, 0
    %p63 = por %p61, %p62
    %s65 = sadd.s32 %s64, 1
    %p68 = scmp.eq.s32.totalorder %s9, 1
    %p69 = scmp.ne.s32.totalorder %s64, %s66
    %p70 = scmp.eq.s32.totalorder %s9, 0
    %p71 = por %p69, %p70
    %p72 = scmp.ne.s32.totalorder %s64, %s66
    %p73 = scmp.eq.s32.totalorder %s14, 1
    %p74 = por %p72, %p73
    %p75 = scmp.ne.s32.totalorder %s66, %s67
    %p76 = scmp.eq.s32.totalorder %s14, 0
    %p77 = por %p75, %p76
    %p78 = scmp.ne.s32.totalorder %s66, %s67
    %p79 = scmp.eq.s32.totalorder %s15, 1
    %p80 = por %p78, %p79
    %p82 = scmp.ne.s32.totalorder %s67, %s81
    %p83 = scmp.eq.s32.totalorder %s15, 0
    %p84 = por %p82, %p83
    %s85 = ssub.s32 %s9, %s16
    %p86 = scmp.eq.s32.totalorder %s85, 0
    %s88 = sadd.s32 %s87, 1
    %s89 = scalar_select %p86, %s87, %s88
    %p92 = pneg %p86
    %p93 = scmp.eq.s32.totalorder %s9, 1
    %p94 = por %p92, %p93
    %p95 = scmp.ne.s32.totalorder %s87, %s90
    %p96 = scmp.eq.s32.totalorder %s9, 0
    %p97 = por %p95, %p96
    %p98 = scmp.ne.s32.totalorder %s87, %s90
    %p99 = scmp.eq.s32.totalorder %s14, 1
    %p100 = por %p98, %p99
    %p101 = scmp.ne.s32.totalorder %s90, %s91
    %p102 = scmp.eq.s32.totalorder %s14, 0
    %p103 = por %p101, %p102
    %p104 = scmp.ne.s32.totalorder %s90, %s91
    %p105 = scmp.eq.s32.totalorder %s15, 1
    %p106 = por %p104, %p105
    %p108 = scmp.ne.s32.totalorder %s91, %s107
    %p109 = scmp.eq.s32.totalorder %s15, 0
    %p110 = por %p108, %p109
    %p111 = scmp.le.s32.totalorder 1, %s9
    %p112 = scmp.lt.s32.totalorder %s9, 3
    %p113 = pnand %p111, %p112
    %p114 = pneg %p113
    // Predicated region
    $region9: #{cnn_mnist_forward.3} parent=5 // pred_check
      _
    $region10: #{cnn_mnist_forward.3} parent=5 // pred_check_branch
      %116 = sbr.rel (%p113) target = $region12
    $region11: #{cnn_mnist_forward.3} parent=5 // pred_region
      %s117 = ssub.s32 %s9, 1
      // Predicated region
      $region13: #{cnn_mnist_forward.3} parent=11 // pred_check
        %p118 = pneg %p56
      $region14: #{cnn_mnist_forward.3} parent=11 // pred_check_branch
        %120 = sbr.rel (%p118) target = $region16
      $region15: #{cnn_mnist_forward.3} parent=11 // pred_region
        _
      $region16: #{cnn_mnist_forward.3} parent=11 // pred_fallthru
        _
      // Predicated region
      $region17: #{cnn_mnist_forward.3} parent=11 // pred_check
        %p121 = pneg %p77
      $region18: #{cnn_mnist_forward.3} parent=11 // pred_check_branch
        %123 = sbr.rel (%p121) target = $region20
      $region19: #{cnn_mnist_forward.3} parent=11 // pred_region
        _
      $region20: #{cnn_mnist_forward.3} parent=11 // pred_fallthru
        _
    $region12: #{cnn_mnist_forward.3} parent=5 // pred_fallthru
      _
    %p124 = scmp.lt.s32.totalorder %s9, 2
    // Predicated region
    $region21: #{cnn_mnist_forward.3} parent=5 // pred_check
      %p125 = pneg %p124
    $region22: #{cnn_mnist_forward.3} parent=5 // pred_check_branch
      %127 = sbr.rel (%p125) target = $region24
    $region23: #{cnn_mnist_forward.3} parent=5 // pred_region
      // Predicated region
      $region25: #{cnn_mnist_forward.3} parent=23 // pred_check
        %p128 = pneg %p29
      $region26: #{cnn_mnist_forward.3} parent=23 // pred_check_branch
        %130 = sbr.rel (%p128) target = $region28
      $region27: #{cnn_mnist_forward.3} parent=23 // pred_region
        %s131 = smul.u32 72, %s9
        %p132 = scmp.lt.s32.totalorder %s131, 143
        %s133 = scalar_select %p132, %s131, 143
        %s134 = smul.addr %s133, 4
        %s135 = scalar_lea.vmem %s0, %s134
        %s136 = smul.u32 72, %s9
      $region28: #{cnn_mnist_forward.3} parent=23 // pred_fallthru
        _
    $region24: #{cnn_mnist_forward.3} parent=5 // pred_fallthru
      _
    %p137 = scmp.le.s32.totalorder 1, %s9
    %p138 = scmp.lt.s32.totalorder %s9, 3
    %p139 = pnand %p137, %p138
    %p140 = pneg %p139
    // Predicated region
    $region29: #{cnn_mnist_forward.3} parent=5 // pred_check
      _
    $region30: #{cnn_mnist_forward.3} parent=5 // pred_check_branch
      %142 = sbr.rel (%p139) target = $region32
    $region31: #{cnn_mnist_forward.3} parent=5 // pred_region
      %s143 = ssub.s32 %s9, 1
      %s144 = smul.u32 72, %s14
      %p145 = scmp.lt.s32.totalorder %s144, 143
      %s146 = scalar_select %p145, %s144, 143
      %s147 = smul.addr %s146, 4
      %s148 = scalar_lea.vmem %s0, %s147
      %p149 = pneg %p35
      %p150 = pneg %p32
      %p151 = pneg %p56
      %p152 = pneg %p53
      %p153 = pneg %p77
      %p154 = pneg %p74
      %p155 = pneg %p103
      %p156 = pneg %p100
      %s157 = smul.u32 18, %s14
      %p158 = scmp.lt.s32.totalorder %s157, 35
      %s159 = scalar_select %p158, %s157, 35
      %s160 = smul.addr %s159, 8
      %s161 = scalar_lea.vmem %s3, %s160
      %s162 = smul.u32 72, %s14
      %p163 = scmp.lt.s32.totalorder %s162, 143
      %s164 = scalar_select %p163, %s162, 143
      %s165 = smul.addr %s164, 4
      %s166 = scalar_lea.vmem %s0, %s165
      %s167 = smul.u32 72, %s14
      %s168 = smul.u32 18, %s14
      %p169 = scmp.lt.s32.totalorder %s168, 35
      %s170 = scalar_select %p169, %s168, 35
      %s171 = smul.addr %s170, 8
      %s172 = scalar_lea.vmem %s3, %s171
      %s173 = smul.u32 18, %s14
      %v175 = vld [vmem:[%s166] sm:$0xf]
      %v176 = vld [vmem:[%s166 + $0x4] sm:$0xf]
      %v177 = vld [vmem:[%s166 + $0x8] sm:$0xf]
      %v178 = vld [vmem:[%s166 + $0xc] sm:$0xf]
      %v179 = vld [vmem:[%s166 + $0x10] sm:$0xf]
      %v180 = vld [vmem:[%s166 + $0x14] sm:$0xf]
      %v181 = vld [vmem:[%s166 + $0x18] sm:$0xf]
      %v182 = vld [vmem:[%s166 + $0x1c] sm:$0xf]
      %v183 = vld [vmem:[%s166 + $0x20] sm:$0xf]
      %v184 = vld [vmem:[%s166 + $0x24] sm:$0xf]
      %v185 = vld [vmem:[%s166 + $0x28] sm:$0xf]
      %v186 = vld [vmem:[%s166 + $0x2c] sm:$0xf]
      %v187 = vld [vmem:[%s166 + $0x30] sm:$0xf]
      %v188 = vld [vmem:[%s166 + $0x34] sm:$0xf]
      %v189 = vld [vmem:[%s166 + $0x38] sm:$0xf]
      %v190 = vld [vmem:[%s166 + $0x3c] sm:$0xf]
      %v191 = vld [vmem:[%s166 + $0x40] sm:$0xf]
      %v192 = vld [vmem:[%s166 + $0x44] sm:$0xf]
      %v193 = vld [vmem:[%s166 + $0x48] sm:$0xf]
      %v194 = vld [vmem:[%s166 + $0x4c] sm:$0xf]
      %v195 = vld [vmem:[%s166 + $0x50] sm:$0xf]
      %v196 = vld [vmem:[%s166 + $0x54] sm:$0xf]
      %v197 = vld [vmem:[%s166 + $0x58] sm:$0xf]
      %v198 = vld [vmem:[%s166 + $0x5c] sm:$0xf]
      %v199 = vld [vmem:[%s166 + $0x60] sm:$0xf]
      %v200 = vld [vmem:[%s166 + $0x64] sm:$0xf]
      %v201 = vld [vmem:[%s166 + $0x68] sm:$0xf]
      %v202 = vld [vmem:[%s166 + $0x6c] sm:$0xf]
      %v203 = vld [vmem:[%s166 + $0x70] sm:$0xf]
      %v204 = vld [vmem:[%s166 + $0x74] sm:$0xf]
      %v205 = vld [vmem:[%s166 + $0x78] sm:$0xf]
      %v206 = vld [vmem:[%s166 + $0x7c] sm:$0xf]
      %v207 = vld [vmem:[%s166 + $0x80] sm:$0xf]
      %v208 = vld [vmem:[%s166 + $0x84] sm:$0xf]
      %v209 = vld [vmem:[%s166 + $0x88] sm:$0xf]
      %v210 = vld [vmem:[%s166 + $0x8c] sm:$0xf]
      %v211 = vld [vmem:[%s166 + $0x90] sm:$0xf]
      %v212 = vld [vmem:[%s166 + $0x94] sm:$0xf]
      %v213 = vld [vmem:[%s166 + $0x98] sm:$0xf]
      %v214 = vld [vmem:[%s166 + $0x9c] sm:$0xf]
      %v215 = vld [vmem:[%s166 + $0xa0] sm:$0xf]
      %v216 = vld [vmem:[%s166 + $0xa4] sm:$0xf]
      %v217 = vld [vmem:[%s166 + $0xa8] sm:$0xf]
      %v218 = vld [vmem:[%s166 + $0xac] sm:$0xf]
      %v219 = vld [vmem:[%s166 + $0xb0] sm:$0xf]
      %v220 = vld [vmem:[%s166 + $0xb4] sm:$0xf]
      %v221 = vld [vmem:[%s166 + $0xb8] sm:$0xf]
      %v222 = vld [vmem:[%s166 + $0xbc] sm:$0xf]
      %v223 = vld [vmem:[%s166 + $0xc0] sm:$0xf]
      %v224 = vld [vmem:[%s166 + $0xc4] sm:$0xf]
      %v225 = vld [vmem:[%s166 + $0xc8] sm:$0xf]
      %v226 = vld [vmem:[%s166 + $0xcc] sm:$0xf]
      %v227 = vld [vmem:[%s166 + $0xd0] sm:$0xf]
      %v228 = vld [vmem:[%s166 + $0xd4] sm:$0xf]
      %v229 = vld [vmem:[%s166 + $0xd8] sm:$0xf]
      %v230 = vld [vmem:[%s166 + $0xdc] sm:$0xf]
      %v231 = vld [vmem:[%s166 + $0xe0] sm:$0xf]
      %v232 = vld [vmem:[%s166 + $0xe4] sm:$0xf]
      %v233 = vld [vmem:[%s166 + $0xe8] sm:$0xf]
      %v234 = vld [vmem:[%s166 + $0xec] sm:$0xf]
      %v235 = vld [vmem:[%s166 + $0xf0] sm:$0xf]
      %v236 = vld [vmem:[%s166 + $0xf4] sm:$0xf]
      %v237 = vld [vmem:[%s166 + $0xf8] sm:$0xf]
      %v238 = vld [vmem:[%s166 + $0xfc] sm:$0xf]
      %v239 = vld [vmem:[%s166 + $0x100] sm:$0xf]
      %v240 = vld [vmem:[%s166 + $0x104] sm:$0xf]
      %v241 = vld [vmem:[%s166 + $0x108] sm:$0xf]
      %v242 = vld [vmem:[%s166 + $0x10c] sm:$0xf]
      %v243 = vld [vmem:[%s166 + $0x110] sm:$0xf]
      %v244 = vld [vmem:[%s166 + $0x114] sm:$0xf]
      %v245 = vld [vmem:[%s166 + $0x118] sm:$0xf]
      %v246 = vld [vmem:[%s166 + $0x11c] sm:$0xf]
      %v247 = vld [vmem:[%s1] sm:$0xf]
      %v248 = vld [vmem:[%s1 + $0x4] sm:$0xf]
      %v249 = vld [vmem:[%s1 + $0x8] sm:$0xf]
      %v250 = vld [vmem:[%s1 + $0xc] sm:$0xf]
      %v251 = vld [vmem:[%s2] sm:$0x1]
      %v253 = vlaneseq
      %v254 = vshrl.u32 %v253, 7
      %v255 = vsub.s32 0, %v254
      %v256 = vrot.slane %v251, %v255
      %v330 = vunpack.c.l.b16 %v175
      %v331 = vunpack.c.l.b16 %v176
      %v332 = vunpack.c.l.b16 %v177
      %v333 = vunpack.c.l.b16 %v178
      %v334 = vunpack.c.l.b16 %v179
      %v335 = vunpack.c.l.b16 %v180
      %v336 = vunpack.c.l.b16 %v181
      %v337 = vunpack.c.l.b16 %v182
      %v338 = vunpack.c.l.b16 %v183
      %v339 = vunpack.c.l.b16 %v184
      %v340 = vunpack.c.l.b16 %v185
      %v341 = vunpack.c.l.b16 %v186
      %v342 = vunpack.c.l.b16 %v187
      %v343 = vunpack.c.l.b16 %v188
      %v344 = vunpack.c.l.b16 %v189
      %v345 = vunpack.c.l.b16 %v190
      %v346 = vunpack.c.l.b16 %v191
      %v347 = vunpack.c.l.b16 %v192
      %v348 = vunpack.c.l.b16 %v193
      %v349 = vunpack.c.l.b16 %v194
      %v350 = vunpack.c.l.b16 %v195
      %v351 = vunpack.c.l.b16 %v196
      %v352 = vunpack.c.l.b16 %v197
      %v353 = vunpack.c.l.b16 %v198
      %v354 = vunpack.c.l.b16 %v199
      %v355 = vunpack.c.l.b16 %v200
      %v356 = vunpack.c.l.b16 %v201
      %v357 = vunpack.c.l.b16 %v202
      %v358 = vunpack.c.l.b16 %v203
      %v359 = vunpack.c.l.b16 %v204
      %v360 = vunpack.c.l.b16 %v205
      %v361 = vunpack.c.l.b16 %v206
      %v362 = vunpack.c.l.b16 %v207
      %v363 = vunpack.c.l.b16 %v208
      %v364 = vunpack.c.l.b16 %v209
      %v365 = vunpack.c.l.b16 %v210
      %v366 = vunpack.c.l.b16 %v211
      %v367 = vunpack.c.l.b16 %v212
      %v368 = vunpack.c.l.b16 %v213
      %v369 = vunpack.c.l.b16 %v214
      %v370 = vunpack.c.l.b16 %v215
      %v371 = vunpack.c.l.b16 %v216
      %v372 = vunpack.c.l.b16 %v217
      %v373 = vunpack.c.l.b16 %v218
      %v374 = vunpack.c.l.b16 %v219
      %v375 = vunpack.c.l.b16 %v220
      %v376 = vunpack.c.l.b16 %v221
      %v377 = vunpack.c.l.b16 %v222
      %v378 = vunpack.c.l.b16 %v223
      %v379 = vunpack.c.l.b16 %v224
      %v380 = vunpack.c.l.b16 %v225
      %v381 = vunpack.c.l.b16 %v226
      %v382 = vunpack.c.l.b16 %v227
      %v383 = vunpack.c.l.b16 %v228
      %v384 = vunpack.c.l.b16 %v229
      %v385 = vunpack.c.l.b16 %v230
      %v386 = vunpack.c.l.b16 %v231
      %v387 = vunpack.c.l.b16 %v232
      %v388 = vunpack.c.l.b16 %v233
      %v389 = vunpack.c.l.b16 %v234
      %v390 = vunpack.c.l.b16 %v235
      %v391 = vunpack.c.l.b16 %v236
      %v392 = vunpack.c.l.b16 %v237
      %v393 = vunpack.c.l.b16 %v238
      %v394 = vunpack.c.l.b16 %v239
      %v395 = vunpack.c.l.b16 %v240
      %v396 = vunpack.c.l.b16 %v241
      %v397 = vunpack.c.l.b16 %v242
      %v398 = vunpack.c.l.b16 %v243
      %v399 = vunpack.c.l.b16 %v244
      %v400 = vunpack.c.l.b16 %v245
      %v401 = vunpack.c.l.b16 %v246
      %v402 = vpack.c.b16 %v331, %v330
      %v403 = vpack.c.b16 %v333, %v332
      %v404 = vpack.c.b16 %v335, %v334
      %v405 = vpack.c.b16 %v337, %v336
      %v406 = vpack.c.b16 %v339, %v338
      %v407 = vpack.c.b16 %v341, %v340
      %v408 = vpack.c.b16 %v343, %v342
      %v409 = vpack.c.b16 %v345, %v344
      %v410 = vpack.c.b16 %v347, %v346
      %v411 = vpack.c.b16 %v349, %v348
      %v412 = vpack.c.b16 %v351, %v350
      %v413 = vpack.c.b16 %v353, %v352
      %v414 = vpack.c.b16 %v355, %v354
      %v415 = vpack.c.b16 %v357, %v356
      %v416 = vpack.c.b16 %v359, %v358
      %v417 = vpack.c.b16 %v361, %v360
      %v418 = vpack.c.b16 %v363, %v362
      %v419 = vpack.c.b16 %v365, %v364
      %v420 = vpack.c.b16 %v367, %v366
      %v421 = vpack.c.b16 %v369, %v368
      %v422 = vpack.c.b16 %v371, %v370
      %v423 = vpack.c.b16 %v373, %v372
      %v424 = vpack.c.b16 %v375, %v374
      %v425 = vpack.c.b16 %v377, %v376
      %v426 = vpack.c.b16 %v379, %v378
      %v427 = vpack.c.b16 %v381, %v380
      %v428 = vpack.c.b16 %v383, %v382
      %v429 = vpack.c.b16 %v385, %v384
      %v430 = vpack.c.b16 %v387, %v386
      %v431 = vpack.c.b16 %v389, %v388
      %v432 = vpack.c.b16 %v391, %v390
      %v433 = vpack.c.b16 %v393, %v392
      %v434 = vpack.c.b16 %v395, %v394
      %v435 = vpack.c.b16 %v397, %v396
      %v436 = vpack.c.b16 %v399, %v398
      %v437 = vpack.c.b16 %v401, %v400
      %v442 = vunpack.c.l.b16 %v247
      %v443 = vunpack.c.l.b16 %v248
      %v444 = vunpack.c.l.b16 %v249
      %v445 = vunpack.c.l.b16 %v250
      %v446 = vpack.c.b16 %v443, %v442
      %v447 = vpack.c.b16 %v445, %v444
      %vm450 = vcmask 261120
      %v452 = vsel %vm450, %v402, 0
      %v455 = vsel %vm450, %v403, 0
      %v458 = vsel %vm450, %v404, 0
      %v461 = vsel %vm450, %v405, 0
      %v464 = vsel %vm450, %v406, 0
      %v467 = vsel %vm450, %v407, 0
      %v470 = vsel %vm450, %v408, 0
      %v473 = vsel %vm450, %v409, 0
      %v476 = vsel %vm450, %v410, 0
      %v479 = vsel %vm450, %v411, 0
      %v482 = vsel %vm450, %v412, 0
      %v485 = vsel %vm450, %v413, 0
      %v488 = vsel %vm450, %v414, 0
      %v491 = vsel %vm450, %v415, 0
      %v494 = vsel %vm450, %v416, 0
      %v497 = vsel %vm450, %v417, 0
      %v500 = vsel %vm450, %v418, 0
      %v503 = vsel %vm450, %v419, 0
      %v506 = vsel %vm450, %v420, 0
      %v509 = vsel %vm450, %v421, 0
      %v512 = vsel %vm450, %v422, 0
      %v515 = vsel %vm450, %v423, 0
      %v518 = vsel %vm450, %v424, 0
      %v521 = vsel %vm450, %v425, 0
      %v524 = vsel %vm450, %v426, 0
      %v527 = vsel %vm450, %v427, 0
      %v530 = vsel %vm450, %v428, 0
      %v533 = vsel %vm450, %v429, 0
      %v536 = vsel %vm450, %v430, 0
      %v539 = vsel %vm450, %v431, 0
      %v542 = vsel %vm450, %v432, 0
      %v545 = vsel %vm450, %v433, 0
      %v548 = vsel %vm450, %v434, 0
      %v551 = vsel %vm450, %v435, 0
      %v554 = vsel %vm450, %v436, 0
      %v557 = vsel %vm450, %v437, 0
      %559 = vmatprep.subr.bf16.mxu0 0
      %560 = vmatpush1.bf16.msra.mxu0 %v446
      %561 = vmatprep.subr.bf16.mxu0 0
      %562 = vmatpush1.bf16.msra.mxu0 %v447
      %563 = vmatprep.subr.bf16.mxu0 0
      %564 = vmatpush1.bf16.msra.mxu0 0
      %565 = vmatprep.subr.bf16.mxu0 0
      %566 = vmatpush1.bf16.msra.mxu0 0
      %567 = vmatprep.subr.bf16.mxu0 0
      %568 = vmatpush1.bf16.msra.mxu0 0
      %569 = vmatprep.subr.bf16.mxu0 0
      %570 = vmatpush1.bf16.msra.mxu0 0
      %571 = vmatprep.subr.bf16.mxu0 0
      %572 = vmatpush1.bf16.msra.mxu0 0
      %573 = vmatprep.subr.bf16.mxu0 0
      %574 = vmatpush1.bf16.msra.mxu0 0
      %575 = vmatprep.subr.bf16.mxu0 0
      %576 = vmatpush1.bf16.msra.mxu0 0
      %577 = vmatprep.subr.bf16.mxu0 0
      %578 = vmatpush1.bf16.msra.mxu0 0
      %579 = vmatprep.subr.bf16.mxu0 0
      %580 = vmatpush1.bf16.msra.mxu0 0
      %581 = vmatprep.subr.bf16.mxu0 0
      %582 = vmatpush1.bf16.msra.mxu0 0
      %583 = vmatprep.subr.bf16.mxu0 0
      %584 = vmatpush1.bf16.msra.mxu0 0
      %585 = vmatprep.subr.bf16.mxu0 0
      %586 = vmatpush1.bf16.msra.mxu0 0
      %587 = vmatprep.subr.bf16.mxu0 0
      %588 = vmatpush1.bf16.msra.mxu0 0
      %589 = vmatprep.subr.bf16.mxu0 0
      %590 = vmatpush1.bf16.msra.mxu0 0
      %591 = vmatprep.mubr.bf16.mxu0 0
      %592 = vmatmul.mubr.bf16.gmra.mrb[0].mxu0 %v452
      %v593 = vpop.f32.mrb[0].mxu0
      %v594 = vadd.f32 %v256, %v593
      %v595 = vpop.f32.mrb[0].mxu0
      %v596 = vpop.f32.mrb[0].mxu0
      %v597 = vadd.f32 %v256, %v596
      %v598 = vpop.f32.mrb[0].mxu0
      %599 = vmatprep.mubr.bf16.mxu0 0
      %600 = vmatmul.mubr.bf16.gmra.mrb[0].mxu0 %v455
      %v601 = vpop.f32.mrb[0].mxu0
      %v602 = vadd.f32 %v256, %v601
      %v603 = vpop.f32.mrb[0].mxu0
      %v604 = vpop.f32.mrb[0].mxu0
      %v605 = vadd.f32 %v256, %v604
      %v606 = vpop.f32.mrb[0].mxu0
      %607 = vmatprep.mubr.bf16.mxu0 0
      %608 = vmatmul.mubr.bf16.gmra.mrb[0].mxu0 %v458
      %v609 = vpop.f32.mrb[0].mxu0
      %v610 = vadd.f32 %v256, %v609
      %v611 = vpop.f32.mrb[0].mxu0
      %v612 = vpop.f32.mrb[0].mxu0
      %v613 = vadd.f32 %v256, %v612
      %v614 = vpop.f32.mrb[0].mxu0
      %615 = vmatprep.mubr.bf16.mxu0 0
      %616 = vmatmul.mubr.bf16.gmra.mrb[0].mxu0 %v461
      %v617 = vpop.f32.mrb[0].mxu0
      %v618 = vadd.f32 %v256, %v617
      %v619 = vpop.f32.mrb[0].mxu0
      %v620 = vpop.f32.mrb[0].mxu0
      %v621 = vadd.f32 %v256, %v620
      %v622 = vpop.f32.mrb[0].mxu0
      %623 = vmatprep.mubr.bf16.mxu0 0
      %624 = vmatmul.mubr.bf16.gmra.mrb[0].mxu0 %v464
      %v625 = vpop.f32.mrb[0].mxu0
      %v626 = vadd.f32 %v256, %v625
      %v627 = vpop.f32.mrb[0].mxu0
      %v628 = vpop.f32.mrb[0].mxu0
      %v629 = vadd.f32 %v256, %v628
      %v630 = vpop.f32.mrb[0].mxu0
      %631 = vmatprep.mubr.bf16.mxu0 0
      %632 = vmatmul.mubr.bf16.gmra.mrb[0].mxu0 %v467
      %v633 = vpop.f32.mrb[0].mxu0
      %v634 = vadd.f32 %v256, %v633
      %v635 = vpop.f32.mrb[0].mxu0
      %v636 = vpop.f32.mrb[0].mxu0
      %v637 = vadd.f32 %v256, %v636
      %v638 = vpop.f32.mrb[0].mxu0
      %639 = vmatprep.mubr.bf16.mxu0 0
      %640 = vmatmul.mubr.bf16.gmra.mrb[0].mxu0 %v470
      %v641 = vpop.f32.mrb[0].mxu0
      %v642 = vadd.f32 %v256, %v641
      %v643 = vpop.f32.mrb[0].mxu0
      %v644 = vpop.f32.mrb[0].mxu0
      %v645 = vadd.f32 %v256, %v644
      %v646 = vpop.f32.mrb[0].mxu0
      %647 = vmatprep.mubr.bf16.mxu0 0
      %648 = vmatmul.mubr.bf16.gmra.mrb[0].mxu0 %v473
      %v649 = vpop.f32.mrb[0].mxu0
      %v650 = vadd.f32 %v256, %v649
      %v651 = vpop.f32.mrb[0].mxu0
      %v652 = vpop.f32.mrb[0].mxu0
      %v653 = vadd.f32 %v256, %v652
      %v654 = vpop.f32.mrb[0].mxu0
      %655 = vmatprep.mubr.bf16.mxu0 0
      %656 = vmatmul.mubr.bf16.gmra.mrb[0].mxu0 %v476
      %v657 = vpop.f32.mrb[0].mxu0
      %v658 = vadd.f32 %v256, %v657
      %v659 = vpop.f32.mrb[0].mxu0
      %v660 = vpop.f32.mrb[0].mxu0
      %v661 = vadd.f32 %v256, %v660
      %v662 = vpop.f32.mrb[0].mxu0
      %663 = vmatprep.mubr.bf16.mxu0 0
      %664 = vmatmul.mubr.bf16.gmra.mrb[0].mxu0 %v479
      %v665 = vpop.f32.mrb[0].mxu0
      %v666 = vadd.f32 %v256, %v665
      %v667 = vpop.f32.mrb[0].mxu0
      %v668 = vpop.f32.mrb[0].mxu0
      %v669 = vadd.f32 %v256, %v668
      %v670 = vpop.f32.mrb[0].mxu0
      %671 = vmatprep.mubr.bf16.mxu0 0
      %672 = vmatmul.mubr.bf16.gmra.mrb[0].mxu0 %v482
      %v673 = vpop.f32.mrb[0].mxu0
      %v674 = vadd.f32 %v256, %v673
      %v675 = vpop.f32.mrb[0].mxu0
      %v676 = vpop.f32.mrb[0].mxu0
      %v677 = vadd.f32 %v256, %v676
      %v678 = vpop.f32.mrb[0].mxu0
      %679 = vmatprep.mubr.bf16.mxu0 0
      %680 = vmatmul.mubr.bf16.gmra.mrb[0].mxu0 %v485
      %v681 = vpop.f32.mrb[0].mxu0
      %v682 = vadd.f32 %v256, %v681
      %v683 = vpop.f32.mrb[0].mxu0
      %v684 = vpop.f32.mrb[0].mxu0
      %v685 = vadd.f32 %v256, %v684
      %v686 = vpop.f32.mrb[0].mxu0
      %687 = vmatprep.mubr.bf16.mxu0 0
      %688 = vmatmul.mubr.bf16.gmra.mrb[0].mxu0 %v488
      %v689 = vpop.f32.mrb[0].mxu0
      %v690 = vadd.f32 %v256, %v689
      %v691 = vpop.f32.mrb[0].mxu0
      %v692 = vpop.f32.mrb[0].mxu0
      %v693 = vadd.f32 %v256, %v692
      %v694 = vpop.f32.mrb[0].mxu0
      %695 = vmatprep.mubr.bf16.mxu0 0
      %696 = vmatmul.mubr.bf16.gmra.mrb[0].mxu0 %v491
      %v697 = vpop.f32.mrb[0].mxu0
      %v698 = vadd.f32 %v256, %v697
      %v699 = vpop.f32.mrb[0].mxu0
      %v700 = vpop.f32.mrb[0].mxu0
      %v701 = vadd.f32 %v256, %v700
      %v702 = vpop.f32.mrb[0].mxu0
      %703 = vmatprep.mubr.bf16.mxu0 0
      %704 = vmatmul.mubr.bf16.gmra.mrb[0].mxu0 %v494
      %v705 = vpop.f32.mrb[0].mxu0
      %v706 = vadd.f32 %v256, %v705
      %v707 = vpop.f32.mrb[0].mxu0
      %v708 = vpop.f32.mrb[0].mxu0
      %v709 = vadd.f32 %v256, %v708
      %v710 = vpop.f32.mrb[0].mxu0
      %711 = vmatprep.mubr.bf16.mxu0 0
      %712 = vmatmul.mubr.bf16.gmra.mrb[0].mxu0 %v497
      %v713 = vpop.f32.mrb[0].mxu0
      %v714 = vadd.f32 %v256, %v713
      %v715 = vpop.f32.mrb[0].mxu0
      %v716 = vpop.f32.mrb[0].mxu0
      %v717 = vadd.f32 %v256, %v716
      %v718 = vpop.f32.mrb[0].mxu0
      %719 = vmatprep.mubr.bf16.mxu0 0
      %720 = vmatmul.mubr.bf16.gmra.mrb[0].mxu0 %v500
      %v721 = vpop.f32.mrb[0].mxu0
      %v722 = vadd.f32 %v256, %v721
      %v723 = vpop.f32.mrb[0].mxu0
      %v724 = vpop.f32.mrb[0].mxu0
      %v725 = vadd.f32 %v256, %v724
      %v726 = vpop.f32.mrb[0].mxu0
      %727 = vmatprep.mubr.bf16.mxu0 0
      %728 = vmatmul.mubr.bf16.gmra.mrb[0].mxu0 %v503
      %v729 = vpop.f32.mrb[0].mxu0
      %v730 = vadd.f32 %v256, %v729
      %v731 = vpop.f32.mrb[0].mxu0
      %v732 = vpop.f32.mrb[0].mxu0
      %v733 = vadd.f32 %v256, %v732
      %v734 = vpop.f32.mrb[0].mxu0
      %735 = vmatprep.mubr.bf16.mxu0 0
      %736 = vmatmul.mubr.bf16.gmra.mrb[0].mxu0 %v506
      %v737 = vpop.f32.mrb[0].mxu0
      %v738 = vadd.f32 %v256, %v737
      %v739 = vpop.f32.mrb[0].mxu0
      %v740 = vpop.f32.mrb[0].mxu0
      %v741 = vadd.f32 %v256, %v740
      %v742 = vpop.f32.mrb[0].mxu0
      %743 = vmatprep.mubr.bf16.mxu0 0
      %744 = vmatmul.mubr.bf16.gmra.mrb[0].mxu0 %v509
      %v745 = vpop.f32.mrb[0].mxu0
      %v746 = vadd.f32 %v256, %v745
      %v747 = vpop.f32.mrb[0].mxu0
      %v748 = vpop.f32.mrb[0].mxu0
      %v749 = vadd.f32 %v256, %v748
      %v750 = vpop.f32.mrb[0].mxu0
      %751 = vmatprep.mubr.bf16.mxu0 0
      %752 = vmatmul.mubr.bf16.gmra.mrb[0].mxu0 %v512
      %v753 = vpop.f32.mrb[0].mxu0
      %v754 = vadd.f32 %v256, %v753
      %v755 = vpop.f32.mrb[0].mxu0
      %v756 = vpop.f32.mrb[0].mxu0
      %v757 = vadd.f32 %v256, %v756
      %v758 = vpop.f32.mrb[0].mxu0
      %759 = vmatprep.mubr.bf16.mxu0 0
      %760 = vmatmul.mubr.bf16.gmra.mrb[0].mxu0 %v515
      %v761 = vpop.f32.mrb[0].mxu0
      %v762 = vadd.f32 %v256, %v761
      %v763 = vpop.f32.mrb[0].mxu0
      %v764 = vpop.f32.mrb[0].mxu0
      %v765 = vadd.f32 %v256, %v764
      %v766 = vpop.f32.mrb[0].mxu0
      %767 = vmatprep.mubr.bf16.mxu0 0
      %768 = vmatmul.mubr.bf16.gmra.mrb[0].mxu0 %v518
      %v769 = vpop.f32.mrb[0].mxu0
      %v770 = vadd.f32 %v256, %v769
      %v771 = vpop.f32.mrb[0].mxu0
      %v772 = vpop.f32.mrb[0].mxu0
      %v773 = vadd.f32 %v256, %v772
      %v774 = vpop.f32.mrb[0].mxu0
      %775 = vmatprep.mubr.bf16.mxu0 0
      %776 = vmatmul.mubr.bf16.gmra.mrb[0].mxu0 %v521
      %v777 = vpop.f32.mrb[0].mxu0
      %v778 = vadd.f32 %v256, %v777
      %v779 = vpop.f32.mrb[0].mxu0
      %v780 = vpop.f32.mrb[0].mxu0
      %v781 = vadd.f32 %v256, %v780
      %v782 = vpop.f32.mrb[0].mxu0
      %783 = vmatprep.mubr.bf16.mxu0 0
      %784 = vmatmul.mubr.bf16.gmra.mrb[0].mxu0 %v524
      %v785 = vpop.f32.mrb[0].mxu0
      %v786 = vadd.f32 %v256, %v785
      %v787 = vpop.f32.mrb[0].mxu0
      %v788 = vpop.f32.mrb[0].mxu0
      %v789 = vadd.f32 %v256, %v788
      %v790 = vpop.f32.mrb[0].mxu0
      %791 = vmatprep.mubr.bf16.mxu0 0
      %792 = vmatmul.mubr.bf16.gmra.mrb[0].mxu0 %v527
      %v793 = vpop.f32.mrb[0].mxu0
      %v794 = vadd.f32 %v256, %v793
      %v795 = vpop.f32.mrb[0].mxu0
      %v796 = vpop.f32.mrb[0].mxu0
      %v797 = vadd.f32 %v256, %v796
      %v798 = vpop.f32.mrb[0].mxu0
      %799 = vmatprep.mubr.bf16.mxu0 0
      %800 = vmatmul.mubr.bf16.gmra.mrb[0].mxu0 %v530
      %v801 = vpop.f32.mrb[0].mxu0
      %v802 = vadd.f32 %v256, %v801
      %v803 = vpop.f32.mrb[0].mxu0
      %v804 = vpop.f32.mrb[0].mxu0
      %v805 = vadd.f32 %v256, %v804
      %v806 = vpop.f32.mrb[0].mxu0
      %807 = vmatprep.mubr.bf16.mxu0 0
      %808 = vmatmul.mubr.bf16.gmra.mrb[0].mxu0 %v533
      %v809 = vpop.f32.mrb[0].mxu0
      %v810 = vadd.f32 %v256, %v809
      %v811 = vpop.f32.mrb[0].mxu0
      %v812 = vpop.f32.mrb[0].mxu0
      %v813 = vadd.f32 %v256, %v812
      %v814 = vpop.f32.mrb[0].mxu0
      %815 = vmatprep.mubr.bf16.mxu0 0
      %816 = vmatmul.mubr.bf16.gmra.mrb[0].mxu0 %v536
      %v817 = vpop.f32.mrb[0].mxu0
      %v818 = vadd.f32 %v256, %v817
      %v819 = vpop.f32.mrb[0].mxu0
      %v820 = vpop.f32.mrb[0].mxu0
      %v821 = vadd.f32 %v256, %v820
      %v822 = vpop.f32.mrb[0].mxu0
      %823 = vmatprep.mubr.bf16.mxu0 0
      %824 = vmatmul.mubr.bf16.gmra.mrb[0].mxu0 %v539
      %v825 = vpop.f32.mrb[0].mxu0
      %v826 = vadd.f32 %v256, %v825
      %v827 = vpop.f32.mrb[0].mxu0
      %v828 = vpop.f32.mrb[0].mxu0
      %v829 = vadd.f32 %v256, %v828
      %v830 = vpop.f32.mrb[0].mxu0
      %831 = vmatprep.mubr.bf16.mxu0 0
      %832 = vmatmul.mubr.bf16.gmra.mrb[0].mxu0 %v542
      %v833 = vpop.f32.mrb[0].mxu0
      %v834 = vadd.f32 %v256, %v833
      %v835 = vpop.f32.mrb[0].mxu0
      %v836 = vpop.f32.mrb[0].mxu0
      %v837 = vadd.f32 %v256, %v836
      %v838 = vpop.f32.mrb[0].mxu0
      %839 = vmatprep.mubr.bf16.mxu0 0
      %840 = vmatmul.mubr.bf16.gmra.mrb[0].mxu0 %v545
      %v841 = vpop.f32.mrb[0].mxu0
      %v842 = vadd.f32 %v256, %v841
      %v843 = vpop.f32.mrb[0].mxu0
      %v844 = vpop.f32.mrb[0].mxu0
      %v845 = vadd.f32 %v256, %v844
      %v846 = vpop.f32.mrb[0].mxu0
      %847 = vmatprep.mubr.bf16.mxu0 0
      %848 = vmatmul.mubr.bf16.gmra.mrb[0].mxu0 %v548
      %v849 = vpop.f32.mrb[0].mxu0
      %v850 = vadd.f32 %v256, %v849
      %v851 = vpop.f32.mrb[0].mxu0
      %v852 = vpop.f32.mrb[0].mxu0
      %v853 = vadd.f32 %v256, %v852
      %v854 = vpop.f32.mrb[0].mxu0
      %855 = vmatprep.mubr.bf16.mxu0 0
      %856 = vmatmul.mubr.bf16.gmra.mrb[0].mxu0 %v551
      %v857 = vpop.f32.mrb[0].mxu0
      %v858 = vadd.f32 %v256, %v857
      %v859 = vpop.f32.mrb[0].mxu0
      %v860 = vpop.f32.mrb[0].mxu0
      %v861 = vadd.f32 %v256, %v860
      %v862 = vpop.f32.mrb[0].mxu0
      %863 = vmatprep.mubr.bf16.mxu0 0
      %864 = vmatmul.mubr.bf16.gmra.mrb[0].mxu0 %v554
      %v865 = vpop.f32.mrb[0].mxu0
      %v866 = vadd.f32 %v256, %v865
      %v867 = vpop.f32.mrb[0].mxu0
      %v868 = vpop.f32.mrb[0].mxu0
      %v869 = vadd.f32 %v256, %v868
      %v870 = vpop.f32.mrb[0].mxu0
      %871 = vmatprep.mubr.bf16.mxu0 0
      %872 = vmatmul.mubr.bf16.gmra.mrb[0].mxu0 %v557
      %v873 = vpop.f32.mrb[0].mxu0
      %v874 = vadd.f32 %v256, %v873
      %v875 = vpop.f32.mrb[0].mxu0
      %v876 = vpop.f32.mrb[0].mxu0
      %v877 = vadd.f32 %v256, %v876
      %v878 = vpop.f32.mrb[0].mxu0
      %879 = vdwg.mxu0
      %v880 = vmax.f32 %v594, 0.0
      %v881 = vmax.f32 %v597, 0.0
      %v882 = vmax.f32 %v602, 0.0
      %v883 = vmax.f32 %v605, 0.0
      %v884 = vmax.f32 %v610, 0.0
      %v885 = vmax.f32 %v613, 0.0
      %v886 = vmax.f32 %v618, 0.0
      %v887 = vmax.f32 %v621, 0.0
      %v888 = vmax.f32 %v626, 0.0
      %v889 = vmax.f32 %v629, 0.0
      %v890 = vmax.f32 %v634, 0.0
      %v891 = vmax.f32 %v637, 0.0
      %v892 = vmax.f32 %v642, 0.0
      %v893 = vmax.f32 %v645, 0.0
      %v894 = vmax.f32 %v650, 0.0
      %v895 = vmax.f32 %v653, 0.0
      %v896 = vmax.f32 %v658, 0.0
      %v897 = vmax.f32 %v661, 0.0
      %v898 = vmax.f32 %v666, 0.0
      %v899 = vmax.f32 %v669, 0.0
      %v900 = vmax.f32 %v674, 0.0
      %v901 = vmax.f32 %v677, 0.0
      %v902 = vmax.f32 %v682, 0.0
      %v903 = vmax.f32 %v685, 0.0
      %v904 = vmax.f32 %v690, 0.0
      %v905 = vmax.f32 %v693, 0.0
      %v906 = vmax.f32 %v698, 0.0
      %v907 = vmax.f32 %v701, 0.0
      %v908 = vmax.f32 %v706, 0.0
      %v909 = vmax.f32 %v709, 0.0
      %v910 = vmax.f32 %v714, 0.0
      %v911 = vmax.f32 %v717, 0.0
      %v912 = vmax.f32 %v722, 0.0
      %v913 = vmax.f32 %v725, 0.0
      %v914 = vmax.f32 %v730, 0.0
      %v915 = vmax.f32 %v733, 0.0
      %v916 = vmax.f32 %v738, 0.0
      %v917 = vmax.f32 %v741, 0.0
      %v918 = vmax.f32 %v746, 0.0
      %v919 = vmax.f32 %v749, 0.0
      %v920 = vmax.f32 %v754, 0.0
      %v921 = vmax.f32 %v757, 0.0
      %v922 = vmax.f32 %v762, 0.0
      %v923 = vmax.f32 %v765, 0.0
      %v924 = vmax.f32 %v770, 0.0
      %v925 = vmax.f32 %v773, 0.0
      %v926 = vmax.f32 %v778, 0.0
      %v927 = vmax.f32 %v781, 0.0
      %v928 = vmax.f32 %v786, 0.0
      %v929 = vmax.f32 %v789, 0.0
      %v930 = vmax.f32 %v794, 0.0
      %v931 = vmax.f32 %v797, 0.0
      %v932 = vmax.f32 %v802, 0.0
      %v933 = vmax.f32 %v805, 0.0
      %v934 = vmax.f32 %v810, 0.0
      %v935 = vmax.f32 %v813, 0.0
      %v936 = vmax.f32 %v818, 0.0
      %v937 = vmax.f32 %v821, 0.0
      %v938 = vmax.f32 %v826, 0.0
      %v939 = vmax.f32 %v829, 0.0
      %v940 = vmax.f32 %v834, 0.0
      %v941 = vmax.f32 %v837, 0.0
      %v942 = vmax.f32 %v842, 0.0
      %v943 = vmax.f32 %v845, 0.0
      %v944 = vmax.f32 %v850, 0.0
      %v945 = vmax.f32 %v853, 0.0
      %v946 = vmax.f32 %v858, 0.0
      %v947 = vmax.f32 %v861, 0.0
      %v948 = vmax.f32 %v866, 0.0
      %v949 = vmax.f32 %v869, 0.0
      %v950 = vmax.f32 %v874, 0.0
      %v951 = vmax.f32 %v877, 0.0
      %v952 = vmax.f32 %v880, %v898
      %v953 = vmax.f32 %v881, %v899
      %v954 = vmax.f32 %v882, %v900
      %v955 = vmax.f32 %v883, %v901
      %v956 = vmax.f32 %v884, %v902
      %v957 = vmax.f32 %v885, %v903
      %v958 = vmax.f32 %v886, %v904
      %v959 = vmax.f32 %v887, %v905
      %v960 = vmax.f32 %v888, %v906
      %v961 = vmax.f32 %v889, %v907
      %v962 = vmax.f32 %v890, %v908
      %v963 = vmax.f32 %v891, %v909
      %v964 = vmax.f32 %v892, %v910
      %v965 = vmax.f32 %v893, %v911
      %v966 = vmax.f32 %v894, %v912
      %v967 = vmax.f32 %v895, %v913
      %v968 = vmax.f32 %v896, %v914
      %v969 = vmax.f32 %v897, %v915
      %v970 = vmax.f32 %v916, %v934
      %v971 = vmax.f32 %v917, %v935
      %v972 = vmax.f32 %v918, %v936
      %v973 = vmax.f32 %v919, %v937
      %v974 = vmax.f32 %v920, %v938
      %v975 = vmax.f32 %v921, %v939
      %v976 = vmax.f32 %v922, %v940
      %v977 = vmax.f32 %v923, %v941
      %v978 = vmax.f32 %v924, %v942
      %v979 = vmax.f32 %v925, %v943
      %v980 = vmax.f32 %v926, %v944
      %v981 = vmax.f32 %v927, %v945
      %v982 = vmax.f32 %v928, %v946
      %v983 = vmax.f32 %v929, %v947
      %v984 = vmax.f32 %v930, %v948
      %v985 = vmax.f32 %v931, %v949
      %v986 = vmax.f32 %v932, %v950
      %v987 = vmax.f32 %v933, %v951
      %v988 = vmax.f32 %v952, %v970
      %v989 = vmax.f32 %v953, %v971
      %v990 = vmax.f32 %v954, %v972
      %v991 = vmax.f32 %v955, %v973
      %v992 = vmax.f32 %v956, %v974
      %v993 = vmax.f32 %v957, %v975
      %v994 = vmax.f32 %v958, %v976
      %v995 = vmax.f32 %v959, %v977
      %v996 = vmax.f32 %v960, %v978
      %v997 = vmax.f32 %v961, %v979
      %v998 = vmax.f32 %v962, %v980
      %v999 = vmax.f32 %v963, %v981
      %v1000 = vmax.f32 %v964, %v982
      %v1001 = vmax.f32 %v965, %v983
      %v1002 = vmax.f32 %v966, %v984
      %v1003 = vmax.f32 %v967, %v985
      %v1004 = vmax.f32 %v968, %v986
      %v1005 = vmax.f32 %v969, %v987
      %1006 = vst [vmem:[%s172] sm:$0xff] %v988
      %1007 = vst [vmem:[%s172 + $0x8] sm:$0xff] %v989
      %1008 = vst [vmem:[%s172 + $0x10] sm:$0xff] %v990
      %1009 = vst [vmem:[%s172 + $0x18] sm:$0xff] %v991
      %1010 = vst [vmem:[%s172 + $0x20] sm:$0xff] %v992
      %1011 = vst [vmem:[%s172 + $0x28] sm:$0xff] %v993
      %1012 = vst [vmem:[%s172 + $0x30] sm:$0xff] %v994
      %1013 = vst [vmem:[%s172 + $0x38] sm:$0xff] %v995
      %1014 = vst [vmem:[%s172 + $0x40] sm:$0xff] %v996
      %1015 = vst [vmem:[%s172 + $0x48] sm:$0xff] %v997
      %1016 = vst [vmem:[%s172 + $0x50] sm:$0xff] %v998
      %1017 = vst [vmem:[%s172 + $0x58] sm:$0xff] %v999
      %1018 = vst [vmem:[%s172 + $0x60] sm:$0xff] %v1000
      %1019 = vst [vmem:[%s172 + $0x68] sm:$0xff] %v1001
      %1020 = vst [vmem:[%s172 + $0x70] sm:$0xff] %v1002
      %1021 = vst [vmem:[%s172 + $0x78] sm:$0xff] %v1003
      %1022 = vst [vmem:[%s172 + $0x80] sm:$0xff] %v1004
      %1023 = vst [vmem:[%s172 + $0x88] sm:$0xff] %v1005
      %s1024 = smul.u32 18, %s14
      %p1025 = scmp.lt.s32.totalorder %s1024, 35
      %s1026 = scalar_select %p1025, %s1024, 35
      %s1027 = smul.addr %s1026, 8
      %s1028 = scalar_lea.vmem %s3, %s1027
      // Predicated region
      $region33: #{cnn_mnist_forward.3} parent=31 // pred_check
        %p1029 = pneg %p100
      $region34: #{cnn_mnist_forward.3} parent=31 // pred_check_branch
        %1031 = sbr.rel (%p1029) target = $region36
      $region35: #{cnn_mnist_forward.3} parent=31 // pred_region
        %s1032 = smul.u32 18, %s14
      $region36: #{cnn_mnist_forward.3} parent=31 // pred_fallthru
        _
    $region32: #{cnn_mnist_forward.3} parent=5 // pred_fallthru
      _
    %p1033 = scmp.le.s32.totalorder 2, %s9
    // Predicated region
    $region37: #{cnn_mnist_forward.3} parent=5 // pred_check
      %p1034 = pneg %p1033
    $region38: #{cnn_mnist_forward.3} parent=5 // pred_check_branch
      %1036 = sbr.rel (%p1034) target = $region40
    $region39: #{cnn_mnist_forward.3} parent=5 // pred_region
      %s1037 = ssub.s32 %s9, 2
      // Predicated region
      $region41: #{cnn_mnist_forward.3} parent=39 // pred_check
        %p1038 = pneg %p106
      $region42: #{cnn_mnist_forward.3} parent=39 // pred_check_branch
        %1040 = sbr.rel (%p1038) target = $region44
      $region43: #{cnn_mnist_forward.3} parent=39 // pred_region
        %s1041 = smul.u32 18, %s15
        %p1042 = scmp.lt.s32.totalorder %s1041, 35
        %s1043 = scalar_select %p1042, %s1041, 35
        %s1044 = smul.addr %s1043, 8
        %s1045 = scalar_lea.vmem %s3, %s1044
      $region44: #{cnn_mnist_forward.3} parent=39 // pred_fallthru
        _
    $region40: #{cnn_mnist_forward.3} parent=5 // pred_fallthru
      _
  $region6: #{cnn_mnist_forward.3} parent=0 // loop_footer
    %s13 = sadd.s32 1, %s9
  $region7: #{cnn_mnist_forward.3} parent=0 // loop_footer_branch
    %8 = sbr.rel target = $region3
  $region8: #{cnn_mnist_forward.3} parent=0 // loop_exit
    _

// kernel: cnn_mnist_forward.4
$region0: #{cnn_mnist_forward.4}
  #allocation0 [shape = 'u32[]', space=smem, size = 0x4, offset = 0x4, fixed_abs, tag = 'smem constant byte address 0x4 - core index']
  #allocation1 [shape = 'u32[144,128]{1,0:T(1,128)}', space=vmem, size = 0x12000, scoped, tag = 'internal scratch']
  #allocation2 [shape = 'bf16[64,3200]{1,0:T(16,128)(2,1)}', space=vmem, size = 0x64000, scoped, tag = 'scratch operand']
  %s0 = inlined_call_operand.vmem [shape: f32[288,128], index: 0, kind: input, shape index: {}]
  %s1 = inlined_call_operand.vmem [shape: bf16[3200,128], index: 1, kind: input, shape index: {}]
  %s2 = inlined_call_operand.vmem [shape: f32[1,128], index: 2, kind: input, shape index: {}]
  %s3 = inlined_call_operand.vmem [shape: bf16[32,128], index: 3, kind: output, shape index: {}]
  %s4 = sld [smem:[#allocation0]]
  $region45: #{cnn_mnist_forward.4} parent=0
    _
  %s6 = ssub.s32 1, %s4
  %s7 = scalar_select 0, %s6, %s4
  loop: start=0, step=1, limit=4
  $region2: #{cnn_mnist_forward.4} parent=0 // loop_pre_header
    _
  $region3: #{cnn_mnist_forward.4} parent=0 // loop_header
    %s9 = sphi 0, %s13
    %p10 = scmp.ge.s32.totalorder %s9, 4
    %s19 = sphi 0, %s21
    %s22 = sphi 0, %s19
    %s23 = sphi 0, %s22
    %s39 = sphi 0, %s23
    %s43 = sphi 0, %s43
    %s45 = sphi 0, %s43
    %s46 = sphi 0, %s45
    %s60 = sphi 0, %s46
    %s64 = sphi 0, %s64
    %s66 = sphi 0, %s64
    %s67 = sphi 0, %s66
    %s81 = sphi 0, %s67
    %s87 = sphi 0, %s89
    %s90 = sphi 0, %s87
    %s91 = sphi 0, %s90
    %s107 = sphi 0, %s91
  $region4: #{cnn_mnist_forward.4} parent=0 // loop_header_branch
    %12 = sbr.rel (%p10) target = $region8
  $region5: #{cnn_mnist_forward.4} parent=0 // loop_body
    %s14 = ssub.s32 %s9, 1
    %s15 = ssub.s32 %s9, 2
    %s16 = sadd.s32 %s9, 1
    %s17 = ssub.s32 %s9, %s16
    %p18 = scmp.eq.s32.totalorder %s17, 0
    %s20 = sadd.s32 %s19, 1
    %s21 = scalar_select %p18, %s19, %s20
    %p24 = pneg %p18
    %p25 = scmp.eq.s32.totalorder %s9, 1
    %p26 = por %p24, %p25
    %p27 = scmp.ne.s32.totalorder %s19, %s22
    %p28 = scmp.eq.s32.totalorder %s9, 0
    %p29 = por %p27, %p28
    %p30 = scmp.ne.s32.totalorder %s19, %s22
    %p31 = scmp.eq.s32.totalorder %s14, 1
    %p32 = por %p30, %p31
    %p33 = scmp.ne.s32.totalorder %s22, %s23
    %p34 = scmp.eq.s32.totalorder %s14, 0
    %p35 = por %p33, %p34
    %p36 = scmp.ne.s32.totalorder %s22, %s23
    %p37 = scmp.eq.s32.totalorder %s15, 1
    %p38 = por %p36, %p37
    %p40 = scmp.ne.s32.totalorder %s23, %s39
    %p41 = scmp.eq.s32.totalorder %s15, 0
    %p42 = por %p40, %p41
    %s44 = sadd.s32 %s43, 1
    %p47 = scmp.eq.s32.totalorder %s9, 1
    %p48 = scmp.ne.s32.totalorder %s43, %s45
    %p49 = scmp.eq.s32.totalorder %s9, 0
    %p50 = por %p48, %p49
    %p51 = scmp.ne.s32.totalorder %s43, %s45
    %p52 = scmp.eq.s32.totalorder %s14, 1
    %p53 = por %p51, %p52
    %p54 = scmp.ne.s32.totalorder %s45, %s46
    %p55 = scmp.eq.s32.totalorder %s14, 0
    %p56 = por %p54, %p55
    %p57 = scmp.ne.s32.totalorder %s45, %s46
    %p58 = scmp.eq.s32.totalorder %s15, 1
    %p59 = por %p57, %p58
    %p61 = scmp.ne.s32.totalorder %s46, %s60
    %p62 = scmp.eq.s32.totalorder %s15, 0
    %p63 = por %p61, %p62
    %s65 = sadd.s32 %s64, 1
    %p68 = scmp.eq.s32.totalorder %s9, 1
    %p69 = scmp.ne.s32.totalorder %s64, %s66
    %p70 = scmp.eq.s32.totalorder %s9, 0
    %p71 = por %p69, %p70
    %p72 = scmp.ne.s32.totalorder %s64, %s66
    %p73 = scmp.eq.s32.totalorder %s14, 1
    %p74 = por %p72, %p73
    %p75 = scmp.ne.s32.totalorder %s66, %s67
    %p76 = scmp.eq.s32.totalorder %s14, 0
    %p77 = por %p75, %p76
    %p78 = scmp.ne.s32.totalorder %s66, %s67
    %p79 = scmp.eq.s32.totalorder %s15, 1
    %p80 = por %p78, %p79
    %p82 = scmp.ne.s32.totalorder %s67, %s81
    %p83 = scmp.eq.s32.totalorder %s15, 0
    %p84 = por %p82, %p83
    %s85 = ssub.s32 %s9, %s16
    %p86 = scmp.eq.s32.totalorder %s85, 0
    %s88 = sadd.s32 %s87, 1
    %s89 = scalar_select %p86, %s87, %s88
    %p92 = pneg %p86
    %p93 = scmp.eq.s32.totalorder %s9, 1
    %p94 = por %p92, %p93
    %p95 = scmp.ne.s32.totalorder %s87, %s90
    %p96 = scmp.eq.s32.totalorder %s9, 0
    %p97 = por %p95, %p96
    %p98 = scmp.ne.s32.totalorder %s87, %s90
    %p99 = scmp.eq.s32.totalorder %s14, 1
    %p100 = por %p98, %p99
    %p101 = scmp.ne.s32.totalorder %s90, %s91
    %p102 = scmp.eq.s32.totalorder %s14, 0
    %p103 = por %p101, %p102
    %p104 = scmp.ne.s32.totalorder %s90, %s91
    %p105 = scmp.eq.s32.totalorder %s15, 1
    %p106 = por %p104, %p105
    %p108 = scmp.ne.s32.totalorder %s91, %s107
    %p109 = scmp.eq.s32.totalorder %s15, 0
    %p110 = por %p108, %p109
    %p111 = scmp.le.s32.totalorder 1, %s9
    %p112 = scmp.lt.s32.totalorder %s9, 3
    %p113 = pnand %p111, %p112
    %p114 = pneg %p113
    // Predicated region
    $region9: #{cnn_mnist_forward.4} parent=5 // pred_check
      _
    $region10: #{cnn_mnist_forward.4} parent=5 // pred_check_branch
      %116 = sbr.rel (%p113) target = $region12
    $region11: #{cnn_mnist_forward.4} parent=5 // pred_region
      %s117 = ssub.s32 %s9, 1
      // Predicated region
      $region13: #{cnn_mnist_forward.4} parent=11 // pred_check
        %p118 = pneg %p56
      $region14: #{cnn_mnist_forward.4} parent=11 // pred_check_branch
        %120 = sbr.rel (%p118) target = $region16
      $region15: #{cnn_mnist_forward.4} parent=11 // pred_region
        _
      $region16: #{cnn_mnist_forward.4} parent=11 // pred_fallthru
        _
      // Predicated region
      $region17: #{cnn_mnist_forward.4} parent=11 // pred_check
        %p121 = pneg %p77
      $region18: #{cnn_mnist_forward.4} parent=11 // pred_check_branch
        %123 = sbr.rel (%p121) target = $region20
      $region19: #{cnn_mnist_forward.4} parent=11 // pred_region
        _
      $region20: #{cnn_mnist_forward.4} parent=11 // pred_fallthru
        _
    $region12: #{cnn_mnist_forward.4} parent=5 // pred_fallthru
      _
    %p124 = scmp.lt.s32.totalorder %s9, 2
    // Predicated region
    $region21: #{cnn_mnist_forward.4} parent=5 // pred_check
      %p125 = pneg %p124
    $region22: #{cnn_mnist_forward.4} parent=5 // pred_check_branch
      %127 = sbr.rel (%p125) target = $region24
    $region23: #{cnn_mnist_forward.4} parent=5 // pred_region
      // Predicated region
      $region25: #{cnn_mnist_forward.4} parent=23 // pred_check
        %p128 = pneg %p29
      $region26: #{cnn_mnist_forward.4} parent=23 // pred_check_branch
        %130 = sbr.rel (%p128) target = $region28
      $region27: #{cnn_mnist_forward.4} parent=23 // pred_region
        %s131 = smul.u32 18, %s9
        %p132 = scmp.lt.s32.totalorder %s131, 35
        %s133 = scalar_select %p132, %s131, 35
        %s134 = smul.addr %s133, 8
        %s135 = scalar_lea.vmem %s0, %s134
        %s136 = smul.u32 18, %s9
      $region28: #{cnn_mnist_forward.4} parent=23 // pred_fallthru
        _
    $region24: #{cnn_mnist_forward.4} parent=5 // pred_fallthru
      _
    %p137 = scmp.le.s32.totalorder 1, %s9
    %p138 = scmp.lt.s32.totalorder %s9, 3
    %p139 = pnand %p137, %p138
    %p140 = pneg %p139
    // Predicated region
    $region29: #{cnn_mnist_forward.4} parent=5 // pred_check
      _
    $region30: #{cnn_mnist_forward.4} parent=5 // pred_check_branch
      %142 = sbr.rel (%p139) target = $region32
    $region31: #{cnn_mnist_forward.4} parent=5 // pred_region
      %s143 = ssub.s32 %s9, 1
      %s144 = smul.u32 18, %s14
      %p145 = scmp.lt.s32.totalorder %s144, 35
      %s146 = scalar_select %p145, %s144, 35
      %s147 = smul.addr %s146, 8
      %s148 = scalar_lea.vmem %s0, %s147
      %p149 = pneg %p35
      %p150 = pneg %p32
      %p151 = pneg %p56
      %p152 = pneg %p53
      %p153 = pneg %p77
      %p154 = pneg %p74
      %p155 = pneg %p103
      %p156 = pneg %p100
      %s157 = smul.u32 2, %s14
      %p158 = scmp.lt.s32.totalorder %s157, 3
      %s159 = scalar_select %p158, %s157, 3
      %s160 = smul.addr %s159, 4
      %s161 = scalar_lea.vmem %s3, %s160
      %s162 = smul.u32 18, %s14
      %p163 = scmp.lt.s32.totalorder %s162, 35
      %s164 = scalar_select %p163, %s162, 35
      %s165 = smul.addr %s164, 8
      %s166 = scalar_lea.vmem %s0, %s165
      %s167 = smul.u32 18, %s14
      %s168 = smul.u32 2, %s14
      %p169 = scmp.lt.s32.totalorder %s168, 3
      %s170 = scalar_select %p169, %s168, 3
      %s171 = smul.addr %s170, 4
      %s172 = scalar_lea.vmem %s3, %s171
      %s173 = smul.u32 2, %s14
      %v175 = vld [vmem:[%s166] sm:$0xff]
      %v176 = vpack.c.bf16 %v175, %v175
      %177 = vst [vmem:[#allocation2] sm:$0xf] %v176
      %v178 = vld [vmem:[%s166 + $0x1] sm:$0xff]
      %v179 = vpack.c.bf16 %v178, %v178
      %180 = vst [vmem:[#allocation2 + $0x8] sm:$0xf] %v179
      %v181 = vld [vmem:[%s166 + $0x2] sm:$0xff]
      %v182 = vpack.c.bf16 %v181, %v181
      %183 = vst [vmem:[#allocation2 + $0x10] sm:$0xf] %v182
      %v184 = vld [vmem:[%s166 + $0x3] sm:$0xff]
      %v185 = vpack.c.bf16 %v184, %v184
      %186 = vst [vmem:[#allocation2 + $0x18] sm:$0xf] %v185
      %v187 = vld [vmem:[%s166 + $0x4] sm:$0xff]
      %v188 = vpack.c.bf16 %v187, %v187
      %189 = vst [vmem:[#allocation2 + $0x20] sm:$0xf] %v188
      %v190 = vld [vmem:[%s166 + $0xc] sm:$0xff]
      %v191 = vpack.c.bf16 %v190, %v190
      %192 = vst [vmem:[#allocation2 + $0x190] sm:$0xf] %v191
      %193 = vst [vmem:[#allocation2 + $0x28] sm:$0xf] %v191
      %v194 = vld [vmem:[%s166 + $0xd] sm:$0xff]
      %v195 = vpack.c.bf16 %v194, %v194
      %196 = vst [vmem:[#allocation2 + $0x198] sm:$0xf] %v195
      %197 = vst [vmem:[#allocation2 + $0x30] sm:$0xf] %v195
      %v198 = vld [vmem:[%s166 + $0xe] sm:$0xff]
      %v199 = vpack.c.bf16 %v198, %v198
      %200 = vst [vmem:[#allocation2 + $0x1a0] sm:$0xf] %v199
      %201 = vst [vmem:[#allocation2 + $0x38] sm:$0xf] %v199
      %v202 = vld [vmem:[%s166 + $0xf] sm:$0xff]
      %v203 = vpack.c.bf16 %v202, %v202
      %204 = vst [vmem:[#allocation2 + $0x1a8] sm:$0xf] %v203
      %205 = vst [vmem:[#allocation2 + $0x40] sm:$0xf] %v203
      %v206 = vld [vmem:[%s166 + $0x10] sm:$0xff]
      %v207 = vpack.c.bf16 %v206, %v206
      %208 = vst [vmem:[#allocation2 + $0x1b0] sm:$0xf] %v207
      %209 = vst [vmem:[#allocation2 + $0x48] sm:$0xf] %v207
      %v210 = vld [vmem:[%s166 + $0x18] sm:$0xff]
      %v211 = vpack.c.bf16 %v210, %v210
      %v213 = vrot.slane %v211, 4
      %215 = vst [vmem:[#allocation2] sm:$0xf0] %v213
      %216 = vst [vmem:[#allocation2 + $0x1b8] sm:$0xf] %v211
      %217 = vst [vmem:[#allocation2 + $0x50] sm:$0xf] %v211
      %v218 = vld [vmem:[%s166 + $0x19] sm:$0xff]
      %v219 = vpack.c.bf16 %v218, %v218
      %v221 = vrot.slane %v219, 4
      %223 = vst [vmem:[#allocation2 + $0x8] sm:$0xf0] %v221
      %224 = vst [vmem:[#allocation2 + $0x1c0] sm:$0xf] %v219
      %225 = vst [vmem:[#allocation2 + $0x58] sm:$0xf] %v219
      %v226 = vld [vmem:[%s166 + $0x1a] sm:$0xff]
      %v227 = vpack.c.bf16 %v226, %v226
      %v229 = vrot.slane %v227, 4
      %231 = vst [vmem:[#allocation2 + $0x10] sm:$0xf0] %v229
      %232 = vst [vmem:[#allocation2 + $0x1c8] sm:$0xf] %v227
      %233 = vst [vmem:[#allocation2 + $0x60] sm:$0xf] %v227
      %v234 = vld [vmem:[%s166 + $0x1b] sm:$0xff]
      %v235 = vpack.c.bf16 %v234, %v234
      %v237 = vrot.slane %v235, 4
      %239 = vst [vmem:[#allocation2 + $0x18] sm:$0xf0] %v237
      %240 = vst [vmem:[#allocation2 + $0x1d0] sm:$0xf] %v235
      %241 = vst [vmem:[#allocation2 + $0x68] sm:$0xf] %v235
      %v242 = vld [vmem:[%s166 + $0x1c] sm:$0xff]
      %v243 = vpack.c.bf16 %v242, %v242
      %v245 = vrot.slane %v243, 4
      %247 = vst [vmem:[#allocation2 + $0x20] sm:$0xf0] %v245
      %248 = vst [vmem:[#allocation2 + $0x1d8] sm:$0xf] %v243
      %249 = vst [vmem:[#allocation2 + $0x70] sm:$0xf] %v243
      %v250 = vld [vmem:[%s166 + $0x24] sm:$0xff]
      %v251 = vpack.c.bf16 %v250, %v250
      %v253 = vrot.slane %v251, 4
      %255 = vst [vmem:[#allocation2 + $0x190] sm:$0xf0] %v253
      %256 = vst [vmem:[#allocation2 + $0x28] sm:$0xf0] %v253
      %257 = vst [vmem:[#allocation2 + $0x1e0] sm:$0xf] %v251
      %258 = vst [vmem:[#allocation2 + $0x78] sm:$0xf] %v251
      %v259 = vld [vmem:[%s166 + $0x25] sm:$0xff]
      %v260 = vpack.c.bf16 %v259, %v259
      %v262 = vrot.slane %v260, 4
      %264 = vst [vmem:[#allocation2 + $0x198] sm:$0xf0] %v262
      %265 = vst [vmem:[#allocation2 + $0x30] sm:$0xf0] %v262
      %266 = vst [vmem:[#allocation2 + $0x1e8] sm:$0xf] %v260
      %267 = vst [vmem:[#allocation2 + $0x80] sm:$0xf] %v260
      %v268 = vld [vmem:[%s166 + $0x26] sm:$0xff]
      %v269 = vpack.c.bf16 %v268, %v268
      %v271 = vrot.slane %v269, 4
      %273 = vst [vmem:[#allocation2 + $0x1a0] sm:$0xf0] %v271
      %274 = vst [vmem:[#allocation2 + $0x38] sm:$0xf0] %v271
      %275 = vst [vmem:[#allocation2 + $0x1f0] sm:$0xf] %v269
      %276 = vst [vmem:[#allocation2 + $0x88] sm:$0xf] %v269
      %v277 = vld [vmem:[%s166 + $0x27] sm:$0xff]
      %v278 = vpack.c.bf16 %v277, %v277
      %v280 = vrot.slane %v278, 4
      %282 = vst [vmem:[#allocation2 + $0x1a8] sm:$0xf0] %v280
      %283 = vst [vmem:[#allocation2 + $0x40] sm:$0xf0] %v280
      %284 = vst [vmem:[#allocation2 + $0x1f8] sm:$0xf] %v278
      %285 = vst [vmem:[#allocation2 + $0x90] sm:$0xf] %v278
      %v286 = vld [vmem:[%s166 + $0x28] sm:$0xff]
      %v287 = vpack.c.bf16 %v286, %v286
      %v289 = vrot.slane %v287, 4
      %291 = vst [vmem:[#allocation2 + $0x1b0] sm:$0xf0] %v289
      %292 = vst [vmem:[#allocation2 + $0x48] sm:$0xf0] %v289
      %293 = vst [vmem:[#allocation2 + $0x200] sm:$0xf] %v287
      %294 = vst [vmem:[#allocation2 + $0x98] sm:$0xf] %v287
      %v295 = vld [vmem:[%s166 + $0x30] sm:$0xff]
      %v296 = vpack.c.bf16 %v295, %v295
      %297 = vst [vmem:[#allocation2 + $0xc8] sm:$0xf] %v296
      %v299 = vrot.slane %v296, 4
      %301 = vst [vmem:[#allocation2 + $0x1b8] sm:$0xf0] %v299
      %302 = vst [vmem:[#allocation2 + $0x50] sm:$0xf0] %v299
      %303 = vst [vmem:[#allocation2 + $0x208] sm:$0xf] %v296
      %304 = vst [vmem:[#allocation2 + $0xa0] sm:$0xf] %v296
      %v305 = vld [vmem:[%s166 + $0x31] sm:$0xff]
      %v306 = vpack.c.bf16 %v305, %v305
      %307 = vst [vmem:[#allocation2 + $0xd0] sm:$0xf] %v306
      %v309 = vrot.slane %v306, 4
      %311 = vst [vmem:[#allocation2 + $0x1c0] sm:$0xf0] %v309
      %312 = vst [vmem:[#allocation2 + $0x58] sm:$0xf0] %v309
      %313 = vst [vmem:[#allocation2 + $0x210] sm:$0xf] %v306
      %314 = vst [vmem:[#allocation2 + $0xa8] sm:$0xf] %v306
      %v315 = vld [vmem:[%s166 + $0x32] sm:$0xff]
      %v316 = vpack.c.bf16 %v315, %v315
      %317 = vst [vmem:[#allocation2 + $0xd8] sm:$0xf] %v316
      %v319 = vrot.slane %v316, 4
      %321 = vst [vmem:[#allocation2 + $0x1c8] sm:$0xf0] %v319
      %322 = vst [vmem:[#allocation2 + $0x60] sm:$0xf0] %v319
      %323 = vst [vmem:[#allocation2 + $0x218] sm:$0xf] %v316
      %324 = vst [vmem:[#allocation2 + $0xb0] sm:$0xf] %v316
      %v325 = vld [vmem:[%s166 + $0x33] sm:$0xff]
      %v326 = vpack.c.bf16 %v325, %v325
      %327 = vst [vmem:[#allocation2 + $0xe0] sm:$0xf] %v326
      %v329 = vrot.slane %v326, 4
      %331 = vst [vmem:[#allocation2 + $0x1d0] sm:$0xf0] %v329
      %332 = vst [vmem:[#allocation2 + $0x68] sm:$0xf0] %v329
      %333 = vst [vmem:[#allocation2 + $0x220] sm:$0xf] %v326
      %334 = vst [vmem:[#allocation2 + $0xb8] sm:$0xf] %v326
      %v335 = vld [vmem:[%s166 + $0x34] sm:$0xff]
      %v336 = vpack.c.bf16 %v335, %v335
      %337 = vst [vmem:[#allocation2 + $0xe8] sm:$0xf] %v336
      %v339 = vrot.slane %v336, 4
      %341 = vst [vmem:[#allocation2 + $0x1d8] sm:$0xf0] %v339
      %342 = vst [vmem:[#allocation2 + $0x70] sm:$0xf0] %v339
      %343 = vst [vmem:[#allocation2 + $0x228] sm:$0xf] %v336
      %344 = vst [vmem:[#allocation2 + $0xc0] sm:$0xf] %v336
      %v345 = vld [vmem:[%s166 + $0x3c] sm:$0xff]
      %v346 = vpack.c.bf16 %v345, %v345
      %347 = vst [vmem:[#allocation2 + $0x258] sm:$0xf] %v346
      %348 = vst [vmem:[#allocation2 + $0xf0] sm:$0xf] %v346
      %v350 = vrot.slane %v346, 4
      %352 = vst [vmem:[#allocation2 + $0x1e0] sm:$0xf0] %v350
      %353 = vst [vmem:[#allocation2 + $0x78] sm:$0xf0] %v350
      %354 = vst [vmem:[#allocation2 + $0x230] sm:$0xf] %v346
      %v355 = vld [vmem:[%s166 + $0x3d] sm:$0xff]
      %v356 = vpack.c.bf16 %v355, %v355
      %357 = vst [vmem:[#allocation2 + $0x260] sm:$0xf] %v356
      %358 = vst [vmem:[#allocation2 + $0xf8] sm:$0xf] %v356
      %v360 = vrot.slane %v356, 4
      %362 = vst [vmem:[#allocation2 + $0x1e8] sm:$0xf0] %v360
      %363 = vst [vmem:[#allocation2 + $0x80] sm:$0xf0] %v360
      %364 = vst [vmem:[#allocation2 + $0x238] sm:$0xf] %v356
      %v365 = vld [vmem:[%s166 + $0x3e] sm:$0xff]
      %v366 = vpack.c.bf16 %v365, %v365
      %367 = vst [vmem:[#allocation2 + $0x268] sm:$0xf] %v366
      %368 = vst [vmem:[#allocation2 + $0x100] sm:$0xf] %v366
      %v370 = vrot.slane %v366, 4
      %372 = vst [vmem:[#allocation2 + $0x1f0] sm:$0xf0] %v370
      %373 = vst [vmem:[#allocation2 + $0x88] sm:$0xf0] %v370
      %374 = vst [vmem:[#allocation2 + $0x240] sm:$0xf] %v366
      %v375 = vld [vmem:[%s166 + $0x3f] sm:$0xff]
      %v376 = vpack.c.bf16 %v375, %v375
      %377 = vst [vmem:[#allocation2 + $0x270] sm:$0xf] %v376
      %378 = vst [vmem:[#allocation2 + $0x108] sm:$0xf] %v376
      %v380 = vrot.slane %v376, 4
      %382 = vst [vmem:[#allocation2 + $0x1f8] sm:$0xf0] %v380
      %383 = vst [vmem:[#allocation2 + $0x90] sm:$0xf0] %v380
      %384 = vst [vmem:[#allocation2 + $0x248] sm:$0xf] %v376
      %v385 = vld [vmem:[%s166 + $0x40] sm:$0xff]
      %v386 = vpack.c.bf16 %v385, %v385
      %387 = vst [vmem:[#allocation2 + $0x278] sm:$0xf] %v386
      %388 = vst [vmem:[#allocation2 + $0x110] sm:$0xf] %v386
      %v390 = vrot.slane %v386, 4
      %392 = vst [vmem:[#allocation2 + $0x200] sm:$0xf0] %v390
      %393 = vst [vmem:[#allocation2 + $0x98] sm:$0xf0] %v390
      %394 = vst [vmem:[#allocation2 + $0x250] sm:$0xf] %v386
      %v395 = vld [vmem:[%s166 + $0x48] sm:$0xff]
      %v396 = vpack.c.bf16 %v395, %v395
      %v398 = vrot.slane %v396, 4
      %400 = vst [vmem:[#allocation2 + $0xc8] sm:$0xf0] %v398
      %401 = vst [vmem:[#allocation2 + $0x280] sm:$0xf] %v396
      %402 = vst [vmem:[#allocation2 + $0x118] sm:$0xf] %v396
      %403 = vst [vmem:[#allocation2 + $0x208] sm:$0xf0] %v398
      %404 = vst [vmem:[#allocation2 + $0xa0] sm:$0xf0] %v398
      %v405 = vld [vmem:[%s166 + $0x49] sm:$0xff]
      %v406 = vpack.c.bf16 %v405, %v405
      %v408 = vrot.slane %v406, 4
      %410 = vst [vmem:[#allocation2 + $0xd0] sm:$0xf0] %v408
      %411 = vst [vmem:[#allocation2 + $0x288] sm:$0xf] %v406
      %412 = vst [vmem:[#allocation2 + $0x120] sm:$0xf] %v406
      %413 = vst [vmem:[#allocation2 + $0x210] sm:$0xf0] %v408
      %414 = vst [vmem:[#allocation2 + $0xa8] sm:$0xf0] %v408
      %v415 = vld [vmem:[%s166 + $0x4a] sm:$0xff]
      %v416 = vpack.c.bf16 %v415, %v415
      %v418 = vrot.slane %v416, 4
      %420 = vst [vmem:[#allocation2 + $0xd8] sm:$0xf0] %v418
      %421 = vst [vmem:[#allocation2 + $0x290] sm:$0xf] %v416
      %422 = vst [vmem:[#allocation2 + $0x128] sm:$0xf] %v416
      %423 = vst [vmem:[#allocation2 + $0x218] sm:$0xf0] %v418
      %424 = vst [vmem:[#allocation2 + $0xb0] sm:$0xf0] %v418
      %v425 = vld [vmem:[%s166 + $0x4b] sm:$0xff]
      %v426 = vpack.c.bf16 %v425, %v425
      %v428 = vrot.slane %v426, 4
      %430 = vst [vmem:[#allocation2 + $0xe0] sm:$0xf0] %v428
      %431 = vst [vmem:[#allocation2 + $0x298] sm:$0xf] %v426
      %432 = vst [vmem:[#allocation2 + $0x130] sm:$0xf] %v426
      %433 = vst [vmem:[#allocation2 + $0x220] sm:$0xf0] %v428
      %434 = vst [vmem:[#allocation2 + $0xb8] sm:$0xf0] %v428
      %v435 = vld [vmem:[%s166 + $0x4c] sm:$0xff]
      %v436 = vpack.c.bf16 %v435, %v435
      %v438 = vrot.slane %v436, 4
      %440 = vst [vmem:[#allocation2 + $0xe8] sm:$0xf0] %v438
      %441 = vst [vmem:[#allocation2 + $0x2a0] sm:$0xf] %v436
      %442 = vst [vmem:[#allocation2 + $0x138] sm:$0xf] %v436
      %443 = vst [vmem:[#allocation2 + $0x228] sm:$0xf0] %v438
      %444 = vst [vmem:[#allocation2 + $0xc0] sm:$0xf0] %v438
      %v445 = vld [vmem:[%s166 + $0x54] sm:$0xff]
      %v446 = vpack.c.bf16 %v445, %v445
      %v448 = vrot.slane %v446, 4
      %450 = vst [vmem:[#allocation2 + $0x258] sm:$0xf0] %v448
      %451 = vst [vmem:[#allocation2 + $0xf0] sm:$0xf0] %v448
      %452 = vst [vmem:[#allocation2 + $0x2a8] sm:$0xf] %v446
      %453 = vst [vmem:[#allocation2 + $0x140] sm:$0xf] %v446
      %454 = vst [vmem:[#allocation2 + $0x230] sm:$0xf0] %v448
      %v455 = vld [vmem:[%s166 + $0x55] sm:$0xff]
      %v456 = vpack.c.bf16 %v455, %v455
      %v458 = vrot.slane %v456, 4
      %460 = vst [vmem:[#allocation2 + $0x260] sm:$0xf0] %v458
      %461 = vst [vmem:[#allocation2 + $0xf8] sm:$0xf0] %v458
      %462 = vst [vmem:[#allocation2 + $0x2b0] sm:$0xf] %v456
      %463 = vst [vmem:[#allocation2 + $0x148] sm:$0xf] %v456
      %464 = vst [vmem:[#allocation2 + $0x238] sm:$0xf0] %v458
      %v465 = vld [vmem:[%s166 + $0x56] sm:$0xff]
      %v466 = vpack.c.bf16 %v465, %v465
      %v468 = vrot.slane %v466, 4
      %470 = vst [vmem:[#allocation2 + $0x268] sm:$0xf0] %v468
      %471 = vst [vmem:[#allocation2 + $0x100] sm:$0xf0] %v468
      %472 = vst [vmem:[#allocation2 + $0x2b8] sm:$0xf] %v466
      %473 = vst [vmem:[#allocation2 + $0x150] sm:$0xf] %v466
      %474 = vst [vmem:[#allocation2 + $0x240] sm:$0xf0] %v468
      %v475 = vld [vmem:[%s166 + $0x57] sm:$0xff]
      %v476 = vpack.c.bf16 %v475, %v475
      %v478 = vrot.slane %v476, 4
      %480 = vst [vmem:[#allocation2 + $0x270] sm:$0xf0] %v478
      %481 = vst [vmem:[#allocation2 + $0x108] sm:$0xf0] %v478
      %482 = vst [vmem:[#allocation2 + $0x2c0] sm:$0xf] %v476
      %483 = vst [vmem:[#allocation2 + $0x158] sm:$0xf] %v476
      %484 = vst [vmem:[#allocation2 + $0x248] sm:$0xf0] %v478
      %v485 = vld [vmem:[%s166 + $0x58] sm:$0xff]
      %v486 = vpack.c.bf16 %v485, %v485
      %v488 = vrot.slane %v486, 4
      %490 = vst [vmem:[#allocation2 + $0x278] sm:$0xf0] %v488
      %491 = vst [vmem:[#allocation2 + $0x110] sm:$0xf0] %v488
      %492 = vst [vmem:[#allocation2 + $0x2c8] sm:$0xf] %v486
      %493 = vst [vmem:[#allocation2 + $0x160] sm:$0xf] %v486
      %494 = vst [vmem:[#allocation2 + $0x250] sm:$0xf0] %v488
      %v495 = vld [vmem:[%s166 + $0x60] sm:$0xff]
      %v496 = vpack.c.bf16 %v495, %v495
      %v498 = vrot.slane %v496, 4
      %500 = vst [vmem:[#allocation2 + $0x280] sm:$0xf0] %v498
      %501 = vst [vmem:[#allocation2 + $0x118] sm:$0xf0] %v498
      %502 = vst [vmem:[#allocation2 + $0x2d0] sm:$0xf] %v496
      %503 = vst [vmem:[#allocation2 + $0x168] sm:$0xf] %v496
      %v504 = vld [vmem:[%s166 + $0x61] sm:$0xff]
      %v505 = vpack.c.bf16 %v504, %v504
      %v507 = vrot.slane %v505, 4
      %509 = vst [vmem:[#allocation2 + $0x288] sm:$0xf0] %v507
      %510 = vst [vmem:[#allocation2 + $0x120] sm:$0xf0] %v507
      %511 = vst [vmem:[#allocation2 + $0x2d8] sm:$0xf] %v505
      %512 = vst [vmem:[#allocation2 + $0x170] sm:$0xf] %v505
      %v513 = vld [vmem:[%s166 + $0x62] sm:$0xff]
      %v514 = vpack.c.bf16 %v513, %v513
      %v516 = vrot.slane %v514, 4
      %518 = vst [vmem:[#allocation2 + $0x290] sm:$0xf0] %v516
      %519 = vst [vmem:[#allocation2 + $0x128] sm:$0xf0] %v516
      %520 = vst [vmem:[#allocation2 + $0x2e0] sm:$0xf] %v514
      %521 = vst [vmem:[#allocation2 + $0x178] sm:$0xf] %v514
      %v522 = vld [vmem:[%s166 + $0x63] sm:$0xff]
      %v523 = vpack.c.bf16 %v522, %v522
      %v525 = vrot.slane %v523, 4
      %527 = vst [vmem:[#allocation2 + $0x298] sm:$0xf0] %v525
      %528 = vst [vmem:[#allocation2 + $0x130] sm:$0xf0] %v525
      %529 = vst [vmem:[#allocation2 + $0x2e8] sm:$0xf] %v523
      %530 = vst [vmem:[#allocation2 + $0x180] sm:$0xf] %v523
      %v531 = vld [vmem:[%s166 + $0x64] sm:$0xff]
      %v532 = vpack.c.bf16 %v531, %v531
      %v534 = vrot.slane %v532, 4
      %536 = vst [vmem:[#allocation2 + $0x2a0] sm:$0xf0] %v534
      %537 = vst [vmem:[#allocation2 + $0x138] sm:$0xf0] %v534
      %538 = vst [vmem:[#allocation2 + $0x2f0] sm:$0xf] %v532
      %539 = vst [vmem:[#allocation2 + $0x188] sm:$0xf] %v532
      %v540 = vld [vmem:[%s166 + $0x6c] sm:$0xff]
      %v541 = vpack.c.bf16 %v540, %v540
      %v543 = vrot.slane %v541, 4
      %545 = vst [vmem:[#allocation2 + $0x2a8] sm:$0xf0] %v543
      %546 = vst [vmem:[#allocation2 + $0x140] sm:$0xf0] %v543
      %547 = vst [vmem:[#allocation2 + $0x2f8] sm:$0xf] %v541
      %v548 = vld [vmem:[%s166 + $0x6d] sm:$0xff]
      %v549 = vpack.c.bf16 %v548, %v548
      %v551 = vrot.slane %v549, 4
      %553 = vst [vmem:[#allocation2 + $0x2b0] sm:$0xf0] %v551
      %554 = vst [vmem:[#allocation2 + $0x148] sm:$0xf0] %v551
      %555 = vst [vmem:[#allocation2 + $0x300] sm:$0xf] %v549
      %v556 = vld [vmem:[%s166 + $0x6e] sm:$0xff]
      %v557 = vpack.c.bf16 %v556, %v556
      %v559 = vrot.slane %v557, 4
      %561 = vst [vmem:[#allocation2 + $0x2b8] sm:$0xf0] %v559
      %562 = vst [vmem:[#allocation2 + $0x150] sm:$0xf0] %v559
      %563 = vst [vmem:[#allocation2 + $0x308] sm:$0xf] %v557
      %v564 = vld [vmem:[%s166 + $0x6f] sm:$0xff]
      %v565 = vpack.c.bf16 %v564, %v564
      %v567 = vrot.slane %v565, 4
      %569 = vst [vmem:[#allocation2 + $0x2c0] sm:$0xf0] %v567
      %570 = vst [vmem:[#allocation2 + $0x158] sm:$0xf0] %v567
      %571 = vst [vmem:[#allocation2 + $0x310] sm:$0xf] %v565
      %v572 = vld [vmem:[%s166 + $0x70] sm:$0xff]
      %v573 = vpack.c.bf16 %v572, %v572
      %v575 = vrot.slane %v573, 4
      %577 = vst [vmem:[#allocation2 + $0x2c8] sm:$0xf0] %v575
      %578 = vst [vmem:[#allocation2 + $0x160] sm:$0xf0] %v575
      %579 = vst [vmem:[#allocation2 + $0x318] sm:$0xf] %v573
      %v580 = vld [vmem:[%s166 + $0x78] sm:$0xff]
      %v581 = vpack.c.bf16 %v580, %v580
      %v583 = vrot.slane %v581, 4
      %585 = vst [vmem:[#allocation2 + $0x2d0] sm:$0xf0] %v583
      %586 = vst [vmem:[#allocation2 + $0x168] sm:$0xf0] %v583
      %v587 = vld [vmem:[%s166 + $0x79] sm:$0xff]
      %v588 = vpack.c.bf16 %v587, %v587
      %v590 = vrot.slane %v588, 4
      %592 = vst [vmem:[#allocation2 + $0x2d8] sm:$0xf0] %v590
      %593 = vst [vmem:[#allocation2 + $0x170] sm:$0xf0] %v590
      %v594 = vld [vmem:[%s166 + $0x7a] sm:$0xff]
      %v595 = vpack.c.bf16 %v594, %v594
      %v597 = vrot.slane %v595, 4
      %599 = vst [vmem:[#allocation2 + $0x2e0] sm:$0xf0] %v597
      %600 = vst [vmem:[#allocation2 + $0x178] sm:$0xf0] %v597
      %v601 = vld [vmem:[%s166 + $0x7b] sm:$0xff]
      %v602 = vpack.c.bf16 %v601, %v601
      %v604 = vrot.slane %v602, 4
      %606 = vst [vmem:[#allocation2 + $0x2e8] sm:$0xf0] %v604
      %607 = vst [vmem:[#allocation2 + $0x180] sm:$0xf0] %v604
      %v608 = vld [vmem:[%s166 + $0x7c] sm:$0xff]
      %v609 = vpack.c.bf16 %v608, %v608
      %v611 = vrot.slane %v609, 4
      %613 = vst [vmem:[#allocation2 + $0x2f0] sm:$0xf0] %v611
      %614 = vst [vmem:[#allocation2 + $0x188] sm:$0xf0] %v611
      %v615 = vld [vmem:[%s166 + $0x84] sm:$0xff]
      %v616 = vpack.c.bf16 %v615, %v615
      %v618 = vrot.slane %v616, 4
      %620 = vst [vmem:[#allocation2 + $0x2f8] sm:$0xf0] %v618
      %v621 = vld [vmem:[%s166 + $0x85] sm:$0xff]
      %v622 = vpack.c.bf16 %v621, %v621
      %v624 = vrot.slane %v622, 4
      %626 = vst [vmem:[#allocation2 + $0x300] sm:$0xf0] %v624
      %v627 = vld [vmem:[%s166 + $0x86] sm:$0xff]
      %v628 = vpack.c.bf16 %v627, %v627
      %v630 = vrot.slane %v628, 4
      %632 = vst [vmem:[#allocation2 + $0x308] sm:$0xf0] %v630
      %v633 = vld [vmem:[%s166 + $0x87] sm:$0xff]
      %v634 = vpack.c.bf16 %v633, %v633
      %v636 = vrot.slane %v634, 4
      %638 = vst [vmem:[#allocation2 + $0x310] sm:$0xf0] %v636
      %v639 = vld [vmem:[%s166 + $0x88] sm:$0xff]
      %v640 = vpack.c.bf16 %v639, %v639
      %v642 = vrot.slane %v640, 4
      %644 = vst [vmem:[#allocation2 + $0x318] sm:$0xf0] %v642
      %v645 = vld [vmem:[#allocation2] sm:$0xff]
      %v646 = vld [vmem:[#allocation2 + $0x8] sm:$0xff]
      %v647 = vld [vmem:[#allocation2 + $0x10] sm:$0xff]
      %v648 = vld [vmem:[#allocation2 + $0x18] sm:$0xff]
      %v649 = vld [vmem:[#allocation2 + $0x20] sm:$0xff]
      %v650 = vld [vmem:[#allocation2 + $0x28] sm:$0xff]
      %v651 = vld [vmem:[#allocation2 + $0x30] sm:$0xff]
      %v652 = vld [vmem:[#allocation2 + $0x38] sm:$0xff]
      %v653 = vld [vmem:[#allocation2 + $0x40] sm:$0xff]
      %v654 = vld [vmem:[#allocation2 + $0x48] sm:$0xff]
      %v655 = vld [vmem:[#allocation2 + $0x50] sm:$0xff]
      %v656 = vld [vmem:[#allocation2 + $0x58] sm:$0xff]
      %v657 = vld [vmem:[#allocation2 + $0x60] sm:$0xff]
      %v658 = vld [vmem:[#allocation2 + $0x68] sm:$0xff]
      %v659 = vld [vmem:[#allocation2 + $0x70] sm:$0xff]
      %v660 = vld [vmem:[#allocation2 + $0x78] sm:$0xff]
      %v661 = vld [vmem:[#allocation2 + $0x80] sm:$0xff]
      %v662 = vld [vmem:[#allocation2 + $0x88] sm:$0xff]
      %v663 = vld [vmem:[#allocation2 + $0x90] sm:$0xff]
      %v664 = vld [vmem:[#allocation2 + $0x98] sm:$0xff]
      %v665 = vld [vmem:[#allocation2 + $0xa0] sm:$0xff]
      %v666 = vld [vmem:[#allocation2 + $0xa8] sm:$0xff]
      %v667 = vld [vmem:[#allocation2 + $0xb0] sm:$0xff]
      %v668 = vld [vmem:[#allocation2 + $0xb8] sm:$0xff]
      %v669 = vld [vmem:[#allocation2 + $0xc0] sm:$0xff]
      %v670 = vld [vmem:[#allocation2 + $0xc8] sm:$0xff]
      %v671 = vld [vmem:[#allocation2 + $0xd0] sm:$0xff]
      %v672 = vld [vmem:[#allocation2 + $0xd8] sm:$0xff]
      %v673 = vld [vmem:[#allocation2 + $0xe0] sm:$0xff]
      %v674 = vld [vmem:[#allocation2 + $0xe8] sm:$0xff]
      %v675 = vld [vmem:[#allocation2 + $0xf0] sm:$0xff]
      %v676 = vld [vmem:[#allocation2 + $0xf8] sm:$0xff]
      %v677 = vld [vmem:[#allocation2 + $0x100] sm:$0xff]
      %v678 = vld [vmem:[#allocation2 + $0x108] sm:$0xff]
      %v679 = vld [vmem:[#allocation2 + $0x110] sm:$0xff]
      %v680 = vld [vmem:[#allocation2 + $0x118] sm:$0xff]
      %v681 = vld [vmem:[#allocation2 + $0x120] sm:$0xff]
      %v682 = vld [vmem:[#allocation2 + $0x128] sm:$0xff]
      %v683 = vld [vmem:[#allocation2 + $0x130] sm:$0xff]
      %v684 = vld [vmem:[#allocation2 + $0x138] sm:$0xff]
      %v685 = vld [vmem:[#allocation2 + $0x140] sm:$0xff]
      %v686 = vld [vmem:[#allocation2 + $0x148] sm:$0xff]
      %v687 = vld [vmem:[#allocation2 + $0x150] sm:$0xff]
      %v688 = vld [vmem:[#allocation2 + $0x158] sm:$0xff]
      %v689 = vld [vmem:[#allocation2 + $0x160] sm:$0xff]
      %v690 = vld [vmem:[#allocation2 + $0x168] sm:$0xff]
      %v691 = vld [vmem:[#allocation2 + $0x170] sm:$0xff]
      %v692 = vld [vmem:[#allocation2 + $0x178] sm:$0xff]
      %v693 = vld [vmem:[#allocation2 + $0x180] sm:$0xff]
      %v694 = vld [vmem:[#allocation2 + $0x188] sm:$0xff]
      %v695 = vld [vmem:[#allocation2 + $0x190] sm:$0xff]
      %v696 = vld [vmem:[#allocation2 + $0x198] sm:$0xff]
      %v697 = vld [vmem:[#allocation2 + $0x1a0] sm:$0xff]
      %v698 = vld [vmem:[#allocation2 + $0x1a8] sm:$0xff]
      %v699 = vld [vmem:[#allocation2 + $0x1b0] sm:$0xff]
      %v700 = vld [vmem:[#allocation2 + $0x1b8] sm:$0xff]
      %v701 = vld [vmem:[#allocation2 + $0x1c0] sm:$0xff]
      %v702 = vld [vmem:[#allocation2 + $0x1c8] sm:$0xff]
      %v703 = vld [vmem:[#allocation2 + $0x1d0] sm:$0xff]
      %v704 = vld [vmem:[#allocation2 + $0x1d8] sm:$0xff]
      %v705 = vld [vmem:[#allocation2 + $0x1e0] sm:$0xff]
      %v706 = vld [vmem:[#allocation2 + $0x1e8] sm:$0xff]
      %v707 = vld [vmem:[#allocation2 + $0x1f0] sm:$0xff]
      %v708 = vld [vmem:[#allocation2 + $0x1f8] sm:$0xff]
      %v709 = vld [vmem:[#allocation2 + $0x200] sm:$0xff]
      %v710 = vld [vmem:[#allocation2 + $0x208] sm:$0xff]
      %v711 = vld [vmem:[#allocation2 + $0x210] sm:$0xff]
      %v712 = vld [vmem:[#allocation2 + $0x218] sm:$0xff]
      %v713 = vld [vmem:[#allocation2 + $0x220] sm:$0xff]
      %v714 = vld [vmem:[#allocation2 + $0x228] sm:$0xff]
      %v715 = vld [vmem:[#allocation2 + $0x230] sm:$0xff]
      %v716 = vld [vmem:[#allocation2 + $0x238] sm:$0xff]
      %v717 = vld [vmem:[#allocation2 + $0x240] sm:$0xff]
      %v718 = vld [vmem:[#allocation2 + $0x248] sm:$0xff]
      %v719 = vld [vmem:[#allocation2 + $0x250] sm:$0xff]
      %v720 = vld [vmem:[#allocation2 + $0x258] sm:$0xff]
      %v721 = vld [vmem:[#allocation2 + $0x260] sm:$0xff]
      %v722 = vld [vmem:[#allocation2 + $0x268] sm:$0xff]
      %v723 = vld [vmem:[#allocation2 + $0x270] sm:$0xff]
      %v724 = vld [vmem:[#allocation2 + $0x278] sm:$0xff]
      %v725 = vld [vmem:[#allocation2 + $0x280] sm:$0xff]
      %v726 = vld [vmem:[#allocation2 + $0x288] sm:$0xff]
      %v727 = vld [vmem:[#allocation2 + $0x290] sm:$0xff]
      %v728 = vld [vmem:[#allocation2 + $0x298] sm:$0xff]
      %v729 = vld [vmem:[#allocation2 + $0x2a0] sm:$0xff]
      %v730 = vld [vmem:[#allocation2 + $0x2a8] sm:$0xff]
      %v731 = vld [vmem:[#allocation2 + $0x2b0] sm:$0xff]
      %v732 = vld [vmem:[#allocation2 + $0x2b8] sm:$0xff]
      %v733 = vld [vmem:[#allocation2 + $0x2c0] sm:$0xff]
      %v734 = vld [vmem:[#allocation2 + $0x2c8] sm:$0xff]
      %v735 = vld [vmem:[#allocation2 + $0x2d0] sm:$0xff]
      %v736 = vld [vmem:[#allocation2 + $0x2d8] sm:$0xff]
      %v737 = vld [vmem:[#allocation2 + $0x2e0] sm:$0xff]
      %v738 = vld [vmem:[#allocation2 + $0x2e8] sm:$0xff]
      %v739 = vld [vmem:[#allocation2 + $0x2f0] sm:$0xff]
      %v740 = vld [vmem:[#allocation2 + $0x2f8] sm:$0xff]
      %v741 = vld [vmem:[#allocation2 + $0x300] sm:$0xff]
      %v742 = vld [vmem:[#allocation2 + $0x308] sm:$0xff]
      %v743 = vld [vmem:[#allocation2 + $0x310] sm:$0xff]
      %v744 = vld [vmem:[#allocation2 + $0x318] sm:$0xff]
      %v745 = vld [vmem:[%s1] sm:$0xf]
      %v746 = vld [vmem:[%s1 + $0x4] sm:$0xf]
      %v747 = vld [vmem:[%s1 + $0x8] sm:$0xf]
      %v748 = vld [vmem:[%s1 + $0xc] sm:$0xf]
      %v749 = vld [vmem:[%s1 + $0x10] sm:$0xf]
      %v750 = vld [vmem:[%s1 + $0x14] sm:$0xf]
      %v751 = vld [vmem:[%s1 + $0x18] sm:$0xf]
      %v752 = vld [vmem:[%s1 + $0x1c] sm:$0xf]
      %v753 = vld [vmem:[%s1 + $0x20] sm:$0xf]
      %v754 = vld [vmem:[%s1 + $0x24] sm:$0xf]
      %v755 = vld [vmem:[%s1 + $0x28] sm:$0xf]
      %v756 = vld [vmem:[%s1 + $0x2c] sm:$0xf]
      %v757 = vld [vmem:[%s1 + $0x30] sm:$0xf]
      %v758 = vld [vmem:[%s1 + $0x34] sm:$0xf]
      %v759 = vld [vmem:[%s1 + $0x38] sm:$0xf]
      %v760 = vld [vmem:[%s1 + $0x3c] sm:$0xf]
      %v761 = vld [vmem:[%s1 + $0x40] sm:$0xf]
      %v762 = vld [vmem:[%s1 + $0x44] sm:$0xf]
      %v763 = vld [vmem:[%s1 + $0x48] sm:$0xf]
      %v764 = vld [vmem:[%s1 + $0x4c] sm:$0xf]
      %v765 = vld [vmem:[%s1 + $0x50] sm:$0xf]
      %v766 = vld [vmem:[%s1 + $0x54] sm:$0xf]
      %v767 = vld [vmem:[%s1 + $0x58] sm:$0xf]
      %v768 = vld [vmem:[%s1 + $0x5c] sm:$0xf]
      %v769 = vld [vmem:[%s1 + $0x60] sm:$0xf]
      %v770 = vld [vmem:[%s1 + $0x64] sm:$0xf]
      %v771 = vld [vmem:[%s1 + $0x68] sm:$0xf]
      %v772 = vld [vmem:[%s1 + $0x6c] sm:$0xf]
      %v773 = vld [vmem:[%s1 + $0x70] sm:$0xf]
      %v774 = vld [vmem:[%s1 + $0x74] sm:$0xf]
      %v775 = vld [vmem:[%s1 + $0x78] sm:$0xf]
      %v776 = vld [vmem:[%s1 + $0x7c] sm:$0xf]
      %v777 = vld [vmem:[%s1 + $0x80] sm:$0xf]
      %v778 = vld [vmem:[%s1 + $0x84] sm:$0xf]
      %v779 = vld [vmem:[%s1 + $0x88] sm:$0xf]
      %v780 = vld [vmem:[%s1 + $0x8c] sm:$0xf]
      %v781 = vld [vmem:[%s1 + $0x90] sm:$0xf]
      %v782 = vld [vmem:[%s1 + $0x94] sm:$0xf]
      %v783 = vld [vmem:[%s1 + $0x98] sm:$0xf]
      %v784 = vld [vmem:[%s1 + $0x9c] sm:$0xf]
      %v785 = vld [vmem:[%s1 + $0xa0] sm:$0xf]
      %v786 = vld [vmem:[%s1 + $0xa4] sm:$0xf]
      %v787 = vld [vmem:[%s1 + $0xa8] sm:$0xf]
      %v788 = vld [vmem:[%s1 + $0xac] sm:$0xf]
      %v789 = vld [vmem:[%s1 + $0xb0] sm:$0xf]
      %v790 = vld [vmem:[%s1 + $0xb4] sm:$0xf]
      %v791 = vld [vmem:[%s1 + $0xb8] sm:$0xf]
      %v792 = vld [vmem:[%s1 + $0xbc] sm:$0xf]
      %v793 = vld [vmem:[%s1 + $0xc0] sm:$0xf]
      %v794 = vld [vmem:[%s1 + $0xc4] sm:$0xf]
      %v795 = vld [vmem:[%s1 + $0xc8] sm:$0xf]
      %v796 = vld [vmem:[%s1 + $0xcc] sm:$0xf]
      %v797 = vld [vmem:[%s1 + $0xd0] sm:$0xf]
      %v798 = vld [vmem:[%s1 + $0xd4] sm:$0xf]
      %v799 = vld [vmem:[%s1 + $0xd8] sm:$0xf]
      %v800 = vld [vmem:[%s1 + $0xdc] sm:$0xf]
      %v801 = vld [vmem:[%s1 + $0xe0] sm:$0xf]
      %v802 = vld [vmem:[%s1 + $0xe4] sm:$0xf]
      %v803 = vld [vmem:[%s1 + $0xe8] sm:$0xf]
      %v804 = vld [vmem:[%s1 + $0xec] sm:$0xf]
      %v805 = vld [vmem:[%s1 + $0xf0] sm:$0xf]
      %v806 = vld [vmem:[%s1 + $0xf4] sm:$0xf]
      %v807 = vld [vmem:[%s1 + $0xf8] sm:$0xf]
      %v808 = vld [vmem:[%s1 + $0xfc] sm:$0xf]
      %v809 = vld [vmem:[%s1 + $0x100] sm:$0xf]
      %v810 = vld [vmem:[%s1 + $0x104] sm:$0xf]
      %v811 = vld [vmem:[%s1 + $0x108] sm:$0xf]
      %v812 = vld [vmem:[%s1 + $0x10c] sm:$0xf]
      %v813 = vld [vmem:[%s1 + $0x110] sm:$0xf]
      %v814 = vld [vmem:[%s1 + $0x114] sm:$0xf]
      %v815 = vld [vmem:[%s1 + $0x118] sm:$0xf]
      %v816 = vld [vmem:[%s1 + $0x11c] sm:$0xf]
      %v817 = vld [vmem:[%s1 + $0x120] sm:$0xf]
      %v818 = vld [vmem:[%s1 + $0x124] sm:$0xf]
      %v819 = vld [vmem:[%s1 + $0x128] sm:$0xf]
      %v820 = vld [vmem:[%s1 + $0x12c] sm:$0xf]
      %v821 = vld [vmem:[%s1 + $0x130] sm:$0xf]
      %v822 = vld [vmem:[%s1 + $0x134] sm:$0xf]
      %v823 = vld [vmem:[%s1 + $0x138] sm:$0xf]
      %v824 = vld [vmem:[%s1 + $0x13c] sm:$0xf]
      %v825 = vld [vmem:[%s1 + $0x140] sm:$0xf]
      %v826 = vld [vmem:[%s1 + $0x144] sm:$0xf]
      %v827 = vld [vmem:[%s1 + $0x148] sm:$0xf]
      %v828 = vld [vmem:[%s1 + $0x14c] sm:$0xf]
      %v829 = vld [vmem:[%s1 + $0x150] sm:$0xf]
      %v830 = vld [vmem:[%s1 + $0x154] sm:$0xf]
      %v831 = vld [vmem:[%s1 + $0x158] sm:$0xf]
      %v832 = vld [vmem:[%s1 + $0x15c] sm:$0xf]
      %v833 = vld [vmem:[%s1 + $0x160] sm:$0xf]
      %v834 = vld [vmem:[%s1 + $0x164] sm:$0xf]
      %v835 = vld [vmem:[%s1 + $0x168] sm:$0xf]
      %v836 = vld [vmem:[%s1 + $0x16c] sm:$0xf]
      %v837 = vld [vmem:[%s1 + $0x170] sm:$0xf]
      %v838 = vld [vmem:[%s1 + $0x174] sm:$0xf]
      %v839 = vld [vmem:[%s1 + $0x178] sm:$0xf]
      %v840 = vld [vmem:[%s1 + $0x17c] sm:$0xf]
      %v841 = vld [vmem:[%s1 + $0x180] sm:$0xf]
      %v842 = vld [vmem:[%s1 + $0x184] sm:$0xf]
      %v843 = vld [vmem:[%s1 + $0x188] sm:$0xf]
      %v844 = vld [vmem:[%s1 + $0x18c] sm:$0xf]
      %v845 = vld [vmem:[%s1 + $0x190] sm:$0xf]
      %v846 = vld [vmem:[%s1 + $0x194] sm:$0xf]
      %v847 = vld [vmem:[%s1 + $0x198] sm:$0xf]
      %v848 = vld [vmem:[%s1 + $0x19c] sm:$0xf]
      %v849 = vld [vmem:[%s1 + $0x1a0] sm:$0xf]
      %v850 = vld [vmem:[%s1 + $0x1a4] sm:$0xf]
      %v851 = vld [vmem:[%s1 + $0x1a8] sm:$0xf]
      %v852 = vld [vmem:[%s1 + $0x1ac] sm:$0xf]
      %v853 = vld [vmem:[%s1 + $0x1b0] sm:$0xf]
      %v854 = vld [vmem:[%s1 + $0x1b4] sm:$0xf]
      %v855 = vld [vmem:[%s1 + $0x1b8] sm:$0xf]
      %v856 = vld [vmem:[%s1 + $0x1bc] sm:$0xf]
      %v857 = vld [vmem:[%s1 + $0x1c0] sm:$0xf]
      %v858 = vld [vmem:[%s1 + $0x1c4] sm:$0xf]
      %v859 = vld [vmem:[%s1 + $0x1c8] sm:$0xf]
      %v860 = vld [vmem:[%s1 + $0x1cc] sm:$0xf]
      %v861 = vld [vmem:[%s1 + $0x1d0] sm:$0xf]
      %v862 = vld [vmem:[%s1 + $0x1d4] sm:$0xf]
      %v863 = vld [vmem:[%s1 + $0x1d8] sm:$0xf]
      %v864 = vld [vmem:[%s1 + $0x1dc] sm:$0xf]
      %v865 = vld [vmem:[%s1 + $0x1e0] sm:$0xf]
      %v866 = vld [vmem:[%s1 + $0x1e4] sm:$0xf]
      %v867 = vld [vmem:[%s1 + $0x1e8] sm:$0xf]
      %v868 = vld [vmem:[%s1 + $0x1ec] sm:$0xf]
      %v869 = vld [vmem:[%s1 + $0x1f0] sm:$0xf]
      %v870 = vld [vmem:[%s1 + $0x1f4] sm:$0xf]
      %v871 = vld [vmem:[%s1 + $0x1f8] sm:$0xf]
      %v872 = vld [vmem:[%s1 + $0x1fc] sm:$0xf]
      %v873 = vld [vmem:[%s1 + $0x200] sm:$0xf]
      %v874 = vld [vmem:[%s1 + $0x204] sm:$0xf]
      %v875 = vld [vmem:[%s1 + $0x208] sm:$0xf]
      %v876 = vld [vmem:[%s1 + $0x20c] sm:$0xf]
      %v877 = vld [vmem:[%s1 + $0x210] sm:$0xf]
      %v878 = vld [vmem:[%s1 + $0x214] sm:$0xf]
      %v879 = vld [vmem:[%s1 + $0x218] sm:$0xf]
      %v880 = vld [vmem:[%s1 + $0x21c] sm:$0xf]
      %v881 = vld [vmem:[%s1 + $0x220] sm:$0xf]
      %v882 = vld [vmem:[%s1 + $0x224] sm:$0xf]
      %v883 = vld [vmem:[%s1 + $0x228] sm:$0xf]
      %v884 = vld [vmem:[%s1 + $0x22c] sm:$0xf]
      %v885 = vld [vmem:[%s1 + $0x230] sm:$0xf]
      %v886 = vld [vmem:[%s1 + $0x234] sm:$0xf]
      %v887 = vld [vmem:[%s1 + $0x238] sm:$0xf]
      %v888 = vld [vmem:[%s1 + $0x23c] sm:$0xf]
      %v889 = vld [vmem:[%s1 + $0x240] sm:$0xf]
      %v890 = vld [vmem:[%s1 + $0x244] sm:$0xf]
      %v891 = vld [vmem:[%s1 + $0x248] sm:$0xf]
      %v892 = vld [vmem:[%s1 + $0x24c] sm:$0xf]
      %v893 = vld [vmem:[%s1 + $0x250] sm:$0xf]
      %v894 = vld [vmem:[%s1 + $0x254] sm:$0xf]
      %v895 = vld [vmem:[%s1 + $0x258] sm:$0xf]
      %v896 = vld [vmem:[%s1 + $0x25c] sm:$0xf]
      %v897 = vld [vmem:[%s1 + $0x260] sm:$0xf]
      %v898 = vld [vmem:[%s1 + $0x264] sm:$0xf]
      %v899 = vld [vmem:[%s1 + $0x268] sm:$0xf]
      %v900 = vld [vmem:[%s1 + $0x26c] sm:$0xf]
      %v901 = vld [vmem:[%s1 + $0x270] sm:$0xf]
      %v902 = vld [vmem:[%s1 + $0x274] sm:$0xf]
      %v903 = vld [vmem:[%s1 + $0x278] sm:$0xf]
      %v904 = vld [vmem:[%s1 + $0x27c] sm:$0xf]
      %v905 = vld [vmem:[%s1 + $0x280] sm:$0xf]
      %v906 = vld [vmem:[%s1 + $0x284] sm:$0xf]
      %v907 = vld [vmem:[%s1 + $0x288] sm:$0xf]
      %v908 = vld [vmem:[%s1 + $0x28c] sm:$0xf]
      %v909 = vld [vmem:[%s1 + $0x290] sm:$0xf]
      %v910 = vld [vmem:[%s1 + $0x294] sm:$0xf]
      %v911 = vld [vmem:[%s1 + $0x298] sm:$0xf]
      %v912 = vld [vmem:[%s1 + $0x29c] sm:$0xf]
      %v913 = vld [vmem:[%s1 + $0x2a0] sm:$0xf]
      %v914 = vld [vmem:[%s1 + $0x2a4] sm:$0xf]
      %v915 = vld [vmem:[%s1 + $0x2a8] sm:$0xf]
      %v916 = vld [vmem:[%s1 + $0x2ac] sm:$0xf]
      %v917 = vld [vmem:[%s1 + $0x2b0] sm:$0xf]
      %v918 = vld [vmem:[%s1 + $0x2b4] sm:$0xf]
      %v919 = vld [vmem:[%s1 + $0x2b8] sm:$0xf]
      %v920 = vld [vmem:[%s1 + $0x2bc] sm:$0xf]
      %v921 = vld [vmem:[%s1 + $0x2c0] sm:$0xf]
      %v922 = vld [vmem:[%s1 + $0x2c4] sm:$0xf]
      %v923 = vld [vmem:[%s1 + $0x2c8] sm:$0xf]
      %v924 = vld [vmem:[%s1 + $0x2cc] sm:$0xf]
      %v925 = vld [vmem:[%s1 + $0x2d0] sm:$0xf]
      %v926 = vld [vmem:[%s1 + $0x2d4] sm:$0xf]
      %v927 = vld [vmem:[%s1 + $0x2d8] sm:$0xf]
      %v928 = vld [vmem:[%s1 + $0x2dc] sm:$0xf]
      %v929 = vld [vmem:[%s1 + $0x2e0] sm:$0xf]
      %v930 = vld [vmem:[%s1 + $0x2e4] sm:$0xf]
      %v931 = vld [vmem:[%s1 + $0x2e8] sm:$0xf]
      %v932 = vld [vmem:[%s1 + $0x2ec] sm:$0xf]
      %v933 = vld [vmem:[%s1 + $0x2f0] sm:$0xf]
      %v934 = vld [vmem:[%s1 + $0x2f4] sm:$0xf]
      %v935 = vld [vmem:[%s1 + $0x2f8] sm:$0xf]
      %v936 = vld [vmem:[%s1 + $0x2fc] sm:$0xf]
      %v937 = vld [vmem:[%s1 + $0x300] sm:$0xf]
      %v938 = vld [vmem:[%s1 + $0x304] sm:$0xf]
      %v939 = vld [vmem:[%s1 + $0x308] sm:$0xf]
      %v940 = vld [vmem:[%s1 + $0x30c] sm:$0xf]
      %v941 = vld [vmem:[%s1 + $0x310] sm:$0xf]
      %v942 = vld [vmem:[%s1 + $0x314] sm:$0xf]
      %v943 = vld [vmem:[%s1 + $0x318] sm:$0xf]
      %v944 = vld [vmem:[%s1 + $0x31c] sm:$0xf]
      %v945 = vld [vmem:[%s1 + $0x320] sm:$0xf]
      %v946 = vld [vmem:[%s1 + $0x324] sm:$0xf]
      %v947 = vld [vmem:[%s1 + $0x328] sm:$0xf]
      %v948 = vld [vmem:[%s1 + $0x32c] sm:$0xf]
      %v949 = vld [vmem:[%s1 + $0x330] sm:$0xf]
      %v950 = vld [vmem:[%s1 + $0x334] sm:$0xf]
      %v951 = vld [vmem:[%s1 + $0x338] sm:$0xf]
      %v952 = vld [vmem:[%s1 + $0x33c] sm:$0xf]
      %v953 = vld [vmem:[%s1 + $0x340] sm:$0xf]
      %v954 = vld [vmem:[%s1 + $0x344] sm:$0xf]
      %v955 = vld [vmem:[%s1 + $0x348] sm:$0xf]
      %v956 = vld [vmem:[%s1 + $0x34c] sm:$0xf]
      %v957 = vld [vmem:[%s1 + $0x350] sm:$0xf]
      %v958 = vld [vmem:[%s1 + $0x354] sm:$0xf]
      %v959 = vld [vmem:[%s1 + $0x358] sm:$0xf]
      %v960 = vld [vmem:[%s1 + $0x35c] sm:$0xf]
      %v961 = vld [vmem:[%s1 + $0x360] sm:$0xf]
      %v962 = vld [vmem:[%s1 + $0x364] sm:$0xf]
      %v963 = vld [vmem:[%s1 + $0x368] sm:$0xf]
      %v964 = vld [vmem:[%s1 + $0x36c] sm:$0xf]
      %v965 = vld [vmem:[%s1 + $0x370] sm:$0xf]
      %v966 = vld [vmem:[%s1 + $0x374] sm:$0xf]
      %v967 = vld [vmem:[%s1 + $0x378] sm:$0xf]
      %v968 = vld [vmem:[%s1 + $0x37c] sm:$0xf]
      %v969 = vld [vmem:[%s1 + $0x380] sm:$0xf]
      %v970 = vld [vmem:[%s1 + $0x384] sm:$0xf]
      %v971 = vld [vmem:[%s1 + $0x388] sm:$0xf]
      %v972 = vld [vmem:[%s1 + $0x38c] sm:$0xf]
      %v973 = vld [vmem:[%s1 + $0x390] sm:$0xf]
      %v974 = vld [vmem:[%s1 + $0x394] sm:$0xf]
      %v975 = vld [vmem:[%s1 + $0x398] sm:$0xf]
      %v976 = vld [vmem:[%s1 + $0x39c] sm:$0xf]
      %v977 = vld [vmem:[%s1 + $0x3a0] sm:$0xf]
      %v978 = vld [vmem:[%s1 + $0x3a4] sm:$0xf]
      %v979 = vld [vmem:[%s1 + $0x3a8] sm:$0xf]
      %v980 = vld [vmem:[%s1 + $0x3ac] sm:$0xf]
      %v981 = vld [vmem:[%s1 + $0x3b0] sm:$0xf]
      %v982 = vld [vmem:[%s1 + $0x3b4] sm:$0xf]
      %v983 = vld [vmem:[%s1 + $0x3b8] sm:$0xf]
      %v984 = vld [vmem:[%s1 + $0x3bc] sm:$0xf]
      %v985 = vld [vmem:[%s1 + $0x3c0] sm:$0xf]
      %v986 = vld [vmem:[%s1 + $0x3c4] sm:$0xf]
      %v987 = vld [vmem:[%s1 + $0x3c8] sm:$0xf]
      %v988 = vld [vmem:[%s1 + $0x3cc] sm:$0xf]
      %v989 = vld [vmem:[%s1 + $0x3d0] sm:$0xf]
      %v990 = vld [vmem:[%s1 + $0x3d4] sm:$0xf]
      %v991 = vld [vmem:[%s1 + $0x3d8] sm:$0xf]
      %v992 = vld [vmem:[%s1 + $0x3dc] sm:$0xf]
      %v993 = vld [vmem:[%s1 + $0x3e0] sm:$0xf]
      %v994 = vld [vmem:[%s1 + $0x3e4] sm:$0xf]
      %v995 = vld [vmem:[%s1 + $0x3e8] sm:$0xf]
      %v996 = vld [vmem:[%s1 + $0x3ec] sm:$0xf]
      %v997 = vld [vmem:[%s1 + $0x3f0] sm:$0xf]
      %v998 = vld [vmem:[%s1 + $0x3f4] sm:$0xf]
      %v999 = vld [vmem:[%s1 + $0x3f8] sm:$0xf]
      %v1000 = vld [vmem:[%s1 + $0x3fc] sm:$0xf]
      %v1001 = vld [vmem:[%s1 + $0x400] sm:$0xf]
      %v1002 = vld [vmem:[%s1 + $0x404] sm:$0xf]
      %v1003 = vld [vmem:[%s1 + $0x408] sm:$0xf]
      %v1004 = vld [vmem:[%s1 + $0x40c] sm:$0xf]
      %v1005 = vld [vmem:[%s1 + $0x410] sm:$0xf]
      %v1006 = vld [vmem:[%s1 + $0x414] sm:$0xf]
      %v1007 = vld [vmem:[%s1 + $0x418] sm:$0xf]
      %v1008 = vld [vmem:[%s1 + $0x41c] sm:$0xf]
      %v1009 = vld [vmem:[%s1 + $0x420] sm:$0xf]
      %v1010 = vld [vmem:[%s1 + $0x424] sm:$0xf]
      %v1011 = vld [vmem:[%s1 + $0x428] sm:$0xf]
      %v1012 = vld [vmem:[%s1 + $0x42c] sm:$0xf]
      %v1013 = vld [vmem:[%s1 + $0x430] sm:$0xf]
      %v1014 = vld [vmem:[%s1 + $0x434] sm:$0xf]
      %v1015 = vld [vmem:[%s1 + $0x438] sm:$0xf]
      %v1016 = vld [vmem:[%s1 + $0x43c] sm:$0xf]
      %v1017 = vld [vmem:[%s1 + $0x440] sm:$0xf]
      %v1018 = vld [vmem:[%s1 + $0x444] sm:$0xf]
      %v1019 = vld [vmem:[%s1 + $0x448] sm:$0xf]
      %v1020 = vld [vmem:[%s1 + $0x44c] sm:$0xf]
      %v1021 = vld [vmem:[%s1 + $0x450] sm:$0xf]
      %v1022 = vld [vmem:[%s1 + $0x454] sm:$0xf]
      %v1023 = vld [vmem:[%s1 + $0x458] sm:$0xf]
      %v1024 = vld [vmem:[%s1 + $0x45c] sm:$0xf]
      %v1025 = vld [vmem:[%s1 + $0x460] sm:$0xf]
      %v1026 = vld [vmem:[%s1 + $0x464] sm:$0xf]
      %v1027 = vld [vmem:[%s1 + $0x468] sm:$0xf]
      %v1028 = vld [vmem:[%s1 + $0x46c] sm:$0xf]
      %v1029 = vld [vmem:[%s1 + $0x470] sm:$0xf]
      %v1030 = vld [vmem:[%s1 + $0x474] sm:$0xf]
      %v1031 = vld [vmem:[%s1 + $0x478] sm:$0xf]
      %v1032 = vld [vmem:[%s1 + $0x47c] sm:$0xf]
      %v1033 = vld [vmem:[%s1 + $0x480] sm:$0xf]
      %v1034 = vld [vmem:[%s1 + $0x484] sm:$0xf]
      %v1035 = vld [vmem:[%s1 + $0x488] sm:$0xf]
      %v1036 = vld [vmem:[%s1 + $0x48c] sm:$0xf]
      %v1037 = vld [vmem:[%s1 + $0x490] sm:$0xf]
      %v1038 = vld [vmem:[%s1 + $0x494] sm:$0xf]
      %v1039 = vld [vmem:[%s1 + $0x498] sm:$0xf]
      %v1040 = vld [vmem:[%s1 + $0x49c] sm:$0xf]
      %v1041 = vld [vmem:[%s1 + $0x4a0] sm:$0xf]
      %v1042 = vld [vmem:[%s1 + $0x4a4] sm:$0xf]
      %v1043 = vld [vmem:[%s1 + $0x4a8] sm:$0xf]
      %v1044 = vld [vmem:[%s1 + $0x4ac] sm:$0xf]
      %v1045 = vld [vmem:[%s1 + $0x4b0] sm:$0xf]
      %v1046 = vld [vmem:[%s1 + $0x4b4] sm:$0xf]
      %v1047 = vld [vmem:[%s1 + $0x4b8] sm:$0xf]
      %v1048 = vld [vmem:[%s1 + $0x4bc] sm:$0xf]
      %v1049 = vld [vmem:[%s1 + $0x4c0] sm:$0xf]
      %v1050 = vld [vmem:[%s1 + $0x4c4] sm:$0xf]
      %v1051 = vld [vmem:[%s1 + $0x4c8] sm:$0xf]
      %v1052 = vld [vmem:[%s1 + $0x4cc] sm:$0xf]
      %v1053 = vld [vmem:[%s1 + $0x4d0] sm:$0xf]
      %v1054 = vld [vmem:[%s1 + $0x4d4] sm:$0xf]
      %v1055 = vld [vmem:[%s1 + $0x4d8] sm:$0xf]
      %v1056 = vld [vmem:[%s1 + $0x4dc] sm:$0xf]
      %v1057 = vld [vmem:[%s1 + $0x4e0] sm:$0xf]
      %v1058 = vld [vmem:[%s1 + $0x4e4] sm:$0xf]
      %v1059 = vld [vmem:[%s1 + $0x4e8] sm:$0xf]
      %v1060 = vld [vmem:[%s1 + $0x4ec] sm:$0xf]
      %v1061 = vld [vmem:[%s1 + $0x4f0] sm:$0xf]
      %v1062 = vld [vmem:[%s1 + $0x4f4] sm:$0xf]
      %v1063 = vld [vmem:[%s1 + $0x4f8] sm:$0xf]
      %v1064 = vld [vmem:[%s1 + $0x4fc] sm:$0xf]
      %v1065 = vld [vmem:[%s1 + $0x500] sm:$0xf]
      %v1066 = vld [vmem:[%s1 + $0x504] sm:$0xf]
      %v1067 = vld [vmem:[%s1 + $0x508] sm:$0xf]
      %v1068 = vld [vmem:[%s1 + $0x50c] sm:$0xf]
      %v1069 = vld [vmem:[%s1 + $0x510] sm:$0xf]
      %v1070 = vld [vmem:[%s1 + $0x514] sm:$0xf]
      %v1071 = vld [vmem:[%s1 + $0x518] sm:$0xf]
      %v1072 = vld [vmem:[%s1 + $0x51c] sm:$0xf]
      %v1073 = vld [vmem:[%s1 + $0x520] sm:$0xf]
      %v1074 = vld [vmem:[%s1 + $0x524] sm:$0xf]
      %v1075 = vld [vmem:[%s1 + $0x528] sm:$0xf]
      %v1076 = vld [vmem:[%s1 + $0x52c] sm:$0xf]
      %v1077 = vld [vmem:[%s1 + $0x530] sm:$0xf]
      %v1078 = vld [vmem:[%s1 + $0x534] sm:$0xf]
      %v1079 = vld [vmem:[%s1 + $0x538] sm:$0xf]
      %v1080 = vld [vmem:[%s1 + $0x53c] sm:$0xf]
      %v1081 = vld [vmem:[%s1 + $0x540] sm:$0xf]
      %v1082 = vld [vmem:[%s1 + $0x544] sm:$0xf]
      %v1083 = vld [vmem:[%s1 + $0x548] sm:$0xf]
      %v1084 = vld [vmem:[%s1 + $0x54c] sm:$0xf]
      %v1085 = vld [vmem:[%s1 + $0x550] sm:$0xf]
      %v1086 = vld [vmem:[%s1 + $0x554] sm:$0xf]
      %v1087 = vld [vmem:[%s1 + $0x558] sm:$0xf]
      %v1088 = vld [vmem:[%s1 + $0x55c] sm:$0xf]
      %v1089 = vld [vmem:[%s1 + $0x560] sm:$0xf]
      %v1090 = vld [vmem:[%s1 + $0x564] sm:$0xf]
      %v1091 = vld [vmem:[%s1 + $0x568] sm:$0xf]
      %v1092 = vld [vmem:[%s1 + $0x56c] sm:$0xf]
      %v1093 = vld [vmem:[%s1 + $0x570] sm:$0xf]
      %v1094 = vld [vmem:[%s1 + $0x574] sm:$0xf]
      %v1095 = vld [vmem:[%s1 + $0x578] sm:$0xf]
      %v1096 = vld [vmem:[%s1 + $0x57c] sm:$0xf]
      %v1097 = vld [vmem:[%s1 + $0x580] sm:$0xf]
      %v1098 = vld [vmem:[%s1 + $0x584] sm:$0xf]
      %v1099 = vld [vmem:[%s1 + $0x588] sm:$0xf]
      %v1100 = vld [vmem:[%s1 + $0x58c] sm:$0xf]
      %v1101 = vld [vmem:[%s1 + $0x590] sm:$0xf]
      %v1102 = vld [vmem:[%s1 + $0x594] sm:$0xf]
      %v1103 = vld [vmem:[%s1 + $0x598] sm:$0xf]
      %v1104 = vld [vmem:[%s1 + $0x59c] sm:$0xf]
      %v1105 = vld [vmem:[%s1 + $0x5a0] sm:$0xf]
      %v1106 = vld [vmem:[%s1 + $0x5a4] sm:$0xf]
      %v1107 = vld [vmem:[%s1 + $0x5a8] sm:$0xf]
      %v1108 = vld [vmem:[%s1 + $0x5ac] sm:$0xf]
      %v1109 = vld [vmem:[%s1 + $0x5b0] sm:$0xf]
      %v1110 = vld [vmem:[%s1 + $0x5b4] sm:$0xf]
      %v1111 = vld [vmem:[%s1 + $0x5b8] sm:$0xf]
      %v1112 = vld [vmem:[%s1 + $0x5bc] sm:$0xf]
      %v1113 = vld [vmem:[%s1 + $0x5c0] sm:$0xf]
      %v1114 = vld [vmem:[%s1 + $0x5c4] sm:$0xf]
      %v1115 = vld [vmem:[%s1 + $0x5c8] sm:$0xf]
      %v1116 = vld [vmem:[%s1 + $0x5cc] sm:$0xf]
      %v1117 = vld [vmem:[%s1 + $0x5d0] sm:$0xf]
      %v1118 = vld [vmem:[%s1 + $0x5d4] sm:$0xf]
      %v1119 = vld [vmem:[%s1 + $0x5d8] sm:$0xf]
      %v1120 = vld [vmem:[%s1 + $0x5dc] sm:$0xf]
      %v1121 = vld [vmem:[%s1 + $0x5e0] sm:$0xf]
      %v1122 = vld [vmem:[%s1 + $0x5e4] sm:$0xf]
      %v1123 = vld [vmem:[%s1 + $0x5e8] sm:$0xf]
      %v1124 = vld [vmem:[%s1 + $0x5ec] sm:$0xf]
      %v1125 = vld [vmem:[%s1 + $0x5f0] sm:$0xf]
      %v1126 = vld [vmem:[%s1 + $0x5f4] sm:$0xf]
      %v1127 = vld [vmem:[%s1 + $0x5f8] sm:$0xf]
      %v1128 = vld [vmem:[%s1 + $0x5fc] sm:$0xf]
      %v1129 = vld [vmem:[%s1 + $0x600] sm:$0xf]
      %v1130 = vld [vmem:[%s1 + $0x604] sm:$0xf]
      %v1131 = vld [vmem:[%s1 + $0x608] sm:$0xf]
      %v1132 = vld [vmem:[%s1 + $0x60c] sm:$0xf]
      %v1133 = vld [vmem:[%s1 + $0x610] sm:$0xf]
      %v1134 = vld [vmem:[%s1 + $0x614] sm:$0xf]
      %v1135 = vld [vmem:[%s1 + $0x618] sm:$0xf]
      %v1136 = vld [vmem:[%s1 + $0x61c] sm:$0xf]
      %v1137 = vld [vmem:[%s1 + $0x620] sm:$0xf]
      %v1138 = vld [vmem:[%s1 + $0x624] sm:$0xf]
      %v1139 = vld [vmem:[%s1 + $0x628] sm:$0xf]
      %v1140 = vld [vmem:[%s1 + $0x62c] sm:$0xf]
      %v1141 = vld [vmem:[%s1 + $0x630] sm:$0xf]
      %v1142 = vld [vmem:[%s1 + $0x634] sm:$0xf]
      %v1143 = vld [vmem:[%s1 + $0x638] sm:$0xf]
      %v1144 = vld [vmem:[%s1 + $0x63c] sm:$0xf]
      %v1145 = vld [vmem:[%s2] sm:$0x1]
      %v1147 = vlaneseq
      %v1148 = vshrl.u32 %v1147, 7
      %v1149 = vsub.s32 0, %v1148
      %v1150 = vrot.slane %v1145, %v1149
      %v1552 = vunpack.c.l.b16 %v745
      %v1553 = vunpack.c.l.b16 %v746
      %v1554 = vunpack.c.l.b16 %v747
      %v1555 = vunpack.c.l.b16 %v748
      %v1556 = vunpack.c.l.b16 %v749
      %v1557 = vunpack.c.l.b16 %v750
      %v1558 = vunpack.c.l.b16 %v751
      %v1559 = vunpack.c.l.b16 %v752
      %v1560 = vunpack.c.l.b16 %v753
      %v1561 = vunpack.c.l.b16 %v754
      %v1562 = vunpack.c.l.b16 %v755
      %v1563 = vunpack.c.l.b16 %v756
      %v1564 = vunpack.c.l.b16 %v757
      %v1565 = vunpack.c.l.b16 %v758
      %v1566 = vunpack.c.l.b16 %v759
      %v1567 = vunpack.c.l.b16 %v760
      %v1568 = vunpack.c.l.b16 %v761
      %v1569 = vunpack.c.l.b16 %v762
      %v1570 = vunpack.c.l.b16 %v763
      %v1571 = vunpack.c.l.b16 %v764
      %v1572 = vunpack.c.l.b16 %v765
      %v1573 = vunpack.c.l.b16 %v766
      %v1574 = vunpack.c.l.b16 %v767
      %v1575 = vunpack.c.l.b16 %v768
      %v1576 = vunpack.c.l.b16 %v769
      %v1577 = vunpack.c.l.b16 %v770
      %v1578 = vunpack.c.l.b16 %v771
      %v1579 = vunpack.c.l.b16 %v772
      %v1580 = vunpack.c.l.b16 %v773
      %v1581 = vunpack.c.l.b16 %v774
      %v1582 = vunpack.c.l.b16 %v775
      %v1583 = vunpack.c.l.b16 %v776
      %v1584 = vunpack.c.l.b16 %v777
      %v1585 = vunpack.c.l.b16 %v778
      %v1586 = vunpack.c.l.b16 %v779
      %v1587 = vunpack.c.l.b16 %v780
      %v1588 = vunpack.c.l.b16 %v781
      %v1589 = vunpack.c.l.b16 %v782
      %v1590 = vunpack.c.l.b16 %v783
      %v1591 = vunpack.c.l.b16 %v784
      %v1592 = vunpack.c.l.b16 %v785
      %v1593 = vunpack.c.l.b16 %v786
      %v1594 = vunpack.c.l.b16 %v787
      %v1595 = vunpack.c.l.b16 %v788
      %v1596 = vunpack.c.l.b16 %v789
      %v1597 = vunpack.c.l.b16 %v790
      %v1598 = vunpack.c.l.b16 %v791
      %v1599 = vunpack.c.l.b16 %v792
      %v1600 = vunpack.c.l.b16 %v793
      %v1601 = vunpack.c.l.b16 %v794
      %v1602 = vunpack.c.l.b16 %v795
      %v1603 = vunpack.c.l.b16 %v796
      %v1604 = vunpack.c.l.b16 %v797
      %v1605 = vunpack.c.l.b16 %v798
      %v1606 = vunpack.c.l.b16 %v799
      %v1607 = vunpack.c.l.b16 %v800
      %v1608 = vunpack.c.l.b16 %v801
      %v1609 = vunpack.c.l.b16 %v802
      %v1610 = vunpack.c.l.b16 %v803
      %v1611 = vunpack.c.l.b16 %v804
      %v1612 = vunpack.c.l.b16 %v805
      %v1613 = vunpack.c.l.b16 %v806
      %v1614 = vunpack.c.l.b16 %v807
      %v1615 = vunpack.c.l.b16 %v808
      %v1616 = vunpack.c.l.b16 %v809
      %v1617 = vunpack.c.l.b16 %v810
      %v1618 = vunpack.c.l.b16 %v811
      %v1619 = vunpack.c.l.b16 %v812
      %v1620 = vunpack.c.l.b16 %v813
      %v1621 = vunpack.c.l.b16 %v814
      %v1622 = vunpack.c.l.b16 %v815
      %v1623 = vunpack.c.l.b16 %v816
      %v1624 = vunpack.c.l.b16 %v817
      %v1625 = vunpack.c.l.b16 %v818
      %v1626 = vunpack.c.l.b16 %v819
      %v1627 = vunpack.c.l.b16 %v820
      %v1628 = vunpack.c.l.b16 %v821
      %v1629 = vunpack.c.l.b16 %v822
      %v1630 = vunpack.c.l.b16 %v823
      %v1631 = vunpack.c.l.b16 %v824
      %v1632 = vunpack.c.l.b16 %v825
      %v1633 = vunpack.c.l.b16 %v826
      %v1634 = vunpack.c.l.b16 %v827
      %v1635 = vunpack.c.l.b16 %v828
      %v1636 = vunpack.c.l.b16 %v829
      %v1637 = vunpack.c.l.b16 %v830
      %v1638 = vunpack.c.l.b16 %v831
      %v1639 = vunpack.c.l.b16 %v832
      %v1640 = vunpack.c.l.b16 %v833
      %v1641 = vunpack.c.l.b16 %v834
      %v1642 = vunpack.c.l.b16 %v835
      %v1643 = vunpack.c.l.b16 %v836
      %v1644 = vunpack.c.l.b16 %v837
      %v1645 = vunpack.c.l.b16 %v838
      %v1646 = vunpack.c.l.b16 %v839
      %v1647 = vunpack.c.l.b16 %v840
      %v1648 = vunpack.c.l.b16 %v841
      %v1649 = vunpack.c.l.b16 %v842
      %v1650 = vunpack.c.l.b16 %v843
      %v1651 = vunpack.c.l.b16 %v844
      %v1652 = vunpack.c.l.b16 %v845
      %v1653 = vunpack.c.l.b16 %v846
      %v1654 = vunpack.c.l.b16 %v847
      %v1655 = vunpack.c.l.b16 %v848
      %v1656 = vunpack.c.l.b16 %v849
      %v1657 = vunpack.c.l.b16 %v850
      %v1658 = vunpack.c.l.b16 %v851
      %v1659 = vunpack.c.l.b16 %v852
      %v1660 = vunpack.c.l.b16 %v853
      %v1661 = vunpack.c.l.b16 %v854
      %v1662 = vunpack.c.l.b16 %v855
      %v1663 = vunpack.c.l.b16 %v856
      %v1664 = vunpack.c.l.b16 %v857
      %v1665 = vunpack.c.l.b16 %v858
      %v1666 = vunpack.c.l.b16 %v859
      %v1667 = vunpack.c.l.b16 %v860
      %v1668 = vunpack.c.l.b16 %v861
      %v1669 = vunpack.c.l.b16 %v862
      %v1670 = vunpack.c.l.b16 %v863
      %v1671 = vunpack.c.l.b16 %v864
      %v1672 = vunpack.c.l.b16 %v865
      %v1673 = vunpack.c.l.b16 %v866
      %v1674 = vunpack.c.l.b16 %v867
      %v1675 = vunpack.c.l.b16 %v868
      %v1676 = vunpack.c.l.b16 %v869
      %v1677 = vunpack.c.l.b16 %v870
      %v1678 = vunpack.c.l.b16 %v871
      %v1679 = vunpack.c.l.b16 %v872
      %v1680 = vunpack.c.l.b16 %v873
      %v1681 = vunpack.c.l.b16 %v874
      %v1682 = vunpack.c.l.b16 %v875
      %v1683 = vunpack.c.l.b16 %v876
      %v1684 = vunpack.c.l.b16 %v877
      %v1685 = vunpack.c.l.b16 %v878
      %v1686 = vunpack.c.l.b16 %v879
      %v1687 = vunpack.c.l.b16 %v880
      %v1688 = vunpack.c.l.b16 %v881
      %v1689 = vunpack.c.l.b16 %v882
      %v1690 = vunpack.c.l.b16 %v883
      %v1691 = vunpack.c.l.b16 %v884
      %v1692 = vunpack.c.l.b16 %v885
      %v1693 = vunpack.c.l.b16 %v886
      %v1694 = vunpack.c.l.b16 %v887
      %v1695 = vunpack.c.l.b16 %v888
      %v1696 = vunpack.c.l.b16 %v889
      %v1697 = vunpack.c.l.b16 %v890
      %v1698 = vunpack.c.l.b16 %v891
      %v1699 = vunpack.c.l.b16 %v892
      %v1700 = vunpack.c.l.b16 %v893
      %v1701 = vunpack.c.l.b16 %v894
      %v1702 = vunpack.c.l.b16 %v895
      %v1703 = vunpack.c.l.b16 %v896
      %v1704 = vunpack.c.l.b16 %v897
      %v1705 = vunpack.c.l.b16 %v898
      %v1706 = vunpack.c.l.b16 %v899
      %v1707 = vunpack.c.l.b16 %v900
      %v1708 = vunpack.c.l.b16 %v901
      %v1709 = vunpack.c.l.b16 %v902
      %v1710 = vunpack.c.l.b16 %v903
      %v1711 = vunpack.c.l.b16 %v904
      %v1712 = vunpack.c.l.b16 %v905
      %v1713 = vunpack.c.l.b16 %v906
      %v1714 = vunpack.c.l.b16 %v907
      %v1715 = vunpack.c.l.b16 %v908
      %v1716 = vunpack.c.l.b16 %v909
      %v1717 = vunpack.c.l.b16 %v910
      %v1718 = vunpack.c.l.b16 %v911
      %v1719 = vunpack.c.l.b16 %v912
      %v1720 = vunpack.c.l.b16 %v913
      %v1721 = vunpack.c.l.b16 %v914
      %v1722 = vunpack.c.l.b16 %v915
      %v1723 = vunpack.c.l.b16 %v916
      %v1724 = vunpack.c.l.b16 %v917
      %v1725 = vunpack.c.l.b16 %v918
      %v1726 = vunpack.c.l.b16 %v919
      %v1727 = vunpack.c.l.b16 %v920
      %v1728 = vunpack.c.l.b16 %v921
      %v1729 = vunpack.c.l.b16 %v922
      %v1730 = vunpack.c.l.b16 %v923
      %v1731 = vunpack.c.l.b16 %v924
      %v1732 = vunpack.c.l.b16 %v925
      %v1733 = vunpack.c.l.b16 %v926
      %v1734 = vunpack.c.l.b16 %v927
      %v1735 = vunpack.c.l.b16 %v928
      %v1736 = vunpack.c.l.b16 %v929
      %v1737 = vunpack.c.l.b16 %v930
      %v1738 = vunpack.c.l.b16 %v931
      %v1739 = vunpack.c.l.b16 %v932
      %v1740 = vunpack.c.l.b16 %v933
      %v1741 = vunpack.c.l.b16 %v934
      %v1742 = vunpack.c.l.b16 %v935
      %v1743 = vunpack.c.l.b16 %v936
      %v1744 = vunpack.c.l.b16 %v937
      %v1745 = vunpack.c.l.b16 %v938
      %v1746 = vunpack.c.l.b16 %v939
      %v1747 = vunpack.c.l.b16 %v940
      %v1748 = vunpack.c.l.b16 %v941
      %v1749 = vunpack.c.l.b16 %v942
      %v1750 = vunpack.c.l.b16 %v943
      %v1751 = vunpack.c.l.b16 %v944
      %v1752 = vunpack.c.l.b16 %v945
      %v1753 = vunpack.c.l.b16 %v946
      %v1754 = vunpack.c.l.b16 %v947
      %v1755 = vunpack.c.l.b16 %v948
      %v1756 = vunpack.c.l.b16 %v949
      %v1757 = vunpack.c.l.b16 %v950
      %v1758 = vunpack.c.l.b16 %v951
      %v1759 = vunpack.c.l.b16 %v952
      %v1760 = vunpack.c.l.b16 %v953
      %v1761 = vunpack.c.l.b16 %v954
      %v1762 = vunpack.c.l.b16 %v955
      %v1763 = vunpack.c.l.b16 %v956
      %v1764 = vunpack.c.l.b16 %v957
      %v1765 = vunpack.c.l.b16 %v958
      %v1766 = vunpack.c.l.b16 %v959
      %v1767 = vunpack.c.l.b16 %v960
      %v1768 = vunpack.c.l.b16 %v961
      %v1769 = vunpack.c.l.b16 %v962
      %v1770 = vunpack.c.l.b16 %v963
      %v1771 = vunpack.c.l.b16 %v964
      %v1772 = vunpack.c.l.b16 %v965
      %v1773 = vunpack.c.l.b16 %v966
      %v1774 = vunpack.c.l.b16 %v967
      %v1775 = vunpack.c.l.b16 %v968
      %v1776 = vunpack.c.l.b16 %v969
      %v1777 = vunpack.c.l.b16 %v970
      %v1778 = vunpack.c.l.b16 %v971
      %v1779 = vunpack.c.l.b16 %v972
      %v1780 = vunpack.c.l.b16 %v973
      %v1781 = vunpack.c.l.b16 %v974
      %v1782 = vunpack.c.l.b16 %v975
      %v1783 = vunpack.c.l.b16 %v976
      %v1784 = vunpack.c.l.b16 %v977
      %v1785 = vunpack.c.l.b16 %v978
      %v1786 = vunpack.c.l.b16 %v979
      %v1787 = vunpack.c.l.b16 %v980
      %v1788 = vunpack.c.l.b16 %v981
      %v1789 = vunpack.c.l.b16 %v982
      %v1790 = vunpack.c.l.b16 %v983
      %v1791 = vunpack.c.l.b16 %v984
      %v1792 = vunpack.c.l.b16 %v985
      %v1793 = vunpack.c.l.b16 %v986
      %v1794 = vunpack.c.l.b16 %v987
      %v1795 = vunpack.c.l.b16 %v988
      %v1796 = vunpack.c.l.b16 %v989
      %v1797 = vunpack.c.l.b16 %v990
      %v1798 = vunpack.c.l.b16 %v991
      %v1799 = vunpack.c.l.b16 %v992
      %v1800 = vunpack.c.l.b16 %v993
      %v1801 = vunpack.c.l.b16 %v994
      %v1802 = vunpack.c.l.b16 %v995
      %v1803 = vunpack.c.l.b16 %v996
      %v1804 = vunpack.c.l.b16 %v997
      %v1805 = vunpack.c.l.b16 %v998
      %v1806 = vunpack.c.l.b16 %v999
      %v1807 = vunpack.c.l.b16 %v1000
      %v1808 = vunpack.c.l.b16 %v1001
      %v1809 = vunpack.c.l.b16 %v1002
      %v1810 = vunpack.c.l.b16 %v1003
      %v1811 = vunpack.c.l.b16 %v1004
      %v1812 = vunpack.c.l.b16 %v1005
      %v1813 = vunpack.c.l.b16 %v1006
      %v1814 = vunpack.c.l.b16 %v1007
      %v1815 = vunpack.c.l.b16 %v1008
      %v1816 = vunpack.c.l.b16 %v1009
      %v1817 = vunpack.c.l.b16 %v1010
      %v1818 = vunpack.c.l.b16 %v1011
      %v1819 = vunpack.c.l.b16 %v1012
      %v1820 = vunpack.c.l.b16 %v1013
      %v1821 = vunpack.c.l.b16 %v1014
      %v1822 = vunpack.c.l.b16 %v1015
      %v1823 = vunpack.c.l.b16 %v1016
      %v1824 = vunpack.c.l.b16 %v1017
      %v1825 = vunpack.c.l.b16 %v1018
      %v1826 = vunpack.c.l.b16 %v1019
      %v1827 = vunpack.c.l.b16 %v1020
      %v1828 = vunpack.c.l.b16 %v1021
      %v1829 = vunpack.c.l.b16 %v1022
      %v1830 = vunpack.c.l.b16 %v1023
      %v1831 = vunpack.c.l.b16 %v1024
      %v1832 = vunpack.c.l.b16 %v1025
      %v1833 = vunpack.c.l.b16 %v1026
      %v1834 = vunpack.c.l.b16 %v1027
      %v1835 = vunpack.c.l.b16 %v1028
      %v1836 = vunpack.c.l.b16 %v1029
      %v1837 = vunpack.c.l.b16 %v1030
      %v1838 = vunpack.c.l.b16 %v1031
      %v1839 = vunpack.c.l.b16 %v1032
      %v1840 = vunpack.c.l.b16 %v1033
      %v1841 = vunpack.c.l.b16 %v1034
      %v1842 = vunpack.c.l.b16 %v1035
      %v1843 = vunpack.c.l.b16 %v1036
      %v1844 = vunpack.c.l.b16 %v1037
      %v1845 = vunpack.c.l.b16 %v1038
      %v1846 = vunpack.c.l.b16 %v1039
      %v1847 = vunpack.c.l.b16 %v1040
      %v1848 = vunpack.c.l.b16 %v1041
      %v1849 = vunpack.c.l.b16 %v1042
      %v1850 = vunpack.c.l.b16 %v1043
      %v1851 = vunpack.c.l.b16 %v1044
      %v1852 = vunpack.c.l.b16 %v1045
      %v1853 = vunpack.c.l.b16 %v1046
      %v1854 = vunpack.c.l.b16 %v1047
      %v1855 = vunpack.c.l.b16 %v1048
      %v1856 = vunpack.c.l.b16 %v1049
      %v1857 = vunpack.c.l.b16 %v1050
      %v1858 = vunpack.c.l.b16 %v1051
      %v1859 = vunpack.c.l.b16 %v1052
      %v1860 = vunpack.c.l.b16 %v1053
      %v1861 = vunpack.c.l.b16 %v1054
      %v1862 = vunpack.c.l.b16 %v1055
      %v1863 = vunpack.c.l.b16 %v1056
      %v1864 = vunpack.c.l.b16 %v1057
      %v1865 = vunpack.c.l.b16 %v1058
      %v1866 = vunpack.c.l.b16 %v1059
      %v1867 = vunpack.c.l.b16 %v1060
      %v1868 = vunpack.c.l.b16 %v1061
      %v1869 = vunpack.c.l.b16 %v1062
      %v1870 = vunpack.c.l.b16 %v1063
      %v1871 = vunpack.c.l.b16 %v1064
      %v1872 = vunpack.c.l.b16 %v1065
      %v1873 = vunpack.c.l.b16 %v1066
      %v1874 = vunpack.c.l.b16 %v1067
      %v1875 = vunpack.c.l.b16 %v1068
      %v1876 = vunpack.c.l.b16 %v1069
      %v1877 = vunpack.c.l.b16 %v1070
      %v1878 = vunpack.c.l.b16 %v1071
      %v1879 = vunpack.c.l.b16 %v1072
      %v1880 = vunpack.c.l.b16 %v1073
      %v1881 = vunpack.c.l.b16 %v1074
      %v1882 = vunpack.c.l.b16 %v1075
      %v1883 = vunpack.c.l.b16 %v1076
      %v1884 = vunpack.c.l.b16 %v1077
      %v1885 = vunpack.c.l.b16 %v1078
      %v1886 = vunpack.c.l.b16 %v1079
      %v1887 = vunpack.c.l.b16 %v1080
      %v1888 = vunpack.c.l.b16 %v1081
      %v1889 = vunpack.c.l.b16 %v1082
      %v1890 = vunpack.c.l.b16 %v1083
      %v1891 = vunpack.c.l.b16 %v1084
      %v1892 = vunpack.c.l.b16 %v1085
      %v1893 = vunpack.c.l.b16 %v1086
      %v1894 = vunpack.c.l.b16 %v1087
      %v1895 = vunpack.c.l.b16 %v1088
      %v1896 = vunpack.c.l.b16 %v1089
      %v1897 = vunpack.c.l.b16 %v1090
      %v1898 = vunpack.c.l.b16 %v1091
      %v1899 = vunpack.c.l.b16 %v1092
      %v1900 = vunpack.c.l.b16 %v1093
      %v1901 = vunpack.c.l.b16 %v1094
      %v1902 = vunpack.c.l.b16 %v1095
      %v1903 = vunpack.c.l.b16 %v1096
      %v1904 = vunpack.c.l.b16 %v1097
      %v1905 = vunpack.c.l.b16 %v1098
      %v1906 = vunpack.c.l.b16 %v1099
      %v1907 = vunpack.c.l.b16 %v1100
      %v1908 = vunpack.c.l.b16 %v1101
      %v1909 = vunpack.c.l.b16 %v1102
      %v1910 = vunpack.c.l.b16 %v1103
      %v1911 = vunpack.c.l.b16 %v1104
      %v1912 = vunpack.c.l.b16 %v1105
      %v1913 = vunpack.c.l.b16 %v1106
      %v1914 = vunpack.c.l.b16 %v1107
      %v1915 = vunpack.c.l.b16 %v1108
      %v1916 = vunpack.c.l.b16 %v1109
      %v1917 = vunpack.c.l.b16 %v1110
      %v1918 = vunpack.c.l.b16 %v1111
      %v1919 = vunpack.c.l.b16 %v1112
      %v1920 = vunpack.c.l.b16 %v1113
      %v1921 = vunpack.c.l.b16 %v1114
      %v1922 = vunpack.c.l.b16 %v1115
      %v1923 = vunpack.c.l.b16 %v1116
      %v1924 = vunpack.c.l.b16 %v1117
      %v1925 = vunpack.c.l.b16 %v1118
      %v1926 = vunpack.c.l.b16 %v1119
      %v1927 = vunpack.c.l.b16 %v1120
      %v1928 = vunpack.c.l.b16 %v1121
      %v1929 = vunpack.c.l.b16 %v1122
      %v1930 = vunpack.c.l.b16 %v1123
      %v1931 = vunpack.c.l.b16 %v1124
      %v1932 = vunpack.c.l.b16 %v1125
      %v1933 = vunpack.c.l.b16 %v1126
      %v1934 = vunpack.c.l.b16 %v1127
      %v1935 = vunpack.c.l.b16 %v1128
      %v1936 = vunpack.c.l.b16 %v1129
      %v1937 = vunpack.c.l.b16 %v1130
      %v1938 = vunpack.c.l.b16 %v1131
      %v1939 = vunpack.c.l.b16 %v1132
      %v1940 = vunpack.c.l.b16 %v1133
      %v1941 = vunpack.c.l.b16 %v1134
      %v1942 = vunpack.c.l.b16 %v1135
      %v1943 = vunpack.c.l.b16 %v1136
      %v1944 = vunpack.c.l.b16 %v1137
      %v1945 = vunpack.c.l.b16 %v1138
      %v1946 = vunpack.c.l.b16 %v1139
      %v1947 = vunpack.c.l.b16 %v1140
      %v1948 = vunpack.c.l.b16 %v1141
      %v1949 = vunpack.c.l.b16 %v1142
      %v1950 = vunpack.c.l.b16 %v1143
      %v1951 = vunpack.c.l.b16 %v1144
      %v1952 = vpack.c.b16 %v1553, %v1552
      %v1953 = vpack.c.b16 %v1555, %v1554
      %v1954 = vpack.c.b16 %v1557, %v1556
      %v1955 = vpack.c.b16 %v1559, %v1558
      %v1956 = vpack.c.b16 %v1561, %v1560
      %v1957 = vpack.c.b16 %v1563, %v1562
      %v1958 = vpack.c.b16 %v1565, %v1564
      %v1959 = vpack.c.b16 %v1567, %v1566
      %v1960 = vpack.c.b16 %v1569, %v1568
      %v1961 = vpack.c.b16 %v1571, %v1570
      %v1962 = vpack.c.b16 %v1573, %v1572
      %v1963 = vpack.c.b16 %v1575, %v1574
      %v1964 = vpack.c.b16 %v1577, %v1576
      %v1965 = vpack.c.b16 %v1579, %v1578
      %v1966 = vpack.c.b16 %v1581, %v1580
      %v1967 = vpack.c.b16 %v1583, %v1582
      %v1968 = vpack.c.b16 %v1585, %v1584
      %v1969 = vpack.c.b16 %v1587, %v1586
      %v1970 = vpack.c.b16 %v1589, %v1588
      %v1971 = vpack.c.b16 %v1591, %v1590
      %v1972 = vpack.c.b16 %v1593, %v1592
      %v1973 = vpack.c.b16 %v1595, %v1594
      %v1974 = vpack.c.b16 %v1597, %v1596
      %v1975 = vpack.c.b16 %v1599, %v1598
      %v1976 = vpack.c.b16 %v1601, %v1600
      %v1977 = vpack.c.b16 %v1603, %v1602
      %v1978 = vpack.c.b16 %v1605, %v1604
      %v1979 = vpack.c.b16 %v1607, %v1606
      %v1980 = vpack.c.b16 %v1609, %v1608
      %v1981 = vpack.c.b16 %v1611, %v1610
      %v1982 = vpack.c.b16 %v1613, %v1612
      %v1983 = vpack.c.b16 %v1615, %v1614
      %v1984 = vpack.c.b16 %v1617, %v1616
      %v1985 = vpack.c.b16 %v1619, %v1618
      %v1986 = vpack.c.b16 %v1621, %v1620
      %v1987 = vpack.c.b16 %v1623, %v1622
      %v1988 = vpack.c.b16 %v1625, %v1624
      %v1989 = vpack.c.b16 %v1627, %v1626
      %v1990 = vpack.c.b16 %v1629, %v1628
      %v1991 = vpack.c.b16 %v1631, %v1630
      %v1992 = vpack.c.b16 %v1633, %v1632
      %v1993 = vpack.c.b16 %v1635, %v1634
      %v1994 = vpack.c.b16 %v1637, %v1636
      %v1995 = vpack.c.b16 %v1639, %v1638
      %v1996 = vpack.c.b16 %v1641, %v1640
      %v1997 = vpack.c.b16 %v1643, %v1642
      %v1998 = vpack.c.b16 %v1645, %v1644
      %v1999 = vpack.c.b16 %v1647, %v1646
      %v2000 = vpack.c.b16 %v1649, %v1648
      %v2001 = vpack.c.b16 %v1651, %v1650
      %v2002 = vpack.c.b16 %v1653, %v1652
      %v2003 = vpack.c.b16 %v1655, %v1654
      %v2004 = vpack.c.b16 %v1657, %v1656
      %v2005 = vpack.c.b16 %v1659, %v1658
      %v2006 = vpack.c.b16 %v1661, %v1660
      %v2007 = vpack.c.b16 %v1663, %v1662
      %v2008 = vpack.c.b16 %v1665, %v1664
      %v2009 = vpack.c.b16 %v1667, %v1666
      %v2010 = vpack.c.b16 %v1669, %v1668
      %v2011 = vpack.c.b16 %v1671, %v1670
      %v2012 = vpack.c.b16 %v1673, %v1672
      %v2013 = vpack.c.b16 %v1675, %v1674
      %v2014 = vpack.c.b16 %v1677, %v1676
      %v2015 = vpack.c.b16 %v1679, %v1678
      %v2016 = vpack.c.b16 %v1681, %v1680
      %v2017 = vpack.c.b16 %v1683, %v1682
      %v2018 = vpack.c.b16 %v1685, %v1684
      %v2019 = vpack.c.b16 %v1687, %v1686
      %v2020 = vpack.c.b16 %v1689, %v1688
      %v2021 = vpack.c.b16 %v1691, %v1690
      %v2022 = vpack.c.b16 %v1693, %v1692
      %v2023 = vpack.c.b16 %v1695, %v1694
      %v2024 = vpack.c.b16 %v1697, %v1696
      %v2025 = vpack.c.b16 %v1699, %v1698
      %v2026 = vpack.c.b16 %v1701, %v1700
      %v2027 = vpack.c.b16 %v1703, %v1702
      %v2028 = vpack.c.b16 %v1705, %v1704
      %v2029 = vpack.c.b16 %v1707, %v1706
      %v2030 = vpack.c.b16 %v1709, %v1708
      %v2031 = vpack.c.b16 %v1711, %v1710
      %v2032 = vpack.c.b16 %v1713, %v1712
      %v2033 = vpack.c.b16 %v1715, %v1714
      %v2034 = vpack.c.b16 %v1717, %v1716
      %v2035 = vpack.c.b16 %v1719, %v1718
      %v2036 = vpack.c.b16 %v1721, %v1720
      %v2037 = vpack.c.b16 %v1723, %v1722
      %v2038 = vpack.c.b16 %v1725, %v1724
      %v2039 = vpack.c.b16 %v1727, %v1726
      %v2040 = vpack.c.b16 %v1729, %v1728
      %v2041 = vpack.c.b16 %v1731, %v1730
      %v2042 = vpack.c.b16 %v1733, %v1732
      %v2043 = vpack.c.b16 %v1735, %v1734
      %v2044 = vpack.c.b16 %v1737, %v1736
      %v2045 = vpack.c.b16 %v1739, %v1738
      %v2046 = vpack.c.b16 %v1741, %v1740
      %v2047 = vpack.c.b16 %v1743, %v1742
      %v2048 = vpack.c.b16 %v1745, %v1744
      %v2049 = vpack.c.b16 %v1747, %v1746
      %v2050 = vpack.c.b16 %v1749, %v1748
      %v2051 = vpack.c.b16 %v1751, %v1750
      %v2052 = vpack.c.b16 %v1753, %v1752
      %v2053 = vpack.c.b16 %v1755, %v1754
      %v2054 = vpack.c.b16 %v1757, %v1756
      %v2055 = vpack.c.b16 %v1759, %v1758
      %v2056 = vpack.c.b16 %v1761, %v1760
      %v2057 = vpack.c.b16 %v1763, %v1762
      %v2058 = vpack.c.b16 %v1765, %v1764
      %v2059 = vpack.c.b16 %v1767, %v1766
      %v2060 = vpack.c.b16 %v1769, %v1768
      %v2061 = vpack.c.b16 %v1771, %v1770
      %v2062 = vpack.c.b16 %v1773, %v1772
      %v2063 = vpack.c.b16 %v1775, %v1774
      %v2064 = vpack.c.b16 %v1777, %v1776
      %v2065 = vpack.c.b16 %v1779, %v1778
      %v2066 = vpack.c.b16 %v1781, %v1780
      %v2067 = vpack.c.b16 %v1783, %v1782
      %v2068 = vpack.c.b16 %v1785, %v1784
      %v2069 = vpack.c.b16 %v1787, %v1786
      %v2070 = vpack.c.b16 %v1789, %v1788
      %v2071 = vpack.c.b16 %v1791, %v1790
      %v2072 = vpack.c.b16 %v1793, %v1792
      %v2073 = vpack.c.b16 %v1795, %v1794
      %v2074 = vpack.c.b16 %v1797, %v1796
      %v2075 = vpack.c.b16 %v1799, %v1798
      %v2076 = vpack.c.b16 %v1801, %v1800
      %v2077 = vpack.c.b16 %v1803, %v1802
      %v2078 = vpack.c.b16 %v1805, %v1804
      %v2079 = vpack.c.b16 %v1807, %v1806
      %v2080 = vpack.c.b16 %v1809, %v1808
      %v2081 = vpack.c.b16 %v1811, %v1810
      %v2082 = vpack.c.b16 %v1813, %v1812
      %v2083 = vpack.c.b16 %v1815, %v1814
      %v2084 = vpack.c.b16 %v1817, %v1816
      %v2085 = vpack.c.b16 %v1819, %v1818
      %v2086 = vpack.c.b16 %v1821, %v1820
      %v2087 = vpack.c.b16 %v1823, %v1822
      %v2088 = vpack.c.b16 %v1825, %v1824
      %v2089 = vpack.c.b16 %v1827, %v1826
      %v2090 = vpack.c.b16 %v1829, %v1828
      %v2091 = vpack.c.b16 %v1831, %v1830
      %v2092 = vpack.c.b16 %v1833, %v1832
      %v2093 = vpack.c.b16 %v1835, %v1834
      %v2094 = vpack.c.b16 %v1837, %v1836
      %v2095 = vpack.c.b16 %v1839, %v1838
      %v2096 = vpack.c.b16 %v1841, %v1840
      %v2097 = vpack.c.b16 %v1843, %v1842
      %v2098 = vpack.c.b16 %v1845, %v1844
      %v2099 = vpack.c.b16 %v1847, %v1846
      %v2100 = vpack.c.b16 %v1849, %v1848
      %v2101 = vpack.c.b16 %v1851, %v1850
      %v2102 = vpack.c.b16 %v1853, %v1852
      %v2103 = vpack.c.b16 %v1855, %v1854
      %v2104 = vpack.c.b16 %v1857, %v1856
      %v2105 = vpack.c.b16 %v1859, %v1858
      %v2106 = vpack.c.b16 %v1861, %v1860
      %v2107 = vpack.c.b16 %v1863, %v1862
      %v2108 = vpack.c.b16 %v1865, %v1864
      %v2109 = vpack.c.b16 %v1867, %v1866
      %v2110 = vpack.c.b16 %v1869, %v1868
      %v2111 = vpack.c.b16 %v1871, %v1870
      %v2112 = vpack.c.b16 %v1873, %v1872
      %v2113 = vpack.c.b16 %v1875, %v1874
      %v2114 = vpack.c.b16 %v1877, %v1876
      %v2115 = vpack.c.b16 %v1879, %v1878
      %v2116 = vpack.c.b16 %v1881, %v1880
      %v2117 = vpack.c.b16 %v1883, %v1882
      %v2118 = vpack.c.b16 %v1885, %v1884
      %v2119 = vpack.c.b16 %v1887, %v1886
      %v2120 = vpack.c.b16 %v1889, %v1888
      %v2121 = vpack.c.b16 %v1891, %v1890
      %v2122 = vpack.c.b16 %v1893, %v1892
      %v2123 = vpack.c.b16 %v1895, %v1894
      %v2124 = vpack.c.b16 %v1897, %v1896
      %v2125 = vpack.c.b16 %v1899, %v1898
      %v2126 = vpack.c.b16 %v1901, %v1900
      %v2127 = vpack.c.b16 %v1903, %v1902
      %v2128 = vpack.c.b16 %v1905, %v1904
      %v2129 = vpack.c.b16 %v1907, %v1906
      %v2130 = vpack.c.b16 %v1909, %v1908
      %v2131 = vpack.c.b16 %v1911, %v1910
      %v2132 = vpack.c.b16 %v1913, %v1912
      %v2133 = vpack.c.b16 %v1915, %v1914
      %v2134 = vpack.c.b16 %v1917, %v1916
      %v2135 = vpack.c.b16 %v1919, %v1918
      %v2136 = vpack.c.b16 %v1921, %v1920
      %v2137 = vpack.c.b16 %v1923, %v1922
      %v2138 = vpack.c.b16 %v1925, %v1924
      %v2139 = vpack.c.b16 %v1927, %v1926
      %v2140 = vpack.c.b16 %v1929, %v1928
      %v2141 = vpack.c.b16 %v1931, %v1930
      %v2142 = vpack.c.b16 %v1933, %v1932
      %v2143 = vpack.c.b16 %v1935, %v1934
      %v2144 = vpack.c.b16 %v1937, %v1936
      %v2145 = vpack.c.b16 %v1939, %v1938
      %v2146 = vpack.c.b16 %v1941, %v1940
      %v2147 = vpack.c.b16 %v1943, %v1942
      %v2148 = vpack.c.b16 %v1945, %v1944
      %v2149 = vpack.c.b16 %v1947, %v1946
      %v2150 = vpack.c.b16 %v1949, %v1948
      %v2151 = vpack.c.b16 %v1951, %v1950
      %2352 = vmatprep.subr.bf16.mxu0 0
      %2353 = vmatpush1.bf16.msra.mxu0 %v1952
      %2354 = vmatprep.subr.bf16.mxu0 0
      %2355 = vmatpush1.bf16.msra.mxu0 %v1953
      %2356 = vmatprep.subr.bf16.mxu0 0
      %2357 = vmatpush1.bf16.msra.mxu0 %v1954
      %2358 = vmatprep.subr.bf16.mxu0 0
      %2359 = vmatpush1.bf16.msra.mxu0 %v1955
      %2360 = vmatprep.subr.bf16.mxu0 0
      %2361 = vmatpush1.bf16.msra.mxu0 %v1956
      %2362 = vmatprep.subr.bf16.mxu0 0
      %2363 = vmatpush1.bf16.msra.mxu0 %v1957
      %2364 = vmatprep.subr.bf16.mxu0 0
      %2365 = vmatpush1.bf16.msra.mxu0 %v1958
      %2366 = vmatprep.subr.bf16.mxu0 0
      %2367 = vmatpush1.bf16.msra.mxu0 %v1959
      %2368 = vmatprep.subr.bf16.mxu0 0
      %2369 = vmatpush1.bf16.msra.mxu0 %v1960
      %2370 = vmatprep.subr.bf16.mxu0 0
      %2371 = vmatpush1.bf16.msra.mxu0 %v1961
      %2372 = vmatprep.subr.bf16.mxu0 0
      %2373 = vmatpush1.bf16.msra.mxu0 %v1962
      %2374 = vmatprep.subr.bf16.mxu0 0
      %2375 = vmatpush1.bf16.msra.mxu0 %v1963
      %2376 = vmatprep.subr.bf16.mxu0 0
      %2377 = vmatpush1.bf16.msra.mxu0 %v1964
      %2378 = vmatprep.subr.bf16.mxu0 0
      %2379 = vmatpush1.bf16.msra.mxu0 %v1965
      %2380 = vmatprep.subr.bf16.mxu0 0
      %2381 = vmatpush1.bf16.msra.mxu0 %v1966
      %2382 = vmatprep.subr.bf16.mxu0 0
      %2383 = vmatpush1.bf16.msra.mxu0 %v1967
      %2384 = vmatprep.mubr.bf16.mxu0 %v646
      %2385 = vmatmul.mubr.bf16.gmra.mrb[0].mxu0 %v645
      %v2386 = vpop.f32.mrb[0].mxu0
      %v2387 = vadd.f32 %v1150, %v2386
      %v2388 = vpop.f32.mrb[0].mxu0
      %v2389 = vpop.f32.mrb[0].mxu0
      %v2390 = vadd.f32 %v1150, %v2389
      %v2391 = vpop.f32.mrb[0].mxu0
      %2392 = vmatprep.mubr.bf16.mxu0 %v671
      %2393 = vmatmul.mubr.bf16.gmra.mrb[0].mxu0 %v670
      %v2394 = vpop.f32.mrb[0].mxu0
      %v2395 = vadd.f32 %v1150, %v2394
      %v2396 = vpop.f32.mrb[0].mxu0
      %v2397 = vpop.f32.mrb[0].mxu0
      %v2398 = vadd.f32 %v1150, %v2397
      %v2399 = vpop.f32.mrb[0].mxu0
      %2400 = vmatprep.mubr.bf16.mxu0 %v696
      %2401 = vmatmul.mubr.bf16.gmra.mrb[0].mxu0 %v695
      %v2402 = vpop.f32.mrb[0].mxu0
      %v2403 = vadd.f32 %v1150, %v2402
      %v2404 = vpop.f32.mrb[0].mxu0
      %v2405 = vpop.f32.mrb[0].mxu0
      %v2406 = vadd.f32 %v1150, %v2405
      %v2407 = vpop.f32.mrb[0].mxu0
      %2408 = vmatprep.mubr.bf16.mxu0 %v721
      %2409 = vmatmul.mubr.bf16.gmra.mrb[0].mxu0 %v720
      %v2410 = vpop.f32.mrb[0].mxu0
      %v2411 = vadd.f32 %v1150, %v2410
      %v2412 = vpop.f32.mrb[0].mxu0
      %v2413 = vpop.f32.mrb[0].mxu0
      %v2414 = vadd.f32 %v1150, %v2413
      %v2415 = vpop.f32.mrb[0].mxu0
      %2416 = vdwg.mxu0
      %2417 = vmatprep.subr.bf16.mxu0 0
      %2418 = vmatpush1.bf16.msra.mxu0 %v1968
      %2419 = vmatprep.subr.bf16.mxu0 0
      %2420 = vmatpush1.bf16.msra.mxu0 %v1969
      %2421 = vmatprep.subr.bf16.mxu0 0
      %2422 = vmatpush1.bf16.msra.mxu0 %v1970
      %2423 = vmatprep.subr.bf16.mxu0 0
      %2424 = vmatpush1.bf16.msra.mxu0 %v1971
      %2425 = vmatprep.subr.bf16.mxu0 0
      %2426 = vmatpush1.bf16.msra.mxu0 %v1972
      %2427 = vmatprep.subr.bf16.mxu0 0
      %2428 = vmatpush1.bf16.msra.mxu0 %v1973
      %2429 = vmatprep.subr.bf16.mxu0 0
      %2430 = vmatpush1.bf16.msra.mxu0 %v1974
      %2431 = vmatprep.subr.bf16.mxu0 0
      %2432 = vmatpush1.bf16.msra.mxu0 %v1975
      %2433 = vmatprep.subr.bf16.mxu0 0
      %2434 = vmatpush1.bf16.msra.mxu0 %v1976
      %2435 = vmatprep.subr.bf16.mxu0 0
      %2436 = vmatpush1.bf16.msra.mxu0 %v1977
      %2437 = vmatprep.subr.bf16.mxu0 0
      %2438 = vmatpush1.bf16.msra.mxu0 %v1978
      %2439 = vmatprep.subr.bf16.mxu0 0
      %2440 = vmatpush1.bf16.msra.mxu0 %v1979
      %2441 = vmatprep.subr.bf16.mxu0 0
      %2442 = vmatpush1.bf16.msra.mxu0 %v1980
      %2443 = vmatprep.subr.bf16.mxu0 0
      %2444 = vmatpush1.bf16.msra.mxu0 %v1981
      %2445 = vmatprep.subr.bf16.mxu0 0
      %2446 = vmatpush1.bf16.msra.mxu0 %v1982
      %2447 = vmatprep.subr.bf16.mxu0 0
      %2448 = vmatpush1.bf16.msra.mxu0 %v1983
      %2449 = vmatprep.mubr.bf16.mxu0 %v648
      %2450 = vmatmul.mubr.bf16.gmra.mrb[0].mxu0 %v647
      %v2451 = vpop.f32.mrb[0].mxu0
      %v2452 = vadd.f32 %v2387, %v2451
      %v2453 = vpop.f32.mrb[0].mxu0
      %v2454 = vpop.f32.mrb[0].mxu0
      %v2455 = vadd.f32 %v2390, %v2454
      %v2456 = vpop.f32.mrb[0].mxu0
      %2457 = vmatprep.mubr.bf16.mxu0 %v673
      %2458 = vmatmul.mubr.bf16.gmra.mrb[0].mxu0 %v672
      %v2459 = vpop.f32.mrb[0].mxu0
      %v2460 = vadd.f32 %v2395, %v2459
      %v2461 = vpop.f32.mrb[0].mxu0
      %v2462 = vpop.f32.mrb[0].mxu0
      %v2463 = vadd.f32 %v2398, %v2462
      %v2464 = vpop.f32.mrb[0].mxu0
      %2465 = vmatprep.mubr.bf16.mxu0 %v698
      %2466 = vmatmul.mubr.bf16.gmra.mrb[0].mxu0 %v697
      %v2467 = vpop.f32.mrb[0].mxu0
      %v2468 = vadd.f32 %v2403, %v2467
      %v2469 = vpop.f32.mrb[0].mxu0
      %v2470 = vpop.f32.mrb[0].mxu0
      %v2471 = vadd.f32 %v2406, %v2470
      %v2472 = vpop.f32.mrb[0].mxu0
      %2473 = vmatprep.mubr.bf16.mxu0 %v723
      %2474 = vmatmul.mubr.bf16.gmra.mrb[0].mxu0 %v722
      %v2475 = vpop.f32.mrb[0].mxu0
      %v2476 = vadd.f32 %v2411, %v2475
      %v2477 = vpop.f32.mrb[0].mxu0
      %v2478 = vpop.f32.mrb[0].mxu0
      %v2479 = vadd.f32 %v2414, %v2478
      %v2480 = vpop.f32.mrb[0].mxu0
      %2481 = vdwg.mxu0
      %2482 = vmatprep.subr.bf16.mxu0 0
      %2483 = vmatpush1.bf16.msra.mxu0 %v1984
      %2484 = vmatprep.subr.bf16.mxu0 0
      %2485 = vmatpush1.bf16.msra.mxu0 %v1985
      %2486 = vmatprep.subr.bf16.mxu0 0
      %2487 = vmatpush1.bf16.msra.mxu0 %v1986
      %2488 = vmatprep.subr.bf16.mxu0 0
      %2489 = vmatpush1.bf16.msra.mxu0 %v1987
      %2490 = vmatprep.subr.bf16.mxu0 0
      %2491 = vmatpush1.bf16.msra.mxu0 %v1988
      %2492 = vmatprep.subr.bf16.mxu0 0
      %2493 = vmatpush1.bf16.msra.mxu0 %v1989
      %2494 = vmatprep.subr.bf16.mxu0 0
      %2495 = vmatpush1.bf16.msra.mxu0 %v1990
      %2496 = vmatprep.subr.bf16.mxu0 0
      %2497 = vmatpush1.bf16.msra.mxu0 %v1991
      %2498 = vmatprep.subr.bf16.mxu0 0
      %2499 = vmatpush1.bf16.msra.mxu0 %v1992
      %2500 = vmatprep.subr.bf16.mxu0 0
      %2501 = vmatpush1.bf16.msra.mxu0 %v1993
      %2502 = vmatprep.subr.bf16.mxu0 0
      %2503 = vmatpush1.bf16.msra.mxu0 %v1994
      %2504 = vmatprep.subr.bf16.mxu0 0
      %2505 = vmatpush1.bf16.msra.mxu0 %v1995
      %2506 = vmatprep.subr.bf16.mxu0 0
      %2507 = vmatpush1.bf16.msra.mxu0 %v1996
      %2508 = vmatprep.subr.bf16.mxu0 0
      %2509 = vmatpush1.bf16.msra.mxu0 %v1997
      %2510 = vmatprep.subr.bf16.mxu0 0
      %2511 = vmatpush1.bf16.msra.mxu0 %v1998
      %2512 = vmatprep.subr.bf16.mxu0 0
      %2513 = vmatpush1.bf16.msra.mxu0 %v1999
      %2514 = vmatprep.mubr.bf16.mxu0 %v650
      %2515 = vmatmul.mubr.bf16.gmra.mrb[0].mxu0 %v649
      %v2516 = vpop.f32.mrb[0].mxu0
      %v2517 = vadd.f32 %v2452, %v2516
      %v2518 = vpop.f32.mrb[0].mxu0
      %v2519 = vpop.f32.mrb[0].mxu0
      %v2520 = vadd.f32 %v2455, %v2519
      %v2521 = vpop.f32.mrb[0].mxu0
      %2522 = vmatprep.mubr.bf16.mxu0 %v675
      %2523 = vmatmul.mubr.bf16.gmra.mrb[0].mxu0 %v674
      %v2524 = vpop.f32.mrb[0].mxu0
      %v2525 = vadd.f32 %v2460, %v2524
      %v2526 = vpop.f32.mrb[0].mxu0
      %v2527 = vpop.f32.mrb[0].mxu0
      %v2528 = vadd.f32 %v2463, %v2527
      %v2529 = vpop.f32.mrb[0].mxu0
      %2530 = vmatprep.mubr.bf16.mxu0 %v700
      %2531 = vmatmul.mubr.bf16.gmra.mrb[0].mxu0 %v699
      %v2532 = vpop.f32.mrb[0].mxu0
      %v2533 = vadd.f32 %v2468, %v2532
      %v2534 = vpop.f32.mrb[0].mxu0
      %v2535 = vpop.f32.mrb[0].mxu0
      %v2536 = vadd.f32 %v2471, %v2535
      %v2537 = vpop.f32.mrb[0].mxu0
      %2538 = vmatprep.mubr.bf16.mxu0 %v725
      %2539 = vmatmul.mubr.bf16.gmra.mrb[0].mxu0 %v724
      %v2540 = vpop.f32.mrb[0].mxu0
      %v2541 = vadd.f32 %v2476, %v2540
      %v2542 = vpop.f32.mrb[0].mxu0
      %v2543 = vpop.f32.mrb[0].mxu0
      %v2544 = vadd.f32 %v2479, %v2543
      %v2545 = vpop.f32.mrb[0].mxu0
      %2546 = vdwg.mxu0
      %2547 = vmatprep.subr.bf16.mxu0 0
      %2548 = vmatpush1.bf16.msra.mxu0 %v2000
      %2549 = vmatprep.subr.bf16.mxu0 0
      %2550 = vmatpush1.bf16.msra.mxu0 %v2001
      %2551 = vmatprep.subr.bf16.mxu0 0
      %2552 = vmatpush1.bf16.msra.mxu0 %v2002
      %2553 = vmatprep.subr.bf16.mxu0 0
      %2554 = vmatpush1.bf16.msra.mxu0 %v2003
      %2555 = vmatprep.subr.bf16.mxu0 0
      %2556 = vmatpush1.bf16.msra.mxu0 %v2004
      %2557 = vmatprep.subr.bf16.mxu0 0
      %2558 = vmatpush1.bf16.msra.mxu0 %v2005
      %2559 = vmatprep.subr.bf16.mxu0 0
      %2560 = vmatpush1.bf16.msra.mxu0 %v2006
      %2561 = vmatprep.subr.bf16.mxu0 0
      %2562 = vmatpush1.bf16.msra.mxu0 %v2007
      %2563 = vmatprep.subr.bf16.mxu0 0
      %2564 = vmatpush1.bf16.msra.mxu0 %v2008
      %2565 = vmatprep.subr.bf16.mxu0 0
      %2566 = vmatpush1.bf16.msra.mxu0 %v2009
      %2567 = vmatprep.subr.bf16.mxu0 0
      %2568 = vmatpush1.bf16.msra.mxu0 %v2010
      %2569 = vmatprep.subr.bf16.mxu0 0
      %2570 = vmatpush1.bf16.msra.mxu0 %v2011
      %2571 = vmatprep.subr.bf16.mxu0 0
      %2572 = vmatpush1.bf16.msra.mxu0 %v2012
      %2573 = vmatprep.subr.bf16.mxu0 0
      %2574 = vmatpush1.bf16.msra.mxu0 %v2013
      %2575 = vmatprep.subr.bf16.mxu0 0
      %2576 = vmatpush1.bf16.msra.mxu0 %v2014
      %2577 = vmatprep.subr.bf16.mxu0 0
      %2578 = vmatpush1.bf16.msra.mxu0 %v2015
      %2579 = vmatprep.mubr.bf16.mxu0 %v652
      %2580 = vmatmul.mubr.bf16.gmra.mrb[0].mxu0 %v651
      %v2581 = vpop.f32.mrb[0].mxu0
      %v2582 = vadd.f32 %v2517, %v2581
      %v2583 = vpop.f32.mrb[0].mxu0
      %v2584 = vpop.f32.mrb[0].mxu0
      %v2585 = vadd.f32 %v2520, %v2584
      %v2586 = vpop.f32.mrb[0].mxu0
      %2587 = vmatprep.mubr.bf16.mxu0 %v677
      %2588 = vmatmul.mubr.bf16.gmra.mrb[0].mxu0 %v676
      %v2589 = vpop.f32.mrb[0].mxu0
      %v2590 = vadd.f32 %v2525, %v2589
      %v2591 = vpop.f32.mrb[0].mxu0
      %v2592 = vpop.f32.mrb[0].mxu0
      %v2593 = vadd.f32 %v2528, %v2592
      %v2594 = vpop.f32.mrb[0].mxu0
      %2595 = vmatprep.mubr.bf16.mxu0 %v702
      %2596 = vmatmul.mubr.bf16.gmra.mrb[0].mxu0 %v701
      %v2597 = vpop.f32.mrb[0].mxu0
      %v2598 = vadd.f32 %v2533, %v2597
      %v2599 = vpop.f32.mrb[0].mxu0
      %v2600 = vpop.f32.mrb[0].mxu0
      %v2601 = vadd.f32 %v2536, %v2600
      %v2602 = vpop.f32.mrb[0].mxu0
      %2603 = vmatprep.mubr.bf16.mxu0 %v727
      %2604 = vmatmul.mubr.bf16.gmra.mrb[0].mxu0 %v726
      %v2605 = vpop.f32.mrb[0].mxu0
      %v2606 = vadd.f32 %v2541, %v2605
      %v2607 = vpop.f32.mrb[0].mxu0
      %v2608 = vpop.f32.mrb[0].mxu0
      %v2609 = vadd.f32 %v2544, %v2608
      %v2610 = vpop.f32.mrb[0].mxu0
      %2611 = vdwg.mxu0
      %2612 = vmatprep.subr.bf16.mxu0 0
      %2613 = vmatpush1.bf16.msra.mxu0 %v2016
      %2614 = vmatprep.subr.bf16.mxu0 0
      %2615 = vmatpush1.bf16.msra.mxu0 %v2017
      %2616 = vmatprep.subr.bf16.mxu0 0
      %2617 = vmatpush1.bf16.msra.mxu0 %v2018
      %2618 = vmatprep.subr.bf16.mxu0 0
      %2619 = vmatpush1.bf16.msra.mxu0 %v2019
      %2620 = vmatprep.subr.bf16.mxu0 0
      %2621 = vmatpush1.bf16.msra.mxu0 %v2020
      %2622 = vmatprep.subr.bf16.mxu0 0
      %2623 = vmatpush1.bf16.msra.mxu0 %v2021
      %2624 = vmatprep.subr.bf16.mxu0 0
      %2625 = vmatpush1.bf16.msra.mxu0 %v2022
      %2626 = vmatprep.subr.bf16.mxu0 0
      %2627 = vmatpush1.bf16.msra.mxu0 %v2023
      %2628 = vmatprep.subr.bf16.mxu0 0
      %2629 = vmatpush1.bf16.msra.mxu0 %v2024
      %2630 = vmatprep.subr.bf16.mxu0 0
      %2631 = vmatpush1.bf16.msra.mxu0 %v2025
      %2632 = vmatprep.subr.bf16.mxu0 0
      %2633 = vmatpush1.bf16.msra.mxu0 %v2026
      %2634 = vmatprep.subr.bf16.mxu0 0
      %2635 = vmatpush1.bf16.msra.mxu0 %v2027
      %2636 = vmatprep.subr.bf16.mxu0 0
      %2637 = vmatpush1.bf16.msra.mxu0 %v2028
      %2638 = vmatprep.subr.bf16.mxu0 0
      %2639 = vmatpush1.bf16.msra.mxu0 %v2029
      %2640 = vmatprep.subr.bf16.mxu0 0
      %2641 = vmatpush1.bf16.msra.mxu0 %v2030
      %2642 = vmatprep.subr.bf16.mxu0 0
      %2643 = vmatpush1.bf16.msra.mxu0 %v2031
      %2644 = vmatprep.mubr.bf16.mxu0 %v654
      %2645 = vmatmul.mubr.bf16.gmra.mrb[0].mxu0 %v653
      %v2646 = vpop.f32.mrb[0].mxu0
      %v2647 = vadd.f32 %v2582, %v2646
      %v2648 = vpop.f32.mrb[0].mxu0
      %v2649 = vpop.f32.mrb[0].mxu0
      %v2650 = vadd.f32 %v2585, %v2649
      %v2651 = vpop.f32.mrb[0].mxu0
      %2652 = vmatprep.mubr.bf16.mxu0 %v679
      %2653 = vmatmul.mubr.bf16.gmra.mrb[0].mxu0 %v678
      %v2654 = vpop.f32.mrb[0].mxu0
      %v2655 = vadd.f32 %v2590, %v2654
      %v2656 = vpop.f32.mrb[0].mxu0
      %v2657 = vpop.f32.mrb[0].mxu0
      %v2658 = vadd.f32 %v2593, %v2657
      %v2659 = vpop.f32.mrb[0].mxu0
      %2660 = vmatprep.mubr.bf16.mxu0 %v704
      %2661 = vmatmul.mubr.bf16.gmra.mrb[0].mxu0 %v703
      %v2662 = vpop.f32.mrb[0].mxu0
      %v2663 = vadd.f32 %v2598, %v2662
      %v2664 = vpop.f32.mrb[0].mxu0
      %v2665 = vpop.f32.mrb[0].mxu0
      %v2666 = vadd.f32 %v2601, %v2665
      %v2667 = vpop.f32.mrb[0].mxu0
      %2668 = vmatprep.mubr.bf16.mxu0 %v729
      %2669 = vmatmul.mubr.bf16.gmra.mrb[0].mxu0 %v728
      %v2670 = vpop.f32.mrb[0].mxu0
      %v2671 = vadd.f32 %v2606, %v2670
      %v2672 = vpop.f32.mrb[0].mxu0
      %v2673 = vpop.f32.mrb[0].mxu0
      %v2674 = vadd.f32 %v2609, %v2673
      %v2675 = vpop.f32.mrb[0].mxu0
      %2676 = vdwg.mxu0
      %2677 = vmatprep.subr.bf16.mxu0 0
      %2678 = vmatpush1.bf16.msra.mxu0 %v2032
      %2679 = vmatprep.subr.bf16.mxu0 0
      %2680 = vmatpush1.bf16.msra.mxu0 %v2033
      %2681 = vmatprep.subr.bf16.mxu0 0
      %2682 = vmatpush1.bf16.msra.mxu0 %v2034
      %2683 = vmatprep.subr.bf16.mxu0 0
      %2684 = vmatpush1.bf16.msra.mxu0 %v2035
      %2685 = vmatprep.subr.bf16.mxu0 0
      %2686 = vmatpush1.bf16.msra.mxu0 %v2036
      %2687 = vmatprep.subr.bf16.mxu0 0
      %2688 = vmatpush1.bf16.msra.mxu0 %v2037
      %2689 = vmatprep.subr.bf16.mxu0 0
      %2690 = vmatpush1.bf16.msra.mxu0 %v2038
      %2691 = vmatprep.subr.bf16.mxu0 0
      %2692 = vmatpush1.bf16.msra.mxu0 %v2039
      %2693 = vmatprep.subr.bf16.mxu0 0
      %2694 = vmatpush1.bf16.msra.mxu0 %v2040
      %2695 = vmatprep.subr.bf16.mxu0 0
      %2696 = vmatpush1.bf16.msra.mxu0 %v2041
      %2697 = vmatprep.subr.bf16.mxu0 0
      %2698 = vmatpush1.bf16.msra.mxu0 %v2042
      %2699 = vmatprep.subr.bf16.mxu0 0
      %2700 = vmatpush1.bf16.msra.mxu0 %v2043
      %2701 = vmatprep.subr.bf16.mxu0 0
      %2702 = vmatpush1.bf16.msra.mxu0 %v2044
      %2703 = vmatprep.subr.bf16.mxu0 0
      %2704 = vmatpush1.bf16.msra.mxu0 %v2045
      %2705 = vmatprep.subr.bf16.mxu0 0
      %2706 = vmatpush1.bf16.msra.mxu0 %v2046
      %2707 = vmatprep.subr.bf16.mxu0 0
      %2708 = vmatpush1.bf16.msra.mxu0 %v2047
      %2709 = vmatprep.mubr.bf16.mxu0 %v656
      %2710 = vmatmul.mubr.bf16.gmra.mrb[0].mxu0 %v655
      %v2711 = vpop.f32.mrb[0].mxu0
      %v2712 = vadd.f32 %v2647, %v2711
      %v2713 = vpop.f32.mrb[0].mxu0
      %v2714 = vpop.f32.mrb[0].mxu0
      %v2715 = vadd.f32 %v2650, %v2714
      %v2716 = vpop.f32.mrb[0].mxu0
      %2717 = vmatprep.mubr.bf16.mxu0 %v681
      %2718 = vmatmul.mubr.bf16.gmra.mrb[0].mxu0 %v680
      %v2719 = vpop.f32.mrb[0].mxu0
      %v2720 = vadd.f32 %v2655, %v2719
      %v2721 = vpop.f32.mrb[0].mxu0
      %v2722 = vpop.f32.mrb[0].mxu0
      %v2723 = vadd.f32 %v2658, %v2722
      %v2724 = vpop.f32.mrb[0].mxu0
      %2725 = vmatprep.mubr.bf16.mxu0 %v706
      %2726 = vmatmul.mubr.bf16.gmra.mrb[0].mxu0 %v705
      %v2727 = vpop.f32.mrb[0].mxu0
      %v2728 = vadd.f32 %v2663, %v2727
      %v2729 = vpop.f32.mrb[0].mxu0
      %v2730 = vpop.f32.mrb[0].mxu0
      %v2731 = vadd.f32 %v2666, %v2730
      %v2732 = vpop.f32.mrb[0].mxu0
      %2733 = vmatprep.mubr.bf16.mxu0 %v731
      %2734 = vmatmul.mubr.bf16.gmra.mrb[0].mxu0 %v730
      %v2735 = vpop.f32.mrb[0].mxu0
      %v2736 = vadd.f32 %v2671, %v2735
      %v2737 = vpop.f32.mrb[0].mxu0
      %v2738 = vpop.f32.mrb[0].mxu0
      %v2739 = vadd.f32 %v2674, %v2738
      %v2740 = vpop.f32.mrb[0].mxu0
      %2741 = vdwg.mxu0
      %2742 = vmatprep.subr.bf16.mxu0 0
      %2743 = vmatpush1.bf16.msra.mxu0 %v2048
      %2744 = vmatprep.subr.bf16.mxu0 0
      %2745 = vmatpush1.bf16.msra.mxu0 %v2049
      %2746 = vmatprep.subr.bf16.mxu0 0
      %2747 = vmatpush1.bf16.msra.mxu0 %v2050
      %2748 = vmatprep.subr.bf16.mxu0 0
      %2749 = vmatpush1.bf16.msra.mxu0 %v2051
      %2750 = vmatprep.subr.bf16.mxu0 0
      %2751 = vmatpush1.bf16.msra.mxu0 %v2052
      %2752 = vmatprep.subr.bf16.mxu0 0
      %2753 = vmatpush1.bf16.msra.mxu0 %v2053
      %2754 = vmatprep.subr.bf16.mxu0 0
      %2755 = vmatpush1.bf16.msra.mxu0 %v2054
      %2756 = vmatprep.subr.bf16.mxu0 0
      %2757 = vmatpush1.bf16.msra.mxu0 %v2055
      %2758 = vmatprep.subr.bf16.mxu0 0
      %2759 = vmatpush1.bf16.msra.mxu0 %v2056
      %2760 = vmatprep.subr.bf16.mxu0 0
      %2761 = vmatpush1.bf16.msra.mxu0 %v2057
      %2762 = vmatprep.subr.bf16.mxu0 0
      %2763 = vmatpush1.bf16.msra.mxu0 %v2058
      %2764 = vmatprep.subr.bf16.mxu0 0
      %2765 = vmatpush1.bf16.msra.mxu0 %v2059
      %2766 = vmatprep.subr.bf16.mxu0 0
      %2767 = vmatpush1.bf16.msra.mxu0 %v2060
      %2768 = vmatprep.subr.bf16.mxu0 0
      %2769 = vmatpush1.bf16.msra.mxu0 %v2061
      %2770 = vmatprep.subr.bf16.mxu0 0
      %2771 = vmatpush1.bf16.msra.mxu0 %v2062
      %2772 = vmatprep.subr.bf16.mxu0 0
      %2773 = vmatpush1.bf16.msra.mxu0 %v2063
      %2774 = vmatprep.mubr.bf16.mxu0 %v658
      %2775 = vmatmul.mubr.bf16.gmra.mrb[0].mxu0 %v657
      %v2776 = vpop.f32.mrb[0].mxu0
      %v2777 = vadd.f32 %v2712, %v2776
      %v2778 = vpop.f32.mrb[0].mxu0
      %v2779 = vpop.f32.mrb[0].mxu0
      %v2780 = vadd.f32 %v2715, %v2779
      %v2781 = vpop.f32.mrb[0].mxu0
      %2782 = vmatprep.mubr.bf16.mxu0 %v683
      %2783 = vmatmul.mubr.bf16.gmra.mrb[0].mxu0 %v682
      %v2784 = vpop.f32.mrb[0].mxu0
      %v2785 = vadd.f32 %v2720, %v2784
      %v2786 = vpop.f32.mrb[0].mxu0
      %v2787 = vpop.f32.mrb[0].mxu0
      %v2788 = vadd.f32 %v2723, %v2787
      %v2789 = vpop.f32.mrb[0].mxu0
      %2790 = vmatprep.mubr.bf16.mxu0 %v708
      %2791 = vmatmul.mubr.bf16.gmra.mrb[0].mxu0 %v707
      %v2792 = vpop.f32.mrb[0].mxu0
      %v2793 = vadd.f32 %v2728, %v2792
      %v2794 = vpop.f32.mrb[0].mxu0
      %v2795 = vpop.f32.mrb[0].mxu0
      %v2796 = vadd.f32 %v2731, %v2795
      %v2797 = vpop.f32.mrb[0].mxu0
      %2798 = vmatprep.mubr.bf16.mxu0 %v733
      %2799 = vmatmul.mubr.bf16.gmra.mrb[0].mxu0 %v732
      %v2800 = vpop.f32.mrb[0].mxu0
      %v2801 = vadd.f32 %v2736, %v2800
      %v2802 = vpop.f32.mrb[0].mxu0
      %v2803 = vpop.f32.mrb[0].mxu0
      %v2804 = vadd.f32 %v2739, %v2803
      %v2805 = vpop.f32.mrb[0].mxu0
      %2806 = vdwg.mxu0
      %2807 = vmatprep.subr.bf16.mxu0 0
      %2808 = vmatpush1.bf16.msra.mxu0 %v2064
      %2809 = vmatprep.subr.bf16.mxu0 0
      %2810 = vmatpush1.bf16.msra.mxu0 %v2065
      %2811 = vmatprep.subr.bf16.mxu0 0
      %2812 = vmatpush1.bf16.msra.mxu0 %v2066
      %2813 = vmatprep.subr.bf16.mxu0 0
      %2814 = vmatpush1.bf16.msra.mxu0 %v2067
      %2815 = vmatprep.subr.bf16.mxu0 0
      %2816 = vmatpush1.bf16.msra.mxu0 %v2068
      %2817 = vmatprep.subr.bf16.mxu0 0
      %2818 = vmatpush1.bf16.msra.mxu0 %v2069
      %2819 = vmatprep.subr.bf16.mxu0 0
      %2820 = vmatpush1.bf16.msra.mxu0 %v2070
      %2821 = vmatprep.subr.bf16.mxu0 0
      %2822 = vmatpush1.bf16.msra.mxu0 %v2071
      %2823 = vmatprep.subr.bf16.mxu0 0
      %2824 = vmatpush1.bf16.msra.mxu0 %v2072
      %2825 = vmatprep.subr.bf16.mxu0 0
      %2826 = vmatpush1.bf16.msra.mxu0 %v2073
      %2827 = vmatprep.subr.bf16.mxu0 0
      %2828 = vmatpush1.bf16.msra.mxu0 %v2074
      %2829 = vmatprep.subr.bf16.mxu0 0
      %2830 = vmatpush1.bf16.msra.mxu0 %v2075
      %2831 = vmatprep.subr.bf16.mxu0 0
      %2832 = vmatpush1.bf16.msra.mxu0 %v2076
      %2833 = vmatprep.subr.bf16.mxu0 0
      %2834 = vmatpush1.bf16.msra.mxu0 %v2077
      %2835 = vmatprep.subr.bf16.mxu0 0
      %2836 = vmatpush1.bf16.msra.mxu0 %v2078
      %2837 = vmatprep.subr.bf16.mxu0 0
      %2838 = vmatpush1.bf16.msra.mxu0 %v2079
      %2839 = vmatprep.mubr.bf16.mxu0 %v660
      %2840 = vmatmul.mubr.bf16.gmra.mrb[0].mxu0 %v659
      %v2841 = vpop.f32.mrb[0].mxu0
      %v2842 = vadd.f32 %v2777, %v2841
      %v2843 = vpop.f32.mrb[0].mxu0
      %v2844 = vpop.f32.mrb[0].mxu0
      %v2845 = vadd.f32 %v2780, %v2844
      %v2846 = vpop.f32.mrb[0].mxu0
      %2847 = vmatprep.mubr.bf16.mxu0 %v685
      %2848 = vmatmul.mubr.bf16.gmra.mrb[0].mxu0 %v684
      %v2849 = vpop.f32.mrb[0].mxu0
      %v2850 = vadd.f32 %v2785, %v2849
      %v2851 = vpop.f32.mrb[0].mxu0
      %v2852 = vpop.f32.mrb[0].mxu0
      %v2853 = vadd.f32 %v2788, %v2852
      %v2854 = vpop.f32.mrb[0].mxu0
      %2855 = vmatprep.mubr.bf16.mxu0 %v710
      %2856 = vmatmul.mubr.bf16.gmra.mrb[0].mxu0 %v709
      %v2857 = vpop.f32.mrb[0].mxu0
      %v2858 = vadd.f32 %v2793, %v2857
      %v2859 = vpop.f32.mrb[0].mxu0
      %v2860 = vpop.f32.mrb[0].mxu0
      %v2861 = vadd.f32 %v2796, %v2860
      %v2862 = vpop.f32.mrb[0].mxu0
      %2863 = vmatprep.mubr.bf16.mxu0 %v735
      %2864 = vmatmul.mubr.bf16.gmra.mrb[0].mxu0 %v734
      %v2865 = vpop.f32.mrb[0].mxu0
      %v2866 = vadd.f32 %v2801, %v2865
      %v2867 = vpop.f32.mrb[0].mxu0
      %v2868 = vpop.f32.mrb[0].mxu0
      %v2869 = vadd.f32 %v2804, %v2868
      %v2870 = vpop.f32.mrb[0].mxu0
      %2871 = vdwg.mxu0
      %2872 = vmatprep.subr.bf16.mxu0 0
      %2873 = vmatpush1.bf16.msra.mxu0 %v2080
      %2874 = vmatprep.subr.bf16.mxu0 0
      %2875 = vmatpush1.bf16.msra.mxu0 %v2081
      %2876 = vmatprep.subr.bf16.mxu0 0
      %2877 = vmatpush1.bf16.msra.mxu0 %v2082
      %2878 = vmatprep.subr.bf16.mxu0 0
      %2879 = vmatpush1.bf16.msra.mxu0 %v2083
      %2880 = vmatprep.subr.bf16.mxu0 0
      %2881 = vmatpush1.bf16.msra.mxu0 %v2084
      %2882 = vmatprep.subr.bf16.mxu0 0
      %2883 = vmatpush1.bf16.msra.mxu0 %v2085
      %2884 = vmatprep.subr.bf16.mxu0 0
      %2885 = vmatpush1.bf16.msra.mxu0 %v2086
      %2886 = vmatprep.subr.bf16.mxu0 0
      %2887 = vmatpush1.bf16.msra.mxu0 %v2087
      %2888 = vmatprep.subr.bf16.mxu0 0
      %2889 = vmatpush1.bf16.msra.mxu0 %v2088
      %2890 = vmatprep.subr.bf16.mxu0 0
      %2891 = vmatpush1.bf16.msra.mxu0 %v2089
      %2892 = vmatprep.subr.bf16.mxu0 0
      %2893 = vmatpush1.bf16.msra.mxu0 %v2090
      %2894 = vmatprep.subr.bf16.mxu0 0
      %2895 = vmatpush1.bf16.msra.mxu0 %v2091
      %2896 = vmatprep.subr.bf16.mxu0 0
      %2897 = vmatpush1.bf16.msra.mxu0 %v2092
      %2898 = vmatprep.subr.bf16.mxu0 0
      %2899 = vmatpush1.bf16.msra.mxu0 %v2093
      %2900 = vmatprep.subr.bf16.mxu0 0
      %2901 = vmatpush1.bf16.msra.mxu0 %v2094
      %2902 = vmatprep.subr.bf16.mxu0 0
      %2903 = vmatpush1.bf16.msra.mxu0 %v2095
      %2904 = vmatprep.mubr.bf16.mxu0 %v662
      %2905 = vmatmul.mubr.bf16.gmra.mrb[0].mxu0 %v661
      %v2906 = vpop.f32.mrb[0].mxu0
      %v2907 = vadd.f32 %v2842, %v2906
      %v2908 = vpop.f32.mrb[0].mxu0
      %v2909 = vpop.f32.mrb[0].mxu0
      %v2910 = vadd.f32 %v2845, %v2909
      %v2911 = vpop.f32.mrb[0].mxu0
      %2912 = vmatprep.mubr.bf16.mxu0 %v687
      %2913 = vmatmul.mubr.bf16.gmra.mrb[0].mxu0 %v686
      %v2914 = vpop.f32.mrb[0].mxu0
      %v2915 = vadd.f32 %v2850, %v2914
      %v2916 = vpop.f32.mrb[0].mxu0
      %v2917 = vpop.f32.mrb[0].mxu0
      %v2918 = vadd.f32 %v2853, %v2917
      %v2919 = vpop.f32.mrb[0].mxu0
      %2920 = vmatprep.mubr.bf16.mxu0 %v712
      %2921 = vmatmul.mubr.bf16.gmra.mrb[0].mxu0 %v711
      %v2922 = vpop.f32.mrb[0].mxu0
      %v2923 = vadd.f32 %v2858, %v2922
      %v2924 = vpop.f32.mrb[0].mxu0
      %v2925 = vpop.f32.mrb[0].mxu0
      %v2926 = vadd.f32 %v2861, %v2925
      %v2927 = vpop.f32.mrb[0].mxu0
      %2928 = vmatprep.mubr.bf16.mxu0 %v737
      %2929 = vmatmul.mubr.bf16.gmra.mrb[0].mxu0 %v736
      %v2930 = vpop.f32.mrb[0].mxu0
      %v2931 = vadd.f32 %v2866, %v2930
      %v2932 = vpop.f32.mrb[0].mxu0
      %v2933 = vpop.f32.mrb[0].mxu0
      %v2934 = vadd.f32 %v2869, %v2933
      %v2935 = vpop.f32.mrb[0].mxu0
      %2936 = vdwg.mxu0
      %2937 = vmatprep.subr.bf16.mxu0 0
      %2938 = vmatpush1.bf16.msra.mxu0 %v2096
      %2939 = vmatprep.subr.bf16.mxu0 0
      %2940 = vmatpush1.bf16.msra.mxu0 %v2097
      %2941 = vmatprep.subr.bf16.mxu0 0
      %2942 = vmatpush1.bf16.msra.mxu0 %v2098
      %2943 = vmatprep.subr.bf16.mxu0 0
      %2944 = vmatpush1.bf16.msra.mxu0 %v2099
      %2945 = vmatprep.subr.bf16.mxu0 0
      %2946 = vmatpush1.bf16.msra.mxu0 %v2100
      %2947 = vmatprep.subr.bf16.mxu0 0
      %2948 = vmatpush1.bf16.msra.mxu0 %v2101
      %2949 = vmatprep.subr.bf16.mxu0 0
      %2950 = vmatpush1.bf16.msra.mxu0 %v2102
      %2951 = vmatprep.subr.bf16.mxu0 0
      %2952 = vmatpush1.bf16.msra.mxu0 %v2103
      %2953 = vmatprep.subr.bf16.mxu0 0
      %2954 = vmatpush1.bf16.msra.mxu0 %v2104
      %2955 = vmatprep.subr.bf16.mxu0 0
      %2956 = vmatpush1.bf16.msra.mxu0 %v2105
      %2957 = vmatprep.subr.bf16.mxu0 0
      %2958 = vmatpush1.bf16.msra.mxu0 %v2106
      %2959 = vmatprep.subr.bf16.mxu0 0
      %2960 = vmatpush1.bf16.msra.mxu0 %v2107
      %2961 = vmatprep.subr.bf16.mxu0 0
      %2962 = vmatpush1.bf16.msra.mxu0 %v2108
      %2963 = vmatprep.subr.bf16.mxu0 0
      %2964 = vmatpush1.bf16.msra.mxu0 %v2109
      %2965 = vmatprep.subr.bf16.mxu0 0
      %2966 = vmatpush1.bf16.msra.mxu0 %v2110
      %2967 = vmatprep.subr.bf16.mxu0 0
      %2968 = vmatpush1.bf16.msra.mxu0 %v2111
      %2969 = vmatprep.mubr.bf16.mxu0 %v664
      %2970 = vmatmul.mubr.bf16.gmra.mrb[0].mxu0 %v663
      %v2971 = vpop.f32.mrb[0].mxu0
      %v2972 = vadd.f32 %v2907, %v2971
      %v2973 = vpop.f32.mrb[0].mxu0
      %v2974 = vpop.f32.mrb[0].mxu0
      %v2975 = vadd.f32 %v2910, %v2974
      %v2976 = vpop.f32.mrb[0].mxu0
      %2977 = vmatprep.mubr.bf16.mxu0 %v689
      %2978 = vmatmul.mubr.bf16.gmra.mrb[0].mxu0 %v688
      %v2979 = vpop.f32.mrb[0].mxu0
      %v2980 = vadd.f32 %v2915, %v2979
      %v2981 = vpop.f32.mrb[0].mxu0
      %v2982 = vpop.f32.mrb[0].mxu0
      %v2983 = vadd.f32 %v2918, %v2982
      %v2984 = vpop.f32.mrb[0].mxu0
      %2985 = vmatprep.mubr.bf16.mxu0 %v714
      %2986 = vmatmul.mubr.bf16.gmra.mrb[0].mxu0 %v713
      %v2987 = vpop.f32.mrb[0].mxu0
      %v2988 = vadd.f32 %v2923, %v2987
      %v2989 = vpop.f32.mrb[0].mxu0
      %v2990 = vpop.f32.mrb[0].mxu0
      %v2991 = vadd.f32 %v2926, %v2990
      %v2992 = vpop.f32.mrb[0].mxu0
      %2993 = vmatprep.mubr.bf16.mxu0 %v739
      %2994 = vmatmul.mubr.bf16.gmra.mrb[0].mxu0 %v738
      %v2995 = vpop.f32.mrb[0].mxu0
      %v2996 = vadd.f32 %v2931, %v2995
      %v2997 = vpop.f32.mrb[0].mxu0
      %v2998 = vpop.f32.mrb[0].mxu0
      %v2999 = vadd.f32 %v2934, %v2998
      %v3000 = vpop.f32.mrb[0].mxu0
      %3001 = vdwg.mxu0
      %3002 = vmatprep.subr.bf16.mxu0 0
      %3003 = vmatpush1.bf16.msra.mxu0 %v2112
      %3004 = vmatprep.subr.bf16.mxu0 0
      %3005 = vmatpush1.bf16.msra.mxu0 %v2113
      %3006 = vmatprep.subr.bf16.mxu0 0
      %3007 = vmatpush1.bf16.msra.mxu0 %v2114
      %3008 = vmatprep.subr.bf16.mxu0 0
      %3009 = vmatpush1.bf16.msra.mxu0 %v2115
      %3010 = vmatprep.subr.bf16.mxu0 0
      %3011 = vmatpush1.bf16.msra.mxu0 %v2116
      %3012 = vmatprep.subr.bf16.mxu0 0
      %3013 = vmatpush1.bf16.msra.mxu0 %v2117
      %3014 = vmatprep.subr.bf16.mxu0 0
      %3015 = vmatpush1.bf16.msra.mxu0 %v2118
      %3016 = vmatprep.subr.bf16.mxu0 0
      %3017 = vmatpush1.bf16.msra.mxu0 %v2119
      %3018 = vmatprep.subr.bf16.mxu0 0
      %3019 = vmatpush1.bf16.msra.mxu0 %v2120
      %3020 = vmatprep.subr.bf16.mxu0 0
      %3021 = vmatpush1.bf16.msra.mxu0 %v2121
      %3022 = vmatprep.subr.bf16.mxu0 0
      %3023 = vmatpush1.bf16.msra.mxu0 %v2122
      %3024 = vmatprep.subr.bf16.mxu0 0
      %3025 = vmatpush1.bf16.msra.mxu0 %v2123
      %3026 = vmatprep.subr.bf16.mxu0 0
      %3027 = vmatpush1.bf16.msra.mxu0 %v2124
      %3028 = vmatprep.subr.bf16.mxu0 0
      %3029 = vmatpush1.bf16.msra.mxu0 %v2125
      %3030 = vmatprep.subr.bf16.mxu0 0
      %3031 = vmatpush1.bf16.msra.mxu0 %v2126
      %3032 = vmatprep.subr.bf16.mxu0 0
      %3033 = vmatpush1.bf16.msra.mxu0 %v2127
      %3034 = vmatprep.mubr.bf16.mxu0 %v666
      %3035 = vmatmul.mubr.bf16.gmra.mrb[0].mxu0 %v665
      %v3036 = vpop.f32.mrb[0].mxu0
      %v3037 = vadd.f32 %v2972, %v3036
      %v3038 = vpop.f32.mrb[0].mxu0
      %v3039 = vpop.f32.mrb[0].mxu0
      %v3040 = vadd.f32 %v2975, %v3039
      %v3041 = vpop.f32.mrb[0].mxu0
      %3042 = vmatprep.mubr.bf16.mxu0 %v691
      %3043 = vmatmul.mubr.bf16.gmra.mrb[0].mxu0 %v690
      %v3044 = vpop.f32.mrb[0].mxu0
      %v3045 = vadd.f32 %v2980, %v3044
      %v3046 = vpop.f32.mrb[0].mxu0
      %v3047 = vpop.f32.mrb[0].mxu0
      %v3048 = vadd.f32 %v2983, %v3047
      %v3049 = vpop.f32.mrb[0].mxu0
      %3050 = vmatprep.mubr.bf16.mxu0 %v716
      %3051 = vmatmul.mubr.bf16.gmra.mrb[0].mxu0 %v715
      %v3052 = vpop.f32.mrb[0].mxu0
      %v3053 = vadd.f32 %v2988, %v3052
      %v3054 = vpop.f32.mrb[0].mxu0
      %v3055 = vpop.f32.mrb[0].mxu0
      %v3056 = vadd.f32 %v2991, %v3055
      %v3057 = vpop.f32.mrb[0].mxu0
      %3058 = vmatprep.mubr.bf16.mxu0 %v741
      %3059 = vmatmul.mubr.bf16.gmra.mrb[0].mxu0 %v740
      %v3060 = vpop.f32.mrb[0].mxu0
      %v3061 = vadd.f32 %v2996, %v3060
      %v3062 = vpop.f32.mrb[0].mxu0
      %v3063 = vpop.f32.mrb[0].mxu0
      %v3064 = vadd.f32 %v2999, %v3063
      %v3065 = vpop.f32.mrb[0].mxu0
      %3066 = vdwg.mxu0
      %3067 = vmatprep.subr.bf16.mxu0 0
      %3068 = vmatpush1.bf16.msra.mxu0 %v2128
      %3069 = vmatprep.subr.bf16.mxu0 0
      %3070 = vmatpush1.bf16.msra.mxu0 %v2129
      %3071 = vmatprep.subr.bf16.mxu0 0
      %3072 = vmatpush1.bf16.msra.mxu0 %v2130
      %3073 = vmatprep.subr.bf16.mxu0 0
      %3074 = vmatpush1.bf16.msra.mxu0 %v2131
      %3075 = vmatprep.subr.bf16.mxu0 0
      %3076 = vmatpush1.bf16.msra.mxu0 %v2132
      %3077 = vmatprep.subr.bf16.mxu0 0
      %3078 = vmatpush1.bf16.msra.mxu0 %v2133
      %3079 = vmatprep.subr.bf16.mxu0 0
      %3080 = vmatpush1.bf16.msra.mxu0 %v2134
      %3081 = vmatprep.subr.bf16.mxu0 0
      %3082 = vmatpush1.bf16.msra.mxu0 %v2135
      %3083 = vmatprep.subr.bf16.mxu0 0
      %3084 = vmatpush1.bf16.msra.mxu0 %v2136
      %3085 = vmatprep.subr.bf16.mxu0 0
      %3086 = vmatpush1.bf16.msra.mxu0 %v2137
      %3087 = vmatprep.subr.bf16.mxu0 0
      %3088 = vmatpush1.bf16.msra.mxu0 %v2138
      %3089 = vmatprep.subr.bf16.mxu0 0
      %3090 = vmatpush1.bf16.msra.mxu0 %v2139
      %3091 = vmatprep.subr.bf16.mxu0 0
      %3092 = vmatpush1.bf16.msra.mxu0 %v2140
      %3093 = vmatprep.subr.bf16.mxu0 0
      %3094 = vmatpush1.bf16.msra.mxu0 %v2141
      %3095 = vmatprep.subr.bf16.mxu0 0
      %3096 = vmatpush1.bf16.msra.mxu0 %v2142
      %3097 = vmatprep.subr.bf16.mxu0 0
      %3098 = vmatpush1.bf16.msra.mxu0 %v2143
      %3099 = vmatprep.mubr.bf16.mxu0 %v668
      %3100 = vmatmul.mubr.bf16.gmra.mrb[0].mxu0 %v667
      %v3101 = vpop.f32.mrb[0].mxu0
      %v3102 = vadd.f32 %v3037, %v3101
      %v3103 = vpop.f32.mrb[0].mxu0
      %v3104 = vpop.f32.mrb[0].mxu0
      %v3105 = vadd.f32 %v3040, %v3104
      %v3106 = vpop.f32.mrb[0].mxu0
      %3107 = vmatprep.mubr.bf16.mxu0 %v693
      %3108 = vmatmul.mubr.bf16.gmra.mrb[0].mxu0 %v692
      %v3109 = vpop.f32.mrb[0].mxu0
      %v3110 = vadd.f32 %v3045, %v3109
      %v3111 = vpop.f32.mrb[0].mxu0
      %v3112 = vpop.f32.mrb[0].mxu0
      %v3113 = vadd.f32 %v3048, %v3112
      %v3114 = vpop.f32.mrb[0].mxu0
      %3115 = vmatprep.mubr.bf16.mxu0 %v718
      %3116 = vmatmul.mubr.bf16.gmra.mrb[0].mxu0 %v717
      %v3117 = vpop.f32.mrb[0].mxu0
      %v3118 = vadd.f32 %v3053, %v3117
      %v3119 = vpop.f32.mrb[0].mxu0
      %v3120 = vpop.f32.mrb[0].mxu0
      %v3121 = vadd.f32 %v3056, %v3120
      %v3122 = vpop.f32.mrb[0].mxu0
      %3123 = vmatprep.mubr.bf16.mxu0 %v743
      %3124 = vmatmul.mubr.bf16.gmra.mrb[0].mxu0 %v742
      %v3125 = vpop.f32.mrb[0].mxu0
      %v3126 = vadd.f32 %v3061, %v3125
      %v3127 = vpop.f32.mrb[0].mxu0
      %v3128 = vpop.f32.mrb[0].mxu0
      %v3129 = vadd.f32 %v3064, %v3128
      %v3130 = vpop.f32.mrb[0].mxu0
      %3131 = vdwg.mxu0
      %3132 = vmatprep.subr.bf16.mxu0 0
      %3133 = vmatpush1.bf16.msra.mxu0 %v2144
      %3134 = vmatprep.subr.bf16.mxu0 0
      %3135 = vmatpush1.bf16.msra.mxu0 %v2145
      %3136 = vmatprep.subr.bf16.mxu0 0
      %3137 = vmatpush1.bf16.msra.mxu0 %v2146
      %3138 = vmatprep.subr.bf16.mxu0 0
      %3139 = vmatpush1.bf16.msra.mxu0 %v2147
      %3140 = vmatprep.subr.bf16.mxu0 0
      %3141 = vmatpush1.bf16.msra.mxu0 %v2148
      %3142 = vmatprep.subr.bf16.mxu0 0
      %3143 = vmatpush1.bf16.msra.mxu0 %v2149
      %3144 = vmatprep.subr.bf16.mxu0 0
      %3145 = vmatpush1.bf16.msra.mxu0 %v2150
      %3146 = vmatprep.subr.bf16.mxu0 0
      %3147 = vmatpush1.bf16.msra.mxu0 %v2151
      %3148 = vmatprep.subr.bf16.mxu0 0
      %3149 = vmatpush1.bf16.msra.mxu0 0
      %3150 = vmatprep.subr.bf16.mxu0 0
      %3151 = vmatpush1.bf16.msra.mxu0 0
      %3152 = vmatprep.subr.bf16.mxu0 0
      %3153 = vmatpush1.bf16.msra.mxu0 0
      %3154 = vmatprep.subr.bf16.mxu0 0
      %3155 = vmatpush1.bf16.msra.mxu0 0
      %3156 = vmatprep.subr.bf16.mxu0 0
      %3157 = vmatpush1.bf16.msra.mxu0 0
      %3158 = vmatprep.subr.bf16.mxu0 0
      %3159 = vmatpush1.bf16.msra.mxu0 0
      %3160 = vmatprep.subr.bf16.mxu0 0
      %3161 = vmatpush1.bf16.msra.mxu0 0
      %3162 = vmatprep.subr.bf16.mxu0 0
      %3163 = vmatpush1.bf16.msra.mxu0 0
      %3164 = vmatprep.mubr.bf16.mxu0 0
      %3165 = vmatmul.mubr.bf16.gmra.mrb[0].mxu0 %v669
      %v3166 = vpop.f32.mrb[0].mxu0
      %v3167 = vadd.f32 %v3102, %v3166
      %v3168 = vpop.f32.mrb[0].mxu0
      %v3169 = vpop.f32.mrb[0].mxu0
      %v3170 = vadd.f32 %v3105, %v3169
      %v3171 = vpop.f32.mrb[0].mxu0
      %3172 = vmatprep.mubr.bf16.mxu0 0
      %3173 = vmatmul.mubr.bf16.gmra.mrb[0].mxu0 %v694
      %v3174 = vpop.f32.mrb[0].mxu0
      %v3175 = vadd.f32 %v3110, %v3174
      %v3176 = vpop.f32.mrb[0].mxu0
      %v3177 = vpop.f32.mrb[0].mxu0
      %v3178 = vadd.f32 %v3113, %v3177
      %v3179 = vpop.f32.mrb[0].mxu0
      %3180 = vmatprep.mubr.bf16.mxu0 0
      %3181 = vmatmul.mubr.bf16.gmra.mrb[0].mxu0 %v719
      %v3182 = vpop.f32.mrb[0].mxu0
      %v3183 = vadd.f32 %v3118, %v3182
      %v3184 = vpop.f32.mrb[0].mxu0
      %v3185 = vpop.f32.mrb[0].mxu0
      %v3186 = vadd.f32 %v3121, %v3185
      %v3187 = vpop.f32.mrb[0].mxu0
      %3188 = vmatprep.mubr.bf16.mxu0 0
      %3189 = vmatmul.mubr.bf16.gmra.mrb[0].mxu0 %v744
      %v3190 = vpop.f32.mrb[0].mxu0
      %v3191 = vadd.f32 %v3126, %v3190
      %v3192 = vpop.f32.mrb[0].mxu0
      %v3193 = vpop.f32.mrb[0].mxu0
      %v3194 = vadd.f32 %v3129, %v3193
      %v3195 = vpop.f32.mrb[0].mxu0
      %3196 = vdwg.mxu0
      %v3197 = vmax.f32 %v3167, 0.0
      %v3198 = vmax.f32 %v3170, 0.0
      %v3199 = vmax.f32 %v3175, 0.0
      %v3200 = vmax.f32 %v3178, 0.0
      %v3201 = vmax.f32 %v3183, 0.0
      %v3202 = vmax.f32 %v3186, 0.0
      %v3203 = vmax.f32 %v3191, 0.0
      %v3204 = vmax.f32 %v3194, 0.0
      %v3205 = vmax.f32 %v3197, %v3201
      %v3206 = vmax.f32 %v3198, %v3202
      %v3207 = vmax.f32 %v3199, %v3203
      %v3208 = vmax.f32 %v3200, %v3204
      %v3210 = vrot.slane %v3205, 1
      %v3212 = vmax.f32 %v3205, %v3210
      %v3214 = vrot.slane %v3206, 1
      %v3216 = vmax.f32 %v3206, %v3214
      %v3218 = vrot.slane %v3207, 1
      %v3220 = vmax.f32 %v3207, %v3218
      %v3222 = vrot.slane %v3208, 1
      %v3224 = vmax.f32 %v3208, %v3222
      %v3226 = vrot.slane %v3212, 1
      %v3228 = vrot.slane %v3212, 2
      %v3230 = vrot.slane %v3212, 3
      %v3233 = vrot.slane %v3216, 4
      %v3235 = vrot.slane %v3216, 5
      %v3237 = vrot.slane %v3216, 6
      %v3239 = vrot.slane %v3216, 7
      %v3242 = vrot.slane %v3220, 1
      %v3244 = vrot.slane %v3220, 2
      %v3246 = vrot.slane %v3220, 3
      %v3249 = vrot.slane %v3224, 4
      %v3251 = vrot.slane %v3224, 5
      %v3253 = vrot.slane %v3224, 6
      %v3255 = vrot.slane %v3224, 7
      %vm3257 = vcmask 1040384
      %v3258 = vsel %vm3257, %v3212, %v3226
      %vm3259 = vcmask 1041408
      %v3260 = vsel %vm3259, %v3258, %v3228
      %vm3261 = vcmask 1042432
      %v3262 = vsel %vm3261, %v3260, %v3230
      %vm3263 = vcmask 1043456
      %v3264 = vsel %vm3263, %v3262, %v3233
      %vm3265 = vcmask 1044480
      %v3266 = vsel %vm3265, %v3264, %v3235
      %vm3267 = vcmask 1045504
      %v3268 = vsel %vm3267, %v3266, %v3237
      %vm3269 = vcmask 1046528
      %v3270 = vsel %vm3269, %v3268, %v3239
      %v3271 = vsel %vm3257, %v3220, %v3242
      %v3272 = vsel %vm3259, %v3271, %v3244
      %v3273 = vsel %vm3261, %v3272, %v3246
      %v3274 = vsel %vm3263, %v3273, %v3249
      %v3275 = vsel %vm3265, %v3274, %v3251
      %v3276 = vsel %vm3267, %v3275, %v3253
      %v3277 = vsel %vm3269, %v3276, %v3255
      %v3278 = vpack.c.bf16 %v3277, %v3270
      %v3280 = vunpack.c.l.b16 %v3278
      %v3281 = vunpack.c.h.b16 %v3278
      %v3282 = vpack.c.b16 %v3280, %v3280
      %v3283 = vpack.c.b16 %v3281, %v3281
      %3286 = vst [vmem:[%s172] sm:$0xf] %v3282
      %3287 = vst [vmem:[%s172 + $0x4] sm:$0xf] %v3283
      %s3288 = smul.u32 2, %s14
      %p3289 = scmp.lt.s32.totalorder %s3288, 3
      %s3290 = scalar_select %p3289, %s3288, 3
      %s3291 = smul.addr %s3290, 4
      %s3292 = scalar_lea.vmem %s3, %s3291
      // Predicated region
      $region33: #{cnn_mnist_forward.4} parent=31 // pred_check
        %p3293 = pneg %p100
      $region34: #{cnn_mnist_forward.4} parent=31 // pred_check_branch
        %3295 = sbr.rel (%p3293) target = $region36
      $region35: #{cnn_mnist_forward.4} parent=31 // pred_region
        %s3296 = smul.u32 2, %s14
      $region36: #{cnn_mnist_forward.4} parent=31 // pred_fallthru
        _
    $region32: #{cnn_mnist_forward.4} parent=5 // pred_fallthru
      _
    %p3297 = scmp.le.s32.totalorder 2, %s9
    // Predicated region
    $region37: #{cnn_mnist_forward.4} parent=5 // pred_check
      %p3298 = pneg %p3297
    $region38: #{cnn_mnist_forward.4} parent=5 // pred_check_branch
      %3300 = sbr.rel (%p3298) target = $region40
    $region39: #{cnn_mnist_forward.4} parent=5 // pred_region
      %s3301 = ssub.s32 %s9, 2
      // Predicated region
      $region41: #{cnn_mnist_forward.4} parent=39 // pred_check
        %p3302 = pneg %p106
      $region42: #{cnn_mnist_forward.4} parent=39 // pred_check_branch
        %3304 = sbr.rel (%p3302) target = $region44
      $region43: #{cnn_mnist_forward.4} parent=39 // pred_region
        %s3305 = smul.u32 2, %s15
        %p3306 = scmp.lt.s32.totalorder %s3305, 3
        %s3307 = scalar_select %p3306, %s3305, 3
        %s3308 = smul.addr %s3307, 4
        %s3309 = scalar_lea.vmem %s3, %s3308
      $region44: #{cnn_mnist_forward.4} parent=39 // pred_fallthru
        _
    $region40: #{cnn_mnist_forward.4} parent=5 // pred_fallthru
      _
  $region6: #{cnn_mnist_forward.4} parent=0 // loop_footer
    %s13 = sadd.s32 1, %s9
  $region7: #{cnn_mnist_forward.4} parent=0 // loop_footer_branch
    %8 = sbr.rel target = $region3
  $region8: #{cnn_mnist_forward.4} parent=0 // loop_exit
    _

// kernel: cnn_mnist_forward.5
$region0: #{cnn_mnist_forward.5}
  #allocation0 [shape = 'u32[]', space=smem, size = 0x4, offset = 0x4, fixed_abs, tag = 'smem constant byte address 0x4 - core index']
  #allocation1 [shape = 'u32[144,128]{1,0:T(1,128)}', space=vmem, size = 0x12000, scoped, tag = 'internal scratch']
  %s0 = inlined_call_operand.vmem [shape: bf16[2,2048], index: 0, kind: input, shape index: {}]
  %s1 = inlined_call_operand.vmem [shape: bf16[2048,512], index: 1, kind: input, shape index: {}]
  %s2 = inlined_call_operand.vmem [shape: f32[1,512], index: 2, kind: input, shape index: {}]
  %s3 = inlined_call_operand.vmem [shape: bf16[512,128], index: 3, kind: input, shape index: {}]
  %s4 = inlined_call_operand.vmem [shape: f32[1,128], index: 4, kind: input, shape index: {}]
  %s5 = inlined_call_operand.hbm [shape: f32[2,128], index: 5, kind: output, shape index: {}]
  %s6 = sld [smem:[#allocation0]]
  $region30: #{cnn_mnist_forward.5} parent=0
    _
  %s8 = ssub.s32 1, %s6
  %s9 = scalar_select 0, %s8, %s6
  $region1: #{cnn_mnist_forward.5} parent=0
    #allocation2 [shape = 'u8[1024]{0}', space=vmem, size = 0x400, scoped, tag = 'output window, operand 0, single buffered']
    #allocation3 [shape = 's32[1]{0}', space=sflag, size = 0x4, scoped, tag = 'scoped memory for cnn_mnist_forward.5']
    %10 = vsyncpa [#allocation3], 0
    // Predicated region
    $region2: #{cnn_mnist_forward.5} parent=1 // pred_check
      _
    $region3: #{cnn_mnist_forward.5} parent=1 // pred_check_branch
      %12 = sbr.rel (0) target = $region5
    $region4: #{cnn_mnist_forward.5} parent=1 // pred_region
      _
    $region5: #{cnn_mnist_forward.5} parent=1 // pred_fallthru
      _
    // Predicated region
    $region6: #{cnn_mnist_forward.5} parent=1 // pred_check
      _
    $region7: #{cnn_mnist_forward.5} parent=1 // pred_check_branch
      %14 = sbr.rel (0) target = $region9
    $region8: #{cnn_mnist_forward.5} parent=1 // pred_region
      _
    $region9: #{cnn_mnist_forward.5} parent=1 // pred_fallthru
      _
    // Predicated region
    $region10: #{cnn_mnist_forward.5} parent=1 // pred_check
      _
    $region11: #{cnn_mnist_forward.5} parent=1 // pred_check_branch
      %16 = sbr.rel (0) target = $region13
    $region12: #{cnn_mnist_forward.5} parent=1 // pred_region
      _
    $region13: #{cnn_mnist_forward.5} parent=1 // pred_fallthru
      _
    // Predicated region
    $region14: #{cnn_mnist_forward.5} parent=1 // pred_check
      _
    $region15: #{cnn_mnist_forward.5} parent=1 // pred_check_branch
      %18 = sbr.rel (0) target = $region17
    $region16: #{cnn_mnist_forward.5} parent=1 // pred_region
      _
    $region17: #{cnn_mnist_forward.5} parent=1 // pred_fallthru
      _
    // Predicated region
    $region18: #{cnn_mnist_forward.5} parent=1 // pred_check
      _
    $region19: #{cnn_mnist_forward.5} parent=1 // pred_check_branch
      %20 = sbr.rel (0) target = $region21
    $region20: #{cnn_mnist_forward.5} parent=1 // pred_region
      _
    $region21: #{cnn_mnist_forward.5} parent=1 // pred_fallthru
      _
    %v22 = vld [vmem:[%s0] sm:$0xff]
    %v23 = vld [vmem:[%s0 + $0x8] sm:$0xff]
    %v24 = vld [vmem:[%s1] sm:$0xff]
    %v25 = vld [vmem:[%s1 + $0x8] sm:$0xff]
    %v26 = vld [vmem:[%s1 + $0x10] sm:$0xff]
    %v27 = vld [vmem:[%s1 + $0x18] sm:$0xff]
    %v28 = vld [vmem:[%s1 + $0x20] sm:$0xff]
    %v29 = vld [vmem:[%s1 + $0x28] sm:$0xff]
    %v30 = vld [vmem:[%s1 + $0x30] sm:$0xff]
    %v31 = vld [vmem:[%s1 + $0x38] sm:$0xff]
    %v32 = vld [vmem:[%s1 + $0x40] sm:$0xff]
    %v33 = vld [vmem:[%s1 + $0x48] sm:$0xff]
    %v34 = vld [vmem:[%s1 + $0x50] sm:$0xff]
    %v35 = vld [vmem:[%s1 + $0x58] sm:$0xff]
    %v36 = vld [vmem:[%s1 + $0x60] sm:$0xff]
    %v37 = vld [vmem:[%s1 + $0x68] sm:$0xff]
    %v38 = vld [vmem:[%s1 + $0x70] sm:$0xff]
    %v39 = vld [vmem:[%s1 + $0x78] sm:$0xff]
    %v40 = vld [vmem:[%s1 + $0x80] sm:$0xff]
    %v41 = vld [vmem:[%s1 + $0x88] sm:$0xff]
    %v42 = vld [vmem:[%s1 + $0x90] sm:$0xff]
    %v43 = vld [vmem:[%s1 + $0x98] sm:$0xff]
    %v44 = vld [vmem:[%s1 + $0xa0] sm:$0xff]
    %v45 = vld [vmem:[%s1 + $0xa8] sm:$0xff]
    %v46 = vld [vmem:[%s1 + $0xb0] sm:$0xff]
    %v47 = vld [vmem:[%s1 + $0xb8] sm:$0xff]
    %v48 = vld [vmem:[%s1 + $0xc0] sm:$0xff]
    %v49 = vld [vmem:[%s1 + $0xc8] sm:$0xff]
    %v50 = vld [vmem:[%s1 + $0xd0] sm:$0xff]
    %v51 = vld [vmem:[%s1 + $0xd8] sm:$0xff]
    %v52 = vld [vmem:[%s1 + $0xe0] sm:$0xff]
    %v53 = vld [vmem:[%s1 + $0xe8] sm:$0xff]
    %v54 = vld [vmem:[%s1 + $0xf0] sm:$0xff]
    %v55 = vld [vmem:[%s1 + $0xf8] sm:$0xff]
    %v56 = vld [vmem:[%s1 + $0x100] sm:$0xff]
    %v57 = vld [vmem:[%s1 + $0x108] sm:$0xff]
    %v58 = vld [vmem:[%s1 + $0x110] sm:$0xff]
    %v59 = vld [vmem:[%s1 + $0x118] sm:$0xff]
    %v60 = vld [vmem:[%s1 + $0x120] sm:$0xff]
    %v61 = vld [vmem:[%s1 + $0x128] sm:$0xff]
    %v62 = vld [vmem:[%s1 + $0x130] sm:$0xff]
    %v63 = vld [vmem:[%s1 + $0x138] sm:$0xff]
    %v64 = vld [vmem:[%s1 + $0x140] sm:$0xff]
    %v65 = vld [vmem:[%s1 + $0x148] sm:$0xff]
    %v66 = vld [vmem:[%s1 + $0x150] sm:$0xff]
    %v67 = vld [vmem:[%s1 + $0x158] sm:$0xff]
    %v68 = vld [vmem:[%s1 + $0x160] sm:$0xff]
    %v69 = vld [vmem:[%s1 + $0x168] sm:$0xff]
    %v70 = vld [vmem:[%s1 + $0x170] sm:$0xff]
    %v71 = vld [vmem:[%s1 + $0x178] sm:$0xff]
    %v72 = vld [vmem:[%s1 + $0x180] sm:$0xff]
    %v73 = vld [vmem:[%s1 + $0x188] sm:$0xff]
    %v74 = vld [vmem:[%s1 + $0x190] sm:$0xff]
    %v75 = vld [vmem:[%s1 + $0x198] sm:$0xff]
    %v76 = vld [vmem:[%s1 + $0x1a0] sm:$0xff]
    %v77 = vld [vmem:[%s1 + $0x1a8] sm:$0xff]
    %v78 = vld [vmem:[%s1 + $0x1b0] sm:$0xff]
    %v79 = vld [vmem:[%s1 + $0x1b8] sm:$0xff]
    %v80 = vld [vmem:[%s1 + $0x1c0] sm:$0xff]
    %v81 = vld [vmem:[%s1 + $0x1c8] sm:$0xff]
    %v82 = vld [vmem:[%s1 + $0x1d0] sm:$0xff]
    %v83 = vld [vmem:[%s1 + $0x1d8] sm:$0xff]
    %v84 = vld [vmem:[%s1 + $0x1e0] sm:$0xff]
    %v85 = vld [vmem:[%s1 + $0x1e8] sm:$0xff]
    %v86 = vld [vmem:[%s1 + $0x1f0] sm:$0xff]
    %v87 = vld [vmem:[%s1 + $0x1f8] sm:$0xff]
    %v88 = vld [vmem:[%s1 + $0x200] sm:$0xff]
    %v89 = vld [vmem:[%s1 + $0x208] sm:$0xff]
    %v90 = vld [vmem:[%s1 + $0x210] sm:$0xff]
    %v91 = vld [vmem:[%s1 + $0x218] sm:$0xff]
    %v92 = vld [vmem:[%s1 + $0x220] sm:$0xff]
    %v93 = vld [vmem:[%s1 + $0x228] sm:$0xff]
    %v94 = vld [vmem:[%s1 + $0x230] sm:$0xff]
    %v95 = vld [vmem:[%s1 + $0x238] sm:$0xff]
    %v96 = vld [vmem:[%s1 + $0x240] sm:$0xff]
    %v97 = vld [vmem:[%s1 + $0x248] sm:$0xff]
    %v98 = vld [vmem:[%s1 + $0x250] sm:$0xff]
    %v99 = vld [vmem:[%s1 + $0x258] sm:$0xff]
    %v100 = vld [vmem:[%s1 + $0x260] sm:$0xff]
    %v101 = vld [vmem:[%s1 + $0x268] sm:$0xff]
    %v102 = vld [vmem:[%s1 + $0x270] sm:$0xff]
    %v103 = vld [vmem:[%s1 + $0x278] sm:$0xff]
    %v104 = vld [vmem:[%s1 + $0x280] sm:$0xff]
    %v105 = vld [vmem:[%s1 + $0x288] sm:$0xff]
    %v106 = vld [vmem:[%s1 + $0x290] sm:$0xff]
    %v107 = vld [vmem:[%s1 + $0x298] sm:$0xff]
    %v108 = vld [vmem:[%s1 + $0x2a0] sm:$0xff]
    %v109 = vld [vmem:[%s1 + $0x2a8] sm:$0xff]
    %v110 = vld [vmem:[%s1 + $0x2b0] sm:$0xff]
    %v111 = vld [vmem:[%s1 + $0x2b8] sm:$0xff]
    %v112 = vld [vmem:[%s1 + $0x2c0] sm:$0xff]
    %v113 = vld [vmem:[%s1 + $0x2c8] sm:$0xff]
    %v114 = vld [vmem:[%s1 + $0x2d0] sm:$0xff]
    %v115 = vld [vmem:[%s1 + $0x2d8] sm:$0xff]
    %v116 = vld [vmem:[%s1 + $0x2e0] sm:$0xff]
    %v117 = vld [vmem:[%s1 + $0x2e8] sm:$0xff]
    %v118 = vld [vmem:[%s1 + $0x2f0] sm:$0xff]
    %v119 = vld [vmem:[%s1 + $0x2f8] sm:$0xff]
    %v120 = vld [vmem:[%s1 + $0x300] sm:$0xff]
    %v121 = vld [vmem:[%s1 + $0x308] sm:$0xff]
    %v122 = vld [vmem:[%s1 + $0x310] sm:$0xff]
    %v123 = vld [vmem:[%s1 + $0x318] sm:$0xff]
    %v124 = vld [vmem:[%s1 + $0x320] sm:$0xff]
    %v125 = vld [vmem:[%s1 + $0x328] sm:$0xff]
    %v126 = vld [vmem:[%s1 + $0x330] sm:$0xff]
    %v127 = vld [vmem:[%s1 + $0x338] sm:$0xff]
    %v128 = vld [vmem:[%s1 + $0x340] sm:$0xff]
    %v129 = vld [vmem:[%s1 + $0x348] sm:$0xff]
    %v130 = vld [vmem:[%s1 + $0x350] sm:$0xff]
    %v131 = vld [vmem:[%s1 + $0x358] sm:$0xff]
    %v132 = vld [vmem:[%s1 + $0x360] sm:$0xff]
    %v133 = vld [vmem:[%s1 + $0x368] sm:$0xff]
    %v134 = vld [vmem:[%s1 + $0x370] sm:$0xff]
    %v135 = vld [vmem:[%s1 + $0x378] sm:$0xff]
    %v136 = vld [vmem:[%s1 + $0x380] sm:$0xff]
    %v137 = vld [vmem:[%s1 + $0x388] sm:$0xff]
    %v138 = vld [vmem:[%s1 + $0x390] sm:$0xff]
    %v139 = vld [vmem:[%s1 + $0x398] sm:$0xff]
    %v140 = vld [vmem:[%s1 + $0x3a0] sm:$0xff]
    %v141 = vld [vmem:[%s1 + $0x3a8] sm:$0xff]
    %v142 = vld [vmem:[%s1 + $0x3b0] sm:$0xff]
    %v143 = vld [vmem:[%s1 + $0x3b8] sm:$0xff]
    %v144 = vld [vmem:[%s1 + $0x3c0] sm:$0xff]
    %v145 = vld [vmem:[%s1 + $0x3c8] sm:$0xff]
    %v146 = vld [vmem:[%s1 + $0x3d0] sm:$0xff]
    %v147 = vld [vmem:[%s1 + $0x3d8] sm:$0xff]
    %v148 = vld [vmem:[%s1 + $0x3e0] sm:$0xff]
    %v149 = vld [vmem:[%s1 + $0x3e8] sm:$0xff]
    %v150 = vld [vmem:[%s1 + $0x3f0] sm:$0xff]
    %v151 = vld [vmem:[%s1 + $0x3f8] sm:$0xff]
    %v152 = vld [vmem:[%s1 + $0x400] sm:$0xff]
    %v153 = vld [vmem:[%s1 + $0x408] sm:$0xff]
    %v154 = vld [vmem:[%s1 + $0x410] sm:$0xff]
    %v155 = vld [vmem:[%s1 + $0x418] sm:$0xff]
    %v156 = vld [vmem:[%s1 + $0x420] sm:$0xff]
    %v157 = vld [vmem:[%s1 + $0x428] sm:$0xff]
    %v158 = vld [vmem:[%s1 + $0x430] sm:$0xff]
    %v159 = vld [vmem:[%s1 + $0x438] sm:$0xff]
    %v160 = vld [vmem:[%s1 + $0x440] sm:$0xff]
    %v161 = vld [vmem:[%s1 + $0x448] sm:$0xff]
    %v162 = vld [vmem:[%s1 + $0x450] sm:$0xff]
    %v163 = vld [vmem:[%s1 + $0x458] sm:$0xff]
    %v164 = vld [vmem:[%s1 + $0x460] sm:$0xff]
    %v165 = vld [vmem:[%s1 + $0x468] sm:$0xff]
    %v166 = vld [vmem:[%s1 + $0x470] sm:$0xff]
    %v167 = vld [vmem:[%s1 + $0x478] sm:$0xff]
    %v168 = vld [vmem:[%s1 + $0x480] sm:$0xff]
    %v169 = vld [vmem:[%s1 + $0x488] sm:$0xff]
    %v170 = vld [vmem:[%s1 + $0x490] sm:$0xff]
    %v171 = vld [vmem:[%s1 + $0x498] sm:$0xff]
    %v172 = vld [vmem:[%s1 + $0x4a0] sm:$0xff]
    %v173 = vld [vmem:[%s1 + $0x4a8] sm:$0xff]
    %v174 = vld [vmem:[%s1 + $0x4b0] sm:$0xff]
    %v175 = vld [vmem:[%s1 + $0x4b8] sm:$0xff]
    %v176 = vld [vmem:[%s1 + $0x4c0] sm:$0xff]
    %v177 = vld [vmem:[%s1 + $0x4c8] sm:$0xff]
    %v178 = vld [vmem:[%s1 + $0x4d0] sm:$0xff]
    %v179 = vld [vmem:[%s1 + $0x4d8] sm:$0xff]
    %v180 = vld [vmem:[%s1 + $0x4e0] sm:$0xff]
    %v181 = vld [vmem:[%s1 + $0x4e8] sm:$0xff]
    %v182 = vld [vmem:[%s1 + $0x4f0] sm:$0xff]
    %v183 = vld [vmem:[%s1 + $0x4f8] sm:$0xff]
    %v184 = vld [vmem:[%s1 + $0x500] sm:$0xff]
    %v185 = vld [vmem:[%s1 + $0x508] sm:$0xff]
    %v186 = vld [vmem:[%s1 + $0x510] sm:$0xff]
    %v187 = vld [vmem:[%s1 + $0x518] sm:$0xff]
    %v188 = vld [vmem:[%s1 + $0x520] sm:$0xff]
    %v189 = vld [vmem:[%s1 + $0x528] sm:$0xff]
    %v190 = vld [vmem:[%s1 + $0x530] sm:$0xff]
    %v191 = vld [vmem:[%s1 + $0x538] sm:$0xff]
    %v192 = vld [vmem:[%s1 + $0x540] sm:$0xff]
    %v193 = vld [vmem:[%s1 + $0x548] sm:$0xff]
    %v194 = vld [vmem:[%s1 + $0x550] sm:$0xff]
    %v195 = vld [vmem:[%s1 + $0x558] sm:$0xff]
    %v196 = vld [vmem:[%s1 + $0x560] sm:$0xff]
    %v197 = vld [vmem:[%s1 + $0x568] sm:$0xff]
    %v198 = vld [vmem:[%s1 + $0x570] sm:$0xff]
    %v199 = vld [vmem:[%s1 + $0x578] sm:$0xff]
    %v200 = vld [vmem:[%s1 + $0x580] sm:$0xff]
    %v201 = vld [vmem:[%s1 + $0x588] sm:$0xff]
    %v202 = vld [vmem:[%s1 + $0x590] sm:$0xff]
    %v203 = vld [vmem:[%s1 + $0x598] sm:$0xff]
    %v204 = vld [vmem:[%s1 + $0x5a0] sm:$0xff]
    %v205 = vld [vmem:[%s1 + $0x5a8] sm:$0xff]
    %v206 = vld [vmem:[%s1 + $0x5b0] sm:$0xff]
    %v207 = vld [vmem:[%s1 + $0x5b8] sm:$0xff]
    %v208 = vld [vmem:[%s1 + $0x5c0] sm:$0xff]
    %v209 = vld [vmem:[%s1 + $0x5c8] sm:$0xff]
    %v210 = vld [vmem:[%s1 + $0x5d0] sm:$0xff]
    %v211 = vld [vmem:[%s1 + $0x5d8] sm:$0xff]
    %v212 = vld [vmem:[%s1 + $0x5e0] sm:$0xff]
    %v213 = vld [vmem:[%s1 + $0x5e8] sm:$0xff]
    %v214 = vld [vmem:[%s1 + $0x5f0] sm:$0xff]
    %v215 = vld [vmem:[%s1 + $0x5f8] sm:$0xff]
    %v216 = vld [vmem:[%s1 + $0x600] sm:$0xff]
    %v217 = vld [vmem:[%s1 + $0x608] sm:$0xff]
    %v218 = vld [vmem:[%s1 + $0x610] sm:$0xff]
    %v219 = vld [vmem:[%s1 + $0x618] sm:$0xff]
    %v220 = vld [vmem:[%s1 + $0x620] sm:$0xff]
    %v221 = vld [vmem:[%s1 + $0x628] sm:$0xff]
    %v222 = vld [vmem:[%s1 + $0x630] sm:$0xff]
    %v223 = vld [vmem:[%s1 + $0x638] sm:$0xff]
    %v224 = vld [vmem:[%s1 + $0x640] sm:$0xff]
    %v225 = vld [vmem:[%s1 + $0x648] sm:$0xff]
    %v226 = vld [vmem:[%s1 + $0x650] sm:$0xff]
    %v227 = vld [vmem:[%s1 + $0x658] sm:$0xff]
    %v228 = vld [vmem:[%s1 + $0x660] sm:$0xff]
    %v229 = vld [vmem:[%s1 + $0x668] sm:$0xff]
    %v230 = vld [vmem:[%s1 + $0x670] sm:$0xff]
    %v231 = vld [vmem:[%s1 + $0x678] sm:$0xff]
    %v232 = vld [vmem:[%s1 + $0x680] sm:$0xff]
    %v233 = vld [vmem:[%s1 + $0x688] sm:$0xff]
    %v234 = vld [vmem:[%s1 + $0x690] sm:$0xff]
    %v235 = vld [vmem:[%s1 + $0x698] sm:$0xff]
    %v236 = vld [vmem:[%s1 + $0x6a0] sm:$0xff]
    %v237 = vld [vmem:[%s1 + $0x6a8] sm:$0xff]
    %v238 = vld [vmem:[%s1 + $0x6b0] sm:$0xff]
    %v239 = vld [vmem:[%s1 + $0x6b8] sm:$0xff]
    %v240 = vld [vmem:[%s1 + $0x6c0] sm:$0xff]
    %v241 = vld [vmem:[%s1 + $0x6c8] sm:$0xff]
    %v242 = vld [vmem:[%s1 + $0x6d0] sm:$0xff]
    %v243 = vld [vmem:[%s1 + $0x6d8] sm:$0xff]
    %v244 = vld [vmem:[%s1 + $0x6e0] sm:$0xff]
    %v245 = vld [vmem:[%s1 + $0x6e8] sm:$0xff]
    %v246 = vld [vmem:[%s1 + $0x6f0] sm:$0xff]
    %v247 = vld [vmem:[%s1 + $0x6f8] sm:$0xff]
    %v248 = vld [vmem:[%s1 + $0x700] sm:$0xff]
    %v249 = vld [vmem:[%s1 + $0x708] sm:$0xff]
    %v250 = vld [vmem:[%s1 + $0x710] sm:$0xff]
    %v251 = vld [vmem:[%s1 + $0x718] sm:$0xff]
    %v252 = vld [vmem:[%s1 + $0x720] sm:$0xff]
    %v253 = vld [vmem:[%s1 + $0x728] sm:$0xff]
    %v254 = vld [vmem:[%s1 + $0x730] sm:$0xff]
    %v255 = vld [vmem:[%s1 + $0x738] sm:$0xff]
    %v256 = vld [vmem:[%s1 + $0x740] sm:$0xff]
    %v257 = vld [vmem:[%s1 + $0x748] sm:$0xff]
    %v258 = vld [vmem:[%s1 + $0x750] sm:$0xff]
    %v259 = vld [vmem:[%s1 + $0x758] sm:$0xff]
    %v260 = vld [vmem:[%s1 + $0x760] sm:$0xff]
    %v261 = vld [vmem:[%s1 + $0x768] sm:$0xff]
    %v262 = vld [vmem:[%s1 + $0x770] sm:$0xff]
    %v263 = vld [vmem:[%s1 + $0x778] sm:$0xff]
    %v264 = vld [vmem:[%s1 + $0x780] sm:$0xff]
    %v265 = vld [vmem:[%s1 + $0x788] sm:$0xff]
    %v266 = vld [vmem:[%s1 + $0x790] sm:$0xff]
    %v267 = vld [vmem:[%s1 + $0x798] sm:$0xff]
    %v268 = vld [vmem:[%s1 + $0x7a0] sm:$0xff]
    %v269 = vld [vmem:[%s1 + $0x7a8] sm:$0xff]
    %v270 = vld [vmem:[%s1 + $0x7b0] sm:$0xff]
    %v271 = vld [vmem:[%s1 + $0x7b8] sm:$0xff]
    %v272 = vld [vmem:[%s1 + $0x7c0] sm:$0xff]
    %v273 = vld [vmem:[%s1 + $0x7c8] sm:$0xff]
    %v274 = vld [vmem:[%s1 + $0x7d0] sm:$0xff]
    %v275 = vld [vmem:[%s1 + $0x7d8] sm:$0xff]
    %v276 = vld [vmem:[%s1 + $0x7e0] sm:$0xff]
    %v277 = vld [vmem:[%s1 + $0x7e8] sm:$0xff]
    %v278 = vld [vmem:[%s1 + $0x7f0] sm:$0xff]
    %v279 = vld [vmem:[%s1 + $0x7f8] sm:$0xff]
    %v280 = vld [vmem:[%s1 + $0x800] sm:$0xff]
    %v281 = vld [vmem:[%s1 + $0x808] sm:$0xff]
    %v282 = vld [vmem:[%s1 + $0x810] sm:$0xff]
    %v283 = vld [vmem:[%s1 + $0x818] sm:$0xff]
    %v284 = vld [vmem:[%s1 + $0x820] sm:$0xff]
    %v285 = vld [vmem:[%s1 + $0x828] sm:$0xff]
    %v286 = vld [vmem:[%s1 + $0x830] sm:$0xff]
    %v287 = vld [vmem:[%s1 + $0x838] sm:$0xff]
    %v288 = vld [vmem:[%s1 + $0x840] sm:$0xff]
    %v289 = vld [vmem:[%s1 + $0x848] sm:$0xff]
    %v290 = vld [vmem:[%s1 + $0x850] sm:$0xff]
    %v291 = vld [vmem:[%s1 + $0x858] sm:$0xff]
    %v292 = vld [vmem:[%s1 + $0x860] sm:$0xff]
    %v293 = vld [vmem:[%s1 + $0x868] sm:$0xff]
    %v294 = vld [vmem:[%s1 + $0x870] sm:$0xff]
    %v295 = vld [vmem:[%s1 + $0x878] sm:$0xff]
    %v296 = vld [vmem:[%s1 + $0x880] sm:$0xff]
    %v297 = vld [vmem:[%s1 + $0x888] sm:$0xff]
    %v298 = vld [vmem:[%s1 + $0x890] sm:$0xff]
    %v299 = vld [vmem:[%s1 + $0x898] sm:$0xff]
    %v300 = vld [vmem:[%s1 + $0x8a0] sm:$0xff]
    %v301 = vld [vmem:[%s1 + $0x8a8] sm:$0xff]
    %v302 = vld [vmem:[%s1 + $0x8b0] sm:$0xff]
    %v303 = vld [vmem:[%s1 + $0x8b8] sm:$0xff]
    %v304 = vld [vmem:[%s1 + $0x8c0] sm:$0xff]
    %v305 = vld [vmem:[%s1 + $0x8c8] sm:$0xff]
    %v306 = vld [vmem:[%s1 + $0x8d0] sm:$0xff]
    %v307 = vld [vmem:[%s1 + $0x8d8] sm:$0xff]
    %v308 = vld [vmem:[%s1 + $0x8e0] sm:$0xff]
    %v309 = vld [vmem:[%s1 + $0x8e8] sm:$0xff]
    %v310 = vld [vmem:[%s1 + $0x8f0] sm:$0xff]
    %v311 = vld [vmem:[%s1 + $0x8f8] sm:$0xff]
    %v312 = vld [vmem:[%s1 + $0x900] sm:$0xff]
    %v313 = vld [vmem:[%s1 + $0x908] sm:$0xff]
    %v314 = vld [vmem:[%s1 + $0x910] sm:$0xff]
    %v315 = vld [vmem:[%s1 + $0x918] sm:$0xff]
    %v316 = vld [vmem:[%s1 + $0x920] sm:$0xff]
    %v317 = vld [vmem:[%s1 + $0x928] sm:$0xff]
    %v318 = vld [vmem:[%s1 + $0x930] sm:$0xff]
    %v319 = vld [vmem:[%s1 + $0x938] sm:$0xff]
    %v320 = vld [vmem:[%s1 + $0x940] sm:$0xff]
    %v321 = vld [vmem:[%s1 + $0x948] sm:$0xff]
    %v322 = vld [vmem:[%s1 + $0x950] sm:$0xff]
    %v323 = vld [vmem:[%s1 + $0x958] sm:$0xff]
    %v324 = vld [vmem:[%s1 + $0x960] sm:$0xff]
    %v325 = vld [vmem:[%s1 + $0x968] sm:$0xff]
    %v326 = vld [vmem:[%s1 + $0x970] sm:$0xff]
    %v327 = vld [vmem:[%s1 + $0x978] sm:$0xff]
    %v328 = vld [vmem:[%s1 + $0x980] sm:$0xff]
    %v329 = vld [vmem:[%s1 + $0x988] sm:$0xff]
    %v330 = vld [vmem:[%s1 + $0x990] sm:$0xff]
    %v331 = vld [vmem:[%s1 + $0x998] sm:$0xff]
    %v332 = vld [vmem:[%s1 + $0x9a0] sm:$0xff]
    %v333 = vld [vmem:[%s1 + $0x9a8] sm:$0xff]
    %v334 = vld [vmem:[%s1 + $0x9b0] sm:$0xff]
    %v335 = vld [vmem:[%s1 + $0x9b8] sm:$0xff]
    %v336 = vld [vmem:[%s1 + $0x9c0] sm:$0xff]
    %v337 = vld [vmem:[%s1 + $0x9c8] sm:$0xff]
    %v338 = vld [vmem:[%s1 + $0x9d0] sm:$0xff]
    %v339 = vld [vmem:[%s1 + $0x9d8] sm:$0xff]
    %v340 = vld [vmem:[%s1 + $0x9e0] sm:$0xff]
    %v341 = vld [vmem:[%s1 + $0x9e8] sm:$0xff]
    %v342 = vld [vmem:[%s1 + $0x9f0] sm:$0xff]
    %v343 = vld [vmem:[%s1 + $0x9f8] sm:$0xff]
    %v344 = vld [vmem:[%s1 + $0xa00] sm:$0xff]
    %v345 = vld [vmem:[%s1 + $0xa08] sm:$0xff]
    %v346 = vld [vmem:[%s1 + $0xa10] sm:$0xff]
    %v347 = vld [vmem:[%s1 + $0xa18] sm:$0xff]
    %v348 = vld [vmem:[%s1 + $0xa20] sm:$0xff]
    %v349 = vld [vmem:[%s1 + $0xa28] sm:$0xff]
    %v350 = vld [vmem:[%s1 + $0xa30] sm:$0xff]
    %v351 = vld [vmem:[%s1 + $0xa38] sm:$0xff]
    %v352 = vld [vmem:[%s1 + $0xa40] sm:$0xff]
    %v353 = vld [vmem:[%s1 + $0xa48] sm:$0xff]
    %v354 = vld [vmem:[%s1 + $0xa50] sm:$0xff]
    %v355 = vld [vmem:[%s1 + $0xa58] sm:$0xff]
    %v356 = vld [vmem:[%s1 + $0xa60] sm:$0xff]
    %v357 = vld [vmem:[%s1 + $0xa68] sm:$0xff]
    %v358 = vld [vmem:[%s1 + $0xa70] sm:$0xff]
    %v359 = vld [vmem:[%s1 + $0xa78] sm:$0xff]
    %v360 = vld [vmem:[%s1 + $0xa80] sm:$0xff]
    %v361 = vld [vmem:[%s1 + $0xa88] sm:$0xff]
    %v362 = vld [vmem:[%s1 + $0xa90] sm:$0xff]
    %v363 = vld [vmem:[%s1 + $0xa98] sm:$0xff]
    %v364 = vld [vmem:[%s1 + $0xaa0] sm:$0xff]
    %v365 = vld [vmem:[%s1 + $0xaa8] sm:$0xff]
    %v366 = vld [vmem:[%s1 + $0xab0] sm:$0xff]
    %v367 = vld [vmem:[%s1 + $0xab8] sm:$0xff]
    %v368 = vld [vmem:[%s1 + $0xac0] sm:$0xff]
    %v369 = vld [vmem:[%s1 + $0xac8] sm:$0xff]
    %v370 = vld [vmem:[%s1 + $0xad0] sm:$0xff]
    %v371 = vld [vmem:[%s1 + $0xad8] sm:$0xff]
    %v372 = vld [vmem:[%s1 + $0xae0] sm:$0xff]
    %v373 = vld [vmem:[%s1 + $0xae8] sm:$0xff]
    %v374 = vld [vmem:[%s1 + $0xaf0] sm:$0xff]
    %v375 = vld [vmem:[%s1 + $0xaf8] sm:$0xff]
    %v376 = vld [vmem:[%s1 + $0xb00] sm:$0xff]
    %v377 = vld [vmem:[%s1 + $0xb08] sm:$0xff]
    %v378 = vld [vmem:[%s1 + $0xb10] sm:$0xff]
    %v379 = vld [vmem:[%s1 + $0xb18] sm:$0xff]
    %v380 = vld [vmem:[%s1 + $0xb20] sm:$0xff]
    %v381 = vld [vmem:[%s1 + $0xb28] sm:$0xff]
    %v382 = vld [vmem:[%s1 + $0xb30] sm:$0xff]
    %v383 = vld [vmem:[%s1 + $0xb38] sm:$0xff]
    %v384 = vld [vmem:[%s1 + $0xb40] sm:$0xff]
    %v385 = vld [vmem:[%s1 + $0xb48] sm:$0xff]
    %v386 = vld [vmem:[%s1 + $0xb50] sm:$0xff]
    %v387 = vld [vmem:[%s1 + $0xb58] sm:$0xff]
    %v388 = vld [vmem:[%s1 + $0xb60] sm:$0xff]
    %v389 = vld [vmem:[%s1 + $0xb68] sm:$0xff]
    %v390 = vld [vmem:[%s1 + $0xb70] sm:$0xff]
    %v391 = vld [vmem:[%s1 + $0xb78] sm:$0xff]
    %v392 = vld [vmem:[%s1 + $0xb80] sm:$0xff]
    %v393 = vld [vmem:[%s1 + $0xb88] sm:$0xff]
    %v394 = vld [vmem:[%s1 + $0xb90] sm:$0xff]
    %v395 = vld [vmem:[%s1 + $0xb98] sm:$0xff]
    %v396 = vld [vmem:[%s1 + $0xba0] sm:$0xff]
    %v397 = vld [vmem:[%s1 + $0xba8] sm:$0xff]
    %v398 = vld [vmem:[%s1 + $0xbb0] sm:$0xff]
    %v399 = vld [vmem:[%s1 + $0xbb8] sm:$0xff]
    %v400 = vld [vmem:[%s1 + $0xbc0] sm:$0xff]
    %v401 = vld [vmem:[%s1 + $0xbc8] sm:$0xff]
    %v402 = vld [vmem:[%s1 + $0xbd0] sm:$0xff]
    %v403 = vld [vmem:[%s1 + $0xbd8] sm:$0xff]
    %v404 = vld [vmem:[%s1 + $0xbe0] sm:$0xff]
    %v405 = vld [vmem:[%s1 + $0xbe8] sm:$0xff]
    %v406 = vld [vmem:[%s1 + $0xbf0] sm:$0xff]
    %v407 = vld [vmem:[%s1 + $0xbf8] sm:$0xff]
    %v408 = vld [vmem:[%s1 + $0xc00] sm:$0xff]
    %v409 = vld [vmem:[%s1 + $0xc08] sm:$0xff]
    %v410 = vld [vmem:[%s1 + $0xc10] sm:$0xff]
    %v411 = vld [vmem:[%s1 + $0xc18] sm:$0xff]
    %v412 = vld [vmem:[%s1 + $0xc20] sm:$0xff]
    %v413 = vld [vmem:[%s1 + $0xc28] sm:$0xff]
    %v414 = vld [vmem:[%s1 + $0xc30] sm:$0xff]
    %v415 = vld [vmem:[%s1 + $0xc38] sm:$0xff]
    %v416 = vld [vmem:[%s1 + $0xc40] sm:$0xff]
    %v417 = vld [vmem:[%s1 + $0xc48] sm:$0xff]
    %v418 = vld [vmem:[%s1 + $0xc50] sm:$0xff]
    %v419 = vld [vmem:[%s1 + $0xc58] sm:$0xff]
    %v420 = vld [vmem:[%s1 + $0xc60] sm:$0xff]
    %v421 = vld [vmem:[%s1 + $0xc68] sm:$0xff]
    %v422 = vld [vmem:[%s1 + $0xc70] sm:$0xff]
    %v423 = vld [vmem:[%s1 + $0xc78] sm:$0xff]
    %v424 = vld [vmem:[%s1 + $0xc80] sm:$0xff]
    %v425 = vld [vmem:[%s1 + $0xc88] sm:$0xff]
    %v426 = vld [vmem:[%s1 + $0xc90] sm:$0xff]
    %v427 = vld [vmem:[%s1 + $0xc98] sm:$0xff]
    %v428 = vld [vmem:[%s1 + $0xca0] sm:$0xff]
    %v429 = vld [vmem:[%s1 + $0xca8] sm:$0xff]
    %v430 = vld [vmem:[%s1 + $0xcb0] sm:$0xff]
    %v431 = vld [vmem:[%s1 + $0xcb8] sm:$0xff]
    %v432 = vld [vmem:[%s1 + $0xcc0] sm:$0xff]
    %v433 = vld [vmem:[%s1 + $0xcc8] sm:$0xff]
    %v434 = vld [vmem:[%s1 + $0xcd0] sm:$0xff]
    %v435 = vld [vmem:[%s1 + $0xcd8] sm:$0xff]
    %v436 = vld [vmem:[%s1 + $0xce0] sm:$0xff]
    %v437 = vld [vmem:[%s1 + $0xce8] sm:$0xff]
    %v438 = vld [vmem:[%s1 + $0xcf0] sm:$0xff]
    %v439 = vld [vmem:[%s1 + $0xcf8] sm:$0xff]
    %v440 = vld [vmem:[%s1 + $0xd00] sm:$0xff]
    %v441 = vld [vmem:[%s1 + $0xd08] sm:$0xff]
    %v442 = vld [vmem:[%s1 + $0xd10] sm:$0xff]
    %v443 = vld [vmem:[%s1 + $0xd18] sm:$0xff]
    %v444 = vld [vmem:[%s1 + $0xd20] sm:$0xff]
    %v445 = vld [vmem:[%s1 + $0xd28] sm:$0xff]
    %v446 = vld [vmem:[%s1 + $0xd30] sm:$0xff]
    %v447 = vld [vmem:[%s1 + $0xd38] sm:$0xff]
    %v448 = vld [vmem:[%s1 + $0xd40] sm:$0xff]
    %v449 = vld [vmem:[%s1 + $0xd48] sm:$0xff]
    %v450 = vld [vmem:[%s1 + $0xd50] sm:$0xff]
    %v451 = vld [vmem:[%s1 + $0xd58] sm:$0xff]
    %v452 = vld [vmem:[%s1 + $0xd60] sm:$0xff]
    %v453 = vld [vmem:[%s1 + $0xd68] sm:$0xff]
    %v454 = vld [vmem:[%s1 + $0xd70] sm:$0xff]
    %v455 = vld [vmem:[%s1 + $0xd78] sm:$0xff]
    %v456 = vld [vmem:[%s1 + $0xd80] sm:$0xff]
    %v457 = vld [vmem:[%s1 + $0xd88] sm:$0xff]
    %v458 = vld [vmem:[%s1 + $0xd90] sm:$0xff]
    %v459 = vld [vmem:[%s1 + $0xd98] sm:$0xff]
    %v460 = vld [vmem:[%s1 + $0xda0] sm:$0xff]
    %v461 = vld [vmem:[%s1 + $0xda8] sm:$0xff]
    %v462 = vld [vmem:[%s1 + $0xdb0] sm:$0xff]
    %v463 = vld [vmem:[%s1 + $0xdb8] sm:$0xff]
    %v464 = vld [vmem:[%s1 + $0xdc0] sm:$0xff]
    %v465 = vld [vmem:[%s1 + $0xdc8] sm:$0xff]
    %v466 = vld [vmem:[%s1 + $0xdd0] sm:$0xff]
    %v467 = vld [vmem:[%s1 + $0xdd8] sm:$0xff]
    %v468 = vld [vmem:[%s1 + $0xde0] sm:$0xff]
    %v469 = vld [vmem:[%s1 + $0xde8] sm:$0xff]
    %v470 = vld [vmem:[%s1 + $0xdf0] sm:$0xff]
    %v471 = vld [vmem:[%s1 + $0xdf8] sm:$0xff]
    %v472 = vld [vmem:[%s1 + $0xe00] sm:$0xff]
    %v473 = vld [vmem:[%s1 + $0xe08] sm:$0xff]
    %v474 = vld [vmem:[%s1 + $0xe10] sm:$0xff]
    %v475 = vld [vmem:[%s1 + $0xe18] sm:$0xff]
    %v476 = vld [vmem:[%s1 + $0xe20] sm:$0xff]
    %v477 = vld [vmem:[%s1 + $0xe28] sm:$0xff]
    %v478 = vld [vmem:[%s1 + $0xe30] sm:$0xff]
    %v479 = vld [vmem:[%s1 + $0xe38] sm:$0xff]
    %v480 = vld [vmem:[%s1 + $0xe40] sm:$0xff]
    %v481 = vld [vmem:[%s1 + $0xe48] sm:$0xff]
    %v482 = vld [vmem:[%s1 + $0xe50] sm:$0xff]
    %v483 = vld [vmem:[%s1 + $0xe58] sm:$0xff]
    %v484 = vld [vmem:[%s1 + $0xe60] sm:$0xff]
    %v485 = vld [vmem:[%s1 + $0xe68] sm:$0xff]
    %v486 = vld [vmem:[%s1 + $0xe70] sm:$0xff]
    %v487 = vld [vmem:[%s1 + $0xe78] sm:$0xff]
    %v488 = vld [vmem:[%s1 + $0xe80] sm:$0xff]
    %v489 = vld [vmem:[%s1 + $0xe88] sm:$0xff]
    %v490 = vld [vmem:[%s1 + $0xe90] sm:$0xff]
    %v491 = vld [vmem:[%s1 + $0xe98] sm:$0xff]
    %v492 = vld [vmem:[%s1 + $0xea0] sm:$0xff]
    %v493 = vld [vmem:[%s1 + $0xea8] sm:$0xff]
    %v494 = vld [vmem:[%s1 + $0xeb0] sm:$0xff]
    %v495 = vld [vmem:[%s1 + $0xeb8] sm:$0xff]
    %v496 = vld [vmem:[%s1 + $0xec0] sm:$0xff]
    %v497 = vld [vmem:[%s1 + $0xec8] sm:$0xff]
    %v498 = vld [vmem:[%s1 + $0xed0] sm:$0xff]
    %v499 = vld [vmem:[%s1 + $0xed8] sm:$0xff]
    %v500 = vld [vmem:[%s1 + $0xee0] sm:$0xff]
    %v501 = vld [vmem:[%s1 + $0xee8] sm:$0xff]
    %v502 = vld [vmem:[%s1 + $0xef0] sm:$0xff]
    %v503 = vld [vmem:[%s1 + $0xef8] sm:$0xff]
    %v504 = vld [vmem:[%s1 + $0xf00] sm:$0xff]
    %v505 = vld [vmem:[%s1 + $0xf08] sm:$0xff]
    %v506 = vld [vmem:[%s1 + $0xf10] sm:$0xff]
    %v507 = vld [vmem:[%s1 + $0xf18] sm:$0xff]
    %v508 = vld [vmem:[%s1 + $0xf20] sm:$0xff]
    %v509 = vld [vmem:[%s1 + $0xf28] sm:$0xff]
    %v510 = vld [vmem:[%s1 + $0xf30] sm:$0xff]
    %v511 = vld [vmem:[%s1 + $0xf38] sm:$0xff]
    %v512 = vld [vmem:[%s1 + $0xf40] sm:$0xff]
    %v513 = vld [vmem:[%s1 + $0xf48] sm:$0xff]
    %v514 = vld [vmem:[%s1 + $0xf50] sm:$0xff]
    %v515 = vld [vmem:[%s1 + $0xf58] sm:$0xff]
    %v516 = vld [vmem:[%s1 + $0xf60] sm:$0xff]
    %v517 = vld [vmem:[%s1 + $0xf68] sm:$0xff]
    %v518 = vld [vmem:[%s1 + $0xf70] sm:$0xff]
    %v519 = vld [vmem:[%s1 + $0xf78] sm:$0xff]
    %v520 = vld [vmem:[%s1 + $0xf80] sm:$0xff]
    %v521 = vld [vmem:[%s1 + $0xf88] sm:$0xff]
    %v522 = vld [vmem:[%s1 + $0xf90] sm:$0xff]
    %v523 = vld [vmem:[%s1 + $0xf98] sm:$0xff]
    %v524 = vld [vmem:[%s1 + $0xfa0] sm:$0xff]
    %v525 = vld [vmem:[%s1 + $0xfa8] sm:$0xff]
    %v526 = vld [vmem:[%s1 + $0xfb0] sm:$0xff]
    %v527 = vld [vmem:[%s1 + $0xfb8] sm:$0xff]
    %v528 = vld [vmem:[%s1 + $0xfc0] sm:$0xff]
    %v529 = vld [vmem:[%s1 + $0xfc8] sm:$0xff]
    %v530 = vld [vmem:[%s1 + $0xfd0] sm:$0xff]
    %v531 = vld [vmem:[%s1 + $0xfd8] sm:$0xff]
    %v532 = vld [vmem:[%s1 + $0xfe0] sm:$0xff]
    %v533 = vld [vmem:[%s1 + $0xfe8] sm:$0xff]
    %v534 = vld [vmem:[%s1 + $0xff0] sm:$0xff]
    %v535 = vld [vmem:[%s1 + $0xff8] sm:$0xff]
    %v536 = vld [vmem:[%s2] sm:$0xf]
    %v538 = vlaneseq
    %v539 = vshrl.u32 %v538, 7
    %v540 = vsub.s32 0, %v539
    %v541 = vrot.slane %v536, %v540
    %v542 = vlaneseq
    %v543 = vshrl.u32 %v542, 7
    %v544 = vsub.s32 1, %v543
    %v545 = vrot.slane %v536, %v544
    %v546 = vlaneseq
    %v547 = vshrl.u32 %v546, 7
    %v548 = vsub.s32 2, %v547
    %v549 = vrot.slane %v536, %v548
    %v550 = vlaneseq
    %v551 = vshrl.u32 %v550, 7
    %v552 = vsub.s32 3, %v551
    %v553 = vrot.slane %v536, %v552
    %v560 = vcombine.high %v22, %v22
    %v562 = vunpack.c.l.s4 1966171168
    %v563 = vunpack.c.0.s8 %v562
    %v564 = vlaneseq
    %v565 = vshrl.u32 %v564, 7
    %v566 = vsub.s32 %v563, %v565
    %v567 = vrot.slane %v22, %v566
    %v569 = vunpack.c.l.s4 1966171168
    %v570 = vunpack.c.0.s8 %v569
    %v571 = vlaneseq
    %v572 = vshrl.u32 %v571, 7
    %v573 = vsub.s32 %v570, %v572
    %v574 = vrot.slane %v560, %v573
    %v575 = vcombine.high %v567, %v567
    %v576 = vcombine.high %v574, %v574
    %v578 = vunpack.c.l.s4 1966171168
    %v579 = vunpack.c.0.s8 %v578
    %v580 = vlaneseq
    %v581 = vshrl.u32 %v580, 7
    %v582 = vsub.s32 %v579, %v581
    %v583 = vrot.slane %v567, %v582
    %v585 = vunpack.c.l.s4 1966171168
    %v586 = vunpack.c.0.s8 %v585
    %v587 = vlaneseq
    %v588 = vshrl.u32 %v587, 7
    %v589 = vsub.s32 %v586, %v588
    %v590 = vrot.slane %v574, %v589
    %v592 = vunpack.c.l.s4 1966171168
    %v593 = vunpack.c.0.s8 %v592
    %v594 = vlaneseq
    %v595 = vshrl.u32 %v594, 7
    %v596 = vsub.s32 %v593, %v595
    %v597 = vrot.slane %v575, %v596
    %v599 = vunpack.c.l.s4 1966171168
    %v600 = vunpack.c.0.s8 %v599
    %v601 = vlaneseq
    %v602 = vshrl.u32 %v601, 7
    %v603 = vsub.s32 %v600, %v602
    %v604 = vrot.slane %v576, %v603
    %v605 = vcombine.high %v583, %v583
    %v606 = vcombine.high %v590, %v590
    %v607 = vcombine.high %v597, %v597
    %v608 = vcombine.high %v604, %v604
    %v609 = vcombine.high %v23, %v23
    %v611 = vunpack.c.l.s4 1966171168
    %v612 = vunpack.c.0.s8 %v611
    %v613 = vlaneseq
    %v614 = vshrl.u32 %v613, 7
    %v615 = vsub.s32 %v612, %v614
    %v616 = vrot.slane %v23, %v615
    %v618 = vunpack.c.l.s4 1966171168
    %v619 = vunpack.c.0.s8 %v618
    %v620 = vlaneseq
    %v621 = vshrl.u32 %v620, 7
    %v622 = vsub.s32 %v619, %v621
    %v623 = vrot.slane %v609, %v622
    %v624 = vcombine.high %v616, %v616
    %v625 = vcombine.high %v623, %v623
    %v627 = vunpack.c.l.s4 1966171168
    %v628 = vunpack.c.0.s8 %v627
    %v629 = vlaneseq
    %v630 = vshrl.u32 %v629, 7
    %v631 = vsub.s32 %v628, %v630
    %v632 = vrot.slane %v616, %v631
    %v634 = vunpack.c.l.s4 1966171168
    %v635 = vunpack.c.0.s8 %v634
    %v636 = vlaneseq
    %v637 = vshrl.u32 %v636, 7
    %v638 = vsub.s32 %v635, %v637
    %v639 = vrot.slane %v623, %v638
    %v641 = vunpack.c.l.s4 1966171168
    %v642 = vunpack.c.0.s8 %v641
    %v643 = vlaneseq
    %v644 = vshrl.u32 %v643, 7
    %v645 = vsub.s32 %v642, %v644
    %v646 = vrot.slane %v624, %v645
    %v648 = vunpack.c.l.s4 1966171168
    %v649 = vunpack.c.0.s8 %v648
    %v650 = vlaneseq
    %v651 = vshrl.u32 %v650, 7
    %v652 = vsub.s32 %v649, %v651
    %v653 = vrot.slane %v625, %v652
    %v654 = vcombine.high %v632, %v632
    %v655 = vcombine.high %v639, %v639
    %v656 = vcombine.high %v646, %v646
    %v657 = vcombine.high %v653, %v653
    %v1186 = vunpack.c.l.b16 %v24
    %v1187 = vunpack.c.h.b16 %v24
    %v1188 = vunpack.c.l.b16 %v25
    %v1189 = vunpack.c.h.b16 %v25
    %v1190 = vunpack.c.l.b16 %v26
    %v1191 = vunpack.c.h.b16 %v26
    %v1192 = vunpack.c.l.b16 %v27
    %v1193 = vunpack.c.h.b16 %v27
    %v1194 = vunpack.c.l.b16 %v28
    %v1195 = vunpack.c.h.b16 %v28
    %v1196 = vunpack.c.l.b16 %v29
    %v1197 = vunpack.c.h.b16 %v29
    %v1198 = vunpack.c.l.b16 %v30
    %v1199 = vunpack.c.h.b16 %v30
    %v1200 = vunpack.c.l.b16 %v31
    %v1201 = vunpack.c.h.b16 %v31
    %v1202 = vunpack.c.l.b16 %v32
    %v1203 = vunpack.c.h.b16 %v32
    %v1204 = vunpack.c.l.b16 %v33
    %v1205 = vunpack.c.h.b16 %v33
    %v1206 = vunpack.c.l.b16 %v34
    %v1207 = vunpack.c.h.b16 %v34
    %v1208 = vunpack.c.l.b16 %v35
    %v1209 = vunpack.c.h.b16 %v35
    %v1210 = vunpack.c.l.b16 %v36
    %v1211 = vunpack.c.h.b16 %v36
    %v1212 = vunpack.c.l.b16 %v37
    %v1213 = vunpack.c.h.b16 %v37
    %v1214 = vunpack.c.l.b16 %v38
    %v1215 = vunpack.c.h.b16 %v38
    %v1216 = vunpack.c.l.b16 %v39
    %v1217 = vunpack.c.h.b16 %v39
    %v1218 = vunpack.c.l.b16 %v40
    %v1219 = vunpack.c.h.b16 %v40
    %v1220 = vunpack.c.l.b16 %v41
    %v1221 = vunpack.c.h.b16 %v41
    %v1222 = vunpack.c.l.b16 %v42
    %v1223 = vunpack.c.h.b16 %v42
    %v1224 = vunpack.c.l.b16 %v43
    %v1225 = vunpack.c.h.b16 %v43
    %v1226 = vunpack.c.l.b16 %v44
    %v1227 = vunpack.c.h.b16 %v44
    %v1228 = vunpack.c.l.b16 %v45
    %v1229 = vunpack.c.h.b16 %v45
    %v1230 = vunpack.c.l.b16 %v46
    %v1231 = vunpack.c.h.b16 %v46
    %v1232 = vunpack.c.l.b16 %v47
    %v1233 = vunpack.c.h.b16 %v47
    %v1234 = vunpack.c.l.b16 %v48
    %v1235 = vunpack.c.h.b16 %v48
    %v1236 = vunpack.c.l.b16 %v49
    %v1237 = vunpack.c.h.b16 %v49
    %v1238 = vunpack.c.l.b16 %v50
    %v1239 = vunpack.c.h.b16 %v50
    %v1240 = vunpack.c.l.b16 %v51
    %v1241 = vunpack.c.h.b16 %v51
    %v1242 = vunpack.c.l.b16 %v52
    %v1243 = vunpack.c.h.b16 %v52
    %v1244 = vunpack.c.l.b16 %v53
    %v1245 = vunpack.c.h.b16 %v53
    %v1246 = vunpack.c.l.b16 %v54
    %v1247 = vunpack.c.h.b16 %v54
    %v1248 = vunpack.c.l.b16 %v55
    %v1249 = vunpack.c.h.b16 %v55
    %v1250 = vunpack.c.l.b16 %v56
    %v1251 = vunpack.c.h.b16 %v56
    %v1252 = vunpack.c.l.b16 %v57
    %v1253 = vunpack.c.h.b16 %v57
    %v1254 = vunpack.c.l.b16 %v58
    %v1255 = vunpack.c.h.b16 %v58
    %v1256 = vunpack.c.l.b16 %v59
    %v1257 = vunpack.c.h.b16 %v59
    %v1258 = vunpack.c.l.b16 %v60
    %v1259 = vunpack.c.h.b16 %v60
    %v1260 = vunpack.c.l.b16 %v61
    %v1261 = vunpack.c.h.b16 %v61
    %v1262 = vunpack.c.l.b16 %v62
    %v1263 = vunpack.c.h.b16 %v62
    %v1264 = vunpack.c.l.b16 %v63
    %v1265 = vunpack.c.h.b16 %v63
    %v1266 = vunpack.c.l.b16 %v64
    %v1267 = vunpack.c.h.b16 %v64
    %v1268 = vunpack.c.l.b16 %v65
    %v1269 = vunpack.c.h.b16 %v65
    %v1270 = vunpack.c.l.b16 %v66
    %v1271 = vunpack.c.h.b16 %v66
    %v1272 = vunpack.c.l.b16 %v67
    %v1273 = vunpack.c.h.b16 %v67
    %v1274 = vunpack.c.l.b16 %v68
    %v1275 = vunpack.c.h.b16 %v68
    %v1276 = vunpack.c.l.b16 %v69
    %v1277 = vunpack.c.h.b16 %v69
    %v1278 = vunpack.c.l.b16 %v70
    %v1279 = vunpack.c.h.b16 %v70
    %v1280 = vunpack.c.l.b16 %v71
    %v1281 = vunpack.c.h.b16 %v71
    %v1282 = vunpack.c.l.b16 %v72
    %v1283 = vunpack.c.h.b16 %v72
    %v1284 = vunpack.c.l.b16 %v73
    %v1285 = vunpack.c.h.b16 %v73
    %v1286 = vunpack.c.l.b16 %v74
    %v1287 = vunpack.c.h.b16 %v74
    %v1288 = vunpack.c.l.b16 %v75
    %v1289 = vunpack.c.h.b16 %v75
    %v1290 = vunpack.c.l.b16 %v76
    %v1291 = vunpack.c.h.b16 %v76
    %v1292 = vunpack.c.l.b16 %v77
    %v1293 = vunpack.c.h.b16 %v77
    %v1294 = vunpack.c.l.b16 %v78
    %v1295 = vunpack.c.h.b16 %v78
    %v1296 = vunpack.c.l.b16 %v79
    %v1297 = vunpack.c.h.b16 %v79
    %v1298 = vunpack.c.l.b16 %v80
    %v1299 = vunpack.c.h.b16 %v80
    %v1300 = vunpack.c.l.b16 %v81
    %v1301 = vunpack.c.h.b16 %v81
    %v1302 = vunpack.c.l.b16 %v82
    %v1303 = vunpack.c.h.b16 %v82
    %v1304 = vunpack.c.l.b16 %v83
    %v1305 = vunpack.c.h.b16 %v83
    %v1306 = vunpack.c.l.b16 %v84
    %v1307 = vunpack.c.h.b16 %v84
    %v1308 = vunpack.c.l.b16 %v85
    %v1309 = vunpack.c.h.b16 %v85
    %v1310 = vunpack.c.l.b16 %v86
    %v1311 = vunpack.c.h.b16 %v86
    %v1312 = vunpack.c.l.b16 %v87
    %v1313 = vunpack.c.h.b16 %v87
    %v1314 = vunpack.c.l.b16 %v88
    %v1315 = vunpack.c.h.b16 %v88
    %v1316 = vunpack.c.l.b16 %v89
    %v1317 = vunpack.c.h.b16 %v89
    %v1318 = vunpack.c.l.b16 %v90
    %v1319 = vunpack.c.h.b16 %v90
    %v1320 = vunpack.c.l.b16 %v91
    %v1321 = vunpack.c.h.b16 %v91
    %v1322 = vunpack.c.l.b16 %v92
    %v1323 = vunpack.c.h.b16 %v92
    %v1324 = vunpack.c.l.b16 %v93
    %v1325 = vunpack.c.h.b16 %v93
    %v1326 = vunpack.c.l.b16 %v94
    %v1327 = vunpack.c.h.b16 %v94
    %v1328 = vunpack.c.l.b16 %v95
    %v1329 = vunpack.c.h.b16 %v95
    %v1330 = vunpack.c.l.b16 %v96
    %v1331 = vunpack.c.h.b16 %v96
    %v1332 = vunpack.c.l.b16 %v97
    %v1333 = vunpack.c.h.b16 %v97
    %v1334 = vunpack.c.l.b16 %v98
    %v1335 = vunpack.c.h.b16 %v98
    %v1336 = vunpack.c.l.b16 %v99
    %v1337 = vunpack.c.h.b16 %v99
    %v1338 = vunpack.c.l.b16 %v100
    %v1339 = vunpack.c.h.b16 %v100
    %v1340 = vunpack.c.l.b16 %v101
    %v1341 = vunpack.c.h.b16 %v101
    %v1342 = vunpack.c.l.b16 %v102
    %v1343 = vunpack.c.h.b16 %v102
    %v1344 = vunpack.c.l.b16 %v103
    %v1345 = vunpack.c.h.b16 %v103
    %v1346 = vunpack.c.l.b16 %v104
    %v1347 = vunpack.c.h.b16 %v104
    %v1348 = vunpack.c.l.b16 %v105
    %v1349 = vunpack.c.h.b16 %v105
    %v1350 = vunpack.c.l.b16 %v106
    %v1351 = vunpack.c.h.b16 %v106
    %v1352 = vunpack.c.l.b16 %v107
    %v1353 = vunpack.c.h.b16 %v107
    %v1354 = vunpack.c.l.b16 %v108
    %v1355 = vunpack.c.h.b16 %v108
    %v1356 = vunpack.c.l.b16 %v109
    %v1357 = vunpack.c.h.b16 %v109
    %v1358 = vunpack.c.l.b16 %v110
    %v1359 = vunpack.c.h.b16 %v110
    %v1360 = vunpack.c.l.b16 %v111
    %v1361 = vunpack.c.h.b16 %v111
    %v1362 = vunpack.c.l.b16 %v112
    %v1363 = vunpack.c.h.b16 %v112
    %v1364 = vunpack.c.l.b16 %v113
    %v1365 = vunpack.c.h.b16 %v113
    %v1366 = vunpack.c.l.b16 %v114
    %v1367 = vunpack.c.h.b16 %v114
    %v1368 = vunpack.c.l.b16 %v115
    %v1369 = vunpack.c.h.b16 %v115
    %v1370 = vunpack.c.l.b16 %v116
    %v1371 = vunpack.c.h.b16 %v116
    %v1372 = vunpack.c.l.b16 %v117
    %v1373 = vunpack.c.h.b16 %v117
    %v1374 = vunpack.c.l.b16 %v118
    %v1375 = vunpack.c.h.b16 %v118
    %v1376 = vunpack.c.l.b16 %v119
    %v1377 = vunpack.c.h.b16 %v119
    %v1378 = vunpack.c.l.b16 %v120
    %v1379 = vunpack.c.h.b16 %v120
    %v1380 = vunpack.c.l.b16 %v121
    %v1381 = vunpack.c.h.b16 %v121
    %v1382 = vunpack.c.l.b16 %v122
    %v1383 = vunpack.c.h.b16 %v122
    %v1384 = vunpack.c.l.b16 %v123
    %v1385 = vunpack.c.h.b16 %v123
    %v1386 = vunpack.c.l.b16 %v124
    %v1387 = vunpack.c.h.b16 %v124
    %v1388 = vunpack.c.l.b16 %v125
    %v1389 = vunpack.c.h.b16 %v125
    %v1390 = vunpack.c.l.b16 %v126
    %v1391 = vunpack.c.h.b16 %v126
    %v1392 = vunpack.c.l.b16 %v127
    %v1393 = vunpack.c.h.b16 %v127
    %v1394 = vunpack.c.l.b16 %v128
    %v1395 = vunpack.c.h.b16 %v128
    %v1396 = vunpack.c.l.b16 %v129
    %v1397 = vunpack.c.h.b16 %v129
    %v1398 = vunpack.c.l.b16 %v130
    %v1399 = vunpack.c.h.b16 %v130
    %v1400 = vunpack.c.l.b16 %v131
    %v1401 = vunpack.c.h.b16 %v131
    %v1402 = vunpack.c.l.b16 %v132
    %v1403 = vunpack.c.h.b16 %v132
    %v1404 = vunpack.c.l.b16 %v133
    %v1405 = vunpack.c.h.b16 %v133
    %v1406 = vunpack.c.l.b16 %v134
    %v1407 = vunpack.c.h.b16 %v134
    %v1408 = vunpack.c.l.b16 %v135
    %v1409 = vunpack.c.h.b16 %v135
    %v1410 = vunpack.c.l.b16 %v136
    %v1411 = vunpack.c.h.b16 %v136
    %v1412 = vunpack.c.l.b16 %v137
    %v1413 = vunpack.c.h.b16 %v137
    %v1414 = vunpack.c.l.b16 %v138
    %v1415 = vunpack.c.h.b16 %v138
    %v1416 = vunpack.c.l.b16 %v139
    %v1417 = vunpack.c.h.b16 %v139
    %v1418 = vunpack.c.l.b16 %v140
    %v1419 = vunpack.c.h.b16 %v140
    %v1420 = vunpack.c.l.b16 %v141
    %v1421 = vunpack.c.h.b16 %v141
    %v1422 = vunpack.c.l.b16 %v142
    %v1423 = vunpack.c.h.b16 %v142
    %v1424 = vunpack.c.l.b16 %v143
    %v1425 = vunpack.c.h.b16 %v143
    %v1426 = vunpack.c.l.b16 %v144
    %v1427 = vunpack.c.h.b16 %v144
    %v1428 = vunpack.c.l.b16 %v145
    %v1429 = vunpack.c.h.b16 %v145
    %v1430 = vunpack.c.l.b16 %v146
    %v1431 = vunpack.c.h.b16 %v146
    %v1432 = vunpack.c.l.b16 %v147
    %v1433 = vunpack.c.h.b16 %v147
    %v1434 = vunpack.c.l.b16 %v148
    %v1435 = vunpack.c.h.b16 %v148
    %v1436 = vunpack.c.l.b16 %v149
    %v1437 = vunpack.c.h.b16 %v149
    %v1438 = vunpack.c.l.b16 %v150
    %v1439 = vunpack.c.h.b16 %v150
    %v1440 = vunpack.c.l.b16 %v151
    %v1441 = vunpack.c.h.b16 %v151
    %v1442 = vunpack.c.l.b16 %v152
    %v1443 = vunpack.c.h.b16 %v152
    %v1444 = vunpack.c.l.b16 %v153
    %v1445 = vunpack.c.h.b16 %v153
    %v1446 = vunpack.c.l.b16 %v154
    %v1447 = vunpack.c.h.b16 %v154
    %v1448 = vunpack.c.l.b16 %v155
    %v1449 = vunpack.c.h.b16 %v155
    %v1450 = vunpack.c.l.b16 %v156
    %v1451 = vunpack.c.h.b16 %v156
    %v1452 = vunpack.c.l.b16 %v157
    %v1453 = vunpack.c.h.b16 %v157
    %v1454 = vunpack.c.l.b16 %v158
    %v1455 = vunpack.c.h.b16 %v158
    %v1456 = vunpack.c.l.b16 %v159
    %v1457 = vunpack.c.h.b16 %v159
    %v1458 = vunpack.c.l.b16 %v160
    %v1459 = vunpack.c.h.b16 %v160
    %v1460 = vunpack.c.l.b16 %v161
    %v1461 = vunpack.c.h.b16 %v161
    %v1462 = vunpack.c.l.b16 %v162
    %v1463 = vunpack.c.h.b16 %v162
    %v1464 = vunpack.c.l.b16 %v163
    %v1465 = vunpack.c.h.b16 %v163
    %v1466 = vunpack.c.l.b16 %v164
    %v1467 = vunpack.c.h.b16 %v164
    %v1468 = vunpack.c.l.b16 %v165
    %v1469 = vunpack.c.h.b16 %v165
    %v1470 = vunpack.c.l.b16 %v166
    %v1471 = vunpack.c.h.b16 %v166
    %v1472 = vunpack.c.l.b16 %v167
    %v1473 = vunpack.c.h.b16 %v167
    %v1474 = vunpack.c.l.b16 %v168
    %v1475 = vunpack.c.h.b16 %v168
    %v1476 = vunpack.c.l.b16 %v169
    %v1477 = vunpack.c.h.b16 %v169
    %v1478 = vunpack.c.l.b16 %v170
    %v1479 = vunpack.c.h.b16 %v170
    %v1480 = vunpack.c.l.b16 %v171
    %v1481 = vunpack.c.h.b16 %v171
    %v1482 = vunpack.c.l.b16 %v172
    %v1483 = vunpack.c.h.b16 %v172
    %v1484 = vunpack.c.l.b16 %v173
    %v1485 = vunpack.c.h.b16 %v173
    %v1486 = vunpack.c.l.b16 %v174
    %v1487 = vunpack.c.h.b16 %v174
    %v1488 = vunpack.c.l.b16 %v175
    %v1489 = vunpack.c.h.b16 %v175
    %v1490 = vunpack.c.l.b16 %v176
    %v1491 = vunpack.c.h.b16 %v176
    %v1492 = vunpack.c.l.b16 %v177
    %v1493 = vunpack.c.h.b16 %v177
    %v1494 = vunpack.c.l.b16 %v178
    %v1495 = vunpack.c.h.b16 %v178
    %v1496 = vunpack.c.l.b16 %v179
    %v1497 = vunpack.c.h.b16 %v179
    %v1498 = vunpack.c.l.b16 %v180
    %v1499 = vunpack.c.h.b16 %v180
    %v1500 = vunpack.c.l.b16 %v181
    %v1501 = vunpack.c.h.b16 %v181
    %v1502 = vunpack.c.l.b16 %v182
    %v1503 = vunpack.c.h.b16 %v182
    %v1504 = vunpack.c.l.b16 %v183
    %v1505 = vunpack.c.h.b16 %v183
    %v1506 = vunpack.c.l.b16 %v184
    %v1507 = vunpack.c.h.b16 %v184
    %v1508 = vunpack.c.l.b16 %v185
    %v1509 = vunpack.c.h.b16 %v185
    %v1510 = vunpack.c.l.b16 %v186
    %v1511 = vunpack.c.h.b16 %v186
    %v1512 = vunpack.c.l.b16 %v187
    %v1513 = vunpack.c.h.b16 %v187
    %v1514 = vunpack.c.l.b16 %v188
    %v1515 = vunpack.c.h.b16 %v188
    %v1516 = vunpack.c.l.b16 %v189
    %v1517 = vunpack.c.h.b16 %v189
    %v1518 = vunpack.c.l.b16 %v190
    %v1519 = vunpack.c.h.b16 %v190
    %v1520 = vunpack.c.l.b16 %v191
    %v1521 = vunpack.c.h.b16 %v191
    %v1522 = vunpack.c.l.b16 %v192
    %v1523 = vunpack.c.h.b16 %v192
    %v1524 = vunpack.c.l.b16 %v193
    %v1525 = vunpack.c.h.b16 %v193
    %v1526 = vunpack.c.l.b16 %v194
    %v1527 = vunpack.c.h.b16 %v194
    %v1528 = vunpack.c.l.b16 %v195
    %v1529 = vunpack.c.h.b16 %v195
    %v1530 = vunpack.c.l.b16 %v196
    %v1531 = vunpack.c.h.b16 %v196
    %v1532 = vunpack.c.l.b16 %v197
    %v1533 = vunpack.c.h.b16 %v197
    %v1534 = vunpack.c.l.b16 %v198
    %v1535 = vunpack.c.h.b16 %v198
    %v1536 = vunpack.c.l.b16 %v199
    %v1537 = vunpack.c.h.b16 %v199
    %v1538 = vunpack.c.l.b16 %v200
    %v1539 = vunpack.c.h.b16 %v200
    %v1540 = vunpack.c.l.b16 %v201
    %v1541 = vunpack.c.h.b16 %v201
    %v1542 = vunpack.c.l.b16 %v202
    %v1543 = vunpack.c.h.b16 %v202
    %v1544 = vunpack.c.l.b16 %v203
    %v1545 = vunpack.c.h.b16 %v203
    %v1546 = vunpack.c.l.b16 %v204
    %v1547 = vunpack.c.h.b16 %v204
    %v1548 = vunpack.c.l.b16 %v205
    %v1549 = vunpack.c.h.b16 %v205
    %v1550 = vunpack.c.l.b16 %v206
    %v1551 = vunpack.c.h.b16 %v206
    %v1552 = vunpack.c.l.b16 %v207
    %v1553 = vunpack.c.h.b16 %v207
    %v1554 = vunpack.c.l.b16 %v208
    %v1555 = vunpack.c.h.b16 %v208
    %v1556 = vunpack.c.l.b16 %v209
    %v1557 = vunpack.c.h.b16 %v209
    %v1558 = vunpack.c.l.b16 %v210
    %v1559 = vunpack.c.h.b16 %v210
    %v1560 = vunpack.c.l.b16 %v211
    %v1561 = vunpack.c.h.b16 %v211
    %v1562 = vunpack.c.l.b16 %v212
    %v1563 = vunpack.c.h.b16 %v212
    %v1564 = vunpack.c.l.b16 %v213
    %v1565 = vunpack.c.h.b16 %v213
    %v1566 = vunpack.c.l.b16 %v214
    %v1567 = vunpack.c.h.b16 %v214
    %v1568 = vunpack.c.l.b16 %v215
    %v1569 = vunpack.c.h.b16 %v215
    %v1570 = vunpack.c.l.b16 %v216
    %v1571 = vunpack.c.h.b16 %v216
    %v1572 = vunpack.c.l.b16 %v217
    %v1573 = vunpack.c.h.b16 %v217
    %v1574 = vunpack.c.l.b16 %v218
    %v1575 = vunpack.c.h.b16 %v218
    %v1576 = vunpack.c.l.b16 %v219
    %v1577 = vunpack.c.h.b16 %v219
    %v1578 = vunpack.c.l.b16 %v220
    %v1579 = vunpack.c.h.b16 %v220
    %v1580 = vunpack.c.l.b16 %v221
    %v1581 = vunpack.c.h.b16 %v221
    %v1582 = vunpack.c.l.b16 %v222
    %v1583 = vunpack.c.h.b16 %v222
    %v1584 = vunpack.c.l.b16 %v223
    %v1585 = vunpack.c.h.b16 %v223
    %v1586 = vunpack.c.l.b16 %v224
    %v1587 = vunpack.c.h.b16 %v224
    %v1588 = vunpack.c.l.b16 %v225
    %v1589 = vunpack.c.h.b16 %v225
    %v1590 = vunpack.c.l.b16 %v226
    %v1591 = vunpack.c.h.b16 %v226
    %v1592 = vunpack.c.l.b16 %v227
    %v1593 = vunpack.c.h.b16 %v227
    %v1594 = vunpack.c.l.b16 %v228
    %v1595 = vunpack.c.h.b16 %v228
    %v1596 = vunpack.c.l.b16 %v229
    %v1597 = vunpack.c.h.b16 %v229
    %v1598 = vunpack.c.l.b16 %v230
    %v1599 = vunpack.c.h.b16 %v230
    %v1600 = vunpack.c.l.b16 %v231
    %v1601 = vunpack.c.h.b16 %v231
    %v1602 = vunpack.c.l.b16 %v232
    %v1603 = vunpack.c.h.b16 %v232
    %v1604 = vunpack.c.l.b16 %v233
    %v1605 = vunpack.c.h.b16 %v233
    %v1606 = vunpack.c.l.b16 %v234
    %v1607 = vunpack.c.h.b16 %v234
    %v1608 = vunpack.c.l.b16 %v235
    %v1609 = vunpack.c.h.b16 %v235
    %v1610 = vunpack.c.l.b16 %v236
    %v1611 = vunpack.c.h.b16 %v236
    %v1612 = vunpack.c.l.b16 %v237
    %v1613 = vunpack.c.h.b16 %v237
    %v1614 = vunpack.c.l.b16 %v238
    %v1615 = vunpack.c.h.b16 %v238
    %v1616 = vunpack.c.l.b16 %v239
    %v1617 = vunpack.c.h.b16 %v239
    %v1618 = vunpack.c.l.b16 %v240
    %v1619 = vunpack.c.h.b16 %v240
    %v1620 = vunpack.c.l.b16 %v241
    %v1621 = vunpack.c.h.b16 %v241
    %v1622 = vunpack.c.l.b16 %v242
    %v1623 = vunpack.c.h.b16 %v242
    %v1624 = vunpack.c.l.b16 %v243
    %v1625 = vunpack.c.h.b16 %v243
    %v1626 = vunpack.c.l.b16 %v244
    %v1627 = vunpack.c.h.b16 %v244
    %v1628 = vunpack.c.l.b16 %v245
    %v1629 = vunpack.c.h.b16 %v245
    %v1630 = vunpack.c.l.b16 %v246
    %v1631 = vunpack.c.h.b16 %v246
    %v1632 = vunpack.c.l.b16 %v247
    %v1633 = vunpack.c.h.b16 %v247
    %v1634 = vunpack.c.l.b16 %v248
    %v1635 = vunpack.c.h.b16 %v248
    %v1636 = vunpack.c.l.b16 %v249
    %v1637 = vunpack.c.h.b16 %v249
    %v1638 = vunpack.c.l.b16 %v250
    %v1639 = vunpack.c.h.b16 %v250
    %v1640 = vunpack.c.l.b16 %v251
    %v1641 = vunpack.c.h.b16 %v251
    %v1642 = vunpack.c.l.b16 %v252
    %v1643 = vunpack.c.h.b16 %v252
    %v1644 = vunpack.c.l.b16 %v253
    %v1645 = vunpack.c.h.b16 %v253
    %v1646 = vunpack.c.l.b16 %v254
    %v1647 = vunpack.c.h.b16 %v254
    %v1648 = vunpack.c.l.b16 %v255
    %v1649 = vunpack.c.h.b16 %v255
    %v1650 = vunpack.c.l.b16 %v256
    %v1651 = vunpack.c.h.b16 %v256
    %v1652 = vunpack.c.l.b16 %v257
    %v1653 = vunpack.c.h.b16 %v257
    %v1654 = vunpack.c.l.b16 %v258
    %v1655 = vunpack.c.h.b16 %v258
    %v1656 = vunpack.c.l.b16 %v259
    %v1657 = vunpack.c.h.b16 %v259
    %v1658 = vunpack.c.l.b16 %v260
    %v1659 = vunpack.c.h.b16 %v260
    %v1660 = vunpack.c.l.b16 %v261
    %v1661 = vunpack.c.h.b16 %v261
    %v1662 = vunpack.c.l.b16 %v262
    %v1663 = vunpack.c.h.b16 %v262
    %v1664 = vunpack.c.l.b16 %v263
    %v1665 = vunpack.c.h.b16 %v263
    %v1666 = vunpack.c.l.b16 %v264
    %v1667 = vunpack.c.h.b16 %v264
    %v1668 = vunpack.c.l.b16 %v265
    %v1669 = vunpack.c.h.b16 %v265
    %v1670 = vunpack.c.l.b16 %v266
    %v1671 = vunpack.c.h.b16 %v266
    %v1672 = vunpack.c.l.b16 %v267
    %v1673 = vunpack.c.h.b16 %v267
    %v1674 = vunpack.c.l.b16 %v268
    %v1675 = vunpack.c.h.b16 %v268
    %v1676 = vunpack.c.l.b16 %v269
    %v1677 = vunpack.c.h.b16 %v269
    %v1678 = vunpack.c.l.b16 %v270
    %v1679 = vunpack.c.h.b16 %v270
    %v1680 = vunpack.c.l.b16 %v271
    %v1681 = vunpack.c.h.b16 %v271
    %v1682 = vunpack.c.l.b16 %v272
    %v1683 = vunpack.c.h.b16 %v272
    %v1684 = vunpack.c.l.b16 %v273
    %v1685 = vunpack.c.h.b16 %v273
    %v1686 = vunpack.c.l.b16 %v274
    %v1687 = vunpack.c.h.b16 %v274
    %v1688 = vunpack.c.l.b16 %v275
    %v1689 = vunpack.c.h.b16 %v275
    %v1690 = vunpack.c.l.b16 %v276
    %v1691 = vunpack.c.h.b16 %v276
    %v1692 = vunpack.c.l.b16 %v277
    %v1693 = vunpack.c.h.b16 %v277
    %v1694 = vunpack.c.l.b16 %v278
    %v1695 = vunpack.c.h.b16 %v278
    %v1696 = vunpack.c.l.b16 %v279
    %v1697 = vunpack.c.h.b16 %v279
    %v1698 = vunpack.c.l.b16 %v280
    %v1699 = vunpack.c.h.b16 %v280
    %v1700 = vunpack.c.l.b16 %v281
    %v1701 = vunpack.c.h.b16 %v281
    %v1702 = vunpack.c.l.b16 %v282
    %v1703 = vunpack.c.h.b16 %v282
    %v1704 = vunpack.c.l.b16 %v283
    %v1705 = vunpack.c.h.b16 %v283
    %v1706 = vunpack.c.l.b16 %v284
    %v1707 = vunpack.c.h.b16 %v284
    %v1708 = vunpack.c.l.b16 %v285
    %v1709 = vunpack.c.h.b16 %v285
    %v1710 = vunpack.c.l.b16 %v286
    %v1711 = vunpack.c.h.b16 %v286
    %v1712 = vunpack.c.l.b16 %v287
    %v1713 = vunpack.c.h.b16 %v287
    %v1714 = vunpack.c.l.b16 %v288
    %v1715 = vunpack.c.h.b16 %v288
    %v1716 = vunpack.c.l.b16 %v289
    %v1717 = vunpack.c.h.b16 %v289
    %v1718 = vunpack.c.l.b16 %v290
    %v1719 = vunpack.c.h.b16 %v290
    %v1720 = vunpack.c.l.b16 %v291
    %v1721 = vunpack.c.h.b16 %v291
    %v1722 = vunpack.c.l.b16 %v292
    %v1723 = vunpack.c.h.b16 %v292
    %v1724 = vunpack.c.l.b16 %v293
    %v1725 = vunpack.c.h.b16 %v293
    %v1726 = vunpack.c.l.b16 %v294
    %v1727 = vunpack.c.h.b16 %v294
    %v1728 = vunpack.c.l.b16 %v295
    %v1729 = vunpack.c.h.b16 %v295
    %v1730 = vunpack.c.l.b16 %v296
    %v1731 = vunpack.c.h.b16 %v296
    %v1732 = vunpack.c.l.b16 %v297
    %v1733 = vunpack.c.h.b16 %v297
    %v1734 = vunpack.c.l.b16 %v298
    %v1735 = vunpack.c.h.b16 %v298
    %v1736 = vunpack.c.l.b16 %v299
    %v1737 = vunpack.c.h.b16 %v299
    %v1738 = vunpack.c.l.b16 %v300
    %v1739 = vunpack.c.h.b16 %v300
    %v1740 = vunpack.c.l.b16 %v301
    %v1741 = vunpack.c.h.b16 %v301
    %v1742 = vunpack.c.l.b16 %v302
    %v1743 = vunpack.c.h.b16 %v302
    %v1744 = vunpack.c.l.b16 %v303
    %v1745 = vunpack.c.h.b16 %v303
    %v1746 = vunpack.c.l.b16 %v304
    %v1747 = vunpack.c.h.b16 %v304
    %v1748 = vunpack.c.l.b16 %v305
    %v1749 = vunpack.c.h.b16 %v305
    %v1750 = vunpack.c.l.b16 %v306
    %v1751 = vunpack.c.h.b16 %v306
    %v1752 = vunpack.c.l.b16 %v307
    %v1753 = vunpack.c.h.b16 %v307
    %v1754 = vunpack.c.l.b16 %v308
    %v1755 = vunpack.c.h.b16 %v308
    %v1756 = vunpack.c.l.b16 %v309
    %v1757 = vunpack.c.h.b16 %v309
    %v1758 = vunpack.c.l.b16 %v310
    %v1759 = vunpack.c.h.b16 %v310
    %v1760 = vunpack.c.l.b16 %v311
    %v1761 = vunpack.c.h.b16 %v311
    %v1762 = vunpack.c.l.b16 %v312
    %v1763 = vunpack.c.h.b16 %v312
    %v1764 = vunpack.c.l.b16 %v313
    %v1765 = vunpack.c.h.b16 %v313
    %v1766 = vunpack.c.l.b16 %v314
    %v1767 = vunpack.c.h.b16 %v314
    %v1768 = vunpack.c.l.b16 %v315
    %v1769 = vunpack.c.h.b16 %v315
    %v1770 = vunpack.c.l.b16 %v316
    %v1771 = vunpack.c.h.b16 %v316
    %v1772 = vunpack.c.l.b16 %v317
    %v1773 = vunpack.c.h.b16 %v317
    %v1774 = vunpack.c.l.b16 %v318
    %v1775 = vunpack.c.h.b16 %v318
    %v1776 = vunpack.c.l.b16 %v319
    %v1777 = vunpack.c.h.b16 %v319
    %v1778 = vunpack.c.l.b16 %v320
    %v1779 = vunpack.c.h.b16 %v320
    %v1780 = vunpack.c.l.b16 %v321
    %v1781 = vunpack.c.h.b16 %v321
    %v1782 = vunpack.c.l.b16 %v322
    %v1783 = vunpack.c.h.b16 %v322
    %v1784 = vunpack.c.l.b16 %v323
    %v1785 = vunpack.c.h.b16 %v323
    %v1786 = vunpack.c.l.b16 %v324
    %v1787 = vunpack.c.h.b16 %v324
    %v1788 = vunpack.c.l.b16 %v325
    %v1789 = vunpack.c.h.b16 %v325
    %v1790 = vunpack.c.l.b16 %v326
    %v1791 = vunpack.c.h.b16 %v326
    %v1792 = vunpack.c.l.b16 %v327
    %v1793 = vunpack.c.h.b16 %v327
    %v1794 = vunpack.c.l.b16 %v328
    %v1795 = vunpack.c.h.b16 %v328
    %v1796 = vunpack.c.l.b16 %v329
    %v1797 = vunpack.c.h.b16 %v329
    %v1798 = vunpack.c.l.b16 %v330
    %v1799 = vunpack.c.h.b16 %v330
    %v1800 = vunpack.c.l.b16 %v331
    %v1801 = vunpack.c.h.b16 %v331
    %v1802 = vunpack.c.l.b16 %v332
    %v1803 = vunpack.c.h.b16 %v332
    %v1804 = vunpack.c.l.b16 %v333
    %v1805 = vunpack.c.h.b16 %v333
    %v1806 = vunpack.c.l.b16 %v334
    %v1807 = vunpack.c.h.b16 %v334
    %v1808 = vunpack.c.l.b16 %v335
    %v1809 = vunpack.c.h.b16 %v335
    %v1810 = vunpack.c.l.b16 %v336
    %v1811 = vunpack.c.h.b16 %v336
    %v1812 = vunpack.c.l.b16 %v337
    %v1813 = vunpack.c.h.b16 %v337
    %v1814 = vunpack.c.l.b16 %v338
    %v1815 = vunpack.c.h.b16 %v338
    %v1816 = vunpack.c.l.b16 %v339
    %v1817 = vunpack.c.h.b16 %v339
    %v1818 = vunpack.c.l.b16 %v340
    %v1819 = vunpack.c.h.b16 %v340
    %v1820 = vunpack.c.l.b16 %v341
    %v1821 = vunpack.c.h.b16 %v341
    %v1822 = vunpack.c.l.b16 %v342
    %v1823 = vunpack.c.h.b16 %v342
    %v1824 = vunpack.c.l.b16 %v343
    %v1825 = vunpack.c.h.b16 %v343
    %v1826 = vunpack.c.l.b16 %v344
    %v1827 = vunpack.c.h.b16 %v344
    %v1828 = vunpack.c.l.b16 %v345
    %v1829 = vunpack.c.h.b16 %v345
    %v1830 = vunpack.c.l.b16 %v346
    %v1831 = vunpack.c.h.b16 %v346
    %v1832 = vunpack.c.l.b16 %v347
    %v1833 = vunpack.c.h.b16 %v347
    %v1834 = vunpack.c.l.b16 %v348
    %v1835 = vunpack.c.h.b16 %v348
    %v1836 = vunpack.c.l.b16 %v349
    %v1837 = vunpack.c.h.b16 %v349
    %v1838 = vunpack.c.l.b16 %v350
    %v1839 = vunpack.c.h.b16 %v350
    %v1840 = vunpack.c.l.b16 %v351
    %v1841 = vunpack.c.h.b16 %v351
    %v1842 = vunpack.c.l.b16 %v352
    %v1843 = vunpack.c.h.b16 %v352
    %v1844 = vunpack.c.l.b16 %v353
    %v1845 = vunpack.c.h.b16 %v353
    %v1846 = vunpack.c.l.b16 %v354
    %v1847 = vunpack.c.h.b16 %v354
    %v1848 = vunpack.c.l.b16 %v355
    %v1849 = vunpack.c.h.b16 %v355
    %v1850 = vunpack.c.l.b16 %v356
    %v1851 = vunpack.c.h.b16 %v356
    %v1852 = vunpack.c.l.b16 %v357
    %v1853 = vunpack.c.h.b16 %v357
    %v1854 = vunpack.c.l.b16 %v358
    %v1855 = vunpack.c.h.b16 %v358
    %v1856 = vunpack.c.l.b16 %v359
    %v1857 = vunpack.c.h.b16 %v359
    %v1858 = vunpack.c.l.b16 %v360
    %v1859 = vunpack.c.h.b16 %v360
    %v1860 = vunpack.c.l.b16 %v361
    %v1861 = vunpack.c.h.b16 %v361
    %v1862 = vunpack.c.l.b16 %v362
    %v1863 = vunpack.c.h.b16 %v362
    %v1864 = vunpack.c.l.b16 %v363
    %v1865 = vunpack.c.h.b16 %v363
    %v1866 = vunpack.c.l.b16 %v364
    %v1867 = vunpack.c.h.b16 %v364
    %v1868 = vunpack.c.l.b16 %v365
    %v1869 = vunpack.c.h.b16 %v365
    %v1870 = vunpack.c.l.b16 %v366
    %v1871 = vunpack.c.h.b16 %v366
    %v1872 = vunpack.c.l.b16 %v367
    %v1873 = vunpack.c.h.b16 %v367
    %v1874 = vunpack.c.l.b16 %v368
    %v1875 = vunpack.c.h.b16 %v368
    %v1876 = vunpack.c.l.b16 %v369
    %v1877 = vunpack.c.h.b16 %v369
    %v1878 = vunpack.c.l.b16 %v370
    %v1879 = vunpack.c.h.b16 %v370
    %v1880 = vunpack.c.l.b16 %v371
    %v1881 = vunpack.c.h.b16 %v371
    %v1882 = vunpack.c.l.b16 %v372
    %v1883 = vunpack.c.h.b16 %v372
    %v1884 = vunpack.c.l.b16 %v373
    %v1885 = vunpack.c.h.b16 %v373
    %v1886 = vunpack.c.l.b16 %v374
    %v1887 = vunpack.c.h.b16 %v374
    %v1888 = vunpack.c.l.b16 %v375
    %v1889 = vunpack.c.h.b16 %v375
    %v1890 = vunpack.c.l.b16 %v376
    %v1891 = vunpack.c.h.b16 %v376
    %v1892 = vunpack.c.l.b16 %v377
    %v1893 = vunpack.c.h.b16 %v377
    %v1894 = vunpack.c.l.b16 %v378
    %v1895 = vunpack.c.h.b16 %v378
    %v1896 = vunpack.c.l.b16 %v379
    %v1897 = vunpack.c.h.b16 %v379
    %v1898 = vunpack.c.l.b16 %v380
    %v1899 = vunpack.c.h.b16 %v380
    %v1900 = vunpack.c.l.b16 %v381
    %v1901 = vunpack.c.h.b16 %v381
    %v1902 = vunpack.c.l.b16 %v382
    %v1903 = vunpack.c.h.b16 %v382
    %v1904 = vunpack.c.l.b16 %v383
    %v1905 = vunpack.c.h.b16 %v383
    %v1906 = vunpack.c.l.b16 %v384
    %v1907 = vunpack.c.h.b16 %v384
    %v1908 = vunpack.c.l.b16 %v385
    %v1909 = vunpack.c.h.b16 %v385
    %v1910 = vunpack.c.l.b16 %v386
    %v1911 = vunpack.c.h.b16 %v386
    %v1912 = vunpack.c.l.b16 %v387
    %v1913 = vunpack.c.h.b16 %v387
    %v1914 = vunpack.c.l.b16 %v388
    %v1915 = vunpack.c.h.b16 %v388
    %v1916 = vunpack.c.l.b16 %v389
    %v1917 = vunpack.c.h.b16 %v389
    %v1918 = vunpack.c.l.b16 %v390
    %v1919 = vunpack.c.h.b16 %v390
    %v1920 = vunpack.c.l.b16 %v391
    %v1921 = vunpack.c.h.b16 %v391
    %v1922 = vunpack.c.l.b16 %v392
    %v1923 = vunpack.c.h.b16 %v392
    %v1924 = vunpack.c.l.b16 %v393
    %v1925 = vunpack.c.h.b16 %v393
    %v1926 = vunpack.c.l.b16 %v394
    %v1927 = vunpack.c.h.b16 %v394
    %v1928 = vunpack.c.l.b16 %v395
    %v1929 = vunpack.c.h.b16 %v395
    %v1930 = vunpack.c.l.b16 %v396
    %v1931 = vunpack.c.h.b16 %v396
    %v1932 = vunpack.c.l.b16 %v397
    %v1933 = vunpack.c.h.b16 %v397
    %v1934 = vunpack.c.l.b16 %v398
    %v1935 = vunpack.c.h.b16 %v398
    %v1936 = vunpack.c.l.b16 %v399
    %v1937 = vunpack.c.h.b16 %v399
    %v1938 = vunpack.c.l.b16 %v400
    %v1939 = vunpack.c.h.b16 %v400
    %v1940 = vunpack.c.l.b16 %v401
    %v1941 = vunpack.c.h.b16 %v401
    %v1942 = vunpack.c.l.b16 %v402
    %v1943 = vunpack.c.h.b16 %v402
    %v1944 = vunpack.c.l.b16 %v403
    %v1945 = vunpack.c.h.b16 %v403
    %v1946 = vunpack.c.l.b16 %v404
    %v1947 = vunpack.c.h.b16 %v404
    %v1948 = vunpack.c.l.b16 %v405
    %v1949 = vunpack.c.h.b16 %v405
    %v1950 = vunpack.c.l.b16 %v406
    %v1951 = vunpack.c.h.b16 %v406
    %v1952 = vunpack.c.l.b16 %v407
    %v1953 = vunpack.c.h.b16 %v407
    %v1954 = vunpack.c.l.b16 %v408
    %v1955 = vunpack.c.h.b16 %v408
    %v1956 = vunpack.c.l.b16 %v409
    %v1957 = vunpack.c.h.b16 %v409
    %v1958 = vunpack.c.l.b16 %v410
    %v1959 = vunpack.c.h.b16 %v410
    %v1960 = vunpack.c.l.b16 %v411
    %v1961 = vunpack.c.h.b16 %v411
    %v1962 = vunpack.c.l.b16 %v412
    %v1963 = vunpack.c.h.b16 %v412
    %v1964 = vunpack.c.l.b16 %v413
    %v1965 = vunpack.c.h.b16 %v413
    %v1966 = vunpack.c.l.b16 %v414
    %v1967 = vunpack.c.h.b16 %v414
    %v1968 = vunpack.c.l.b16 %v415
    %v1969 = vunpack.c.h.b16 %v415
    %v1970 = vunpack.c.l.b16 %v416
    %v1971 = vunpack.c.h.b16 %v416
    %v1972 = vunpack.c.l.b16 %v417
    %v1973 = vunpack.c.h.b16 %v417
    %v1974 = vunpack.c.l.b16 %v418
    %v1975 = vunpack.c.h.b16 %v418
    %v1976 = vunpack.c.l.b16 %v419
    %v1977 = vunpack.c.h.b16 %v419
    %v1978 = vunpack.c.l.b16 %v420
    %v1979 = vunpack.c.h.b16 %v420
    %v1980 = vunpack.c.l.b16 %v421
    %v1981 = vunpack.c.h.b16 %v421
    %v1982 = vunpack.c.l.b16 %v422
    %v1983 = vunpack.c.h.b16 %v422
    %v1984 = vunpack.c.l.b16 %v423
    %v1985 = vunpack.c.h.b16 %v423
    %v1986 = vunpack.c.l.b16 %v424
    %v1987 = vunpack.c.h.b16 %v424
    %v1988 = vunpack.c.l.b16 %v425
    %v1989 = vunpack.c.h.b16 %v425
    %v1990 = vunpack.c.l.b16 %v426
    %v1991 = vunpack.c.h.b16 %v426
    %v1992 = vunpack.c.l.b16 %v427
    %v1993 = vunpack.c.h.b16 %v427
    %v1994 = vunpack.c.l.b16 %v428
    %v1995 = vunpack.c.h.b16 %v428
    %v1996 = vunpack.c.l.b16 %v429
    %v1997 = vunpack.c.h.b16 %v429
    %v1998 = vunpack.c.l.b16 %v430
    %v1999 = vunpack.c.h.b16 %v430
    %v2000 = vunpack.c.l.b16 %v431
    %v2001 = vunpack.c.h.b16 %v431
    %v2002 = vunpack.c.l.b16 %v432
    %v2003 = vunpack.c.h.b16 %v432
    %v2004 = vunpack.c.l.b16 %v433
    %v2005 = vunpack.c.h.b16 %v433
    %v2006 = vunpack.c.l.b16 %v434
    %v2007 = vunpack.c.h.b16 %v434
    %v2008 = vunpack.c.l.b16 %v435
    %v2009 = vunpack.c.h.b16 %v435
    %v2010 = vunpack.c.l.b16 %v436
    %v2011 = vunpack.c.h.b16 %v436
    %v2012 = vunpack.c.l.b16 %v437
    %v2013 = vunpack.c.h.b16 %v437
    %v2014 = vunpack.c.l.b16 %v438
    %v2015 = vunpack.c.h.b16 %v438
    %v2016 = vunpack.c.l.b16 %v439
    %v2017 = vunpack.c.h.b16 %v439
    %v2018 = vunpack.c.l.b16 %v440
    %v2019 = vunpack.c.h.b16 %v440
    %v2020 = vunpack.c.l.b16 %v441
    %v2021 = vunpack.c.h.b16 %v441
    %v2022 = vunpack.c.l.b16 %v442
    %v2023 = vunpack.c.h.b16 %v442
    %v2024 = vunpack.c.l.b16 %v443
    %v2025 = vunpack.c.h.b16 %v443
    %v2026 = vunpack.c.l.b16 %v444
    %v2027 = vunpack.c.h.b16 %v444
    %v2028 = vunpack.c.l.b16 %v445
    %v2029 = vunpack.c.h.b16 %v445
    %v2030 = vunpack.c.l.b16 %v446
    %v2031 = vunpack.c.h.b16 %v446
    %v2032 = vunpack.c.l.b16 %v447
    %v2033 = vunpack.c.h.b16 %v447
    %v2034 = vunpack.c.l.b16 %v448
    %v2035 = vunpack.c.h.b16 %v448
    %v2036 = vunpack.c.l.b16 %v449
    %v2037 = vunpack.c.h.b16 %v449
    %v2038 = vunpack.c.l.b16 %v450
    %v2039 = vunpack.c.h.b16 %v450
    %v2040 = vunpack.c.l.b16 %v451
    %v2041 = vunpack.c.h.b16 %v451
    %v2042 = vunpack.c.l.b16 %v452
    %v2043 = vunpack.c.h.b16 %v452
    %v2044 = vunpack.c.l.b16 %v453
    %v2045 = vunpack.c.h.b16 %v453
    %v2046 = vunpack.c.l.b16 %v454
    %v2047 = vunpack.c.h.b16 %v454
    %v2048 = vunpack.c.l.b16 %v455
    %v2049 = vunpack.c.h.b16 %v455
    %v2050 = vunpack.c.l.b16 %v456
    %v2051 = vunpack.c.h.b16 %v456
    %v2052 = vunpack.c.l.b16 %v457
    %v2053 = vunpack.c.h.b16 %v457
    %v2054 = vunpack.c.l.b16 %v458
    %v2055 = vunpack.c.h.b16 %v458
    %v2056 = vunpack.c.l.b16 %v459
    %v2057 = vunpack.c.h.b16 %v459
    %v2058 = vunpack.c.l.b16 %v460
    %v2059 = vunpack.c.h.b16 %v460
    %v2060 = vunpack.c.l.b16 %v461
    %v2061 = vunpack.c.h.b16 %v461
    %v2062 = vunpack.c.l.b16 %v462
    %v2063 = vunpack.c.h.b16 %v462
    %v2064 = vunpack.c.l.b16 %v463
    %v2065 = vunpack.c.h.b16 %v463
    %v2066 = vunpack.c.l.b16 %v464
    %v2067 = vunpack.c.h.b16 %v464
    %v2068 = vunpack.c.l.b16 %v465
    %v2069 = vunpack.c.h.b16 %v465
    %v2070 = vunpack.c.l.b16 %v466
    %v2071 = vunpack.c.h.b16 %v466
    %v2072 = vunpack.c.l.b16 %v467
    %v2073 = vunpack.c.h.b16 %v467
    %v2074 = vunpack.c.l.b16 %v468
    %v2075 = vunpack.c.h.b16 %v468
    %v2076 = vunpack.c.l.b16 %v469
    %v2077 = vunpack.c.h.b16 %v469
    %v2078 = vunpack.c.l.b16 %v470
    %v2079 = vunpack.c.h.b16 %v470
    %v2080 = vunpack.c.l.b16 %v471
    %v2081 = vunpack.c.h.b16 %v471
    %v2082 = vunpack.c.l.b16 %v472
    %v2083 = vunpack.c.h.b16 %v472
    %v2084 = vunpack.c.l.b16 %v473
    %v2085 = vunpack.c.h.b16 %v473
    %v2086 = vunpack.c.l.b16 %v474
    %v2087 = vunpack.c.h.b16 %v474
    %v2088 = vunpack.c.l.b16 %v475
    %v2089 = vunpack.c.h.b16 %v475
    %v2090 = vunpack.c.l.b16 %v476
    %v2091 = vunpack.c.h.b16 %v476
    %v2092 = vunpack.c.l.b16 %v477
    %v2093 = vunpack.c.h.b16 %v477
    %v2094 = vunpack.c.l.b16 %v478
    %v2095 = vunpack.c.h.b16 %v478
    %v2096 = vunpack.c.l.b16 %v479
    %v2097 = vunpack.c.h.b16 %v479
    %v2098 = vunpack.c.l.b16 %v480
    %v2099 = vunpack.c.h.b16 %v480
    %v2100 = vunpack.c.l.b16 %v481
    %v2101 = vunpack.c.h.b16 %v481
    %v2102 = vunpack.c.l.b16 %v482
    %v2103 = vunpack.c.h.b16 %v482
    %v2104 = vunpack.c.l.b16 %v483
    %v2105 = vunpack.c.h.b16 %v483
    %v2106 = vunpack.c.l.b16 %v484
    %v2107 = vunpack.c.h.b16 %v484
    %v2108 = vunpack.c.l.b16 %v485
    %v2109 = vunpack.c.h.b16 %v485
    %v2110 = vunpack.c.l.b16 %v486
    %v2111 = vunpack.c.h.b16 %v486
    %v2112 = vunpack.c.l.b16 %v487
    %v2113 = vunpack.c.h.b16 %v487
    %v2114 = vunpack.c.l.b16 %v488
    %v2115 = vunpack.c.h.b16 %v488
    %v2116 = vunpack.c.l.b16 %v489
    %v2117 = vunpack.c.h.b16 %v489
    %v2118 = vunpack.c.l.b16 %v490
    %v2119 = vunpack.c.h.b16 %v490
    %v2120 = vunpack.c.l.b16 %v491
    %v2121 = vunpack.c.h.b16 %v491
    %v2122 = vunpack.c.l.b16 %v492
    %v2123 = vunpack.c.h.b16 %v492
    %v2124 = vunpack.c.l.b16 %v493
    %v2125 = vunpack.c.h.b16 %v493
    %v2126 = vunpack.c.l.b16 %v494
    %v2127 = vunpack.c.h.b16 %v494
    %v2128 = vunpack.c.l.b16 %v495
    %v2129 = vunpack.c.h.b16 %v495
    %v2130 = vunpack.c.l.b16 %v496
    %v2131 = vunpack.c.h.b16 %v496
    %v2132 = vunpack.c.l.b16 %v497
    %v2133 = vunpack.c.h.b16 %v497
    %v2134 = vunpack.c.l.b16 %v498
    %v2135 = vunpack.c.h.b16 %v498
    %v2136 = vunpack.c.l.b16 %v499
    %v2137 = vunpack.c.h.b16 %v499
    %v2138 = vunpack.c.l.b16 %v500
    %v2139 = vunpack.c.h.b16 %v500
    %v2140 = vunpack.c.l.b16 %v501
    %v2141 = vunpack.c.h.b16 %v501
    %v2142 = vunpack.c.l.b16 %v502
    %v2143 = vunpack.c.h.b16 %v502
    %v2144 = vunpack.c.l.b16 %v503
    %v2145 = vunpack.c.h.b16 %v503
    %v2146 = vunpack.c.l.b16 %v504
    %v2147 = vunpack.c.h.b16 %v504
    %v2148 = vunpack.c.l.b16 %v505
    %v2149 = vunpack.c.h.b16 %v505
    %v2150 = vunpack.c.l.b16 %v506
    %v2151 = vunpack.c.h.b16 %v506
    %v2152 = vunpack.c.l.b16 %v507
    %v2153 = vunpack.c.h.b16 %v507
    %v2154 = vunpack.c.l.b16 %v508
    %v2155 = vunpack.c.h.b16 %v508
    %v2156 = vunpack.c.l.b16 %v509
    %v2157 = vunpack.c.h.b16 %v509
    %v2158 = vunpack.c.l.b16 %v510
    %v2159 = vunpack.c.h.b16 %v510
    %v2160 = vunpack.c.l.b16 %v511
    %v2161 = vunpack.c.h.b16 %v511
    %v2162 = vunpack.c.l.b16 %v512
    %v2163 = vunpack.c.h.b16 %v512
    %v2164 = vunpack.c.l.b16 %v513
    %v2165 = vunpack.c.h.b16 %v513
    %v2166 = vunpack.c.l.b16 %v514
    %v2167 = vunpack.c.h.b16 %v514
    %v2168 = vunpack.c.l.b16 %v515
    %v2169 = vunpack.c.h.b16 %v515
    %v2170 = vunpack.c.l.b16 %v516
    %v2171 = vunpack.c.h.b16 %v516
    %v2172 = vunpack.c.l.b16 %v517
    %v2173 = vunpack.c.h.b16 %v517
    %v2174 = vunpack.c.l.b16 %v518
    %v2175 = vunpack.c.h.b16 %v518
    %v2176 = vunpack.c.l.b16 %v519
    %v2177 = vunpack.c.h.b16 %v519
    %v2178 = vunpack.c.l.b16 %v520
    %v2179 = vunpack.c.h.b16 %v520
    %v2180 = vunpack.c.l.b16 %v521
    %v2181 = vunpack.c.h.b16 %v521
    %v2182 = vunpack.c.l.b16 %v522
    %v2183 = vunpack.c.h.b16 %v522
    %v2184 = vunpack.c.l.b16 %v523
    %v2185 = vunpack.c.h.b16 %v523
    %v2186 = vunpack.c.l.b16 %v524
    %v2187 = vunpack.c.h.b16 %v524
    %v2188 = vunpack.c.l.b16 %v525
    %v2189 = vunpack.c.h.b16 %v525
    %v2190 = vunpack.c.l.b16 %v526
    %v2191 = vunpack.c.h.b16 %v526
    %v2192 = vunpack.c.l.b16 %v527
    %v2193 = vunpack.c.h.b16 %v527
    %v2194 = vunpack.c.l.b16 %v528
    %v2195 = vunpack.c.h.b16 %v528
    %v2196 = vunpack.c.l.b16 %v529
    %v2197 = vunpack.c.h.b16 %v529
    %v2198 = vunpack.c.l.b16 %v530
    %v2199 = vunpack.c.h.b16 %v530
    %v2200 = vunpack.c.l.b16 %v531
    %v2201 = vunpack.c.h.b16 %v531
    %v2202 = vunpack.c.l.b16 %v532
    %v2203 = vunpack.c.h.b16 %v532
    %v2204 = vunpack.c.l.b16 %v533
    %v2205 = vunpack.c.h.b16 %v533
    %v2206 = vunpack.c.l.b16 %v534
    %v2207 = vunpack.c.h.b16 %v534
    %v2208 = vunpack.c.l.b16 %v535
    %v2209 = vunpack.c.h.b16 %v535
    %v2210 = vpack.c.b16 %v1190, %v1186
    %v2211 = vpack.c.b16 %v1191, %v1187
    %v2212 = vpack.c.b16 %v1192, %v1188
    %v2213 = vpack.c.b16 %v1193, %v1189
    %v2214 = vpack.c.b16 %v1198, %v1194
    %v2215 = vpack.c.b16 %v1199, %v1195
    %v2216 = vpack.c.b16 %v1200, %v1196
    %v2217 = vpack.c.b16 %v1201, %v1197
    %v2218 = vpack.c.b16 %v1206, %v1202
    %v2219 = vpack.c.b16 %v1207, %v1203
    %v2220 = vpack.c.b16 %v1208, %v1204
    %v2221 = vpack.c.b16 %v1209, %v1205
    %v2222 = vpack.c.b16 %v1214, %v1210
    %v2223 = vpack.c.b16 %v1215, %v1211
    %v2224 = vpack.c.b16 %v1216, %v1212
    %v2225 = vpack.c.b16 %v1217, %v1213
    %v2226 = vpack.c.b16 %v1222, %v1218
    %v2227 = vpack.c.b16 %v1223, %v1219
    %v2228 = vpack.c.b16 %v1224, %v1220
    %v2229 = vpack.c.b16 %v1225, %v1221
    %v2230 = vpack.c.b16 %v1230, %v1226
    %v2231 = vpack.c.b16 %v1231, %v1227
    %v2232 = vpack.c.b16 %v1232, %v1228
    %v2233 = vpack.c.b16 %v1233, %v1229
    %v2234 = vpack.c.b16 %v1238, %v1234
    %v2235 = vpack.c.b16 %v1239, %v1235
    %v2236 = vpack.c.b16 %v1240, %v1236
    %v2237 = vpack.c.b16 %v1241, %v1237
    %v2238 = vpack.c.b16 %v1246, %v1242
    %v2239 = vpack.c.b16 %v1247, %v1243
    %v2240 = vpack.c.b16 %v1248, %v1244
    %v2241 = vpack.c.b16 %v1249, %v1245
    %v2242 = vpack.c.b16 %v1254, %v1250
    %v2243 = vpack.c.b16 %v1255, %v1251
    %v2244 = vpack.c.b16 %v1256, %v1252
    %v2245 = vpack.c.b16 %v1257, %v1253
    %v2246 = vpack.c.b16 %v1262, %v1258
    %v2247 = vpack.c.b16 %v1263, %v1259
    %v2248 = vpack.c.b16 %v1264, %v1260
    %v2249 = vpack.c.b16 %v1265, %v1261
    %v2250 = vpack.c.b16 %v1270, %v1266
    %v2251 = vpack.c.b16 %v1271, %v1267
    %v2252 = vpack.c.b16 %v1272, %v1268
    %v2253 = vpack.c.b16 %v1273, %v1269
    %v2254 = vpack.c.b16 %v1278, %v1274
    %v2255 = vpack.c.b16 %v1279, %v1275
    %v2256 = vpack.c.b16 %v1280, %v1276
    %v2257 = vpack.c.b16 %v1281, %v1277
    %v2258 = vpack.c.b16 %v1286, %v1282
    %v2259 = vpack.c.b16 %v1287, %v1283
    %v2260 = vpack.c.b16 %v1288, %v1284
    %v2261 = vpack.c.b16 %v1289, %v1285
    %v2262 = vpack.c.b16 %v1294, %v1290
    %v2263 = vpack.c.b16 %v1295, %v1291
    %v2264 = vpack.c.b16 %v1296, %v1292
    %v2265 = vpack.c.b16 %v1297, %v1293
    %v2266 = vpack.c.b16 %v1302, %v1298
    %v2267 = vpack.c.b16 %v1303, %v1299
    %v2268 = vpack.c.b16 %v1304, %v1300
    %v2269 = vpack.c.b16 %v1305, %v1301
    %v2270 = vpack.c.b16 %v1310, %v1306
    %v2271 = vpack.c.b16 %v1311, %v1307
    %v2272 = vpack.c.b16 %v1312, %v1308
    %v2273 = vpack.c.b16 %v1313, %v1309
    %v2274 = vpack.c.b16 %v1318, %v1314
    %v2275 = vpack.c.b16 %v1319, %v1315
    %v2276 = vpack.c.b16 %v1320, %v1316
    %v2277 = vpack.c.b16 %v1321, %v1317
    %v2278 = vpack.c.b16 %v1326, %v1322
    %v2279 = vpack.c.b16 %v1327, %v1323
    %v2280 = vpack.c.b16 %v1328, %v1324
    %v2281 = vpack.c.b16 %v1329, %v1325
    %v2282 = vpack.c.b16 %v1334, %v1330
    %v2283 = vpack.c.b16 %v1335, %v1331
    %v2284 = vpack.c.b16 %v1336, %v1332
    %v2285 = vpack.c.b16 %v1337, %v1333
    %v2286 = vpack.c.b16 %v1342, %v1338
    %v2287 = vpack.c.b16 %v1343, %v1339
    %v2288 = vpack.c.b16 %v1344, %v1340
    %v2289 = vpack.c.b16 %v1345, %v1341
    %v2290 = vpack.c.b16 %v1350, %v1346
    %v2291 = vpack.c.b16 %v1351, %v1347
    %v2292 = vpack.c.b16 %v1352, %v1348
    %v2293 = vpack.c.b16 %v1353, %v1349
    %v2294 = vpack.c.b16 %v1358, %v1354
    %v2295 = vpack.c.b16 %v1359, %v1355
    %v2296 = vpack.c.b16 %v1360, %v1356
    %v2297 = vpack.c.b16 %v1361, %v1357
    %v2298 = vpack.c.b16 %v1366, %v1362
    %v2299 = vpack.c.b16 %v1367, %v1363
    %v2300 = vpack.c.b16 %v1368, %v1364
    %v2301 = vpack.c.b16 %v1369, %v1365
    %v2302 = vpack.c.b16 %v1374, %v1370
    %v2303 = vpack.c.b16 %v1375, %v1371
    %v2304 = vpack.c.b16 %v1376, %v1372
    %v2305 = vpack.c.b16 %v1377, %v1373
    %v2306 = vpack.c.b16 %v1382, %v1378
    %v2307 = vpack.c.b16 %v1383, %v1379
    %v2308 = vpack.c.b16 %v1384, %v1380
    %v2309 = vpack.c.b16 %v1385, %v1381
    %v2310 = vpack.c.b16 %v1390, %v1386
    %v2311 = vpack.c.b16 %v1391, %v1387
    %v2312 = vpack.c.b16 %v1392, %v1388
    %v2313 = vpack.c.b16 %v1393, %v1389
    %v2314 = vpack.c.b16 %v1398, %v1394
    %v2315 = vpack.c.b16 %v1399, %v1395
    %v2316 = vpack.c.b16 %v1400, %v1396
    %v2317 = vpack.c.b16 %v1401, %v1397
    %v2318 = vpack.c.b16 %v1406, %v1402
    %v2319 = vpack.c.b16 %v1407, %v1403
    %v2320 = vpack.c.b16 %v1408, %v1404
    %v2321 = vpack.c.b16 %v1409, %v1405
    %v2322 = vpack.c.b16 %v1414, %v1410
    %v2323 = vpack.c.b16 %v1415, %v1411
    %v2324 = vpack.c.b16 %v1416, %v1412
    %v2325 = vpack.c.b16 %v1417, %v1413
    %v2326 = vpack.c.b16 %v1422, %v1418
    %v2327 = vpack.c.b16 %v1423, %v1419
    %v2328 = vpack.c.b16 %v1424, %v1420
    %v2329 = vpack.c.b16 %v1425, %v1421
    %v2330 = vpack.c.b16 %v1430, %v1426
    %v2331 = vpack.c.b16 %v1431, %v1427
    %v2332 = vpack.c.b16 %v1432, %v1428
    %v2333 = vpack.c.b16 %v1433, %v1429
    %v2334 = vpack.c.b16 %v1438, %v1434
    %v2335 = vpack.c.b16 %v1439, %v1435
    %v2336 = vpack.c.b16 %v1440, %v1436
    %v2337 = vpack.c.b16 %v1441, %v1437
    %v2338 = vpack.c.b16 %v1446, %v1442
    %v2339 = vpack.c.b16 %v1447, %v1443
    %v2340 = vpack.c.b16 %v1448, %v1444
    %v2341 = vpack.c.b16 %v1449, %v1445
    %v2342 = vpack.c.b16 %v1454, %v1450
    %v2343 = vpack.c.b16 %v1455, %v1451
    %v2344 = vpack.c.b16 %v1456, %v1452
    %v2345 = vpack.c.b16 %v1457, %v1453
    %v2346 = vpack.c.b16 %v1462, %v1458
    %v2347 = vpack.c.b16 %v1463, %v1459
    %v2348 = vpack.c.b16 %v1464, %v1460
    %v2349 = vpack.c.b16 %v1465, %v1461
    %v2350 = vpack.c.b16 %v1470, %v1466
    %v2351 = vpack.c.b16 %v1471, %v1467
    %v2352 = vpack.c.b16 %v1472, %v1468
    %v2353 = vpack.c.b16 %v1473, %v1469
    %v2354 = vpack.c.b16 %v1478, %v1474
    %v2355 = vpack.c.b16 %v1479, %v1475
    %v2356 = vpack.c.b16 %v1480, %v1476
    %v2357 = vpack.c.b16 %v1481, %v1477
    %v2358 = vpack.c.b16 %v1486, %v1482
    %v2359 = vpack.c.b16 %v1487, %v1483
    %v2360 = vpack.c.b16 %v1488, %v1484
    %v2361 = vpack.c.b16 %v1489, %v1485
    %v2362 = vpack.c.b16 %v1494, %v1490
    %v2363 = vpack.c.b16 %v1495, %v1491
    %v2364 = vpack.c.b16 %v1496, %v1492
    %v2365 = vpack.c.b16 %v1497, %v1493
    %v2366 = vpack.c.b16 %v1502, %v1498
    %v2367 = vpack.c.b16 %v1503, %v1499
    %v2368 = vpack.c.b16 %v1504, %v1500
    %v2369 = vpack.c.b16 %v1505, %v1501
    %v2370 = vpack.c.b16 %v1510, %v1506
    %v2371 = vpack.c.b16 %v1511, %v1507
    %v2372 = vpack.c.b16 %v1512, %v1508
    %v2373 = vpack.c.b16 %v1513, %v1509
    %v2374 = vpack.c.b16 %v1518, %v1514
    %v2375 = vpack.c.b16 %v1519, %v1515
    %v2376 = vpack.c.b16 %v1520, %v1516
    %v2377 = vpack.c.b16 %v1521, %v1517
    %v2378 = vpack.c.b16 %v1526, %v1522
    %v2379 = vpack.c.b16 %v1527, %v1523
    %v2380 = vpack.c.b16 %v1528, %v1524
    %v2381 = vpack.c.b16 %v1529, %v1525
    %v2382 = vpack.c.b16 %v1534, %v1530
    %v2383 = vpack.c.b16 %v1535, %v1531
    %v2384 = vpack.c.b16 %v1536, %v1532
    %v2385 = vpack.c.b16 %v1537, %v1533
    %v2386 = vpack.c.b16 %v1542, %v1538
    %v2387 = vpack.c.b16 %v1543, %v1539
    %v2388 = vpack.c.b16 %v1544, %v1540
    %v2389 = vpack.c.b16 %v1545, %v1541
    %v2390 = vpack.c.b16 %v1550, %v1546
    %v2391 = vpack.c.b16 %v1551, %v1547
    %v2392 = vpack.c.b16 %v1552, %v1548
    %v2393 = vpack.c.b16 %v1553, %v1549
    %v2394 = vpack.c.b16 %v1558, %v1554
    %v2395 = vpack.c.b16 %v1559, %v1555
    %v2396 = vpack.c.b16 %v1560, %v1556
    %v2397 = vpack.c.b16 %v1561, %v1557
    %v2398 = vpack.c.b16 %v1566, %v1562
    %v2399 = vpack.c.b16 %v1567, %v1563
    %v2400 = vpack.c.b16 %v1568, %v1564
    %v2401 = vpack.c.b16 %v1569, %v1565
    %v2402 = vpack.c.b16 %v1574, %v1570
    %v2403 = vpack.c.b16 %v1575, %v1571
    %v2404 = vpack.c.b16 %v1576, %v1572
    %v2405 = vpack.c.b16 %v1577, %v1573
    %v2406 = vpack.c.b16 %v1582, %v1578
    %v2407 = vpack.c.b16 %v1583, %v1579
    %v2408 = vpack.c.b16 %v1584, %v1580
    %v2409 = vpack.c.b16 %v1585, %v1581
    %v2410 = vpack.c.b16 %v1590, %v1586
    %v2411 = vpack.c.b16 %v1591, %v1587
    %v2412 = vpack.c.b16 %v1592, %v1588
    %v2413 = vpack.c.b16 %v1593, %v1589
    %v2414 = vpack.c.b16 %v1598, %v1594
    %v2415 = vpack.c.b16 %v1599, %v1595
    %v2416 = vpack.c.b16 %v1600, %v1596
    %v2417 = vpack.c.b16 %v1601, %v1597
    %v2418 = vpack.c.b16 %v1606, %v1602
    %v2419 = vpack.c.b16 %v1607, %v1603
    %v2420 = vpack.c.b16 %v1608, %v1604
    %v2421 = vpack.c.b16 %v1609, %v1605
    %v2422 = vpack.c.b16 %v1614, %v1610
    %v2423 = vpack.c.b16 %v1615, %v1611
    %v2424 = vpack.c.b16 %v1616, %v1612
    %v2425 = vpack.c.b16 %v1617, %v1613
    %v2426 = vpack.c.b16 %v1622, %v1618
    %v2427 = vpack.c.b16 %v1623, %v1619
    %v2428 = vpack.c.b16 %v1624, %v1620
    %v2429 = vpack.c.b16 %v1625, %v1621
    %v2430 = vpack.c.b16 %v1630, %v1626
    %v2431 = vpack.c.b16 %v1631, %v1627
    %v2432 = vpack.c.b16 %v1632, %v1628
    %v2433 = vpack.c.b16 %v1633, %v1629
    %v2434 = vpack.c.b16 %v1638, %v1634
    %v2435 = vpack.c.b16 %v1639, %v1635
    %v2436 = vpack.c.b16 %v1640, %v1636
    %v2437 = vpack.c.b16 %v1641, %v1637
    %v2438 = vpack.c.b16 %v1646, %v1642
    %v2439 = vpack.c.b16 %v1647, %v1643
    %v2440 = vpack.c.b16 %v1648, %v1644
    %v2441 = vpack.c.b16 %v1649, %v1645
    %v2442 = vpack.c.b16 %v1654, %v1650
    %v2443 = vpack.c.b16 %v1655, %v1651
    %v2444 = vpack.c.b16 %v1656, %v1652
    %v2445 = vpack.c.b16 %v1657, %v1653
    %v2446 = vpack.c.b16 %v1662, %v1658
    %v2447 = vpack.c.b16 %v1663, %v1659
    %v2448 = vpack.c.b16 %v1664, %v1660
    %v2449 = vpack.c.b16 %v1665, %v1661
    %v2450 = vpack.c.b16 %v1670, %v1666
    %v2451 = vpack.c.b16 %v1671, %v1667
    %v2452 = vpack.c.b16 %v1672, %v1668
    %v2453 = vpack.c.b16 %v1673, %v1669
    %v2454 = vpack.c.b16 %v1678, %v1674
    %v2455 = vpack.c.b16 %v1679, %v1675
    %v2456 = vpack.c.b16 %v1680, %v1676
    %v2457 = vpack.c.b16 %v1681, %v1677
    %v2458 = vpack.c.b16 %v1686, %v1682
    %v2459 = vpack.c.b16 %v1687, %v1683
    %v2460 = vpack.c.b16 %v1688, %v1684
    %v2461 = vpack.c.b16 %v1689, %v1685
    %v2462 = vpack.c.b16 %v1694, %v1690
    %v2463 = vpack.c.b16 %v1695, %v1691
    %v2464 = vpack.c.b16 %v1696, %v1692
    %v2465 = vpack.c.b16 %v1697, %v1693
    %v2466 = vpack.c.b16 %v1702, %v1698
    %v2467 = vpack.c.b16 %v1703, %v1699
    %v2468 = vpack.c.b16 %v1704, %v1700
    %v2469 = vpack.c.b16 %v1705, %v1701
    %v2470 = vpack.c.b16 %v1710, %v1706
    %v2471 = vpack.c.b16 %v1711, %v1707
    %v2472 = vpack.c.b16 %v1712, %v1708
    %v2473 = vpack.c.b16 %v1713, %v1709
    %v2474 = vpack.c.b16 %v1718, %v1714
    %v2475 = vpack.c.b16 %v1719, %v1715
    %v2476 = vpack.c.b16 %v1720, %v1716
    %v2477 = vpack.c.b16 %v1721, %v1717
    %v2478 = vpack.c.b16 %v1726, %v1722
    %v2479 = vpack.c.b16 %v1727, %v1723
    %v2480 = vpack.c.b16 %v1728, %v1724
    %v2481 = vpack.c.b16 %v1729, %v1725
    %v2482 = vpack.c.b16 %v1734, %v1730
    %v2483 = vpack.c.b16 %v1735, %v1731
    %v2484 = vpack.c.b16 %v1736, %v1732
    %v2485 = vpack.c.b16 %v1737, %v1733
    %v2486 = vpack.c.b16 %v1742, %v1738
    %v2487 = vpack.c.b16 %v1743, %v1739
    %v2488 = vpack.c.b16 %v1744, %v1740
    %v2489 = vpack.c.b16 %v1745, %v1741
    %v2490 = vpack.c.b16 %v1750, %v1746
    %v2491 = vpack.c.b16 %v1751, %v1747
    %v2492 = vpack.c.b16 %v1752, %v1748
    %v2493 = vpack.c.b16 %v1753, %v1749
    %v2494 = vpack.c.b16 %v1758, %v1754
    %v2495 = vpack.c.b16 %v1759, %v1755
    %v2496 = vpack.c.b16 %v1760, %v1756
    %v2497 = vpack.c.b16 %v1761, %v1757
    %v2498 = vpack.c.b16 %v1766, %v1762
    %v2499 = vpack.c.b16 %v1767, %v1763
    %v2500 = vpack.c.b16 %v1768, %v1764
    %v2501 = vpack.c.b16 %v1769, %v1765
    %v2502 = vpack.c.b16 %v1774, %v1770
    %v2503 = vpack.c.b16 %v1775, %v1771
    %v2504 = vpack.c.b16 %v1776, %v1772
    %v2505 = vpack.c.b16 %v1777, %v1773
    %v2506 = vpack.c.b16 %v1782, %v1778
    %v2507 = vpack.c.b16 %v1783, %v1779
    %v2508 = vpack.c.b16 %v1784, %v1780
    %v2509 = vpack.c.b16 %v1785, %v1781
    %v2510 = vpack.c.b16 %v1790, %v1786
    %v2511 = vpack.c.b16 %v1791, %v1787
    %v2512 = vpack.c.b16 %v1792, %v1788
    %v2513 = vpack.c.b16 %v1793, %v1789
    %v2514 = vpack.c.b16 %v1798, %v1794
    %v2515 = vpack.c.b16 %v1799, %v1795
    %v2516 = vpack.c.b16 %v1800, %v1796
    %v2517 = vpack.c.b16 %v1801, %v1797
    %v2518 = vpack.c.b16 %v1806, %v1802
    %v2519 = vpack.c.b16 %v1807, %v1803
    %v2520 = vpack.c.b16 %v1808, %v1804
    %v2521 = vpack.c.b16 %v1809, %v1805
    %v2522 = vpack.c.b16 %v1814, %v1810
    %v2523 = vpack.c.b16 %v1815, %v1811
    %v2524 = vpack.c.b16 %v1816, %v1812
    %v2525 = vpack.c.b16 %v1817, %v1813
    %v2526 = vpack.c.b16 %v1822, %v1818
    %v2527 = vpack.c.b16 %v1823, %v1819
    %v2528 = vpack.c.b16 %v1824, %v1820
    %v2529 = vpack.c.b16 %v1825, %v1821
    %v2530 = vpack.c.b16 %v1830, %v1826
    %v2531 = vpack.c.b16 %v1831, %v1827
    %v2532 = vpack.c.b16 %v1832, %v1828
    %v2533 = vpack.c.b16 %v1833, %v1829
    %v2534 = vpack.c.b16 %v1838, %v1834
    %v2535 = vpack.c.b16 %v1839, %v1835
    %v2536 = vpack.c.b16 %v1840, %v1836
    %v2537 = vpack.c.b16 %v1841, %v1837
    %v2538 = vpack.c.b16 %v1846, %v1842
    %v2539 = vpack.c.b16 %v1847, %v1843
    %v2540 = vpack.c.b16 %v1848, %v1844
    %v2541 = vpack.c.b16 %v1849, %v1845
    %v2542 = vpack.c.b16 %v1854, %v1850
    %v2543 = vpack.c.b16 %v1855, %v1851
    %v2544 = vpack.c.b16 %v1856, %v1852
    %v2545 = vpack.c.b16 %v1857, %v1853
    %v2546 = vpack.c.b16 %v1862, %v1858
    %v2547 = vpack.c.b16 %v1863, %v1859
    %v2548 = vpack.c.b16 %v1864, %v1860
    %v2549 = vpack.c.b16 %v1865, %v1861
    %v2550 = vpack.c.b16 %v1870, %v1866
    %v2551 = vpack.c.b16 %v1871, %v1867
    %v2552 = vpack.c.b16 %v1872, %v1868
    %v2553 = vpack.c.b16 %v1873, %v1869
    %v2554 = vpack.c.b16 %v1878, %v1874
    %v2555 = vpack.c.b16 %v1879, %v1875
    %v2556 = vpack.c.b16 %v1880, %v1876
    %v2557 = vpack.c.b16 %v1881, %v1877
    %v2558 = vpack.c.b16 %v1886, %v1882
    %v2559 = vpack.c.b16 %v1887, %v1883
    %v2560 = vpack.c.b16 %v1888, %v1884
    %v2561 = vpack.c.b16 %v1889, %v1885
    %v2562 = vpack.c.b16 %v1894, %v1890
    %v2563 = vpack.c.b16 %v1895, %v1891
    %v2564 = vpack.c.b16 %v1896, %v1892
    %v2565 = vpack.c.b16 %v1897, %v1893
    %v2566 = vpack.c.b16 %v1902, %v1898
    %v2567 = vpack.c.b16 %v1903, %v1899
    %v2568 = vpack.c.b16 %v1904, %v1900
    %v2569 = vpack.c.b16 %v1905, %v1901
    %v2570 = vpack.c.b16 %v1910, %v1906
    %v2571 = vpack.c.b16 %v1911, %v1907
    %v2572 = vpack.c.b16 %v1912, %v1908
    %v2573 = vpack.c.b16 %v1913, %v1909
    %v2574 = vpack.c.b16 %v1918, %v1914
    %v2575 = vpack.c.b16 %v1919, %v1915
    %v2576 = vpack.c.b16 %v1920, %v1916
    %v2577 = vpack.c.b16 %v1921, %v1917
    %v2578 = vpack.c.b16 %v1926, %v1922
    %v2579 = vpack.c.b16 %v1927, %v1923
    %v2580 = vpack.c.b16 %v1928, %v1924
    %v2581 = vpack.c.b16 %v1929, %v1925
    %v2582 = vpack.c.b16 %v1934, %v1930
    %v2583 = vpack.c.b16 %v1935, %v1931
    %v2584 = vpack.c.b16 %v1936, %v1932
    %v2585 = vpack.c.b16 %v1937, %v1933
    %v2586 = vpack.c.b16 %v1942, %v1938
    %v2587 = vpack.c.b16 %v1943, %v1939
    %v2588 = vpack.c.b16 %v1944, %v1940
    %v2589 = vpack.c.b16 %v1945, %v1941
    %v2590 = vpack.c.b16 %v1950, %v1946
    %v2591 = vpack.c.b16 %v1951, %v1947
    %v2592 = vpack.c.b16 %v1952, %v1948
    %v2593 = vpack.c.b16 %v1953, %v1949
    %v2594 = vpack.c.b16 %v1958, %v1954
    %v2595 = vpack.c.b16 %v1959, %v1955
    %v2596 = vpack.c.b16 %v1960, %v1956
    %v2597 = vpack.c.b16 %v1961, %v1957
    %v2598 = vpack.c.b16 %v1966, %v1962
    %v2599 = vpack.c.b16 %v1967, %v1963
    %v2600 = vpack.c.b16 %v1968, %v1964
    %v2601 = vpack.c.b16 %v1969, %v1965
    %v2602 = vpack.c.b16 %v1974, %v1970
    %v2603 = vpack.c.b16 %v1975, %v1971
    %v2604 = vpack.c.b16 %v1976, %v1972
    %v2605 = vpack.c.b16 %v1977, %v1973
    %v2606 = vpack.c.b16 %v1982, %v1978
    %v2607 = vpack.c.b16 %v1983, %v1979
    %v2608 = vpack.c.b16 %v1984, %v1980
    %v2609 = vpack.c.b16 %v1985, %v1981
    %v2610 = vpack.c.b16 %v1990, %v1986
    %v2611 = vpack.c.b16 %v1991, %v1987
    %v2612 = vpack.c.b16 %v1992, %v1988
    %v2613 = vpack.c.b16 %v1993, %v1989
    %v2614 = vpack.c.b16 %v1998, %v1994
    %v2615 = vpack.c.b16 %v1999, %v1995
    %v2616 = vpack.c.b16 %v2000, %v1996
    %v2617 = vpack.c.b16 %v2001, %v1997
    %v2618 = vpack.c.b16 %v2006, %v2002
    %v2619 = vpack.c.b16 %v2007, %v2003
    %v2620 = vpack.c.b16 %v2008, %v2004
    %v2621 = vpack.c.b16 %v2009, %v2005
    %v2622 = vpack.c.b16 %v2014, %v2010
    %v2623 = vpack.c.b16 %v2015, %v2011
    %v2624 = vpack.c.b16 %v2016, %v2012
    %v2625 = vpack.c.b16 %v2017, %v2013
    %v2626 = vpack.c.b16 %v2022, %v2018
    %v2627 = vpack.c.b16 %v2023, %v2019
    %v2628 = vpack.c.b16 %v2024, %v2020
    %v2629 = vpack.c.b16 %v2025, %v2021
    %v2630 = vpack.c.b16 %v2030, %v2026
    %v2631 = vpack.c.b16 %v2031, %v2027
    %v2632 = vpack.c.b16 %v2032, %v2028
    %v2633 = vpack.c.b16 %v2033, %v2029
    %v2634 = vpack.c.b16 %v2038, %v2034
    %v2635 = vpack.c.b16 %v2039, %v2035
    %v2636 = vpack.c.b16 %v2040, %v2036
    %v2637 = vpack.c.b16 %v2041, %v2037
    %v2638 = vpack.c.b16 %v2046, %v2042
    %v2639 = vpack.c.b16 %v2047, %v2043
    %v2640 = vpack.c.b16 %v2048, %v2044
    %v2641 = vpack.c.b16 %v2049, %v2045
    %v2642 = vpack.c.b16 %v2054, %v2050
    %v2643 = vpack.c.b16 %v2055, %v2051
    %v2644 = vpack.c.b16 %v2056, %v2052
    %v2645 = vpack.c.b16 %v2057, %v2053
    %v2646 = vpack.c.b16 %v2062, %v2058
    %v2647 = vpack.c.b16 %v2063, %v2059
    %v2648 = vpack.c.b16 %v2064, %v2060
    %v2649 = vpack.c.b16 %v2065, %v2061
    %v2650 = vpack.c.b16 %v2070, %v2066
    %v2651 = vpack.c.b16 %v2071, %v2067
    %v2652 = vpack.c.b16 %v2072, %v2068
    %v2653 = vpack.c.b16 %v2073, %v2069
    %v2654 = vpack.c.b16 %v2078, %v2074
    %v2655 = vpack.c.b16 %v2079, %v2075
    %v2656 = vpack.c.b16 %v2080, %v2076
    %v2657 = vpack.c.b16 %v2081, %v2077
    %v2658 = vpack.c.b16 %v2086, %v2082
    %v2659 = vpack.c.b16 %v2087, %v2083
    %v2660 = vpack.c.b16 %v2088, %v2084
    %v2661 = vpack.c.b16 %v2089, %v2085
    %v2662 = vpack.c.b16 %v2094, %v2090
    %v2663 = vpack.c.b16 %v2095, %v2091
    %v2664 = vpack.c.b16 %v2096, %v2092
    %v2665 = vpack.c.b16 %v2097, %v2093
    %v2666 = vpack.c.b16 %v2102, %v2098
    %v2667 = vpack.c.b16 %v2103, %v2099
    %v2668 = vpack.c.b16 %v2104, %v2100
    %v2669 = vpack.c.b16 %v2105, %v2101
    %v2670 = vpack.c.b16 %v2110, %v2106
    %v2671 = vpack.c.b16 %v2111, %v2107
    %v2672 = vpack.c.b16 %v2112, %v2108
    %v2673 = vpack.c.b16 %v2113, %v2109
    %v2674 = vpack.c.b16 %v2118, %v2114
    %v2675 = vpack.c.b16 %v2119, %v2115
    %v2676 = vpack.c.b16 %v2120, %v2116
    %v2677 = vpack.c.b16 %v2121, %v2117
    %v2678 = vpack.c.b16 %v2126, %v2122
    %v2679 = vpack.c.b16 %v2127, %v2123
    %v2680 = vpack.c.b16 %v2128, %v2124
    %v2681 = vpack.c.b16 %v2129, %v2125
    %v2682 = vpack.c.b16 %v2134, %v2130
    %v2683 = vpack.c.b16 %v2135, %v2131
    %v2684 = vpack.c.b16 %v2136, %v2132
    %v2685 = vpack.c.b16 %v2137, %v2133
    %v2686 = vpack.c.b16 %v2142, %v2138
    %v2687 = vpack.c.b16 %v2143, %v2139
    %v2688 = vpack.c.b16 %v2144, %v2140
    %v2689 = vpack.c.b16 %v2145, %v2141
    %v2690 = vpack.c.b16 %v2150, %v2146
    %v2691 = vpack.c.b16 %v2151, %v2147
    %v2692 = vpack.c.b16 %v2152, %v2148
    %v2693 = vpack.c.b16 %v2153, %v2149
    %v2694 = vpack.c.b16 %v2158, %v2154
    %v2695 = vpack.c.b16 %v2159, %v2155
    %v2696 = vpack.c.b16 %v2160, %v2156
    %v2697 = vpack.c.b16 %v2161, %v2157
    %v2698 = vpack.c.b16 %v2166, %v2162
    %v2699 = vpack.c.b16 %v2167, %v2163
    %v2700 = vpack.c.b16 %v2168, %v2164
    %v2701 = vpack.c.b16 %v2169, %v2165
    %v2702 = vpack.c.b16 %v2174, %v2170
    %v2703 = vpack.c.b16 %v2175, %v2171
    %v2704 = vpack.c.b16 %v2176, %v2172
    %v2705 = vpack.c.b16 %v2177, %v2173
    %v2706 = vpack.c.b16 %v2182, %v2178
    %v2707 = vpack.c.b16 %v2183, %v2179
    %v2708 = vpack.c.b16 %v2184, %v2180
    %v2709 = vpack.c.b16 %v2185, %v2181
    %v2710 = vpack.c.b16 %v2190, %v2186
    %v2711 = vpack.c.b16 %v2191, %v2187
    %v2712 = vpack.c.b16 %v2192, %v2188
    %v2713 = vpack.c.b16 %v2193, %v2189
    %v2714 = vpack.c.b16 %v2198, %v2194
    %v2715 = vpack.c.b16 %v2199, %v2195
    %v2716 = vpack.c.b16 %v2200, %v2196
    %v2717 = vpack.c.b16 %v2201, %v2197
    %v2718 = vpack.c.b16 %v2206, %v2202
    %v2719 = vpack.c.b16 %v2207, %v2203
    %v2720 = vpack.c.b16 %v2208, %v2204
    %v2721 = vpack.c.b16 %v2209, %v2205
    %3234 = vmatprep.subr.bf16.mxu0 %v2211
    %3235 = vmatpush1.bf16.msra.mxu0 %v2210
    %3236 = vmatprep.subr.bf16.mxu0 %v2215
    %3237 = vmatpush1.bf16.msra.mxu0 %v2214
    %3238 = vmatprep.subr.bf16.mxu0 %v2219
    %3239 = vmatpush1.bf16.msra.mxu0 %v2218
    %3240 = vmatprep.subr.bf16.mxu0 %v2223
    %3241 = vmatpush1.bf16.msra.mxu0 %v2222
    %3242 = vmatprep.subr.bf16.mxu0 %v2227
    %3243 = vmatpush1.bf16.msra.mxu0 %v2226
    %3244 = vmatprep.subr.bf16.mxu0 %v2231
    %3245 = vmatpush1.bf16.msra.mxu0 %v2230
    %3246 = vmatprep.subr.bf16.mxu0 %v2235
    %3247 = vmatpush1.bf16.msra.mxu0 %v2234
    %3248 = vmatprep.subr.bf16.mxu0 %v2239
    %3249 = vmatpush1.bf16.msra.mxu0 %v2238
    %3250 = vmatprep.subr.bf16.mxu0 %v2243
    %3251 = vmatpush1.bf16.msra.mxu0 %v2242
    %3252 = vmatprep.subr.bf16.mxu0 %v2247
    %3253 = vmatpush1.bf16.msra.mxu0 %v2246
    %3254 = vmatprep.subr.bf16.mxu0 %v2251
    %3255 = vmatpush1.bf16.msra.mxu0 %v2250
    %3256 = vmatprep.subr.bf16.mxu0 %v2255
    %3257 = vmatpush1.bf16.msra.mxu0 %v2254
    %3258 = vmatprep.subr.bf16.mxu0 %v2259
    %3259 = vmatpush1.bf16.msra.mxu0 %v2258
    %3260 = vmatprep.subr.bf16.mxu0 %v2263
    %3261 = vmatpush1.bf16.msra.mxu0 %v2262
    %3262 = vmatprep.subr.bf16.mxu0 %v2267
    %3263 = vmatpush1.bf16.msra.mxu0 %v2266
    %3264 = vmatprep.subr.bf16.mxu0 %v2271
    %3265 = vmatpush1.bf16.msra.mxu0 %v2270
    %3266 = vmatprep.mubr.bf16.mxu0 %v597
    %3267 = vmatmul.mubr.bf16.gmra.mrb[0].mxu0 %v583
    %v3268 = vpop.f32.mrb[0].mxu0
    %v3269 = vadd.f32 %v541, %v3268
    %v3270 = vpop.f32.mrb[0].mxu0
    %v3271 = vadd.f32 %v545, %v3270
    %v3272 = vpop.f32.mrb[0].mxu0
    %v3273 = vpop.f32.mrb[0].mxu0
    %3274 = vdwg.mxu0
    %3275 = vmatprep.subr.bf16.mxu0 %v2275
    %3276 = vmatpush1.bf16.msra.mxu0 %v2274
    %3277 = vmatprep.subr.bf16.mxu0 %v2279
    %3278 = vmatpush1.bf16.msra.mxu0 %v2278
    %3279 = vmatprep.subr.bf16.mxu0 %v2283
    %3280 = vmatpush1.bf16.msra.mxu0 %v2282
    %3281 = vmatprep.subr.bf16.mxu0 %v2287
    %3282 = vmatpush1.bf16.msra.mxu0 %v2286
    %3283 = vmatprep.subr.bf16.mxu0 %v2291
    %3284 = vmatpush1.bf16.msra.mxu0 %v2290
    %3285 = vmatprep.subr.bf16.mxu0 %v2295
    %3286 = vmatpush1.bf16.msra.mxu0 %v2294
    %3287 = vmatprep.subr.bf16.mxu0 %v2299
    %3288 = vmatpush1.bf16.msra.mxu0 %v2298
    %3289 = vmatprep.subr.bf16.mxu0 %v2303
    %3290 = vmatpush1.bf16.msra.mxu0 %v2302
    %3291 = vmatprep.subr.bf16.mxu0 %v2307
    %3292 = vmatpush1.bf16.msra.mxu0 %v2306
    %3293 = vmatprep.subr.bf16.mxu0 %v2311
    %3294 = vmatpush1.bf16.msra.mxu0 %v2310
    %3295 = vmatprep.subr.bf16.mxu0 %v2315
    %3296 = vmatpush1.bf16.msra.mxu0 %v2314
    %3297 = vmatprep.subr.bf16.mxu0 %v2319
    %3298 = vmatpush1.bf16.msra.mxu0 %v2318
    %3299 = vmatprep.subr.bf16.mxu0 %v2323
    %3300 = vmatpush1.bf16.msra.mxu0 %v2322
    %3301 = vmatprep.subr.bf16.mxu0 %v2327
    %3302 = vmatpush1.bf16.msra.mxu0 %v2326
    %3303 = vmatprep.subr.bf16.mxu0 %v2331
    %3304 = vmatpush1.bf16.msra.mxu0 %v2330
    %3305 = vmatprep.subr.bf16.mxu0 %v2335
    %3306 = vmatpush1.bf16.msra.mxu0 %v2334
    %3307 = vmatprep.mubr.bf16.mxu0 %v607
    %3308 = vmatmul.mubr.bf16.gmra.mrb[0].mxu0 %v605
    %v3309 = vpop.f32.mrb[0].mxu0
    %v3310 = vadd.f32 %v3269, %v3309
    %v3311 = vpop.f32.mrb[0].mxu0
    %v3312 = vadd.f32 %v3271, %v3311
    %v3313 = vpop.f32.mrb[0].mxu0
    %v3314 = vpop.f32.mrb[0].mxu0
    %3315 = vdwg.mxu0
    %3316 = vmatprep.subr.bf16.mxu0 %v2339
    %3317 = vmatpush1.bf16.msra.mxu0 %v2338
    %3318 = vmatprep.subr.bf16.mxu0 %v2343
    %3319 = vmatpush1.bf16.msra.mxu0 %v2342
    %3320 = vmatprep.subr.bf16.mxu0 %v2347
    %3321 = vmatpush1.bf16.msra.mxu0 %v2346
    %3322 = vmatprep.subr.bf16.mxu0 %v2351
    %3323 = vmatpush1.bf16.msra.mxu0 %v2350
    %3324 = vmatprep.subr.bf16.mxu0 %v2355
    %3325 = vmatpush1.bf16.msra.mxu0 %v2354
    %3326 = vmatprep.subr.bf16.mxu0 %v2359
    %3327 = vmatpush1.bf16.msra.mxu0 %v2358
    %3328 = vmatprep.subr.bf16.mxu0 %v2363
    %3329 = vmatpush1.bf16.msra.mxu0 %v2362
    %3330 = vmatprep.subr.bf16.mxu0 %v2367
    %3331 = vmatpush1.bf16.msra.mxu0 %v2366
    %3332 = vmatprep.subr.bf16.mxu0 %v2371
    %3333 = vmatpush1.bf16.msra.mxu0 %v2370
    %3334 = vmatprep.subr.bf16.mxu0 %v2375
    %3335 = vmatpush1.bf16.msra.mxu0 %v2374
    %3336 = vmatprep.subr.bf16.mxu0 %v2379
    %3337 = vmatpush1.bf16.msra.mxu0 %v2378
    %3338 = vmatprep.subr.bf16.mxu0 %v2383
    %3339 = vmatpush1.bf16.msra.mxu0 %v2382
    %3340 = vmatprep.subr.bf16.mxu0 %v2387
    %3341 = vmatpush1.bf16.msra.mxu0 %v2386
    %3342 = vmatprep.subr.bf16.mxu0 %v2391
    %3343 = vmatpush1.bf16.msra.mxu0 %v2390
    %3344 = vmatprep.subr.bf16.mxu0 %v2395
    %3345 = vmatpush1.bf16.msra.mxu0 %v2394
    %3346 = vmatprep.subr.bf16.mxu0 %v2399
    %3347 = vmatpush1.bf16.msra.mxu0 %v2398
    %3348 = vmatprep.mubr.bf16.mxu0 %v604
    %3349 = vmatmul.mubr.bf16.gmra.mrb[0].mxu0 %v590
    %v3350 = vpop.f32.mrb[0].mxu0
    %v3351 = vadd.f32 %v3310, %v3350
    %v3352 = vpop.f32.mrb[0].mxu0
    %v3353 = vadd.f32 %v3312, %v3352
    %v3354 = vpop.f32.mrb[0].mxu0
    %v3355 = vpop.f32.mrb[0].mxu0
    %3356 = vdwg.mxu0
    %3357 = vmatprep.subr.bf16.mxu0 %v2403
    %3358 = vmatpush1.bf16.msra.mxu0 %v2402
    %3359 = vmatprep.subr.bf16.mxu0 %v2407
    %3360 = vmatpush1.bf16.msra.mxu0 %v2406
    %3361 = vmatprep.subr.bf16.mxu0 %v2411
    %3362 = vmatpush1.bf16.msra.mxu0 %v2410
    %3363 = vmatprep.subr.bf16.mxu0 %v2415
    %3364 = vmatpush1.bf16.msra.mxu0 %v2414
    %3365 = vmatprep.subr.bf16.mxu0 %v2419
    %3366 = vmatpush1.bf16.msra.mxu0 %v2418
    %3367 = vmatprep.subr.bf16.mxu0 %v2423
    %3368 = vmatpush1.bf16.msra.mxu0 %v2422
    %3369 = vmatprep.subr.bf16.mxu0 %v2427
    %3370 = vmatpush1.bf16.msra.mxu0 %v2426
    %3371 = vmatprep.subr.bf16.mxu0 %v2431
    %3372 = vmatpush1.bf16.msra.mxu0 %v2430
    %3373 = vmatprep.subr.bf16.mxu0 %v2435
    %3374 = vmatpush1.bf16.msra.mxu0 %v2434
    %3375 = vmatprep.subr.bf16.mxu0 %v2439
    %3376 = vmatpush1.bf16.msra.mxu0 %v2438
    %3377 = vmatprep.subr.bf16.mxu0 %v2443
    %3378 = vmatpush1.bf16.msra.mxu0 %v2442
    %3379 = vmatprep.subr.bf16.mxu0 %v2447
    %3380 = vmatpush1.bf16.msra.mxu0 %v2446
    %3381 = vmatprep.subr.bf16.mxu0 %v2451
    %3382 = vmatpush1.bf16.msra.mxu0 %v2450
    %3383 = vmatprep.subr.bf16.mxu0 %v2455
    %3384 = vmatpush1.bf16.msra.mxu0 %v2454
    %3385 = vmatprep.subr.bf16.mxu0 %v2459
    %3386 = vmatpush1.bf16.msra.mxu0 %v2458
    %3387 = vmatprep.subr.bf16.mxu0 %v2463
    %3388 = vmatpush1.bf16.msra.mxu0 %v2462
    %3389 = vmatprep.mubr.bf16.mxu0 %v608
    %3390 = vmatmul.mubr.bf16.gmra.mrb[0].mxu0 %v606
    %v3391 = vpop.f32.mrb[0].mxu0
    %v3392 = vadd.f32 %v3351, %v3391
    %v3393 = vpop.f32.mrb[0].mxu0
    %v3394 = vadd.f32 %v3353, %v3393
    %v3395 = vpop.f32.mrb[0].mxu0
    %v3396 = vpop.f32.mrb[0].mxu0
    %3397 = vdwg.mxu0
    %3398 = vmatprep.subr.bf16.mxu0 %v2467
    %3399 = vmatpush1.bf16.msra.mxu0 %v2466
    %3400 = vmatprep.subr.bf16.mxu0 %v2471
    %3401 = vmatpush1.bf16.msra.mxu0 %v2470
    %3402 = vmatprep.subr.bf16.mxu0 %v2475
    %3403 = vmatpush1.bf16.msra.mxu0 %v2474
    %3404 = vmatprep.subr.bf16.mxu0 %v2479
    %3405 = vmatpush1.bf16.msra.mxu0 %v2478
    %3406 = vmatprep.subr.bf16.mxu0 %v2483
    %3407 = vmatpush1.bf16.msra.mxu0 %v2482
    %3408 = vmatprep.subr.bf16.mxu0 %v2487
    %3409 = vmatpush1.bf16.msra.mxu0 %v2486
    %3410 = vmatprep.subr.bf16.mxu0 %v2491
    %3411 = vmatpush1.bf16.msra.mxu0 %v2490
    %3412 = vmatprep.subr.bf16.mxu0 %v2495
    %3413 = vmatpush1.bf16.msra.mxu0 %v2494
    %3414 = vmatprep.subr.bf16.mxu0 %v2499
    %3415 = vmatpush1.bf16.msra.mxu0 %v2498
    %3416 = vmatprep.subr.bf16.mxu0 %v2503
    %3417 = vmatpush1.bf16.msra.mxu0 %v2502
    %3418 = vmatprep.subr.bf16.mxu0 %v2507
    %3419 = vmatpush1.bf16.msra.mxu0 %v2506
    %3420 = vmatprep.subr.bf16.mxu0 %v2511
    %3421 = vmatpush1.bf16.msra.mxu0 %v2510
    %3422 = vmatprep.subr.bf16.mxu0 %v2515
    %3423 = vmatpush1.bf16.msra.mxu0 %v2514
    %3424 = vmatprep.subr.bf16.mxu0 %v2519
    %3425 = vmatpush1.bf16.msra.mxu0 %v2518
    %3426 = vmatprep.subr.bf16.mxu0 %v2523
    %3427 = vmatpush1.bf16.msra.mxu0 %v2522
    %3428 = vmatprep.subr.bf16.mxu0 %v2527
    %3429 = vmatpush1.bf16.msra.mxu0 %v2526
    %3430 = vmatprep.mubr.bf16.mxu0 %v646
    %3431 = vmatmul.mubr.bf16.gmra.mrb[0].mxu0 %v632
    %v3432 = vpop.f32.mrb[0].mxu0
    %v3433 = vadd.f32 %v3392, %v3432
    %v3434 = vpop.f32.mrb[0].mxu0
    %v3435 = vadd.f32 %v3394, %v3434
    %v3436 = vpop.f32.mrb[0].mxu0
    %v3437 = vpop.f32.mrb[0].mxu0
    %3438 = vdwg.mxu0
    %3439 = vmatprep.subr.bf16.mxu0 %v2531
    %3440 = vmatpush1.bf16.msra.mxu0 %v2530
    %3441 = vmatprep.subr.bf16.mxu0 %v2535
    %3442 = vmatpush1.bf16.msra.mxu0 %v2534
    %3443 = vmatprep.subr.bf16.mxu0 %v2539
    %3444 = vmatpush1.bf16.msra.mxu0 %v2538
    %3445 = vmatprep.subr.bf16.mxu0 %v2543
    %3446 = vmatpush1.bf16.msra.mxu0 %v2542
    %3447 = vmatprep.subr.bf16.mxu0 %v2547
    %3448 = vmatpush1.bf16.msra.mxu0 %v2546
    %3449 = vmatprep.subr.bf16.mxu0 %v2551
    %3450 = vmatpush1.bf16.msra.mxu0 %v2550
    %3451 = vmatprep.subr.bf16.mxu0 %v2555
    %3452 = vmatpush1.bf16.msra.mxu0 %v2554
    %3453 = vmatprep.subr.bf16.mxu0 %v2559
    %3454 = vmatpush1.bf16.msra.mxu0 %v2558
    %3455 = vmatprep.subr.bf16.mxu0 %v2563
    %3456 = vmatpush1.bf16.msra.mxu0 %v2562
    %3457 = vmatprep.subr.bf16.mxu0 %v2567
    %3458 = vmatpush1.bf16.msra.mxu0 %v2566
    %3459 = vmatprep.subr.bf16.mxu0 %v2571
    %3460 = vmatpush1.bf16.msra.mxu0 %v2570
    %3461 = vmatprep.subr.bf16.mxu0 %v2575
    %3462 = vmatpush1.bf16.msra.mxu0 %v2574
    %3463 = vmatprep.subr.bf16.mxu0 %v2579
    %3464 = vmatpush1.bf16.msra.mxu0 %v2578
    %3465 = vmatprep.subr.bf16.mxu0 %v2583
    %3466 = vmatpush1.bf16.msra.mxu0 %v2582
    %3467 = vmatprep.subr.bf16.mxu0 %v2587
    %3468 = vmatpush1.bf16.msra.mxu0 %v2586
    %3469 = vmatprep.subr.bf16.mxu0 %v2591
    %3470 = vmatpush1.bf16.msra.mxu0 %v2590
    %3471 = vmatprep.mubr.bf16.mxu0 %v656
    %3472 = vmatmul.mubr.bf16.gmra.mrb[0].mxu0 %v654
    %v3473 = vpop.f32.mrb[0].mxu0
    %v3474 = vadd.f32 %v3433, %v3473
    %v3475 = vpop.f32.mrb[0].mxu0
    %v3476 = vadd.f32 %v3435, %v3475
    %v3477 = vpop.f32.mrb[0].mxu0
    %v3478 = vpop.f32.mrb[0].mxu0
    %3479 = vdwg.mxu0
    %3480 = vmatprep.subr.bf16.mxu0 %v2595
    %3481 = vmatpush1.bf16.msra.mxu0 %v2594
    %3482 = vmatprep.subr.bf16.mxu0 %v2599
    %3483 = vmatpush1.bf16.msra.mxu0 %v2598
    %3484 = vmatprep.subr.bf16.mxu0 %v2603
    %3485 = vmatpush1.bf16.msra.mxu0 %v2602
    %3486 = vmatprep.subr.bf16.mxu0 %v2607
    %3487 = vmatpush1.bf16.msra.mxu0 %v2606
    %3488 = vmatprep.subr.bf16.mxu0 %v2611
    %3489 = vmatpush1.bf16.msra.mxu0 %v2610
    %3490 = vmatprep.subr.bf16.mxu0 %v2615
    %3491 = vmatpush1.bf16.msra.mxu0 %v2614
    %3492 = vmatprep.subr.bf16.mxu0 %v2619
    %3493 = vmatpush1.bf16.msra.mxu0 %v2618
    %3494 = vmatprep.subr.bf16.mxu0 %v2623
    %3495 = vmatpush1.bf16.msra.mxu0 %v2622
    %3496 = vmatprep.subr.bf16.mxu0 %v2627
    %3497 = vmatpush1.bf16.msra.mxu0 %v2626
    %3498 = vmatprep.subr.bf16.mxu0 %v2631
    %3499 = vmatpush1.bf16.msra.mxu0 %v2630
    %3500 = vmatprep.subr.bf16.mxu0 %v2635
    %3501 = vmatpush1.bf16.msra.mxu0 %v2634
    %3502 = vmatprep.subr.bf16.mxu0 %v2639
    %3503 = vmatpush1.bf16.msra.mxu0 %v2638
    %3504 = vmatprep.subr.bf16.mxu0 %v2643
    %3505 = vmatpush1.bf16.msra.mxu0 %v2642
    %3506 = vmatprep.subr.bf16.mxu0 %v2647
    %3507 = vmatpush1.bf16.msra.mxu0 %v2646
    %3508 = vmatprep.subr.bf16.mxu0 %v2651
    %3509 = vmatpush1.bf16.msra.mxu0 %v2650
    %3510 = vmatprep.subr.bf16.mxu0 %v2655
    %3511 = vmatpush1.bf16.msra.mxu0 %v2654
    %3512 = vmatprep.mubr.bf16.mxu0 %v653
    %3513 = vmatmul.mubr.bf16.gmra.mrb[0].mxu0 %v639
    %v3514 = vpop.f32.mrb[0].mxu0
    %v3515 = vadd.f32 %v3474, %v3514
    %v3516 = vpop.f32.mrb[0].mxu0
    %v3517 = vadd.f32 %v3476, %v3516
    %v3518 = vpop.f32.mrb[0].mxu0
    %v3519 = vpop.f32.mrb[0].mxu0
    %3520 = vdwg.mxu0
    %3521 = vmatprep.subr.bf16.mxu0 %v2659
    %3522 = vmatpush1.bf16.msra.mxu0 %v2658
    %3523 = vmatprep.subr.bf16.mxu0 %v2663
    %3524 = vmatpush1.bf16.msra.mxu0 %v2662
    %3525 = vmatprep.subr.bf16.mxu0 %v2667
    %3526 = vmatpush1.bf16.msra.mxu0 %v2666
    %3527 = vmatprep.subr.bf16.mxu0 %v2671
    %3528 = vmatpush1.bf16.msra.mxu0 %v2670
    %3529 = vmatprep.subr.bf16.mxu0 %v2675
    %3530 = vmatpush1.bf16.msra.mxu0 %v2674
    %3531 = vmatprep.subr.bf16.mxu0 %v2679
    %3532 = vmatpush1.bf16.msra.mxu0 %v2678
    %3533 = vmatprep.subr.bf16.mxu0 %v2683
    %3534 = vmatpush1.bf16.msra.mxu0 %v2682
    %3535 = vmatprep.subr.bf16.mxu0 %v2687
    %3536 = vmatpush1.bf16.msra.mxu0 %v2686
    %3537 = vmatprep.subr.bf16.mxu0 %v2691
    %3538 = vmatpush1.bf16.msra.mxu0 %v2690
    %3539 = vmatprep.subr.bf16.mxu0 %v2695
    %3540 = vmatpush1.bf16.msra.mxu0 %v2694
    %3541 = vmatprep.subr.bf16.mxu0 %v2699
    %3542 = vmatpush1.bf16.msra.mxu0 %v2698
    %3543 = vmatprep.subr.bf16.mxu0 %v2703
    %3544 = vmatpush1.bf16.msra.mxu0 %v2702
    %3545 = vmatprep.subr.bf16.mxu0 %v2707
    %3546 = vmatpush1.bf16.msra.mxu0 %v2706
    %3547 = vmatprep.subr.bf16.mxu0 %v2711
    %3548 = vmatpush1.bf16.msra.mxu0 %v2710
    %3549 = vmatprep.subr.bf16.mxu0 %v2715
    %3550 = vmatpush1.bf16.msra.mxu0 %v2714
    %3551 = vmatprep.subr.bf16.mxu0 %v2719
    %3552 = vmatpush1.bf16.msra.mxu0 %v2718
    %3553 = vmatprep.mubr.bf16.mxu0 %v657
    %3554 = vmatmul.mubr.bf16.gmra.mrb[0].mxu0 %v655
    %v3555 = vpop.f32.mrb[0].mxu0
    %v3556 = vadd.f32 %v3515, %v3555
    %v3557 = vpop.f32.mrb[0].mxu0
    %v3558 = vadd.f32 %v3517, %v3557
    %v3559 = vpop.f32.mrb[0].mxu0
    %v3560 = vpop.f32.mrb[0].mxu0
    %3561 = vdwg.mxu0
    %3562 = vmatprep.subr.bf16.mxu0 %v2213
    %3563 = vmatpush1.bf16.msra.mxu0 %v2212
    %3564 = vmatprep.subr.bf16.mxu0 %v2217
    %3565 = vmatpush1.bf16.msra.mxu0 %v2216
    %3566 = vmatprep.subr.bf16.mxu0 %v2221
    %3567 = vmatpush1.bf16.msra.mxu0 %v2220
    %3568 = vmatprep.subr.bf16.mxu0 %v2225
    %3569 = vmatpush1.bf16.msra.mxu0 %v2224
    %3570 = vmatprep.subr.bf16.mxu0 %v2229
    %3571 = vmatpush1.bf16.msra.mxu0 %v2228
    %3572 = vmatprep.subr.bf16.mxu0 %v2233
    %3573 = vmatpush1.bf16.msra.mxu0 %v2232
    %3574 = vmatprep.subr.bf16.mxu0 %v2237
    %3575 = vmatpush1.bf16.msra.mxu0 %v2236
    %3576 = vmatprep.subr.bf16.mxu0 %v2241
    %3577 = vmatpush1.bf16.msra.mxu0 %v2240
    %3578 = vmatprep.subr.bf16.mxu0 %v2245
    %3579 = vmatpush1.bf16.msra.mxu0 %v2244
    %3580 = vmatprep.subr.bf16.mxu0 %v2249
    %3581 = vmatpush1.bf16.msra.mxu0 %v2248
    %3582 = vmatprep.subr.bf16.mxu0 %v2253
    %3583 = vmatpush1.bf16.msra.mxu0 %v2252
    %3584 = vmatprep.subr.bf16.mxu0 %v2257
    %3585 = vmatpush1.bf16.msra.mxu0 %v2256
    %3586 = vmatprep.subr.bf16.mxu0 %v2261
    %3587 = vmatpush1.bf16.msra.mxu0 %v2260
    %3588 = vmatprep.subr.bf16.mxu0 %v2265
    %3589 = vmatpush1.bf16.msra.mxu0 %v2264
    %3590 = vmatprep.subr.bf16.mxu0 %v2269
    %3591 = vmatpush1.bf16.msra.mxu0 %v2268
    %3592 = vmatprep.subr.bf16.mxu0 %v2273
    %3593 = vmatpush1.bf16.msra.mxu0 %v2272
    %3594 = vmatprep.mubr.bf16.mxu0 %v597
    %3595 = vmatmul.mubr.bf16.gmra.mrb[0].mxu0 %v583
    %v3596 = vpop.f32.mrb[0].mxu0
    %v3597 = vadd.f32 %v549, %v3596
    %v3598 = vpop.f32.mrb[0].mxu0
    %v3599 = vadd.f32 %v553, %v3598
    %v3600 = vpop.f32.mrb[0].mxu0
    %v3601 = vpop.f32.mrb[0].mxu0
    %3602 = vdwg.mxu0
    %3603 = vmatprep.subr.bf16.mxu0 %v2277
    %3604 = vmatpush1.bf16.msra.mxu0 %v2276
    %3605 = vmatprep.subr.bf16.mxu0 %v2281
    %3606 = vmatpush1.bf16.msra.mxu0 %v2280
    %3607 = vmatprep.subr.bf16.mxu0 %v2285
    %3608 = vmatpush1.bf16.msra.mxu0 %v2284
    %3609 = vmatprep.subr.bf16.mxu0 %v2289
    %3610 = vmatpush1.bf16.msra.mxu0 %v2288
    %3611 = vmatprep.subr.bf16.mxu0 %v2293
    %3612 = vmatpush1.bf16.msra.mxu0 %v2292
    %3613 = vmatprep.subr.bf16.mxu0 %v2297
    %3614 = vmatpush1.bf16.msra.mxu0 %v2296
    %3615 = vmatprep.subr.bf16.mxu0 %v2301
    %3616 = vmatpush1.bf16.msra.mxu0 %v2300
    %3617 = vmatprep.subr.bf16.mxu0 %v2305
    %3618 = vmatpush1.bf16.msra.mxu0 %v2304
    %3619 = vmatprep.subr.bf16.mxu0 %v2309
    %3620 = vmatpush1.bf16.msra.mxu0 %v2308
    %3621 = vmatprep.subr.bf16.mxu0 %v2313
    %3622 = vmatpush1.bf16.msra.mxu0 %v2312
    %3623 = vmatprep.subr.bf16.mxu0 %v2317
    %3624 = vmatpush1.bf16.msra.mxu0 %v2316
    %3625 = vmatprep.subr.bf16.mxu0 %v2321
    %3626 = vmatpush1.bf16.msra.mxu0 %v2320
    %3627 = vmatprep.subr.bf16.mxu0 %v2325
    %3628 = vmatpush1.bf16.msra.mxu0 %v2324
    %3629 = vmatprep.subr.bf16.mxu0 %v2329
    %3630 = vmatpush1.bf16.msra.mxu0 %v2328
    %3631 = vmatprep.subr.bf16.mxu0 %v2333
    %3632 = vmatpush1.bf16.msra.mxu0 %v2332
    %3633 = vmatprep.subr.bf16.mxu0 %v2337
    %3634 = vmatpush1.bf16.msra.mxu0 %v2336
    %3635 = vmatprep.mubr.bf16.mxu0 %v607
    %3636 = vmatmul.mubr.bf16.gmra.mrb[0].mxu0 %v605
    %v3637 = vpop.f32.mrb[0].mxu0
    %v3638 = vadd.f32 %v3597, %v3637
    %v3639 = vpop.f32.mrb[0].mxu0
    %v3640 = vadd.f32 %v3599, %v3639
    %v3641 = vpop.f32.mrb[0].mxu0
    %v3642 = vpop.f32.mrb[0].mxu0
    %3643 = vdwg.mxu0
    %3644 = vmatprep.subr.bf16.mxu0 %v2341
    %3645 = vmatpush1.bf16.msra.mxu0 %v2340
    %3646 = vmatprep.subr.bf16.mxu0 %v2345
    %3647 = vmatpush1.bf16.msra.mxu0 %v2344
    %3648 = vmatprep.subr.bf16.mxu0 %v2349
    %3649 = vmatpush1.bf16.msra.mxu0 %v2348
    %3650 = vmatprep.subr.bf16.mxu0 %v2353
    %3651 = vmatpush1.bf16.msra.mxu0 %v2352
    %3652 = vmatprep.subr.bf16.mxu0 %v2357
    %3653 = vmatpush1.bf16.msra.mxu0 %v2356
    %3654 = vmatprep.subr.bf16.mxu0 %v2361
    %3655 = vmatpush1.bf16.msra.mxu0 %v2360
    %3656 = vmatprep.subr.bf16.mxu0 %v2365
    %3657 = vmatpush1.bf16.msra.mxu0 %v2364
    %3658 = vmatprep.subr.bf16.mxu0 %v2369
    %3659 = vmatpush1.bf16.msra.mxu0 %v2368
    %3660 = vmatprep.subr.bf16.mxu0 %v2373
    %3661 = vmatpush1.bf16.msra.mxu0 %v2372
    %3662 = vmatprep.subr.bf16.mxu0 %v2377
    %3663 = vmatpush1.bf16.msra.mxu0 %v2376
    %3664 = vmatprep.subr.bf16.mxu0 %v2381
    %3665 = vmatpush1.bf16.msra.mxu0 %v2380
    %3666 = vmatprep.subr.bf16.mxu0 %v2385
    %3667 = vmatpush1.bf16.msra.mxu0 %v2384
    %3668 = vmatprep.subr.bf16.mxu0 %v2389
    %3669 = vmatpush1.bf16.msra.mxu0 %v2388
    %3670 = vmatprep.subr.bf16.mxu0 %v2393
    %3671 = vmatpush1.bf16.msra.mxu0 %v2392
    %3672 = vmatprep.subr.bf16.mxu0 %v2397
    %3673 = vmatpush1.bf16.msra.mxu0 %v2396
    %3674 = vmatprep.subr.bf16.mxu0 %v2401
    %3675 = vmatpush1.bf16.msra.mxu0 %v2400
    %3676 = vmatprep.mubr.bf16.mxu0 %v604
    %3677 = vmatmul.mubr.bf16.gmra.mrb[0].mxu0 %v590
    %v3678 = vpop.f32.mrb[0].mxu0
    %v3679 = vadd.f32 %v3638, %v3678
    %v3680 = vpop.f32.mrb[0].mxu0
    %v3681 = vadd.f32 %v3640, %v3680
    %v3682 = vpop.f32.mrb[0].mxu0
    %v3683 = vpop.f32.mrb[0].mxu0
    %3684 = vdwg.mxu0
    %3685 = vmatprep.subr.bf16.mxu0 %v2405
    %3686 = vmatpush1.bf16.msra.mxu0 %v2404
    %3687 = vmatprep.subr.bf16.mxu0 %v2409
    %3688 = vmatpush1.bf16.msra.mxu0 %v2408
    %3689 = vmatprep.subr.bf16.mxu0 %v2413
    %3690 = vmatpush1.bf16.msra.mxu0 %v2412
    %3691 = vmatprep.subr.bf16.mxu0 %v2417
    %3692 = vmatpush1.bf16.msra.mxu0 %v2416
    %3693 = vmatprep.subr.bf16.mxu0 %v2421
    %3694 = vmatpush1.bf16.msra.mxu0 %v2420
    %3695 = vmatprep.subr.bf16.mxu0 %v2425
    %3696 = vmatpush1.bf16.msra.mxu0 %v2424
    %3697 = vmatprep.subr.bf16.mxu0 %v2429
    %3698 = vmatpush1.bf16.msra.mxu0 %v2428
    %3699 = vmatprep.subr.bf16.mxu0 %v2433
    %3700 = vmatpush1.bf16.msra.mxu0 %v2432
    %3701 = vmatprep.subr.bf16.mxu0 %v2437
    %3702 = vmatpush1.bf16.msra.mxu0 %v2436
    %3703 = vmatprep.subr.bf16.mxu0 %v2441
    %3704 = vmatpush1.bf16.msra.mxu0 %v2440
    %3705 = vmatprep.subr.bf16.mxu0 %v2445
    %3706 = vmatpush1.bf16.msra.mxu0 %v2444
    %3707 = vmatprep.subr.bf16.mxu0 %v2449
    %3708 = vmatpush1.bf16.msra.mxu0 %v2448
    %3709 = vmatprep.subr.bf16.mxu0 %v2453
    %3710 = vmatpush1.bf16.msra.mxu0 %v2452
    %3711 = vmatprep.subr.bf16.mxu0 %v2457
    %3712 = vmatpush1.bf16.msra.mxu0 %v2456
    %3713 = vmatprep.subr.bf16.mxu0 %v2461
    %3714 = vmatpush1.bf16.msra.mxu0 %v2460
    %3715 = vmatprep.subr.bf16.mxu0 %v2465
    %3716 = vmatpush1.bf16.msra.mxu0 %v2464
    %3717 = vmatprep.mubr.bf16.mxu0 %v608
    %3718 = vmatmul.mubr.bf16.gmra.mrb[0].mxu0 %v606
    %v3719 = vpop.f32.mrb[0].mxu0
    %v3720 = vadd.f32 %v3679, %v3719
    %v3721 = vpop.f32.mrb[0].mxu0
    %v3722 = vadd.f32 %v3681, %v3721
    %v3723 = vpop.f32.mrb[0].mxu0
    %v3724 = vpop.f32.mrb[0].mxu0
    %3725 = vdwg.mxu0
    %3726 = vmatprep.subr.bf16.mxu0 %v2469
    %3727 = vmatpush1.bf16.msra.mxu0 %v2468
    %3728 = vmatprep.subr.bf16.mxu0 %v2473
    %3729 = vmatpush1.bf16.msra.mxu0 %v2472
    %3730 = vmatprep.subr.bf16.mxu0 %v2477
    %3731 = vmatpush1.bf16.msra.mxu0 %v2476
    %3732 = vmatprep.subr.bf16.mxu0 %v2481
    %3733 = vmatpush1.bf16.msra.mxu0 %v2480
    %3734 = vmatprep.subr.bf16.mxu0 %v2485
    %3735 = vmatpush1.bf16.msra.mxu0 %v2484
    %3736 = vmatprep.subr.bf16.mxu0 %v2489
    %3737 = vmatpush1.bf16.msra.mxu0 %v2488
    %3738 = vmatprep.subr.bf16.mxu0 %v2493
    %3739 = vmatpush1.bf16.msra.mxu0 %v2492
    %3740 = vmatprep.subr.bf16.mxu0 %v2497
    %3741 = vmatpush1.bf16.msra.mxu0 %v2496
    %3742 = vmatprep.subr.bf16.mxu0 %v2501
    %3743 = vmatpush1.bf16.msra.mxu0 %v2500
    %3744 = vmatprep.subr.bf16.mxu0 %v2505
    %3745 = vmatpush1.bf16.msra.mxu0 %v2504
    %3746 = vmatprep.subr.bf16.mxu0 %v2509
    %3747 = vmatpush1.bf16.msra.mxu0 %v2508
    %3748 = vmatprep.subr.bf16.mxu0 %v2513
    %3749 = vmatpush1.bf16.msra.mxu0 %v2512
    %3750 = vmatprep.subr.bf16.mxu0 %v2517
    %3751 = vmatpush1.bf16.msra.mxu0 %v2516
    %3752 = vmatprep.subr.bf16.mxu0 %v2521
    %3753 = vmatpush1.bf16.msra.mxu0 %v2520
    %3754 = vmatprep.subr.bf16.mxu0 %v2525
    %3755 = vmatpush1.bf16.msra.mxu0 %v2524
    %3756 = vmatprep.subr.bf16.mxu0 %v2529
    %3757 = vmatpush1.bf16.msra.mxu0 %v2528
    %3758 = vmatprep.mubr.bf16.mxu0 %v646
    %3759 = vmatmul.mubr.bf16.gmra.mrb[0].mxu0 %v632
    %v3760 = vpop.f32.mrb[0].mxu0
    %v3761 = vadd.f32 %v3720, %v3760
    %v3762 = vpop.f32.mrb[0].mxu0
    %v3763 = vadd.f32 %v3722, %v3762
    %v3764 = vpop.f32.mrb[0].mxu0
    %v3765 = vpop.f32.mrb[0].mxu0
    %3766 = vdwg.mxu0
    %3767 = vmatprep.subr.bf16.mxu0 %v2533
    %3768 = vmatpush1.bf16.msra.mxu0 %v2532
    %3769 = vmatprep.subr.bf16.mxu0 %v2537
    %3770 = vmatpush1.bf16.msra.mxu0 %v2536
    %3771 = vmatprep.subr.bf16.mxu0 %v2541
    %3772 = vmatpush1.bf16.msra.mxu0 %v2540
    %3773 = vmatprep.subr.bf16.mxu0 %v2545
    %3774 = vmatpush1.bf16.msra.mxu0 %v2544
    %3775 = vmatprep.subr.bf16.mxu0 %v2549
    %3776 = vmatpush1.bf16.msra.mxu0 %v2548
    %3777 = vmatprep.subr.bf16.mxu0 %v2553
    %3778 = vmatpush1.bf16.msra.mxu0 %v2552
    %3779 = vmatprep.subr.bf16.mxu0 %v2557
    %3780 = vmatpush1.bf16.msra.mxu0 %v2556
    %3781 = vmatprep.subr.bf16.mxu0 %v2561
    %3782 = vmatpush1.bf16.msra.mxu0 %v2560
    %3783 = vmatprep.subr.bf16.mxu0 %v2565
    %3784 = vmatpush1.bf16.msra.mxu0 %v2564
    %3785 = vmatprep.subr.bf16.mxu0 %v2569
    %3786 = vmatpush1.bf16.msra.mxu0 %v2568
    %3787 = vmatprep.subr.bf16.mxu0 %v2573
    %3788 = vmatpush1.bf16.msra.mxu0 %v2572
    %3789 = vmatprep.subr.bf16.mxu0 %v2577
    %3790 = vmatpush1.bf16.msra.mxu0 %v2576
    %3791 = vmatprep.subr.bf16.mxu0 %v2581
    %3792 = vmatpush1.bf16.msra.mxu0 %v2580
    %3793 = vmatprep.subr.bf16.mxu0 %v2585
    %3794 = vmatpush1.bf16.msra.mxu0 %v2584
    %3795 = vmatprep.subr.bf16.mxu0 %v2589
    %3796 = vmatpush1.bf16.msra.mxu0 %v2588
    %3797 = vmatprep.subr.bf16.mxu0 %v2593
    %3798 = vmatpush1.bf16.msra.mxu0 %v2592
    %3799 = vmatprep.mubr.bf16.mxu0 %v656
    %3800 = vmatmul.mubr.bf16.gmra.mrb[0].mxu0 %v654
    %v3801 = vpop.f32.mrb[0].mxu0
    %v3802 = vadd.f32 %v3761, %v3801
    %v3803 = vpop.f32.mrb[0].mxu0
    %v3804 = vadd.f32 %v3763, %v3803
    %v3805 = vpop.f32.mrb[0].mxu0
    %v3806 = vpop.f32.mrb[0].mxu0
    %3807 = vdwg.mxu0
    %3808 = vmatprep.subr.bf16.mxu0 %v2597
    %3809 = vmatpush1.bf16.msra.mxu0 %v2596
    %3810 = vmatprep.subr.bf16.mxu0 %v2601
    %3811 = vmatpush1.bf16.msra.mxu0 %v2600
    %3812 = vmatprep.subr.bf16.mxu0 %v2605
    %3813 = vmatpush1.bf16.msra.mxu0 %v2604
    %3814 = vmatprep.subr.bf16.mxu0 %v2609
    %3815 = vmatpush1.bf16.msra.mxu0 %v2608
    %3816 = vmatprep.subr.bf16.mxu0 %v2613
    %3817 = vmatpush1.bf16.msra.mxu0 %v2612
    %3818 = vmatprep.subr.bf16.mxu0 %v2617
    %3819 = vmatpush1.bf16.msra.mxu0 %v2616
    %3820 = vmatprep.subr.bf16.mxu0 %v2621
    %3821 = vmatpush1.bf16.msra.mxu0 %v2620
    %3822 = vmatprep.subr.bf16.mxu0 %v2625
    %3823 = vmatpush1.bf16.msra.mxu0 %v2624
    %3824 = vmatprep.subr.bf16.mxu0 %v2629
    %3825 = vmatpush1.bf16.msra.mxu0 %v2628
    %3826 = vmatprep.subr.bf16.mxu0 %v2633
    %3827 = vmatpush1.bf16.msra.mxu0 %v2632
    %3828 = vmatprep.subr.bf16.mxu0 %v2637
    %3829 = vmatpush1.bf16.msra.mxu0 %v2636
    %3830 = vmatprep.subr.bf16.mxu0 %v2641
    %3831 = vmatpush1.bf16.msra.mxu0 %v2640
    %3832 = vmatprep.subr.bf16.mxu0 %v2645
    %3833 = vmatpush1.bf16.msra.mxu0 %v2644
    %3834 = vmatprep.subr.bf16.mxu0 %v2649
    %3835 = vmatpush1.bf16.msra.mxu0 %v2648
    %3836 = vmatprep.subr.bf16.mxu0 %v2653
    %3837 = vmatpush1.bf16.msra.mxu0 %v2652
    %3838 = vmatprep.subr.bf16.mxu0 %v2657
    %3839 = vmatpush1.bf16.msra.mxu0 %v2656
    %3840 = vmatprep.mubr.bf16.mxu0 %v653
    %3841 = vmatmul.mubr.bf16.gmra.mrb[0].mxu0 %v639
    %v3842 = vpop.f32.mrb[0].mxu0
    %v3843 = vadd.f32 %v3802, %v3842
    %v3844 = vpop.f32.mrb[0].mxu0
    %v3845 = vadd.f32 %v3804, %v3844
    %v3846 = vpop.f32.mrb[0].mxu0
    %v3847 = vpop.f32.mrb[0].mxu0
    %3848 = vdwg.mxu0
    %3849 = vmatprep.subr.bf16.mxu0 %v2661
    %3850 = vmatpush1.bf16.msra.mxu0 %v2660
    %3851 = vmatprep.subr.bf16.mxu0 %v2665
    %3852 = vmatpush1.bf16.msra.mxu0 %v2664
    %3853 = vmatprep.subr.bf16.mxu0 %v2669
    %3854 = vmatpush1.bf16.msra.mxu0 %v2668
    %3855 = vmatprep.subr.bf16.mxu0 %v2673
    %3856 = vmatpush1.bf16.msra.mxu0 %v2672
    %3857 = vmatprep.subr.bf16.mxu0 %v2677
    %3858 = vmatpush1.bf16.msra.mxu0 %v2676
    %3859 = vmatprep.subr.bf16.mxu0 %v2681
    %3860 = vmatpush1.bf16.msra.mxu0 %v2680
    %3861 = vmatprep.subr.bf16.mxu0 %v2685
    %3862 = vmatpush1.bf16.msra.mxu0 %v2684
    %3863 = vmatprep.subr.bf16.mxu0 %v2689
    %3864 = vmatpush1.bf16.msra.mxu0 %v2688
    %3865 = vmatprep.subr.bf16.mxu0 %v2693
    %3866 = vmatpush1.bf16.msra.mxu0 %v2692
    %3867 = vmatprep.subr.bf16.mxu0 %v2697
    %3868 = vmatpush1.bf16.msra.mxu0 %v2696
    %3869 = vmatprep.subr.bf16.mxu0 %v2701
    %3870 = vmatpush1.bf16.msra.mxu0 %v2700
    %3871 = vmatprep.subr.bf16.mxu0 %v2705
    %3872 = vmatpush1.bf16.msra.mxu0 %v2704
    %3873 = vmatprep.subr.bf16.mxu0 %v2709
    %3874 = vmatpush1.bf16.msra.mxu0 %v2708
    %3875 = vmatprep.subr.bf16.mxu0 %v2713
    %3876 = vmatpush1.bf16.msra.mxu0 %v2712
    %3877 = vmatprep.subr.bf16.mxu0 %v2717
    %3878 = vmatpush1.bf16.msra.mxu0 %v2716
    %3879 = vmatprep.subr.bf16.mxu0 %v2721
    %3880 = vmatpush1.bf16.msra.mxu0 %v2720
    %3881 = vmatprep.mubr.bf16.mxu0 %v657
    %3882 = vmatmul.mubr.bf16.gmra.mrb[0].mxu0 %v655
    %v3883 = vpop.f32.mrb[0].mxu0
    %v3884 = vadd.f32 %v3843, %v3883
    %v3885 = vpop.f32.mrb[0].mxu0
    %v3886 = vadd.f32 %v3845, %v3885
    %v3887 = vpop.f32.mrb[0].mxu0
    %v3888 = vpop.f32.mrb[0].mxu0
    %3889 = vdwg.mxu0
    %v3890 = vmax.f32 %v3556, 0.0
    %v3891 = vmax.f32 %v3558, 0.0
    %v3892 = vmax.f32 %v3884, 0.0
    %v3893 = vmax.f32 %v3886, 0.0
    %v3894 = vpack.c.bf16 %v3890, %v3890
    %v3895 = vpack.c.bf16 %v3891, %v3891
    %v3896 = vpack.c.bf16 %v3892, %v3892
    %v3897 = vpack.c.bf16 %v3893, %v3893
    %v3898 = vld [vmem:[%s3] sm:$0xf]
    %v3899 = vld [vmem:[%s3 + $0x4] sm:$0xf]
    %v3900 = vld [vmem:[%s3 + $0x8] sm:$0xf]
    %v3901 = vld [vmem:[%s3 + $0xc] sm:$0xf]
    %v3902 = vld [vmem:[%s3 + $0x10] sm:$0xf]
    %v3903 = vld [vmem:[%s3 + $0x14] sm:$0xf]
    %v3904 = vld [vmem:[%s3 + $0x18] sm:$0xf]
    %v3905 = vld [vmem:[%s3 + $0x1c] sm:$0xf]
    %v3906 = vld [vmem:[%s3 + $0x20] sm:$0xf]
    %v3907 = vld [vmem:[%s3 + $0x24] sm:$0xf]
    %v3908 = vld [vmem:[%s3 + $0x28] sm:$0xf]
    %v3909 = vld [vmem:[%s3 + $0x2c] sm:$0xf]
    %v3910 = vld [vmem:[%s3 + $0x30] sm:$0xf]
    %v3911 = vld [vmem:[%s3 + $0x34] sm:$0xf]
    %v3912 = vld [vmem:[%s3 + $0x38] sm:$0xf]
    %v3913 = vld [vmem:[%s3 + $0x3c] sm:$0xf]
    %v3914 = vld [vmem:[%s3 + $0x40] sm:$0xf]
    %v3915 = vld [vmem:[%s3 + $0x44] sm:$0xf]
    %v3916 = vld [vmem:[%s3 + $0x48] sm:$0xf]
    %v3917 = vld [vmem:[%s3 + $0x4c] sm:$0xf]
    %v3918 = vld [vmem:[%s3 + $0x50] sm:$0xf]
    %v3919 = vld [vmem:[%s3 + $0x54] sm:$0xf]
    %v3920 = vld [vmem:[%s3 + $0x58] sm:$0xf]
    %v3921 = vld [vmem:[%s3 + $0x5c] sm:$0xf]
    %v3922 = vld [vmem:[%s3 + $0x60] sm:$0xf]
    %v3923 = vld [vmem:[%s3 + $0x64] sm:$0xf]
    %v3924 = vld [vmem:[%s3 + $0x68] sm:$0xf]
    %v3925 = vld [vmem:[%s3 + $0x6c] sm:$0xf]
    %v3926 = vld [vmem:[%s3 + $0x70] sm:$0xf]
    %v3927 = vld [vmem:[%s3 + $0x74] sm:$0xf]
    %v3928 = vld [vmem:[%s3 + $0x78] sm:$0xf]
    %v3929 = vld [vmem:[%s3 + $0x7c] sm:$0xf]
    %v3930 = vld [vmem:[%s3 + $0x80] sm:$0xf]
    %v3931 = vld [vmem:[%s3 + $0x84] sm:$0xf]
    %v3932 = vld [vmem:[%s3 + $0x88] sm:$0xf]
    %v3933 = vld [vmem:[%s3 + $0x8c] sm:$0xf]
    %v3934 = vld [vmem:[%s3 + $0x90] sm:$0xf]
    %v3935 = vld [vmem:[%s3 + $0x94] sm:$0xf]
    %v3936 = vld [vmem:[%s3 + $0x98] sm:$0xf]
    %v3937 = vld [vmem:[%s3 + $0x9c] sm:$0xf]
    %v3938 = vld [vmem:[%s3 + $0xa0] sm:$0xf]
    %v3939 = vld [vmem:[%s3 + $0xa4] sm:$0xf]
    %v3940 = vld [vmem:[%s3 + $0xa8] sm:$0xf]
    %v3941 = vld [vmem:[%s3 + $0xac] sm:$0xf]
    %v3942 = vld [vmem:[%s3 + $0xb0] sm:$0xf]
    %v3943 = vld [vmem:[%s3 + $0xb4] sm:$0xf]
    %v3944 = vld [vmem:[%s3 + $0xb8] sm:$0xf]
    %v3945 = vld [vmem:[%s3 + $0xbc] sm:$0xf]
    %v3946 = vld [vmem:[%s3 + $0xc0] sm:$0xf]
    %v3947 = vld [vmem:[%s3 + $0xc4] sm:$0xf]
    %v3948 = vld [vmem:[%s3 + $0xc8] sm:$0xf]
    %v3949 = vld [vmem:[%s3 + $0xcc] sm:$0xf]
    %v3950 = vld [vmem:[%s3 + $0xd0] sm:$0xf]
    %v3951 = vld [vmem:[%s3 + $0xd4] sm:$0xf]
    %v3952 = vld [vmem:[%s3 + $0xd8] sm:$0xf]
    %v3953 = vld [vmem:[%s3 + $0xdc] sm:$0xf]
    %v3954 = vld [vmem:[%s3 + $0xe0] sm:$0xf]
    %v3955 = vld [vmem:[%s3 + $0xe4] sm:$0xf]
    %v3956 = vld [vmem:[%s3 + $0xe8] sm:$0xf]
    %v3957 = vld [vmem:[%s3 + $0xec] sm:$0xf]
    %v3958 = vld [vmem:[%s3 + $0xf0] sm:$0xf]
    %v3959 = vld [vmem:[%s3 + $0xf4] sm:$0xf]
    %v3960 = vld [vmem:[%s3 + $0xf8] sm:$0xf]
    %v3961 = vld [vmem:[%s3 + $0xfc] sm:$0xf]
    %v3962 = vld [vmem:[%s4] sm:$0x1]
    %v3964 = vlaneseq
    %v3965 = vshrl.u32 %v3964, 7
    %v3966 = vsub.s32 0, %v3965
    %v3967 = vrot.slane %v3962, %v3966
    %v4033 = vunpack.c.l.b16 %v3898
    %v4034 = vunpack.c.l.b16 %v3899
    %v4035 = vunpack.c.l.b16 %v3900
    %v4036 = vunpack.c.l.b16 %v3901
    %v4037 = vunpack.c.l.b16 %v3902
    %v4038 = vunpack.c.l.b16 %v3903
    %v4039 = vunpack.c.l.b16 %v3904
    %v4040 = vunpack.c.l.b16 %v3905
    %v4041 = vunpack.c.l.b16 %v3906
    %v4042 = vunpack.c.l.b16 %v3907
    %v4043 = vunpack.c.l.b16 %v3908
    %v4044 = vunpack.c.l.b16 %v3909
    %v4045 = vunpack.c.l.b16 %v3910
    %v4046 = vunpack.c.l.b16 %v3911
    %v4047 = vunpack.c.l.b16 %v3912
    %v4048 = vunpack.c.l.b16 %v3913
    %v4049 = vunpack.c.l.b16 %v3914
    %v4050 = vunpack.c.l.b16 %v3915
    %v4051 = vunpack.c.l.b16 %v3916
    %v4052 = vunpack.c.l.b16 %v3917
    %v4053 = vunpack.c.l.b16 %v3918
    %v4054 = vunpack.c.l.b16 %v3919
    %v4055 = vunpack.c.l.b16 %v3920
    %v4056 = vunpack.c.l.b16 %v3921
    %v4057 = vunpack.c.l.b16 %v3922
    %v4058 = vunpack.c.l.b16 %v3923
    %v4059 = vunpack.c.l.b16 %v3924
    %v4060 = vunpack.c.l.b16 %v3925
    %v4061 = vunpack.c.l.b16 %v3926
    %v4062 = vunpack.c.l.b16 %v3927
    %v4063 = vunpack.c.l.b16 %v3928
    %v4064 = vunpack.c.l.b16 %v3929
    %v4065 = vunpack.c.l.b16 %v3930
    %v4066 = vunpack.c.l.b16 %v3931
    %v4067 = vunpack.c.l.b16 %v3932
    %v4068 = vunpack.c.l.b16 %v3933
    %v4069 = vunpack.c.l.b16 %v3934
    %v4070 = vunpack.c.l.b16 %v3935
    %v4071 = vunpack.c.l.b16 %v3936
    %v4072 = vunpack.c.l.b16 %v3937
    %v4073 = vunpack.c.l.b16 %v3938
    %v4074 = vunpack.c.l.b16 %v3939
    %v4075 = vunpack.c.l.b16 %v3940
    %v4076 = vunpack.c.l.b16 %v3941
    %v4077 = vunpack.c.l.b16 %v3942
    %v4078 = vunpack.c.l.b16 %v3943
    %v4079 = vunpack.c.l.b16 %v3944
    %v4080 = vunpack.c.l.b16 %v3945
    %v4081 = vunpack.c.l.b16 %v3946
    %v4082 = vunpack.c.l.b16 %v3947
    %v4083 = vunpack.c.l.b16 %v3948
    %v4084 = vunpack.c.l.b16 %v3949
    %v4085 = vunpack.c.l.b16 %v3950
    %v4086 = vunpack.c.l.b16 %v3951
    %v4087 = vunpack.c.l.b16 %v3952
    %v4088 = vunpack.c.l.b16 %v3953
    %v4089 = vunpack.c.l.b16 %v3954
    %v4090 = vunpack.c.l.b16 %v3955
    %v4091 = vunpack.c.l.b16 %v3956
    %v4092 = vunpack.c.l.b16 %v3957
    %v4093 = vunpack.c.l.b16 %v3958
    %v4094 = vunpack.c.l.b16 %v3959
    %v4095 = vunpack.c.l.b16 %v3960
    %v4096 = vunpack.c.l.b16 %v3961
    %v4097 = vpack.c.b16 %v4034, %v4033
    %v4098 = vpack.c.b16 %v4036, %v4035
    %v4099 = vpack.c.b16 %v4038, %v4037
    %v4100 = vpack.c.b16 %v4040, %v4039
    %v4101 = vpack.c.b16 %v4042, %v4041
    %v4102 = vpack.c.b16 %v4044, %v4043
    %v4103 = vpack.c.b16 %v4046, %v4045
    %v4104 = vpack.c.b16 %v4048, %v4047
    %v4105 = vpack.c.b16 %v4050, %v4049
    %v4106 = vpack.c.b16 %v4052, %v4051
    %v4107 = vpack.c.b16 %v4054, %v4053
    %v4108 = vpack.c.b16 %v4056, %v4055
    %v4109 = vpack.c.b16 %v4058, %v4057
    %v4110 = vpack.c.b16 %v4060, %v4059
    %v4111 = vpack.c.b16 %v4062, %v4061
    %v4112 = vpack.c.b16 %v4064, %v4063
    %v4113 = vpack.c.b16 %v4066, %v4065
    %v4114 = vpack.c.b16 %v4068, %v4067
    %v4115 = vpack.c.b16 %v4070, %v4069
    %v4116 = vpack.c.b16 %v4072, %v4071
    %v4117 = vpack.c.b16 %v4074, %v4073
    %v4118 = vpack.c.b16 %v4076, %v4075
    %v4119 = vpack.c.b16 %v4078, %v4077
    %v4120 = vpack.c.b16 %v4080, %v4079
    %v4121 = vpack.c.b16 %v4082, %v4081
    %v4122 = vpack.c.b16 %v4084, %v4083
    %v4123 = vpack.c.b16 %v4086, %v4085
    %v4124 = vpack.c.b16 %v4088, %v4087
    %v4125 = vpack.c.b16 %v4090, %v4089
    %v4126 = vpack.c.b16 %v4092, %v4091
    %v4127 = vpack.c.b16 %v4094, %v4093
    %v4128 = vpack.c.b16 %v4096, %v4095
    %4161 = vmatprep.subr.bf16.mxu0 0
    %4162 = vmatpush1.bf16.msra.mxu0 %v4097
    %4163 = vmatprep.subr.bf16.mxu0 0
    %4164 = vmatpush1.bf16.msra.mxu0 %v4098
    %4165 = vmatprep.subr.bf16.mxu0 0
    %4166 = vmatpush1.bf16.msra.mxu0 %v4099
    %4167 = vmatprep.subr.bf16.mxu0 0
    %4168 = vmatpush1.bf16.msra.mxu0 %v4100
    %4169 = vmatprep.subr.bf16.mxu0 0
    %4170 = vmatpush1.bf16.msra.mxu0 %v4101
    %4171 = vmatprep.subr.bf16.mxu0 0
    %4172 = vmatpush1.bf16.msra.mxu0 %v4102
    %4173 = vmatprep.subr.bf16.mxu0 0
    %4174 = vmatpush1.bf16.msra.mxu0 %v4103
    %4175 = vmatprep.subr.bf16.mxu0 0
    %4176 = vmatpush1.bf16.msra.mxu0 %v4104
    %4177 = vmatprep.subr.bf16.mxu0 0
    %4178 = vmatpush1.bf16.msra.mxu0 %v4105
    %4179 = vmatprep.subr.bf16.mxu0 0
    %4180 = vmatpush1.bf16.msra.mxu0 %v4106
    %4181 = vmatprep.subr.bf16.mxu0 0
    %4182 = vmatpush1.bf16.msra.mxu0 %v4107
    %4183 = vmatprep.subr.bf16.mxu0 0
    %4184 = vmatpush1.bf16.msra.mxu0 %v4108
    %4185 = vmatprep.subr.bf16.mxu0 0
    %4186 = vmatpush1.bf16.msra.mxu0 %v4109
    %4187 = vmatprep.subr.bf16.mxu0 0
    %4188 = vmatpush1.bf16.msra.mxu0 %v4110
    %4189 = vmatprep.subr.bf16.mxu0 0
    %4190 = vmatpush1.bf16.msra.mxu0 %v4111
    %4191 = vmatprep.subr.bf16.mxu0 0
    %4192 = vmatpush1.bf16.msra.mxu0 %v4112
    %4193 = vmatprep.mubr.bf16.mxu0 %v3895
    %4194 = vmatmul.mubr.bf16.gmra.mrb[0].mxu0 %v3894
    %v4195 = vpop.f32.mrb[0].mxu0
    %v4196 = vadd.f32 %v3967, %v4195
    %v4197 = vpop.f32.mrb[0].mxu0
    %v4198 = vpop.f32.mrb[0].mxu0
    %v4199 = vpop.f32.mrb[0].mxu0
    %4200 = vdwg.mxu0
    %4201 = vmatprep.subr.bf16.mxu0 0
    %4202 = vmatpush1.bf16.msra.mxu0 %v4113
    %4203 = vmatprep.subr.bf16.mxu0 0
    %4204 = vmatpush1.bf16.msra.mxu0 %v4114
    %4205 = vmatprep.subr.bf16.mxu0 0
    %4206 = vmatpush1.bf16.msra.mxu0 %v4115
    %4207 = vmatprep.subr.bf16.mxu0 0
    %4208 = vmatpush1.bf16.msra.mxu0 %v4116
    %4209 = vmatprep.subr.bf16.mxu0 0
    %4210 = vmatpush1.bf16.msra.mxu0 %v4117
    %4211 = vmatprep.subr.bf16.mxu0 0
    %4212 = vmatpush1.bf16.msra.mxu0 %v4118
    %4213 = vmatprep.subr.bf16.mxu0 0
    %4214 = vmatpush1.bf16.msra.mxu0 %v4119
    %4215 = vmatprep.subr.bf16.mxu0 0
    %4216 = vmatpush1.bf16.msra.mxu0 %v4120
    %4217 = vmatprep.subr.bf16.mxu0 0
    %4218 = vmatpush1.bf16.msra.mxu0 %v4121
    %4219 = vmatprep.subr.bf16.mxu0 0
    %4220 = vmatpush1.bf16.msra.mxu0 %v4122
    %4221 = vmatprep.subr.bf16.mxu0 0
    %4222 = vmatpush1.bf16.msra.mxu0 %v4123
    %4223 = vmatprep.subr.bf16.mxu0 0
    %4224 = vmatpush1.bf16.msra.mxu0 %v4124
    %4225 = vmatprep.subr.bf16.mxu0 0
    %4226 = vmatpush1.bf16.msra.mxu0 %v4125
    %4227 = vmatprep.subr.bf16.mxu0 0
    %4228 = vmatpush1.bf16.msra.mxu0 %v4126
    %4229 = vmatprep.subr.bf16.mxu0 0
    %4230 = vmatpush1.bf16.msra.mxu0 %v4127
    %4231 = vmatprep.subr.bf16.mxu0 0
    %4232 = vmatpush1.bf16.msra.mxu0 %v4128
    %4233 = vmatprep.mubr.bf16.mxu0 %v3897
    %4234 = vmatmul.mubr.bf16.gmra.mrb[0].mxu0 %v3896
    %v4235 = vpop.f32.mrb[0].mxu0
    %v4236 = vadd.f32 %v4196, %v4235
    %v4237 = vpop.f32.mrb[0].mxu0
    %v4238 = vpop.f32.mrb[0].mxu0
    %v4239 = vpop.f32.mrb[0].mxu0
    %4240 = vdwg.mxu0
    %4241 = vst [vmem:[#allocation2] sm:$0x3] %v4236
    // Predicated region
    $region22: #{cnn_mnist_forward.5} parent=1 // pred_check
      _
    $region23: #{cnn_mnist_forward.5} parent=1 // pred_check_branch
      %4243 = sbr.rel (0) target = $region25
    $region24: #{cnn_mnist_forward.5} parent=1 // pred_region
      %s4245 = ssub.s32 32, 32
      %4246 = vsyncadd [#allocation3], %s4245
      %s4248 = sshll.u32 [#allocation2], 4
      %s4249 = int_to_ptr.vmem [resolvable:$true] %s4248
      %4251 = dma.vmem_to_hbm [thread:$0]  %s4249, 32, %s5, [#allocation3]
    $region25: #{cnn_mnist_forward.5} parent=1 // pred_fallthru
      _
    // Predicated region
    $region26: #{cnn_mnist_forward.5} parent=1 // pred_check
      _
    $region27: #{cnn_mnist_forward.5} parent=1 // pred_check_branch
      %4253 = sbr.rel (0) target = $region29
    $region28: #{cnn_mnist_forward.5} parent=1 // pred_region
      %4254 = dma.done [#allocation3], 32
    $region29: #{cnn_mnist_forward.5} parent=1 // pred_fallthru
      _
    %4255 = vsyncpa [#allocation3], 1

</llo_original>
